<compile_context>
chip_gen: v6e
topology: v6e:2x2x1
jax: 0.10.0
libtpu: 0.0.40
codegen_flags: <defaults>
</compile_context>

<pallas_src>
import numpy as np
import jax
import jax.numpy as jnp
from jax.experimental import pallas as pl

# ----------------------------- hyper-parameters ------------------------------
HP = dict(
    num_channels=1,
    dim=16,                         # latent dim
    num_filters=8,                  # num_initial_filters
    upsampling_ratios=(2, 2),
    upsampling_kernel_sizes=(4, 4),
    resblock_kernel_sizes=(3, 1),
    resblock_dilations=(1,),        # TODO(synk): real hparams use a list of dilation sizes
    initial_kernel_size=7,
    last_kernel_size=7,
    num_lstm_layers=1,
    elu_alpha=1.0,
    compress=2,
    chunk_length=32,
)
HOP = int(np.prod(HP['upsampling_ratios']))
# NOTE: Encodec's extra right padding for non-integral frame counts is omitted;
# this is safe only because of this assert.
assert HP['chunk_length'] % HOP == 0
FRAME_SIZE = HP['chunk_length'] // HOP
DTYPE = jnp.float32
MXU_DTYPE = jnp.bfloat16            # matmul-input dtype (f32 accumulation)


def _enc_stage_specs():
    return list(zip(reversed(HP['upsampling_ratios']),
                    reversed(HP['upsampling_kernel_sizes'])))


# --------------------------- static per-conv metadata -------------------------
def _encoder_conv_meta():
    nf, comp = HP['num_filters'], HP['compress']
    kres = HP['resblock_kernel_sizes']
    metas = [dict(cout=nf, cin=HP['num_channels'], k=HP['initial_kernel_size'],
                  stride=1, dil=1, tr=False)]
    ch = nf
    for (ratio, ksz) in _enc_stage_specs():
        for d in HP['resblock_dilations']:
            metas.append(dict(cout=ch // comp, cin=ch, k=kres[0], stride=1, dil=d, tr=False))
            metas.append(dict(cout=ch, cin=ch // comp, k=kres[1], stride=1, dil=1, tr=False))
        metas.append(dict(cout=ch * 2, cin=ch, k=ksz, stride=ratio, dil=1, tr=False))
        ch *= 2
    metas.append(dict(cout=2 * HP['dim'], cin=ch, k=HP['last_kernel_size'],
                      stride=1, dil=1, tr=False))
    return metas


def _decoder_conv_meta():
    nf, comp = HP['num_filters'], HP['compress']
    kres = HP['resblock_kernel_sizes']
    ch = nf * (2 ** len(HP['upsampling_ratios']))
    metas = [dict(cout=ch, cin=HP['dim'], k=HP['initial_kernel_size'],
                  stride=1, dil=1, tr=False)]
    for (ratio, ksz) in zip(HP['upsampling_ratios'], HP['upsampling_kernel_sizes']):
        metas.append(dict(cout=ch // 2, cin=ch, k=ksz, stride=ratio, dil=1, tr=True))
        ch //= 2
        for d in HP['resblock_dilations']:
            metas.append(dict(cout=ch // comp, cin=ch, k=kres[0], stride=1, dil=d, tr=False))
            metas.append(dict(cout=ch, cin=ch // comp, k=kres[1], stride=1, dil=1, tr=False))
    metas.append(dict(cout=HP['num_channels'], cin=ch, k=HP['last_kernel_size'],
                      stride=1, dil=1, tr=False))
    return metas


# ----------------------- in-kernel helpers (traced inside Pallas) -------------
def _dot(a, b):
    return jnp.dot(a, b, preferred_element_type=jnp.float32)


def _elu(x, alpha):
    # exp(min(x,0)) avoids overflow on the non-selected branch; f32 elementwise.
    return jnp.where(x > 0, x, alpha * (jnp.exp(jnp.minimum(x, 0.0)) - 1.0))


def _sigmoid(x):
    # EUP reciprocal (otherwise-idle slot) instead of a VPU divide.
    return pl.reciprocal(1.0 + jnp.exp(-x), approx=True)


def _conv1d(x, w_flat, bias, k, cin, cout, batch, stride, dilation, ds_mat=None):
    """Conv1d (Encodec 'same' non-causal padding) in time-major (C, T*B) layout.

    Zero-pad along lanes, take K static lane slices (taps), stack along the
    contraction axis, then ONE fused (cout, k*cin) x (k*cin, B*T) matmul.
    For stride > 1 a tiny precomputed 0/1 matrix downsamples the stacked
    activations (exact selection) before the weight matmul."""
    del cout
    t_in = x.shape[1] // batch
    pad_total = (k - 1) * dilation - (stride - 1)
    pad_right = pad_total // 2
    pad_left = pad_total - pad_right
    pad_r_full = pad_right + (stride - 1)     # evaluate at all T_in positions, then select
    pieces = []
    if pad_left > 0:
        pieces.append(jnp.zeros((cin, pad_left * batch), x.dtype))
    pieces.append(x)
    if pad_r_full > 0:
        pieces.append(jnp.zeros((cin, pad_r_full * batch), x.dtype))
    x_pad = jnp.concatenate(pieces, axis=1) if len(pieces) > 1 else x
    taps = [x_pad[:, j * dilation * batch: j * dilation * batch + t_in * batch]
            for j in range(k)]
    stacked = (jnp.concatenate(taps, axis=0) if k > 1 else taps[0]).astype(MXU_DTYPE)
    if stride > 1:
        stacked = _dot(stacked, ds_mat).astype(MXU_DTYPE)     # exact 0/1 downsample
    return _dot(w_flat, stacked) + bias


def _conv_tr1d(x, w_flat, bias, k, cin, cout, batch, stride, stuff_mat):
    """ConvTranspose1d with Encodec trim of (K - stride), time-major layout.

    `stuff_mat` (precomputed 0/1) zero-stuffs + pads the input along time; the
    transposed conv then becomes a stride-1 conv with the kernel reversed
    (reversal pre-baked into w_flat): one fused MXU matmul."""
    del cin, cout
    t_in = x.shape[1] // batch
    t_out = t_in * stride
    x_st = _dot(x.astype(MXU_DTYPE), stuff_mat)               # (cin, B*(t_out+k-1))
    taps = [x_st[:, j * batch: j * batch + t_out * batch] for j in range(k)]
    stacked = (jnp.concatenate(taps, axis=0) if k > 1 else taps[0]).astype(MXU_DTYPE)
    return _dot(w_flat, stacked) + bias


def _slstm(x, lstm_w_ref, lstm_b_ref, batch):
    """Encodec SLSTM (stacked LSTM over time + skip of the block input).

    Time-major (H, T*B): the per-step input-projection column group is a static
    lane slice, h/c stay in vregs (f32), outputs are gathered with one concat."""
    hidden = x.shape[0]
    t_len = x.shape[1] // batch
    y = x
    for l in range(lstm_w_ref.shape[0]):
        wih = lstm_w_ref[l, :, 0:hidden]                      # (4H, H) bf16
        whh = lstm_w_ref[l, :, hidden:2 * hidden]             # (4H, H) bf16
        b = lstm_b_ref[l]                                     # (4H, 1) f32 (= b_ih + b_hh)
        gx = _dot(wih, y.astype(MXU_DTYPE)) + b               # (4H, T*B) f32
        h = jnp.zeros((hidden, batch), jnp.float32)
        c = jnp.zeros((hidden, batch), jnp.float32)
        outs = []
        for t in range(t_len):
            gates = gx[:, t * batch:(t + 1) * batch] + _dot(whh, h.astype(MXU_DTYPE))
            i_g = _sigmoid(gates[0:hidden])                   # torch gate order i,f,g,o
            f_g = _sigmoid(gates[hidden:2 * hidden])
            g_g = jnp.tanh(gates[2 * hidden:3 * hidden])
            o_g = _sigmoid(gates[3 * hidden:4 * hidden])
            c = f_g * c + i_g * g_g
            h = o_g * jnp.tanh(c)
            outs.append(h)
        y = jnp.concatenate(outs, axis=1)
    return y + x                                              # fused skip connection


def _make_conv_applier(wpack_ref, bpack_ref, sel_vals, metas, batch):
    counter = [0]

    def next_conv(x):
        i = counter[0]
        counter[0] += 1
        m = metas[i]
        kcin = m['k'] * m['cin']
        w = wpack_ref[i, 0:m['cout'], 0:kcin]                 # (cout, k*cin) bf16
        bias = bpack_ref[0:m['cout'], i:i + 1]                # (cout, 1) f32
        sel = sel_vals.get(i)
        if m['tr']:
            return _conv_tr1d(x, w, bias, m['k'], m['cin'], m['cout'], batch,
                              m['stride'], sel)
        return _conv1d(x, w, bias, m['k'], m['cin'], m['cout'], batch,
                       m['stride'], m['dil'], sel)

    return next_conv


# ----------------------------- megakernels -----------------------------------
def _make_encoder_kernel(batch):
    metas = _encoder_conv_meta()
    n_sel = len(HP['upsampling_ratios'])
    sel_conv_idx = [i for i, m in enumerate(metas) if m['stride'] > 1 or m['tr']]

    def kernel(x_ref, wpack_ref, bpack_ref, lstm_w_ref, lstm_b_ref, *rest):
        sel_refs, out_ref = rest[:n_sel], rest[n_sel]
        sel_vals = {i: r[...] for i, r in zip(sel_conv_idx, sel_refs)}
        next_conv = _make_conv_applier(wpack_ref, bpack_ref, sel_vals, metas, batch)
        alpha = HP['elu_alpha']

        x = next_conv(x_ref[...])                             # initial conv
        for (_ratio, _ksz) in _enc_stage_specs():
            for _d in HP['resblock_dilations']:
                h = next_conv(_elu(x, alpha))
                h = next_conv(_elu(h, alpha))
                x = x + h                                     # fused residual add
            x = next_conv(_elu(x, alpha))                     # strided downsample conv
        x = _slstm(x, lstm_w_ref, lstm_b_ref, batch)
        x = next_conv(_elu(x, alpha))                         # final conv -> (2*dim, B*F)
        out_ref[...] = x.astype(out_ref.dtype)                # single lane-dense store

    return kernel


def _make_decoder_kernel(batch):
    metas = _decoder_conv_meta()
    n_sel = len(HP['upsampling_ratios'])
    sel_conv_idx = [i for i, m in enumerate(metas) if m['stride'] > 1 or m['tr']]

    def kernel(mean_ref, logvar_ref, eps_ref, wpack_ref, bpack_ref,
               lstm_w_ref, lstm_b_ref, *rest):
        sel_refs, out_ref = rest[:n_sel], rest[n_sel]
        sel_vals = {i: r[...] for i, r in zip(sel_conv_idx, sel_refs)}
        next_conv = _make_conv_applier(wpack_ref, bpack_ref, sel_vals, metas, batch)
        alpha = HP['elu_alpha']

        # fused reparameterization (kept in f32): z = mean + eps * exp(0.5*logvar)
        z = mean_ref[...] + eps_ref[...] * jnp.exp(0.5 * logvar_ref[...])

        x = next_conv(z)                                      # initial conv
        x = _slstm(x, lstm_w_ref, lstm_b_ref, batch)
        for (_ratio, _ksz) in zip(HP['upsampling_ratios'], HP['upsampling_kernel_sizes']):
            x = next_conv(_elu(x, alpha))                     # transposed upsample conv
            for _d in HP['resblock_dilations']:
                h = next_conv(_elu(x, alpha))
                h = next_conv(_elu(h, alpha))
                x = x + h
        x = next_conv(_elu(x, alpha))                         # final conv -> (1, B*T)
        # TODO(synk): final_activation_decoder assumed Tanh (synthetic choice).
        out_ref[...] = jnp.tanh(x).astype(out_ref.dtype)      # single lane-dense store

    return kernel


# ------------------------- weight packing (host side, outside jit) ------------
def _flatten_conv_weight(w, meta):
    if meta['tr']:
        # torch ConvTranspose1d layout (Cin, Cout, K): reverse taps -> (Cout, K*Cin)
        return jnp.transpose(jnp.flip(w, axis=2), (1, 2, 0)).reshape(meta['cout'], -1)
    # torch Conv1d layout (Cout, Cin, K) -> (Cout, K*Cin) (tap-major, matches im2col stack)
    return jnp.transpose(w, (0, 2, 1)).reshape(meta['cout'], -1)


def _pack_convs(wb_list, metas):
    cmax = max(m['cout'] for m in metas)
    kcmax = max(m['k'] * m['cin'] for m in metas)
    wpads = []
    bpack = jnp.zeros((cmax, len(metas)), jnp.float32)
    for i, ((w, b), m) in enumerate(zip(wb_list, metas)):
        wf = _flatten_conv_weight(w, m)
        wpads.append(jnp.pad(wf, ((0, cmax - wf.shape[0]), (0, kcmax - wf.shape[1]))))
        bpack = bpack.at[:m['cout'], i].set(b)
    return jnp.stack(wpads, 0).astype(MXU_DTYPE), bpack


def _pack_lstm(layers):
    ws, bs = [], []
    for (wih, whh, bih, bhh) in layers:
        ws.append(jnp.concatenate([wih, whh], axis=1))        # (4H, 2H)
        bs.append((bih + bhh).reshape(-1, 1))                 # (4H, 1)
    return jnp.stack(ws, 0).astype(MXU_DTYPE), jnp.stack(bs, 0).astype(jnp.float32)


def _downsample_matrix(t_in, stride, batch):
    """(B*t_in, B*t_out) 0/1: output column t*B+b selects input column (t*stride)*B+b."""
    t_out = t_in // stride
    m = np.zeros((batch * t_in, batch * t_out), np.float32)
    for t in range(t_out):
        for b in range(batch):
            m[t * stride * batch + b, t * batch + b] = 1.0
    return jnp.asarray(m, MXU_DTYPE)


def _zero_stuff_matrix(t_in, stride, k, batch):
    """(B*t_in, B*(t_in*stride + k - 1)) 0/1 zero-stuff + pad for ConvTranspose1d."""
    pad_total = k - stride
    pad_left = pad_total - pad_total // 2
    left_ext = (k - 1) - pad_left
    t_st = t_in * stride + k - 1
    m = np.zeros((batch * t_in, batch * t_st), np.float32)
    for t in range(t_in):
        for b in range(batch):
            m[t * batch + b, (left_ext + t * stride) * batch + b] = 1.0
    return jnp.asarray(m, MXU_DTYPE)


def prepare_packed_params(P, batch):
    """One-time (outside jit) packing of all weights into a few large operands."""
    n_stages = len(HP['upsampling_ratios'])
    # encoder
    enc_wb = [P['enc_init']]
    for i in range(n_stages):
        for j in range(len(HP['resblock_dilations'])):
            enc_wb += list(P[f'enc_res_{i}_{j}'])
        enc_wb.append(P[f'enc_down_{i}'])
    enc_wb.append(P['enc_final'])
    enc_wpack, enc_bpack = _pack_convs(enc_wb, _encoder_conv_meta())
    enc_lstm_w, enc_lstm_b = _pack_lstm(P['enc_lstm'])
    enc_sel, t = [], HP['chunk_length']
    for (ratio, _ksz) in _enc_stage_specs():
        enc_sel.append(_downsample_matrix(t, ratio, batch))
        t //= ratio
    # decoder
    dec_wb = [P['dec_init']]
    for i in range(n_stages):
        dec_wb.append(P[f'dec_up_{i}'])
        for j in range(len(HP['resblock_dilations'])):
            dec_wb += list(P[f'dec_res_{i}_{j}'])
    dec_wb.append(P['dec_final'])
    dec_wpack, dec_bpack = _pack_convs(dec_wb, _decoder_conv_meta())
    dec_lstm_w, dec_lstm_b = _pack_lstm(P['dec_lstm'])
    dec_sel, t = [], FRAME_SIZE
    for (ratio, ksz) in zip(HP['upsampling_ratios'], HP['upsampling_kernel_sizes']):
        dec_sel.append(_zero_stuff_matrix(t, ratio, ksz, batch))
        t *= ratio
    return dict(
        enc=dict(wpack=enc_wpack, bpack=enc_bpack, lstm_w=enc_lstm_w,
                 lstm_b=enc_lstm_b, sel=tuple(enc_sel)),
        dec=dict(wpack=dec_wpack, bpack=dec_bpack, lstm_w=dec_lstm_w,
                 lstm_b=dec_lstm_b, sel=tuple(dec_sel)),
    )


# ----------------------------- pallas_call wrappers ---------------------------
def encoder_forward(audio, ew):
    B, C, T = audio.shape
    dim = HP['dim']
    # (B, C, T) -> (C, T*B) time-major fold (wrapper-side layout plumbing)
    x_folded = jnp.transpose(audio, (1, 2, 0)).reshape(C, T * B)
    out = pl.pallas_call(
        _make_encoder_kernel(B),
        out_shape=jax.ShapeDtypeStruct((2 * dim, FRAME_SIZE * B), DTYPE),
        cost_estimate=pl.CostEstimate(flops=1_200_000, transcendentals=25_000,
                                      bytes_accessed=220_000),
    )(x_folded, ew['wpack'], ew['bpack'], ew['lstm_w'], ew['lstm_b'], *ew['sel'])
    out = jnp.transpose(out.reshape(2 * dim, FRAME_SIZE, B), (2, 0, 1))  # (B, 2*dim, F)
    return out[:, :dim, :], out[:, dim:, :]


def decoder_forward(mean, logvar, eps, dw):
    B = mean.shape[0]
    fold = lambda a: jnp.transpose(a, (1, 2, 0)).reshape(a.shape[1], a.shape[2] * B)
    rec = pl.pallas_call(
        _make_decoder_kernel(B),
        out_shape=jax.ShapeDtypeStruct((HP['num_channels'], HP['chunk_length'] * B), DTYPE),
        cost_estimate=pl.CostEstimate(flops=1_000_000, transcendentals=25_000,
                                      bytes_accessed=180_000),
    )(fold(mean), fold(logvar), fold(eps), dw['wpack'], dw['bpack'],
      dw['lstm_w'], dw['lstm_b'], *dw['sel'])
    return jnp.transpose(rec.reshape(HP['num_channels'], HP['chunk_length'], B), (2, 0, 1))


def vae2_forward(packed, audio_frame, eps):
    # encode_frame: right-pad to chunk_length if needed (static shape decision)
    T = audio_frame.shape[-1]
    if T < HP['chunk_length']:
        audio_frame = jnp.pad(audio_frame, ((0, 0), (0, 0), (0, HP['chunk_length'] - T)))
    mean, log_var = encoder_forward(audio_frame, packed['enc'])
    reconstructed = decoder_forward(mean, log_var, eps, packed['dec'])  # reparam fused in-kernel
    return reconstructed, mean, log_var


# ----------------------------- parameter init --------------------------------
def _init_conv(key, cout, cin, k, scale=0.1):
    kw, kb = jax.random.split(key)
    w = jax.random.normal(kw, (cout, cin, k), jnp.float32) * scale
    b = jax.random.normal(kb, (cout,), jnp.float32) * scale
    return w, b


def _init_convtr(key, cin, cout, k, scale=0.1):
    kw, kb = jax.random.split(key)
    w = jax.random.normal(kw, (cin, cout, k), jnp.float32) * scale
    b = jax.random.normal(kb, (cout,), jnp.float32) * scale
    return w, b


def _init_lstm(key, h, scale=0.1):
    k1, k2, k3, k4 = jax.random.split(key, 4)
    return (jax.random.normal(k1, (4 * h, h), jnp.float32) * scale,
            jax.random.normal(k2, (4 * h, h), jnp.float32) * scale,
            jax.random.normal(k3, (4 * h,), jnp.float32) * scale,
            jax.random.normal(k4, (4 * h,), jnp.float32) * scale)


def init_params(key):
    keys = iter(jax.random.split(key, 64))
    nf, dim, comp = HP['num_filters'], HP['dim'], HP['compress']
    kres = HP['resblock_kernel_sizes']
    P = {}
    # encoder
    P['enc_init'] = _init_conv(next(keys), nf, HP['num_channels'], HP['initial_kernel_size'])
    ch = nf
    for i, (ratio, ksz) in enumerate(_enc_stage_specs()):
        for j, _ in enumerate(HP['resblock_dilations']):
            P[f'enc_res_{i}_{j}'] = (
                _init_conv(next(keys), ch // comp, ch, kres[0]),
                _init_conv(next(keys), ch, ch // comp, kres[1]),
            )
        P[f'enc_down_{i}'] = _init_conv(next(keys), ch * 2, ch, ksz)
        ch *= 2
    P['enc_lstm'] = [_init_lstm(next(keys), ch) for _ in range(HP['num_lstm_layers'])]
    P['enc_final'] = _init_conv(next(keys), 2 * dim, ch, HP['last_kernel_size'])
    # decoder (mirror)
    P['dec_init'] = _init_conv(next(keys), ch, dim, HP['initial_kernel_size'])
    P['dec_lstm'] = [_init_lstm(next(keys), ch) for _ in range(HP['num_lstm_layers'])]
    for i, (ratio, ksz) in enumerate(zip(HP['upsampling_ratios'],
                                         HP['upsampling_kernel_sizes'])):
        P[f'dec_up_{i}'] = _init_convtr(next(keys), ch, ch // 2, ksz)
        ch //= 2
        for j, _ in enumerate(HP['resblock_dilations']):
            P[f'dec_res_{i}_{j}'] = (
                _init_conv(next(keys), ch // comp, ch, kres[0]),
                _init_conv(next(keys), ch, ch // comp, kres[1]),
            )
    P['dec_final'] = _init_conv(next(keys), HP['num_channels'], ch, HP['last_kernel_size'])
    return P


# ----------------------------------- main -------------------------------------
if __name__ == "__main__":
    key = jax.random.PRNGKey(0)
    pkey, akey, ekey = jax.random.split(key, 3)

    params = init_params(pkey)

    B = 2
    audio_frame = jax.random.normal(
        akey, (B, HP['num_channels'], HP['chunk_length']), jnp.float32)
    mean_shape = (B, HP['dim'], FRAME_SIZE)
    # matches torch default: eps = randn(world_size, *mean.shape)[rank]
    eps = jax.random.normal(ekey, mean_shape, jnp.float32)

    packed = prepare_packed_params(params, B)     # one-time weight packing (outside jit)

    fwd = jax.jit(vae2_forward)
    reconstructed, mean, log_var = fwd(packed, audio_frame, eps)
    jax.block_until_ready((reconstructed, mean, log_var))

    assert reconstructed.shape == audio_frame.shape, reconstructed.shape
    assert mean.shape == mean_shape and log_var.shape == mean_shape
    assert bool(jnp.all(jnp.isfinite(reconstructed)))
    assert bool(jnp.all(jnp.isfinite(mean))) and bool(jnp.all(jnp.isfinite(log_var)))
    print("KERNEL_OK")
</pallas_src>

<mosaic_0001>
module attributes {stable_mosaic.version = 11 : i64} {
  func.func @kernel(%arg0: memref<1x64xf32, #tpu.memory_space<vmem>>, %arg1: memref<8x32x224xbf16, #tpu.memory_space<vmem>>, %arg2: memref<32x8xf32, #tpu.memory_space<vmem>>, %arg3: memref<1x128x64xbf16, #tpu.memory_space<vmem>>, %arg4: memref<1x128x1xf32, #tpu.memory_space<vmem>>, %arg5: memref<64x32xbf16, #tpu.memory_space<vmem>>, %arg6: memref<32x16xbf16, #tpu.memory_space<vmem>>, %arg7: memref<32x16xf32, #tpu.memory_space<vmem>>) attributes {dimension_semantics = [], scalar_prefetch = 0 : i64, scratch_operands = 0 : i64, tpu.core_type = #tpu.core_type<tc>} {
    %c0 = arith.constant 0 : index
    %c0_0 = arith.constant 0 : index
    %0 = vector.load %arg5[%c0, %c0_0] : memref<64x32xbf16, #tpu.memory_space<vmem>>, vector<64x32xbf16>
    %c0_1 = arith.constant 0 : index
    %c0_2 = arith.constant 0 : index
    %1 = vector.load %arg6[%c0_1, %c0_2] : memref<32x16xbf16, #tpu.memory_space<vmem>>, vector<32x16xbf16>
    %c0_3 = arith.constant 0 : index
    %c0_4 = arith.constant 0 : index
    %2 = vector.load %arg0[%c0_3, %c0_4] : memref<1x64xf32, #tpu.memory_space<vmem>>, vector<1x64xf32>
    %c0_5 = arith.constant 0 : index
    %c0_6 = arith.constant 0 : index
    %c0_7 = arith.constant 0 : index
    %3 = vector.load %arg1[%c0_5, %c0_6, %c0_7] : memref<8x32x224xbf16, #tpu.memory_space<vmem>>, vector<1x8x7xbf16>
    %4 = vector.shape_cast %3 : vector<1x8x7xbf16> to vector<8x7xbf16>
    %c0_8 = arith.constant 0 : index
    %c0_9 = arith.constant 0 : index
    %5 = vector.load %arg2[%c0_8, %c0_9] : memref<32x8xf32, #tpu.memory_space<vmem>>, vector<8x1xf32>
    %cst = arith.constant 0.000000e+00 : f32
    %6 = vector.broadcast %cst : f32 to vector<1x6xf32>
    %cst_10 = arith.constant 0.000000e+00 : f32
    %7 = vector.broadcast %cst_10 : f32 to vector<1x6xf32>
    %8 = tpu.concatenate %6, %2, %7 in 1 : vector<1x6xf32>, vector<1x64xf32>, vector<1x6xf32> -> vector<1x76xf32>
    %9 = vector.extract_strided_slice %8 {offsets = [0, 0], sizes = [1, 64], strides = [1, 1]} : vector<1x76xf32> to vector<1x64xf32>
    %10 = vector.extract_strided_slice %8 {offsets = [0, 2], sizes = [1, 64], strides = [1, 1]} : vector<1x76xf32> to vector<1x64xf32>
    %11 = vector.extract_strided_slice %8 {offsets = [0, 4], sizes = [1, 64], strides = [1, 1]} : vector<1x76xf32> to vector<1x64xf32>
    %12 = vector.extract_strided_slice %8 {offsets = [0, 6], sizes = [1, 64], strides = [1, 1]} : vector<1x76xf32> to vector<1x64xf32>
    %13 = vector.extract_strided_slice %8 {offsets = [0, 8], sizes = [1, 64], strides = [1, 1]} : vector<1x76xf32> to vector<1x64xf32>
    %14 = vector.extract_strided_slice %8 {offsets = [0, 10], sizes = [1, 64], strides = [1, 1]} : vector<1x76xf32> to vector<1x64xf32>
    %15 = vector.extract_strided_slice %8 {offsets = [0, 12], sizes = [1, 64], strides = [1, 1]} : vector<1x76xf32> to vector<1x64xf32>
    %16 = tpu.concatenate %9, %10, %11, %12, %13, %14, %15 in 0 : vector<1x64xf32>, vector<1x64xf32>, vector<1x64xf32>, vector<1x64xf32>, vector<1x64xf32>, vector<1x64xf32>, vector<1x64xf32> -> vector<7x64xf32>
    %17 = arith.truncf %16 : vector<7x64xf32> to vector<7x64xbf16>
    %cst_11 = arith.constant dense<0.000000e+00> : vector<8x64xf32>
    %18 = tpu.matmul %4, %17, %cst_11 {dimension_numbers = #tpu.dot_dimension_numbers<[1], [0], [0], [1], [0, 0, 1, 1], [], []>} : vector<8x7xbf16>, vector<7x64xbf16>, vector<8x64xf32> -> vector<8x64xf32>
    %19 = vector.broadcast %5 : vector<8x1xf32> to vector<8x64xf32>
    %20 = arith.addf %18, %19 : vector<8x64xf32>
    %cst_12 = arith.constant 0.000000e+00 : f32
    %21 = vector.broadcast %cst_12 : f32 to vector<8x64xf32>
    %22 = arith.cmpf ogt, %20, %21 : vector<8x64xf32>
    %cst_13 = arith.constant 0.000000e+00 : f32
    %23 = vector.broadcast %cst_13 : f32 to vector<8x64xf32>
    %24 = arith.minimumf %20, %23 : vector<8x64xf32>
    %25 = math.exp %24 : vector<8x64xf32>
    %cst_14 = arith.constant 1.000000e+00 : f32
    %26 = vector.broadcast %cst_14 : f32 to vector<8x64xf32>
    %27 = arith.subf %25, %26 : vector<8x64xf32>
    %cst_15 = arith.constant 1.000000e+00 : f32
    %28 = vector.broadcast %cst_15 : f32 to vector<8x64xf32>
    %29 = arith.mulf %28, %27 : vector<8x64xf32>
    %30 = arith.select %22, %20, %29 : vector<8x64xi1>, vector<8x64xf32>
    %c1 = arith.constant 1 : index
    %c0_16 = arith.constant 0 : index
    %c0_17 = arith.constant 0 : index
    %31 = vector.load %arg1[%c1, %c0_16, %c0_17] : memref<8x32x224xbf16, #tpu.memory_space<vmem>>, vector<1x4x24xbf16>
    %32 = vector.shape_cast %31 : vector<1x4x24xbf16> to vector<4x24xbf16>
    %c0_18 = arith.constant 0 : index
    %c1_19 = arith.constant 1 : index
    %33 = vector.load %arg2[%c0_18, %c1_19] : memref<32x8xf32, #tpu.memory_space<vmem>>, vector<4x1xf32>
    %cst_20 = arith.constant 0.000000e+00 : f32
    %34 = vector.broadcast %cst_20 : f32 to vector<8x2xf32>
    %cst_21 = arith.constant 0.000000e+00 : f32
    %35 = vector.broadcast %cst_21 : f32 to vector<8x2xf32>
    %36 = tpu.concatenate %34, %30, %35 in 1 : vector<8x2xf32>, vector<8x64xf32>, vector<8x2xf32> -> vector<8x68xf32>
    %37 = vector.extract_strided_slice %36 {offsets = [0, 0], sizes = [8, 64], strides = [1, 1]} : vector<8x68xf32> to vector<8x64xf32>
    %38 = vector.extract_strided_slice %36 {offsets = [0, 2], sizes = [8, 64], strides = [1, 1]} : vector<8x68xf32> to vector<8x64xf32>
    %39 = vector.extract_strided_slice %36 {offsets = [0, 4], sizes = [8, 64], strides = [1, 1]} : vector<8x68xf32> to vector<8x64xf32>
    %40 = tpu.concatenate %37, %38, %39 in 0 : vector<8x64xf32>, vector<8x64xf32>, vector<8x64xf32> -> vector<24x64xf32>
    %41 = arith.truncf %40 : vector<24x64xf32> to vector<24x64xbf16>
    %cst_22 = arith.constant dense<0.000000e+00> : vector<4x64xf32>
    %42 = tpu.matmul %32, %41, %cst_22 {dimension_numbers = #tpu.dot_dimension_numbers<[1], [0], [0], [1], [0, 0, 1, 1], [], []>} : vector<4x24xbf16>, vector<24x64xbf16>, vector<4x64xf32> -> vector<4x64xf32>
    %43 = vector.broadcast %33 : vector<4x1xf32> to vector<4x64xf32>
    %44 = arith.addf %42, %43 : vector<4x64xf32>
    %cst_23 = arith.constant 0.000000e+00 : f32
    %45 = vector.broadcast %cst_23 : f32 to vector<4x64xf32>
    %46 = arith.cmpf ogt, %44, %45 : vector<4x64xf32>
    %cst_24 = arith.constant 0.000000e+00 : f32
    %47 = vector.broadcast %cst_24 : f32 to vector<4x64xf32>
    %48 = arith.minimumf %44, %47 : vector<4x64xf32>
    %49 = math.exp %48 : vector<4x64xf32>
    %cst_25 = arith.constant 1.000000e+00 : f32
    %50 = vector.broadcast %cst_25 : f32 to vector<4x64xf32>
    %51 = arith.subf %49, %50 : vector<4x64xf32>
    %cst_26 = arith.constant 1.000000e+00 : f32
    %52 = vector.broadcast %cst_26 : f32 to vector<4x64xf32>
    %53 = arith.mulf %52, %51 : vector<4x64xf32>
    %54 = arith.select %46, %44, %53 : vector<4x64xi1>, vector<4x64xf32>
    %c2 = arith.constant 2 : index
    %c0_27 = arith.constant 0 : index
    %c0_28 = arith.constant 0 : index
    %55 = vector.load %arg1[%c2, %c0_27, %c0_28] : memref<8x32x224xbf16, #tpu.memory_space<vmem>>, vector<1x8x4xbf16>
    %56 = vector.shape_cast %55 : vector<1x8x4xbf16> to vector<8x4xbf16>
    %c0_29 = arith.constant 0 : index
    %c2_30 = arith.constant 2 : index
    %57 = vector.load %arg2[%c0_29, %c2_30] : memref<32x8xf32, #tpu.memory_space<vmem>>, vector<8x1xf32>
    %58 = arith.truncf %54 : vector<4x64xf32> to vector<4x64xbf16>
    %cst_31 = arith.constant dense<0.000000e+00> : vector<8x64xf32>
    %59 = tpu.matmul %56, %58, %cst_31 {dimension_numbers = #tpu.dot_dimension_numbers<[1], [0], [0], [1], [0, 0, 1, 1], [], []>} : vector<8x4xbf16>, vector<4x64xbf16>, vector<8x64xf32> -> vector<8x64xf32>
    %60 = vector.broadcast %57 : vector<8x1xf32> to vector<8x64xf32>
    %61 = arith.addf %59, %60 : vector<8x64xf32>
    %62 = arith.addf %20, %61 : vector<8x64xf32>
    %cst_32 = arith.constant 0.000000e+00 : f32
    %63 = vector.broadcast %cst_32 : f32 to vector<8x64xf32>
    %64 = arith.cmpf ogt, %62, %63 : vector<8x64xf32>
    %cst_33 = arith.constant 0.000000e+00 : f32
    %65 = vector.broadcast %cst_33 : f32 to vector<8x64xf32>
    %66 = arith.minimumf %62, %65 : vector<8x64xf32>
    %67 = math.exp %66 : vector<8x64xf32>
    %cst_34 = arith.constant 1.000000e+00 : f32
    %68 = vector.broadcast %cst_34 : f32 to vector<8x64xf32>
    %69 = arith.subf %67, %68 : vector<8x64xf32>
    %cst_35 = arith.constant 1.000000e+00 : f32
    %70 = vector.broadcast %cst_35 : f32 to vector<8x64xf32>
    %71 = arith.mulf %70, %69 : vector<8x64xf32>
    %72 = arith.select %64, %62, %71 : vector<8x64xi1>, vector<8x64xf32>
    %c3 = arith.constant 3 : index
    %c0_36 = arith.constant 0 : index
    %c0_37 = arith.constant 0 : index
    %73 = vector.load %arg1[%c3, %c0_36, %c0_37] : memref<8x32x224xbf16, #tpu.memory_space<vmem>>, vector<1x16x32xbf16>
    %74 = vector.shape_cast %73 : vector<1x16x32xbf16> to vector<16x32xbf16>
    %c0_38 = arith.constant 0 : index
    %c3_39 = arith.constant 3 : index
    %75 = vector.load %arg2[%c0_38, %c3_39] : memref<32x8xf32, #tpu.memory_space<vmem>>, vector<16x1xf32>
    %cst_40 = arith.constant 0.000000e+00 : f32
    %76 = vector.broadcast %cst_40 : f32 to vector<8x2xf32>
    %cst_41 = arith.constant 0.000000e+00 : f32
    %77 = vector.broadcast %cst_41 : f32 to vector<8x4xf32>
    %78 = tpu.concatenate %76, %72, %77 in 1 : vector<8x2xf32>, vector<8x64xf32>, vector<8x4xf32> -> vector<8x70xf32>
    %79 = vector.extract_strided_slice %78 {offsets = [0, 0], sizes = [8, 64], strides = [1, 1]} : vector<8x70xf32> to vector<8x64xf32>
    %80 = vector.extract_strided_slice %78 {offsets = [0, 2], sizes = [8, 64], strides = [1, 1]} : vector<8x70xf32> to vector<8x64xf32>
    %81 = vector.extract_strided_slice %78 {offsets = [0, 4], sizes = [8, 64], strides = [1, 1]} : vector<8x70xf32> to vector<8x64xf32>
    %82 = vector.extract_strided_slice %78 {offsets = [0, 6], sizes = [8, 64], strides = [1, 1]} : vector<8x70xf32> to vector<8x64xf32>
    %83 = tpu.concatenate %79, %80, %81, %82 in 0 : vector<8x64xf32>, vector<8x64xf32>, vector<8x64xf32>, vector<8x64xf32> -> vector<32x64xf32>
    %84 = arith.truncf %83 : vector<32x64xf32> to vector<32x64xbf16>
    %cst_42 = arith.constant dense<0.000000e+00> : vector<32x32xf32>
    %85 = tpu.matmul %84, %0, %cst_42 {dimension_numbers = #tpu.dot_dimension_numbers<[1], [0], [0], [1], [0, 0, 1, 1], [], []>} : vector<32x64xbf16>, vector<64x32xbf16>, vector<32x32xf32> -> vector<32x32xf32>
    %86 = arith.truncf %85 : vector<32x32xf32> to vector<32x32xbf16>
    %cst_43 = arith.constant dense<0.000000e+00> : vector<16x32xf32>
    %87 = tpu.matmul %74, %86, %cst_43 {dimension_numbers = #tpu.dot_dimension_numbers<[1], [0], [0], [1], [0, 0, 1, 1], [], []>} : vector<16x32xbf16>, vector<32x32xbf16>, vector<16x32xf32> -> vector<16x32xf32>
    %88 = vector.broadcast %75 : vector<16x1xf32> to vector<16x32xf32>
    %89 = arith.addf %87, %88 : vector<16x32xf32>
    %cst_44 = arith.constant 0.000000e+00 : f32
    %90 = vector.broadcast %cst_44 : f32 to vector<16x32xf32>
    %91 = arith.cmpf ogt, %89, %90 : vector<16x32xf32>
    %cst_45 = arith.constant 0.000000e+00 : f32
    %92 = vector.broadcast %cst_45 : f32 to vector<16x32xf32>
    %93 = arith.minimumf %89, %92 : vector<16x32xf32>
    %94 = math.exp %93 : vector<16x32xf32>
    %cst_46 = arith.constant 1.000000e+00 : f32
    %95 = vector.broadcast %cst_46 : f32 to vector<16x32xf32>
    %96 = arith.subf %94, %95 : vector<16x32xf32>
    %cst_47 = arith.constant 1.000000e+00 : f32
    %97 = vector.broadcast %cst_47 : f32 to vector<16x32xf32>
    %98 = arith.mulf %97, %96 : vector<16x32xf32>
    %99 = arith.select %91, %89, %98 : vector<16x32xi1>, vector<16x32xf32>
    %c4 = arith.constant 4 : index
    %c0_48 = arith.constant 0 : index
    %c0_49 = arith.constant 0 : index
    %100 = vector.load %arg1[%c4, %c0_48, %c0_49] : memref<8x32x224xbf16, #tpu.memory_space<vmem>>, vector<1x8x48xbf16>
    %101 = vector.shape_cast %100 : vector<1x8x48xbf16> to vector<8x48xbf16>
    %c0_50 = arith.constant 0 : index
    %c4_51 = arith.constant 4 : index
    %102 = vector.load %arg2[%c0_50, %c4_51] : memref<32x8xf32, #tpu.memory_space<vmem>>, vector<8x1xf32>
    %cst_52 = arith.constant 0.000000e+00 : f32
    %103 = vector.broadcast %cst_52 : f32 to vector<16x2xf32>
    %cst_53 = arith.constant 0.000000e+00 : f32
    %104 = vector.broadcast %cst_53 : f32 to vector<16x2xf32>
    %105 = tpu.concatenate %103, %99, %104 in 1 : vector<16x2xf32>, vector<16x32xf32>, vector<16x2xf32> -> vector<16x36xf32>
    %106 = vector.extract_strided_slice %105 {offsets = [0, 0], sizes = [16, 32], strides = [1, 1]} : vector<16x36xf32> to vector<16x32xf32>
    %107 = vector.extract_strided_slice %105 {offsets = [0, 2], sizes = [16, 32], strides = [1, 1]} : vector<16x36xf32> to vector<16x32xf32>
    %108 = vector.extract_strided_slice %105 {offsets = [0, 4], sizes = [16, 32], strides = [1, 1]} : vector<16x36xf32> to vector<16x32xf32>
    %109 = tpu.concatenate %106, %107, %108 in 0 : vector<16x32xf32>, vector<16x32xf32>, vector<16x32xf32> -> vector<48x32xf32>
    %110 = arith.truncf %109 : vector<48x32xf32> to vector<48x32xbf16>
    %cst_54 = arith.constant dense<0.000000e+00> : vector<8x32xf32>
    %111 = tpu.matmul %101, %110, %cst_54 {dimension_numbers = #tpu.dot_dimension_numbers<[1], [0], [0], [1], [0, 0, 1, 1], [], []>} : vector<8x48xbf16>, vector<48x32xbf16>, vector<8x32xf32> -> vector<8x32xf32>
    %112 = vector.broadcast %102 : vector<8x1xf32> to vector<8x32xf32>
    %113 = arith.addf %111, %112 : vector<8x32xf32>
    %cst_55 = arith.constant 0.000000e+00 : f32
    %114 = vector.broadcast %cst_55 : f32 to vector<8x32xf32>
    %115 = arith.cmpf ogt, %113, %114 : vector<8x32xf32>
    %cst_56 = arith.constant 0.000000e+00 : f32
    %116 = vector.broadcast %cst_56 : f32 to vector<8x32xf32>
    %117 = arith.minimumf %113, %116 : vector<8x32xf32>
    %118 = math.exp %117 : vector<8x32xf32>
    %cst_57 = arith.constant 1.000000e+00 : f32
    %119 = vector.broadcast %cst_57 : f32 to vector<8x32xf32>
    %120 = arith.subf %118, %119 : vector<8x32xf32>
    %cst_58 = arith.constant 1.000000e+00 : f32
    %121 = vector.broadcast %cst_58 : f32 to vector<8x32xf32>
    %122 = arith.mulf %121, %120 : vector<8x32xf32>
    %123 = arith.select %115, %113, %122 : vector<8x32xi1>, vector<8x32xf32>
    %c5 = arith.constant 5 : index
    %c0_59 = arith.constant 0 : index
    %c0_60 = arith.constant 0 : index
    %124 = vector.load %arg1[%c5, %c0_59, %c0_60] : memref<8x32x224xbf16, #tpu.memory_space<vmem>>, vector<1x16x8xbf16>
    %125 = vector.shape_cast %124 : vector<1x16x8xbf16> to vector<16x8xbf16>
    %c0_61 = arith.constant 0 : index
    %c5_62 = arith.constant 5 : index
    %126 = vector.load %arg2[%c0_61, %c5_62] : memref<32x8xf32, #tpu.memory_space<vmem>>, vector<16x1xf32>
    %127 = arith.truncf %123 : vector<8x32xf32> to vector<8x32xbf16>
    %cst_63 = arith.constant dense<0.000000e+00> : vector<16x32xf32>
    %128 = tpu.matmul %125, %127, %cst_63 {dimension_numbers = #tpu.dot_dimension_numbers<[1], [0], [0], [1], [0, 0, 1, 1], [], []>} : vector<16x8xbf16>, vector<8x32xbf16>, vector<16x32xf32> -> vector<16x32xf32>
    %129 = vector.broadcast %126 : vector<16x1xf32> to vector<16x32xf32>
    %130 = arith.addf %128, %129 : vector<16x32xf32>
    %131 = arith.addf %89, %130 : vector<16x32xf32>
    %cst_64 = arith.constant 0.000000e+00 : f32
    %132 = vector.broadcast %cst_64 : f32 to vector<16x32xf32>
    %133 = arith.cmpf ogt, %131, %132 : vector<16x32xf32>
    %cst_65 = arith.constant 0.000000e+00 : f32
    %134 = vector.broadcast %cst_65 : f32 to vector<16x32xf32>
    %135 = arith.minimumf %131, %134 : vector<16x32xf32>
    %136 = math.exp %135 : vector<16x32xf32>
    %cst_66 = arith.constant 1.000000e+00 : f32
    %137 = vector.broadcast %cst_66 : f32 to vector<16x32xf32>
    %138 = arith.subf %136, %137 : vector<16x32xf32>
    %cst_67 = arith.constant 1.000000e+00 : f32
    %139 = vector.broadcast %cst_67 : f32 to vector<16x32xf32>
    %140 = arith.mulf %139, %138 : vector<16x32xf32>
    %141 = arith.select %133, %131, %140 : vector<16x32xi1>, vector<16x32xf32>
    %c6 = arith.constant 6 : index
    %c0_68 = arith.constant 0 : index
    %c0_69 = arith.constant 0 : index
    %142 = vector.load %arg1[%c6, %c0_68, %c0_69] : memref<8x32x224xbf16, #tpu.memory_space<vmem>>, vector<1x32x64xbf16>
    %143 = vector.shape_cast %142 : vector<1x32x64xbf16> to vector<32x64xbf16>
    %c0_70 = arith.constant 0 : index
    %c6_71 = arith.constant 6 : index
    %144 = vector.load %arg2[%c0_70, %c6_71] : memref<32x8xf32, #tpu.memory_space<vmem>>, vector<32x1xf32>
    %cst_72 = arith.constant 0.000000e+00 : f32
    %145 = vector.broadcast %cst_72 : f32 to vector<16x2xf32>
    %cst_73 = arith.constant 0.000000e+00 : f32
    %146 = vector.broadcast %cst_73 : f32 to vector<16x4xf32>
    %147 = tpu.concatenate %145, %141, %146 in 1 : vector<16x2xf32>, vector<16x32xf32>, vector<16x4xf32> -> vector<16x38xf32>
    %148 = vector.extract_strided_slice %147 {offsets = [0, 0], sizes = [16, 32], strides = [1, 1]} : vector<16x38xf32> to vector<16x32xf32>
    %149 = vector.extract_strided_slice %147 {offsets = [0, 2], sizes = [16, 32], strides = [1, 1]} : vector<16x38xf32> to vector<16x32xf32>
    %150 = vector.extract_strided_slice %147 {offsets = [0, 4], sizes = [16, 32], strides = [1, 1]} : vector<16x38xf32> to vector<16x32xf32>
    %151 = vector.extract_strided_slice %147 {offsets = [0, 6], sizes = [16, 32], strides = [1, 1]} : vector<16x38xf32> to vector<16x32xf32>
    %152 = tpu.concatenate %148, %149, %150, %151 in 0 : vector<16x32xf32>, vector<16x32xf32>, vector<16x32xf32>, vector<16x32xf32> -> vector<64x32xf32>
    %153 = arith.truncf %152 : vector<64x32xf32> to vector<64x32xbf16>
    %cst_74 = arith.constant dense<0.000000e+00> : vector<64x16xf32>
    %154 = tpu.matmul %153, %1, %cst_74 {dimension_numbers = #tpu.dot_dimension_numbers<[1], [0], [0], [1], [0, 0, 1, 1], [], []>} : vector<64x32xbf16>, vector<32x16xbf16>, vector<64x16xf32> -> vector<64x16xf32>
    %155 = arith.truncf %154 : vector<64x16xf32> to vector<64x16xbf16>
    %cst_75 = arith.constant dense<0.000000e+00> : vector<32x16xf32>
    %156 = tpu.matmul %143, %155, %cst_75 {dimension_numbers = #tpu.dot_dimension_numbers<[1], [0], [0], [1], [0, 0, 1, 1], [], []>} : vector<32x64xbf16>, vector<64x16xbf16>, vector<32x16xf32> -> vector<32x16xf32>
    %157 = vector.broadcast %144 : vector<32x1xf32> to vector<32x16xf32>
    %158 = arith.addf %156, %157 : vector<32x16xf32>
    %c0_76 = arith.constant 0 : index
    %c0_77 = arith.constant 0 : index
    %c0_78 = arith.constant 0 : index
    %159 = vector.load %arg3[%c0_76, %c0_77, %c0_78] : memref<1x128x64xbf16, #tpu.memory_space<vmem>>, vector<1x128x32xbf16>
    %160 = vector.shape_cast %159 : vector<1x128x32xbf16> to vector<128x32xbf16>
    %c0_79 = arith.constant 0 : index
    %c0_80 = arith.constant 0 : index
    %c32 = arith.constant 32 : index
    %161 = vector.load %arg3[%c0_79, %c0_80, %c32] : memref<1x128x64xbf16, #tpu.memory_space<vmem>>, vector<1x128x32xbf16>
    %162 = vector.shape_cast %161 : vector<1x128x32xbf16> to vector<128x32xbf16>
    %c0_81 = arith.constant 0 : index
    %c0_82 = arith.constant 0 : index
    %c0_83 = arith.constant 0 : index
    %163 = vector.load %arg4[%c0_81, %c0_82, %c0_83] : memref<1x128x1xf32, #tpu.memory_space<vmem>>, vector<1x128x1xf32>
    %164 = vector.shape_cast %163 : vector<1x128x1xf32> to vector<128x1xf32>
    %165 = arith.truncf %158 : vector<32x16xf32> to vector<32x16xbf16>
    %cst_84 = arith.constant dense<0.000000e+00> : vector<128x16xf32>
    %166 = tpu.matmul %160, %165, %cst_84 {dimension_numbers = #tpu.dot_dimension_numbers<[1], [0], [0], [1], [0, 0, 1, 1], [], []>} : vector<128x32xbf16>, vector<32x16xbf16>, vector<128x16xf32> -> vector<128x16xf32>
    %167 = vector.broadcast %164 : vector<128x1xf32> to vector<128x16xf32>
    %168 = arith.addf %166, %167 : vector<128x16xf32>
    %cst_85 = arith.constant 0.000000e+00 : f32
    %169 = vector.broadcast %cst_85 : f32 to vector<32x2xf32>
    %cst_86 = arith.constant 0.000000e+00 : f32
    %170 = vector.broadcast %cst_86 : f32 to vector<32x2xf32>
    %171 = vector.extract_strided_slice %168 {offsets = [0, 0], sizes = [128, 2], strides = [1, 1]} : vector<128x16xf32> to vector<128x2xf32>
    %172 = arith.truncf %169 : vector<32x2xf32> to vector<32x2xbf16>
    %cst_87 = arith.constant dense<0.000000e+00> : vector<128x2xf32>
    %173 = tpu.matmul %162, %172, %cst_87 {dimension_numbers = #tpu.dot_dimension_numbers<[1], [0], [0], [1], [0, 0, 1, 1], [], []>} : vector<128x32xbf16>, vector<32x2xbf16>, vector<128x2xf32> -> vector<128x2xf32>
    %174 = arith.addf %171, %173 : vector<128x2xf32>
    %175 = vector.extract_strided_slice %174 {offsets = [0, 0], sizes = [32, 2], strides = [1, 1]} : vector<128x2xf32> to vector<32x2xf32>
    %cst_88 = arith.constant 0.000000e+00 : f32
    %176 = vector.broadcast %cst_88 : f32 to vector<32x2xf32>
    %177 = arith.subf %176, %175 : vector<32x2xf32>
    %178 = math.exp %177 : vector<32x2xf32>
    %cst_89 = arith.constant 1.000000e+00 : f32
    %179 = vector.broadcast %cst_89 : f32 to vector<32x2xf32>
    %180 = arith.addf %179, %178 : vector<32x2xf32>
    %181 = tpu.reciprocal %180 {approx = true} : vector<32x2xf32> -> vector<32x2xf32>
    %182 = vector.extract_strided_slice %174 {offsets = [32, 0], sizes = [32, 2], strides = [1, 1]} : vector<128x2xf32> to vector<32x2xf32>
    %cst_90 = arith.constant 0.000000e+00 : f32
    %183 = vector.broadcast %cst_90 : f32 to vector<32x2xf32>
    %184 = arith.subf %183, %182 : vector<32x2xf32>
    %185 = math.exp %184 : vector<32x2xf32>
    %cst_91 = arith.constant 1.000000e+00 : f32
    %186 = vector.broadcast %cst_91 : f32 to vector<32x2xf32>
    %187 = arith.addf %186, %185 : vector<32x2xf32>
    %188 = tpu.reciprocal %187 {approx = true} : vector<32x2xf32> -> vector<32x2xf32>
    %189 = vector.extract_strided_slice %174 {offsets = [64, 0], sizes = [32, 2], strides = [1, 1]} : vector<128x2xf32> to vector<32x2xf32>
    %190 = math.tanh %189 : vector<32x2xf32>
    %191 = vector.extract_strided_slice %174 {offsets = [96, 0], sizes = [32, 2], strides = [1, 1]} : vector<128x2xf32> to vector<32x2xf32>
    %cst_92 = arith.constant 0.000000e+00 : f32
    %192 = vector.broadcast %cst_92 : f32 to vector<32x2xf32>
    %193 = arith.subf %192, %191 : vector<32x2xf32>
    %194 = math.exp %193 : vector<32x2xf32>
    %cst_93 = arith.constant 1.000000e+00 : f32
    %195 = vector.broadcast %cst_93 : f32 to vector<32x2xf32>
    %196 = arith.addf %195, %194 : vector<32x2xf32>
    %197 = tpu.reciprocal %196 {approx = true} : vector<32x2xf32> -> vector<32x2xf32>
    %198 = arith.mulf %188, %170 : vector<32x2xf32>
    %199 = arith.mulf %181, %190 : vector<32x2xf32>
    %200 = arith.addf %198, %199 : vector<32x2xf32>
    %201 = math.tanh %200 : vector<32x2xf32>
    %202 = arith.mulf %197, %201 : vector<32x2xf32>
    %203 = vector.extract_strided_slice %168 {offsets = [0, 2], sizes = [128, 2], strides = [1, 1]} : vector<128x16xf32> to vector<128x2xf32>
    %204 = arith.truncf %202 : vector<32x2xf32> to vector<32x2xbf16>
    %cst_94 = arith.constant dense<0.000000e+00> : vector<128x2xf32>
    %205 = tpu.matmul %162, %204, %cst_94 {dimension_numbers = #tpu.dot_dimension_numbers<[1], [0], [0], [1], [0, 0, 1, 1], [], []>} : vector<128x32xbf16>, vector<32x2xbf16>, vector<128x2xf32> -> vector<128x2xf32>
    %206 = arith.addf %203, %205 : vector<128x2xf32>
    %207 = vector.extract_strided_slice %206 {offsets = [0, 0], sizes = [32, 2], strides = [1, 1]} : vector<128x2xf32> to vector<32x2xf32>
    %cst_95 = arith.constant 0.000000e+00 : f32
    %208 = vector.broadcast %cst_95 : f32 to vector<32x2xf32>
    %209 = arith.subf %208, %207 : vector<32x2xf32>
    %210 = math.exp %209 : vector<32x2xf32>
    %cst_96 = arith.constant 1.000000e+00 : f32
    %211 = vector.broadcast %cst_96 : f32 to vector<32x2xf32>
    %212 = arith.addf %211, %210 : vector<32x2xf32>
    %213 = tpu.reciprocal %212 {approx = true} : vector<32x2xf32> -> vector<32x2xf32>
    %214 = vector.extract_strided_slice %206 {offsets = [32, 0], sizes = [32, 2], strides = [1, 1]} : vector<128x2xf32> to vector<32x2xf32>
    %cst_97 = arith.constant 0.000000e+00 : f32
    %215 = vector.broadcast %cst_97 : f32 to vector<32x2xf32>
    %216 = arith.subf %215, %214 : vector<32x2xf32>
    %217 = math.exp %216 : vector<32x2xf32>
    %cst_98 = arith.constant 1.000000e+00 : f32
    %218 = vector.broadcast %cst_98 : f32 to vector<32x2xf32>
    %219 = arith.addf %218, %217 : vector<32x2xf32>
    %220 = tpu.reciprocal %219 {approx = true} : vector<32x2xf32> -> vector<32x2xf32>
    %221 = vector.extract_strided_slice %206 {offsets = [64, 0], sizes = [32, 2], strides = [1, 1]} : vector<128x2xf32> to vector<32x2xf32>
    %222 = math.tanh %221 : vector<32x2xf32>
    %223 = vector.extract_strided_slice %206 {offsets = [96, 0], sizes = [32, 2], strides = [1, 1]} : vector<128x2xf32> to vector<32x2xf32>
    %cst_99 = arith.constant 0.000000e+00 : f32
    %224 = vector.broadcast %cst_99 : f32 to vector<32x2xf32>
    %225 = arith.subf %224, %223 : vector<32x2xf32>
    %226 = math.exp %225 : vector<32x2xf32>
    %cst_100 = arith.constant 1.000000e+00 : f32
    %227 = vector.broadcast %cst_100 : f32 to vector<32x2xf32>
    %228 = arith.addf %227, %226 : vector<32x2xf32>
    %229 = tpu.reciprocal %228 {approx = true} : vector<32x2xf32> -> vector<32x2xf32>
    %230 = arith.mulf %220, %200 : vector<32x2xf32>
    %231 = arith.mulf %213, %222 : vector<32x2xf32>
    %232 = arith.addf %230, %231 : vector<32x2xf32>
    %233 = math.tanh %232 : vector<32x2xf32>
    %234 = arith.mulf %229, %233 : vector<32x2xf32>
    %235 = vector.extract_strided_slice %168 {offsets = [0, 4], sizes = [128, 2], strides = [1, 1]} : vector<128x16xf32> to vector<128x2xf32>
    %236 = arith.truncf %234 : vector<32x2xf32> to vector<32x2xbf16>
    %cst_101 = arith.constant dense<0.000000e+00> : vector<128x2xf32>
    %237 = tpu.matmul %162, %236, %cst_101 {dimension_numbers = #tpu.dot_dimension_numbers<[1], [0], [0], [1], [0, 0, 1, 1], [], []>} : vector<128x32xbf16>, vector<32x2xbf16>, vector<128x2xf32> -> vector<128x2xf32>
    %238 = arith.addf %235, %237 : vector<128x2xf32>
    %239 = vector.extract_strided_slice %238 {offsets = [0, 0], sizes = [32, 2], strides = [1, 1]} : vector<128x2xf32> to vector<32x2xf32>
    %cst_102 = arith.constant 0.000000e+00 : f32
    %240 = vector.broadcast %cst_102 : f32 to vector<32x2xf32>
    %241 = arith.subf %240, %239 : vector<32x2xf32>
    %242 = math.exp %241 : vector<32x2xf32>
    %cst_103 = arith.constant 1.000000e+00 : f32
    %243 = vector.broadcast %cst_103 : f32 to vector<32x2xf32>
    %244 = arith.addf %243, %242 : vector<32x2xf32>
    %245 = tpu.reciprocal %244 {approx = true} : vector<32x2xf32> -> vector<32x2xf32>
    %246 = vector.extract_strided_slice %238 {offsets = [32, 0], sizes = [32, 2], strides = [1, 1]} : vector<128x2xf32> to vector<32x2xf32>
    %cst_104 = arith.constant 0.000000e+00 : f32
    %247 = vector.broadcast %cst_104 : f32 to vector<32x2xf32>
    %248 = arith.subf %247, %246 : vector<32x2xf32>
    %249 = math.exp %248 : vector<32x2xf32>
    %cst_105 = arith.constant 1.000000e+00 : f32
    %250 = vector.broadcast %cst_105 : f32 to vector<32x2xf32>
    %251 = arith.addf %250, %249 : vector<32x2xf32>
    %252 = tpu.reciprocal %251 {approx = true} : vector<32x2xf32> -> vector<32x2xf32>
    %253 = vector.extract_strided_slice %238 {offsets = [64, 0], sizes = [32, 2], strides = [1, 1]} : vector<128x2xf32> to vector<32x2xf32>
    %254 = math.tanh %253 : vector<32x2xf32>
    %255 = vector.extract_strided_slice %238 {offsets = [96, 0], sizes = [32, 2], strides = [1, 1]} : vector<128x2xf32> to vector<32x2xf32>
    %cst_106 = arith.constant 0.000000e+00 : f32
    %256 = vector.broadcast %cst_106 : f32 to vector<32x2xf32>
    %257 = arith.subf %256, %255 : vector<32x2xf32>
    %258 = math.exp %257 : vector<32x2xf32>
    %cst_107 = arith.constant 1.000000e+00 : f32
    %259 = vector.broadcast %cst_107 : f32 to vector<32x2xf32>
    %260 = arith.addf %259, %258 : vector<32x2xf32>
    %261 = tpu.reciprocal %260 {approx = true} : vector<32x2xf32> -> vector<32x2xf32>
    %262 = arith.mulf %252, %232 : vector<32x2xf32>
    %263 = arith.mulf %245, %254 : vector<32x2xf32>
    %264 = arith.addf %262, %263 : vector<32x2xf32>
    %265 = math.tanh %264 : vector<32x2xf32>
    %266 = arith.mulf %261, %265 : vector<32x2xf32>
    %267 = vector.extract_strided_slice %168 {offsets = [0, 6], sizes = [128, 2], strides = [1, 1]} : vector<128x16xf32> to vector<128x2xf32>
    %268 = arith.truncf %266 : vector<32x2xf32> to vector<32x2xbf16>
    %cst_108 = arith.constant dense<0.000000e+00> : vector<128x2xf32>
    %269 = tpu.matmul %162, %268, %cst_108 {dimension_numbers = #tpu.dot_dimension_numbers<[1], [0], [0], [1], [0, 0, 1, 1], [], []>} : vector<128x32xbf16>, vector<32x2xbf16>, vector<128x2xf32> -> vector<128x2xf32>
    %270 = arith.addf %267, %269 : vector<128x2xf32>
    %271 = vector.extract_strided_slice %270 {offsets = [0, 0], sizes = [32, 2], strides = [1, 1]} : vector<128x2xf32> to vector<32x2xf32>
    %cst_109 = arith.constant 0.000000e+00 : f32
    %272 = vector.broadcast %cst_109 : f32 to vector<32x2xf32>
    %273 = arith.subf %272, %271 : vector<32x2xf32>
    %274 = math.exp %273 : vector<32x2xf32>
    %cst_110 = arith.constant 1.000000e+00 : f32
    %275 = vector.broadcast %cst_110 : f32 to vector<32x2xf32>
    %276 = arith.addf %275, %274 : vector<32x2xf32>
    %277 = tpu.reciprocal %276 {approx = true} : vector<32x2xf32> -> vector<32x2xf32>
    %278 = vector.extract_strided_slice %270 {offsets = [32, 0], sizes = [32, 2], strides = [1, 1]} : vector<128x2xf32> to vector<32x2xf32>
    %cst_111 = arith.constant 0.000000e+00 : f32
    %279 = vector.broadcast %cst_111 : f32 to vector<32x2xf32>
    %280 = arith.subf %279, %278 : vector<32x2xf32>
    %281 = math.exp %280 : vector<32x2xf32>
    %cst_112 = arith.constant 1.000000e+00 : f32
    %282 = vector.broadcast %cst_112 : f32 to vector<32x2xf32>
    %283 = arith.addf %282, %281 : vector<32x2xf32>
    %284 = tpu.reciprocal %283 {approx = true} : vector<32x2xf32> -> vector<32x2xf32>
    %285 = vector.extract_strided_slice %270 {offsets = [64, 0], sizes = [32, 2], strides = [1, 1]} : vector<128x2xf32> to vector<32x2xf32>
    %286 = math.tanh %285 : vector<32x2xf32>
    %287 = vector.extract_strided_slice %270 {offsets = [96, 0], sizes = [32, 2], strides = [1, 1]} : vector<128x2xf32> to vector<32x2xf32>
    %cst_113 = arith.constant 0.000000e+00 : f32
    %288 = vector.broadcast %cst_113 : f32 to vector<32x2xf32>
    %289 = arith.subf %288, %287 : vector<32x2xf32>
    %290 = math.exp %289 : vector<32x2xf32>
    %cst_114 = arith.constant 1.000000e+00 : f32
    %291 = vector.broadcast %cst_114 : f32 to vector<32x2xf32>
    %292 = arith.addf %291, %290 : vector<32x2xf32>
    %293 = tpu.reciprocal %292 {approx = true} : vector<32x2xf32> -> vector<32x2xf32>
    %294 = arith.mulf %284, %264 : vector<32x2xf32>
    %295 = arith.mulf %277, %286 : vector<32x2xf32>
    %296 = arith.addf %294, %295 : vector<32x2xf32>
    %297 = math.tanh %296 : vector<32x2xf32>
    %298 = arith.mulf %293, %297 : vector<32x2xf32>
    %299 = vector.extract_strided_slice %168 {offsets = [0, 8], sizes = [128, 2], strides = [1, 1]} : vector<128x16xf32> to vector<128x2xf32>
    %300 = arith.truncf %298 : vector<32x2xf32> to vector<32x2xbf16>
    %cst_115 = arith.constant dense<0.000000e+00> : vector<128x2xf32>
    %301 = tpu.matmul %162, %300, %cst_115 {dimension_numbers = #tpu.dot_dimension_numbers<[1], [0], [0], [1], [0, 0, 1, 1], [], []>} : vector<128x32xbf16>, vector<32x2xbf16>, vector<128x2xf32> -> vector<128x2xf32>
    %302 = arith.addf %299, %301 : vector<128x2xf32>
    %303 = vector.extract_strided_slice %302 {offsets = [0, 0], sizes = [32, 2], strides = [1, 1]} : vector<128x2xf32> to vector<32x2xf32>
    %cst_116 = arith.constant 0.000000e+00 : f32
    %304 = vector.broadcast %cst_116 : f32 to vector<32x2xf32>
    %305 = arith.subf %304, %303 : vector<32x2xf32>
    %306 = math.exp %305 : vector<32x2xf32>
    %cst_117 = arith.constant 1.000000e+00 : f32
    %307 = vector.broadcast %cst_117 : f32 to vector<32x2xf32>
    %308 = arith.addf %307, %306 : vector<32x2xf32>
    %309 = tpu.reciprocal %308 {approx = true} : vector<32x2xf32> -> vector<32x2xf32>
    %310 = vector.extract_strided_slice %302 {offsets = [32, 0], sizes = [32, 2], strides = [1, 1]} : vector<128x2xf32> to vector<32x2xf32>
    %cst_118 = arith.constant 0.000000e+00 : f32
    %311 = vector.broadcast %cst_118 : f32 to vector<32x2xf32>
    %312 = arith.subf %311, %310 : vector<32x2xf32>
    %313 = math.exp %312 : vector<32x2xf32>
    %cst_119 = arith.constant 1.000000e+00 : f32
    %314 = vector.broadcast %cst_119 : f32 to vector<32x2xf32>
    %315 = arith.addf %314, %313 : vector<32x2xf32>
    %316 = tpu.reciprocal %315 {approx = true} : vector<32x2xf32> -> vector<32x2xf32>
    %317 = vector.extract_strided_slice %302 {offsets = [64, 0], sizes = [32, 2], strides = [1, 1]} : vector<128x2xf32> to vector<32x2xf32>
    %318 = math.tanh %317 : vector<32x2xf32>
    %319 = vector.extract_strided_slice %302 {offsets = [96, 0], sizes = [32, 2], strides = [1, 1]} : vector<128x2xf32> to vector<32x2xf32>
    %cst_120 = arith.constant 0.000000e+00 : f32
    %320 = vector.broadcast %cst_120 : f32 to vector<32x2xf32>
    %321 = arith.subf %320, %319 : vector<32x2xf32>
    %322 = math.exp %321 : vector<32x2xf32>
    %cst_121 = arith.constant 1.000000e+00 : f32
    %323 = vector.broadcast %cst_121 : f32 to vector<32x2xf32>
    %324 = arith.addf %323, %322 : vector<32x2xf32>
    %325 = tpu.reciprocal %324 {approx = true} : vector<32x2xf32> -> vector<32x2xf32>
    %326 = arith.mulf %316, %296 : vector<32x2xf32>
    %327 = arith.mulf %309, %318 : vector<32x2xf32>
    %328 = arith.addf %326, %327 : vector<32x2xf32>
    %329 = math.tanh %328 : vector<32x2xf32>
    %330 = arith.mulf %325, %329 : vector<32x2xf32>
    %331 = vector.extract_strided_slice %168 {offsets = [0, 10], sizes = [128, 2], strides = [1, 1]} : vector<128x16xf32> to vector<128x2xf32>
    %332 = arith.truncf %330 : vector<32x2xf32> to vector<32x2xbf16>
    %cst_122 = arith.constant dense<0.000000e+00> : vector<128x2xf32>
    %333 = tpu.matmul %162, %332, %cst_122 {dimension_numbers = #tpu.dot_dimension_numbers<[1], [0], [0], [1], [0, 0, 1, 1], [], []>} : vector<128x32xbf16>, vector<32x2xbf16>, vector<128x2xf32> -> vector<128x2xf32>
    %334 = arith.addf %331, %333 : vector<128x2xf32>
    %335 = vector.extract_strided_slice %334 {offsets = [0, 0], sizes = [32, 2], strides = [1, 1]} : vector<128x2xf32> to vector<32x2xf32>
    %cst_123 = arith.constant 0.000000e+00 : f32
    %336 = vector.broadcast %cst_123 : f32 to vector<32x2xf32>
    %337 = arith.subf %336, %335 : vector<32x2xf32>
    %338 = math.exp %337 : vector<32x2xf32>
    %cst_124 = arith.constant 1.000000e+00 : f32
    %339 = vector.broadcast %cst_124 : f32 to vector<32x2xf32>
    %340 = arith.addf %339, %338 : vector<32x2xf32>
    %341 = tpu.reciprocal %340 {approx = true} : vector<32x2xf32> -> vector<32x2xf32>
    %342 = vector.extract_strided_slice %334 {offsets = [32, 0], sizes = [32, 2], strides = [1, 1]} : vector<128x2xf32> to vector<32x2xf32>
    %cst_125 = arith.constant 0.000000e+00 : f32
    %343 = vector.broadcast %cst_125 : f32 to vector<32x2xf32>
    %344 = arith.subf %343, %342 : vector<32x2xf32>
    %345 = math.exp %344 : vector<32x2xf32>
    %cst_126 = arith.constant 1.000000e+00 : f32
    %346 = vector.broadcast %cst_126 : f32 to vector<32x2xf32>
    %347 = arith.addf %346, %345 : vector<32x2xf32>
    %348 = tpu.reciprocal %347 {approx = true} : vector<32x2xf32> -> vector<32x2xf32>
    %349 = vector.extract_strided_slice %334 {offsets = [64, 0], sizes = [32, 2], strides = [1, 1]} : vector<128x2xf32> to vector<32x2xf32>
    %350 = math.tanh %349 : vector<32x2xf32>
    %351 = vector.extract_strided_slice %334 {offsets = [96, 0], sizes = [32, 2], strides = [1, 1]} : vector<128x2xf32> to vector<32x2xf32>
    %cst_127 = arith.constant 0.000000e+00 : f32
    %352 = vector.broadcast %cst_127 : f32 to vector<32x2xf32>
    %353 = arith.subf %352, %351 : vector<32x2xf32>
    %354 = math.exp %353 : vector<32x2xf32>
    %cst_128 = arith.constant 1.000000e+00 : f32
    %355 = vector.broadcast %cst_128 : f32 to vector<32x2xf32>
    %356 = arith.addf %355, %354 : vector<32x2xf32>
    %357 = tpu.reciprocal %356 {approx = true} : vector<32x2xf32> -> vector<32x2xf32>
    %358 = arith.mulf %348, %328 : vector<32x2xf32>
    %359 = arith.mulf %341, %350 : vector<32x2xf32>
    %360 = arith.addf %358, %359 : vector<32x2xf32>
    %361 = math.tanh %360 : vector<32x2xf32>
    %362 = arith.mulf %357, %361 : vector<32x2xf32>
    %363 = vector.extract_strided_slice %168 {offsets = [0, 12], sizes = [128, 2], strides = [1, 1]} : vector<128x16xf32> to vector<128x2xf32>
    %364 = arith.truncf %362 : vector<32x2xf32> to vector<32x2xbf16>
    %cst_129 = arith.constant dense<0.000000e+00> : vector<128x2xf32>
    %365 = tpu.matmul %162, %364, %cst_129 {dimension_numbers = #tpu.dot_dimension_numbers<[1], [0], [0], [1], [0, 0, 1, 1], [], []>} : vector<128x32xbf16>, vector<32x2xbf16>, vector<128x2xf32> -> vector<128x2xf32>
    %366 = arith.addf %363, %365 : vector<128x2xf32>
    %367 = vector.extract_strided_slice %366 {offsets = [0, 0], sizes = [32, 2], strides = [1, 1]} : vector<128x2xf32> to vector<32x2xf32>
    %cst_130 = arith.constant 0.000000e+00 : f32
    %368 = vector.broadcast %cst_130 : f32 to vector<32x2xf32>
    %369 = arith.subf %368, %367 : vector<32x2xf32>
    %370 = math.exp %369 : vector<32x2xf32>
    %cst_131 = arith.constant 1.000000e+00 : f32
    %371 = vector.broadcast %cst_131 : f32 to vector<32x2xf32>
    %372 = arith.addf %371, %370 : vector<32x2xf32>
    %373 = tpu.reciprocal %372 {approx = true} : vector<32x2xf32> -> vector<32x2xf32>
    %374 = vector.extract_strided_slice %366 {offsets = [32, 0], sizes = [32, 2], strides = [1, 1]} : vector<128x2xf32> to vector<32x2xf32>
    %cst_132 = arith.constant 0.000000e+00 : f32
    %375 = vector.broadcast %cst_132 : f32 to vector<32x2xf32>
    %376 = arith.subf %375, %374 : vector<32x2xf32>
    %377 = math.exp %376 : vector<32x2xf32>
    %cst_133 = arith.constant 1.000000e+00 : f32
    %378 = vector.broadcast %cst_133 : f32 to vector<32x2xf32>
    %379 = arith.addf %378, %377 : vector<32x2xf32>
    %380 = tpu.reciprocal %379 {approx = true} : vector<32x2xf32> -> vector<32x2xf32>
    %381 = vector.extract_strided_slice %366 {offsets = [64, 0], sizes = [32, 2], strides = [1, 1]} : vector<128x2xf32> to vector<32x2xf32>
    %382 = math.tanh %381 : vector<32x2xf32>
    %383 = vector.extract_strided_slice %366 {offsets = [96, 0], sizes = [32, 2], strides = [1, 1]} : vector<128x2xf32> to vector<32x2xf32>
    %cst_134 = arith.constant 0.000000e+00 : f32
    %384 = vector.broadcast %cst_134 : f32 to vector<32x2xf32>
    %385 = arith.subf %384, %383 : vector<32x2xf32>
    %386 = math.exp %385 : vector<32x2xf32>
    %cst_135 = arith.constant 1.000000e+00 : f32
    %387 = vector.broadcast %cst_135 : f32 to vector<32x2xf32>
    %388 = arith.addf %387, %386 : vector<32x2xf32>
    %389 = tpu.reciprocal %388 {approx = true} : vector<32x2xf32> -> vector<32x2xf32>
    %390 = arith.mulf %380, %360 : vector<32x2xf32>
    %391 = arith.mulf %373, %382 : vector<32x2xf32>
    %392 = arith.addf %390, %391 : vector<32x2xf32>
    %393 = math.tanh %392 : vector<32x2xf32>
    %394 = arith.mulf %389, %393 : vector<32x2xf32>
    %395 = vector.extract_strided_slice %168 {offsets = [0, 14], sizes = [128, 2], strides = [1, 1]} : vector<128x16xf32> to vector<128x2xf32>
    %396 = arith.truncf %394 : vector<32x2xf32> to vector<32x2xbf16>
    %cst_136 = arith.constant dense<0.000000e+00> : vector<128x2xf32>
    %397 = tpu.matmul %162, %396, %cst_136 {dimension_numbers = #tpu.dot_dimension_numbers<[1], [0], [0], [1], [0, 0, 1, 1], [], []>} : vector<128x32xbf16>, vector<32x2xbf16>, vector<128x2xf32> -> vector<128x2xf32>
    %398 = arith.addf %395, %397 : vector<128x2xf32>
    %399 = vector.extract_strided_slice %398 {offsets = [0, 0], sizes = [32, 2], strides = [1, 1]} : vector<128x2xf32> to vector<32x2xf32>
    %cst_137 = arith.constant 0.000000e+00 : f32
    %400 = vector.broadcast %cst_137 : f32 to vector<32x2xf32>
    %401 = arith.subf %400, %399 : vector<32x2xf32>
    %402 = math.exp %401 : vector<32x2xf32>
    %cst_138 = arith.constant 1.000000e+00 : f32
    %403 = vector.broadcast %cst_138 : f32 to vector<32x2xf32>
    %404 = arith.addf %403, %402 : vector<32x2xf32>
    %405 = tpu.reciprocal %404 {approx = true} : vector<32x2xf32> -> vector<32x2xf32>
    %406 = vector.extract_strided_slice %398 {offsets = [32, 0], sizes = [32, 2], strides = [1, 1]} : vector<128x2xf32> to vector<32x2xf32>
    %cst_139 = arith.constant 0.000000e+00 : f32
    %407 = vector.broadcast %cst_139 : f32 to vector<32x2xf32>
    %408 = arith.subf %407, %406 : vector<32x2xf32>
    %409 = math.exp %408 : vector<32x2xf32>
    %cst_140 = arith.constant 1.000000e+00 : f32
    %410 = vector.broadcast %cst_140 : f32 to vector<32x2xf32>
    %411 = arith.addf %410, %409 : vector<32x2xf32>
    %412 = tpu.reciprocal %411 {approx = true} : vector<32x2xf32> -> vector<32x2xf32>
    %413 = vector.extract_strided_slice %398 {offsets = [64, 0], sizes = [32, 2], strides = [1, 1]} : vector<128x2xf32> to vector<32x2xf32>
    %414 = math.tanh %413 : vector<32x2xf32>
    %415 = vector.extract_strided_slice %398 {offsets = [96, 0], sizes = [32, 2], strides = [1, 1]} : vector<128x2xf32> to vector<32x2xf32>
    %cst_141 = arith.constant 0.000000e+00 : f32
    %416 = vector.broadcast %cst_141 : f32 to vector<32x2xf32>
    %417 = arith.subf %416, %415 : vector<32x2xf32>
    %418 = math.exp %417 : vector<32x2xf32>
    %cst_142 = arith.constant 1.000000e+00 : f32
    %419 = vector.broadcast %cst_142 : f32 to vector<32x2xf32>
    %420 = arith.addf %419, %418 : vector<32x2xf32>
    %421 = tpu.reciprocal %420 {approx = true} : vector<32x2xf32> -> vector<32x2xf32>
    %422 = arith.mulf %412, %392 : vector<32x2xf32>
    %423 = arith.mulf %405, %414 : vector<32x2xf32>
    %424 = arith.addf %422, %423 : vector<32x2xf32>
    %425 = math.tanh %424 : vector<32x2xf32>
    %426 = arith.mulf %421, %425 : vector<32x2xf32>
    %427 = tpu.concatenate %202, %234, %266, %298, %330, %362, %394, %426 in 1 : vector<32x2xf32>, vector<32x2xf32>, vector<32x2xf32>, vector<32x2xf32>, vector<32x2xf32>, vector<32x2xf32>, vector<32x2xf32>, vector<32x2xf32> -> vector<32x16xf32>
    %428 = arith.addf %427, %158 : vector<32x16xf32>
    %cst_143 = arith.constant 0.000000e+00 : f32
    %429 = vector.broadcast %cst_143 : f32 to vector<32x16xf32>
    %430 = arith.cmpf ogt, %428, %429 : vector<32x16xf32>
    %cst_144 = arith.constant 0.000000e+00 : f32
    %431 = vector.broadcast %cst_144 : f32 to vector<32x16xf32>
    %432 = arith.minimumf %428, %431 : vector<32x16xf32>
    %433 = math.exp %432 : vector<32x16xf32>
    %cst_145 = arith.constant 1.000000e+00 : f32
    %434 = vector.broadcast %cst_145 : f32 to vector<32x16xf32>
    %435 = arith.subf %433, %434 : vector<32x16xf32>
    %cst_146 = arith.constant 1.000000e+00 : f32
    %436 = vector.broadcast %cst_146 : f32 to vector<32x16xf32>
    %437 = arith.mulf %436, %435 : vector<32x16xf32>
    %438 = arith.select %430, %428, %437 : vector<32x16xi1>, vector<32x16xf32>
    %c7 = arith.constant 7 : index
    %c0_147 = arith.constant 0 : index
    %c0_148 = arith.constant 0 : index
    %439 = vector.load %arg1[%c7, %c0_147, %c0_148] : memref<8x32x224xbf16, #tpu.memory_space<vmem>>, vector<1x32x224xbf16>
    %440 = vector.shape_cast %439 : vector<1x32x224xbf16> to vector<32x224xbf16>
    %c0_149 = arith.constant 0 : index
    %c7_150 = arith.constant 7 : index
    %441 = vector.load %arg2[%c0_149, %c7_150] : memref<32x8xf32, #tpu.memory_space<vmem>>, vector<32x1xf32>
    %cst_151 = arith.constant 0.000000e+00 : f32
    %442 = vector.broadcast %cst_151 : f32 to vector<32x6xf32>
    %cst_152 = arith.constant 0.000000e+00 : f32
    %443 = vector.broadcast %cst_152 : f32 to vector<32x6xf32>
    %444 = tpu.concatenate %442, %438, %443 in 1 : vector<32x6xf32>, vector<32x16xf32>, vector<32x6xf32> -> vector<32x28xf32>
    %445 = vector.extract_strided_slice %444 {offsets = [0, 0], sizes = [32, 16], strides = [1, 1]} : vector<32x28xf32> to vector<32x16xf32>
    %446 = vector.extract_strided_slice %444 {offsets = [0, 2], sizes = [32, 16], strides = [1, 1]} : vector<32x28xf32> to vector<32x16xf32>
    %447 = vector.extract_strided_slice %444 {offsets = [0, 4], sizes = [32, 16], strides = [1, 1]} : vector<32x28xf32> to vector<32x16xf32>
    %448 = vector.extract_strided_slice %444 {offsets = [0, 6], sizes = [32, 16], strides = [1, 1]} : vector<32x28xf32> to vector<32x16xf32>
    %449 = vector.extract_strided_slice %444 {offsets = [0, 8], sizes = [32, 16], strides = [1, 1]} : vector<32x28xf32> to vector<32x16xf32>
    %450 = vector.extract_strided_slice %444 {offsets = [0, 10], sizes = [32, 16], strides = [1, 1]} : vector<32x28xf32> to vector<32x16xf32>
    %451 = vector.extract_strided_slice %444 {offsets = [0, 12], sizes = [32, 16], strides = [1, 1]} : vector<32x28xf32> to vector<32x16xf32>
    %452 = tpu.concatenate %445, %446, %447, %448, %449, %450, %451 in 0 : vector<32x16xf32>, vector<32x16xf32>, vector<32x16xf32>, vector<32x16xf32>, vector<32x16xf32>, vector<32x16xf32>, vector<32x16xf32> -> vector<224x16xf32>
    %453 = arith.truncf %452 : vector<224x16xf32> to vector<224x16xbf16>
    %cst_153 = arith.constant dense<0.000000e+00> : vector<32x16xf32>
    %454 = tpu.matmul %440, %453, %cst_153 {dimension_numbers = #tpu.dot_dimension_numbers<[1], [0], [0], [1], [0, 0, 1, 1], [], []>} : vector<32x224xbf16>, vector<224x16xbf16>, vector<32x16xf32> -> vector<32x16xf32>
    %455 = vector.broadcast %441 : vector<32x1xf32> to vector<32x16xf32>
    %456 = arith.addf %454, %455 : vector<32x16xf32>
    %c0_154 = arith.constant 0 : index
    %c0_155 = arith.constant 0 : index
    %457 = vector.load %arg7[%c0_154, %c0_155] : memref<32x16xf32, #tpu.memory_space<vmem>>, vector<32x16xf32>
    tpu.vector_store %arg7[%c0_154, %c0_155], %456 {strides = array<i32>} : memref<32x16xf32, #tpu.memory_space<vmem>>, vector<32x16xf32>,
    return
  }
}

module attributes {stable_mosaic.version = 11 : i64} {
  func.func @kernel(%arg0: memref<16x16xf32, #tpu.memory_space<vmem>>, %arg1: memref<16x16xf32, #tpu.memory_space<vmem>>, %arg2: memref<16x16xf32, #tpu.memory_space<vmem>>, %arg3: memref<8x32x128xbf16, #tpu.memory_space<vmem>>, %arg4: memref<32x8xf32, #tpu.memory_space<vmem>>, %arg5: memref<1x128x64xbf16, #tpu.memory_space<vmem>>, %arg6: memref<1x128x1xf32, #tpu.memory_space<vmem>>, %arg7: memref<16x38xbf16, #tpu.memory_space<vmem>>, %arg8: memref<32x70xbf16, #tpu.memory_space<vmem>>, %arg9: memref<1x64xf32, #tpu.memory_space<vmem>>) attributes {dimension_semantics = [], scalar_prefetch = 0 : i64, scratch_operands = 0 : i64, tpu.core_type = #tpu.core_type<tc>} {
    %c0 = arith.constant 0 : index
    %c0_0 = arith.constant 0 : index
    %0 = vector.load %arg7[%c0, %c0_0] : memref<16x38xbf16, #tpu.memory_space<vmem>>, vector<16x38xbf16>
    %c0_1 = arith.constant 0 : index
    %c0_2 = arith.constant 0 : index
    %1 = vector.load %arg8[%c0_1, %c0_2] : memref<32x70xbf16, #tpu.memory_space<vmem>>, vector<32x70xbf16>
    %c0_3 = arith.constant 0 : index
    %c0_4 = arith.constant 0 : index
    %2 = vector.load %arg0[%c0_3, %c0_4] : memref<16x16xf32, #tpu.memory_space<vmem>>, vector<16x16xf32>
    %c0_5 = arith.constant 0 : index
    %c0_6 = arith.constant 0 : index
    %3 = vector.load %arg2[%c0_5, %c0_6] : memref<16x16xf32, #tpu.memory_space<vmem>>, vector<16x16xf32>
    %c0_7 = arith.constant 0 : index
    %c0_8 = arith.constant 0 : index
    %4 = vector.load %arg1[%c0_7, %c0_8] : memref<16x16xf32, #tpu.memory_space<vmem>>, vector<16x16xf32>
    %cst = arith.constant 5.000000e-01 : f32
    %5 = vector.broadcast %cst : f32 to vector<16x16xf32>
    %6 = arith.mulf %5, %4 : vector<16x16xf32>
    %7 = math.exp %6 : vector<16x16xf32>
    %8 = arith.mulf %3, %7 : vector<16x16xf32>
    %9 = arith.addf %2, %8 : vector<16x16xf32>
    %c0_9 = arith.constant 0 : index
    %c0_10 = arith.constant 0 : index
    %c0_11 = arith.constant 0 : index
    %10 = vector.load %arg3[%c0_9, %c0_10, %c0_11] : memref<8x32x128xbf16, #tpu.memory_space<vmem>>, vector<1x32x112xbf16>
    %11 = vector.shape_cast %10 : vector<1x32x112xbf16> to vector<32x112xbf16>
    %c0_12 = arith.constant 0 : index
    %c0_13 = arith.constant 0 : index
    %12 = vector.load %arg4[%c0_12, %c0_13] : memref<32x8xf32, #tpu.memory_space<vmem>>, vector<32x1xf32>
    %cst_14 = arith.constant 0.000000e+00 : f32
    %13 = vector.broadcast %cst_14 : f32 to vector<16x6xf32>
    %cst_15 = arith.constant 0.000000e+00 : f32
    %14 = vector.broadcast %cst_15 : f32 to vector<16x6xf32>
    %15 = tpu.concatenate %13, %9, %14 in 1 : vector<16x6xf32>, vector<16x16xf32>, vector<16x6xf32> -> vector<16x28xf32>
    %16 = vector.extract_strided_slice %15 {offsets = [0, 0], sizes = [16, 16], strides = [1, 1]} : vector<16x28xf32> to vector<16x16xf32>
    %17 = vector.extract_strided_slice %15 {offsets = [0, 2], sizes = [16, 16], strides = [1, 1]} : vector<16x28xf32> to vector<16x16xf32>
    %18 = vector.extract_strided_slice %15 {offsets = [0, 4], sizes = [16, 16], strides = [1, 1]} : vector<16x28xf32> to vector<16x16xf32>
    %19 = vector.extract_strided_slice %15 {offsets = [0, 6], sizes = [16, 16], strides = [1, 1]} : vector<16x28xf32> to vector<16x16xf32>
    %20 = vector.extract_strided_slice %15 {offsets = [0, 8], sizes = [16, 16], strides = [1, 1]} : vector<16x28xf32> to vector<16x16xf32>
    %21 = vector.extract_strided_slice %15 {offsets = [0, 10], sizes = [16, 16], strides = [1, 1]} : vector<16x28xf32> to vector<16x16xf32>
    %22 = vector.extract_strided_slice %15 {offsets = [0, 12], sizes = [16, 16], strides = [1, 1]} : vector<16x28xf32> to vector<16x16xf32>
    %23 = tpu.concatenate %16, %17, %18, %19, %20, %21, %22 in 0 : vector<16x16xf32>, vector<16x16xf32>, vector<16x16xf32>, vector<16x16xf32>, vector<16x16xf32>, vector<16x16xf32>, vector<16x16xf32> -> vector<112x16xf32>
    %24 = arith.truncf %23 : vector<112x16xf32> to vector<112x16xbf16>
    %cst_16 = arith.constant dense<0.000000e+00> : vector<32x16xf32>
    %25 = tpu.matmul %11, %24, %cst_16 {dimension_numbers = #tpu.dot_dimension_numbers<[1], [0], [0], [1], [0, 0, 1, 1], [], []>} : vector<32x112xbf16>, vector<112x16xbf16>, vector<32x16xf32> -> vector<32x16xf32>
    %26 = vector.broadcast %12 : vector<32x1xf32> to vector<32x16xf32>
    %27 = arith.addf %25, %26 : vector<32x16xf32>
    %c0_17 = arith.constant 0 : index
    %c0_18 = arith.constant 0 : index
    %c0_19 = arith.constant 0 : index
    %28 = vector.load %arg5[%c0_17, %c0_18, %c0_19] : memref<1x128x64xbf16, #tpu.memory_space<vmem>>, vector<1x128x32xbf16>
    %29 = vector.shape_cast %28 : vector<1x128x32xbf16> to vector<128x32xbf16>
    %c0_20 = arith.constant 0 : index
    %c0_21 = arith.constant 0 : index
    %c32 = arith.constant 32 : index
    %30 = vector.load %arg5[%c0_20, %c0_21, %c32] : memref<1x128x64xbf16, #tpu.memory_space<vmem>>, vector<1x128x32xbf16>
    %31 = vector.shape_cast %30 : vector<1x128x32xbf16> to vector<128x32xbf16>
    %c0_22 = arith.constant 0 : index
    %c0_23 = arith.constant 0 : index
    %c0_24 = arith.constant 0 : index
    %32 = vector.load %arg6[%c0_22, %c0_23, %c0_24] : memref<1x128x1xf32, #tpu.memory_space<vmem>>, vector<1x128x1xf32>
    %33 = vector.shape_cast %32 : vector<1x128x1xf32> to vector<128x1xf32>
    %34 = arith.truncf %27 : vector<32x16xf32> to vector<32x16xbf16>
    %cst_25 = arith.constant dense<0.000000e+00> : vector<128x16xf32>
    %35 = tpu.matmul %29, %34, %cst_25 {dimension_numbers = #tpu.dot_dimension_numbers<[1], [0], [0], [1], [0, 0, 1, 1], [], []>} : vector<128x32xbf16>, vector<32x16xbf16>, vector<128x16xf32> -> vector<128x16xf32>
    %36 = vector.broadcast %33 : vector<128x1xf32> to vector<128x16xf32>
    %37 = arith.addf %35, %36 : vector<128x16xf32>
    %cst_26 = arith.constant 0.000000e+00 : f32
    %38 = vector.broadcast %cst_26 : f32 to vector<32x2xf32>
    %cst_27 = arith.constant 0.000000e+00 : f32
    %39 = vector.broadcast %cst_27 : f32 to vector<32x2xf32>
    %40 = vector.extract_strided_slice %37 {offsets = [0, 0], sizes = [128, 2], strides = [1, 1]} : vector<128x16xf32> to vector<128x2xf32>
    %41 = arith.truncf %38 : vector<32x2xf32> to vector<32x2xbf16>
    %cst_28 = arith.constant dense<0.000000e+00> : vector<128x2xf32>
    %42 = tpu.matmul %31, %41, %cst_28 {dimension_numbers = #tpu.dot_dimension_numbers<[1], [0], [0], [1], [0, 0, 1, 1], [], []>} : vector<128x32xbf16>, vector<32x2xbf16>, vector<128x2xf32> -> vector<128x2xf32>
    %43 = arith.addf %40, %42 : vector<128x2xf32>
    %44 = vector.extract_strided_slice %43 {offsets = [0, 0], sizes = [32, 2], strides = [1, 1]} : vector<128x2xf32> to vector<32x2xf32>
    %cst_29 = arith.constant 0.000000e+00 : f32
    %45 = vector.broadcast %cst_29 : f32 to vector<32x2xf32>
    %46 = arith.subf %45, %44 : vector<32x2xf32>
    %47 = math.exp %46 : vector<32x2xf32>
    %cst_30 = arith.constant 1.000000e+00 : f32
    %48 = vector.broadcast %cst_30 : f32 to vector<32x2xf32>
    %49 = arith.addf %48, %47 : vector<32x2xf32>
    %50 = tpu.reciprocal %49 {approx = true} : vector<32x2xf32> -> vector<32x2xf32>
    %51 = vector.extract_strided_slice %43 {offsets = [32, 0], sizes = [32, 2], strides = [1, 1]} : vector<128x2xf32> to vector<32x2xf32>
    %cst_31 = arith.constant 0.000000e+00 : f32
    %52 = vector.broadcast %cst_31 : f32 to vector<32x2xf32>
    %53 = arith.subf %52, %51 : vector<32x2xf32>
    %54 = math.exp %53 : vector<32x2xf32>
    %cst_32 = arith.constant 1.000000e+00 : f32
    %55 = vector.broadcast %cst_32 : f32 to vector<32x2xf32>
    %56 = arith.addf %55, %54 : vector<32x2xf32>
    %57 = tpu.reciprocal %56 {approx = true} : vector<32x2xf32> -> vector<32x2xf32>
    %58 = vector.extract_strided_slice %43 {offsets = [64, 0], sizes = [32, 2], strides = [1, 1]} : vector<128x2xf32> to vector<32x2xf32>
    %59 = math.tanh %58 : vector<32x2xf32>
    %60 = vector.extract_strided_slice %43 {offsets = [96, 0], sizes = [32, 2], strides = [1, 1]} : vector<128x2xf32> to vector<32x2xf32>
    %cst_33 = arith.constant 0.000000e+00 : f32
    %61 = vector.broadcast %cst_33 : f32 to vector<32x2xf32>
    %62 = arith.subf %61, %60 : vector<32x2xf32>
    %63 = math.exp %62 : vector<32x2xf32>
    %cst_34 = arith.constant 1.000000e+00 : f32
    %64 = vector.broadcast %cst_34 : f32 to vector<32x2xf32>
    %65 = arith.addf %64, %63 : vector<32x2xf32>
    %66 = tpu.reciprocal %65 {approx = true} : vector<32x2xf32> -> vector<32x2xf32>
    %67 = arith.mulf %57, %39 : vector<32x2xf32>
    %68 = arith.mulf %50, %59 : vector<32x2xf32>
    %69 = arith.addf %67, %68 : vector<32x2xf32>
    %70 = math.tanh %69 : vector<32x2xf32>
    %71 = arith.mulf %66, %70 : vector<32x2xf32>
    %72 = vector.extract_strided_slice %37 {offsets = [0, 2], sizes = [128, 2], strides = [1, 1]} : vector<128x16xf32> to vector<128x2xf32>
    %73 = arith.truncf %71 : vector<32x2xf32> to vector<32x2xbf16>
    %cst_35 = arith.constant dense<0.000000e+00> : vector<128x2xf32>
    %74 = tpu.matmul %31, %73, %cst_35 {dimension_numbers = #tpu.dot_dimension_numbers<[1], [0], [0], [1], [0, 0, 1, 1], [], []>} : vector<128x32xbf16>, vector<32x2xbf16>, vector<128x2xf32> -> vector<128x2xf32>
    %75 = arith.addf %72, %74 : vector<128x2xf32>
    %76 = vector.extract_strided_slice %75 {offsets = [0, 0], sizes = [32, 2], strides = [1, 1]} : vector<128x2xf32> to vector<32x2xf32>
    %cst_36 = arith.constant 0.000000e+00 : f32
    %77 = vector.broadcast %cst_36 : f32 to vector<32x2xf32>
    %78 = arith.subf %77, %76 : vector<32x2xf32>
    %79 = math.exp %78 : vector<32x2xf32>
    %cst_37 = arith.constant 1.000000e+00 : f32
    %80 = vector.broadcast %cst_37 : f32 to vector<32x2xf32>
    %81 = arith.addf %80, %79 : vector<32x2xf32>
    %82 = tpu.reciprocal %81 {approx = true} : vector<32x2xf32> -> vector<32x2xf32>
    %83 = vector.extract_strided_slice %75 {offsets = [32, 0], sizes = [32, 2], strides = [1, 1]} : vector<128x2xf32> to vector<32x2xf32>
    %cst_38 = arith.constant 0.000000e+00 : f32
    %84 = vector.broadcast %cst_38 : f32 to vector<32x2xf32>
    %85 = arith.subf %84, %83 : vector<32x2xf32>
    %86 = math.exp %85 : vector<32x2xf32>
    %cst_39 = arith.constant 1.000000e+00 : f32
    %87 = vector.broadcast %cst_39 : f32 to vector<32x2xf32>
    %88 = arith.addf %87, %86 : vector<32x2xf32>
    %89 = tpu.reciprocal %88 {approx = true} : vector<32x2xf32> -> vector<32x2xf32>
    %90 = vector.extract_strided_slice %75 {offsets = [64, 0], sizes = [32, 2], strides = [1, 1]} : vector<128x2xf32> to vector<32x2xf32>
    %91 = math.tanh %90 : vector<32x2xf32>
    %92 = vector.extract_strided_slice %75 {offsets = [96, 0], sizes = [32, 2], strides = [1, 1]} : vector<128x2xf32> to vector<32x2xf32>
    %cst_40 = arith.constant 0.000000e+00 : f32
    %93 = vector.broadcast %cst_40 : f32 to vector<32x2xf32>
    %94 = arith.subf %93, %92 : vector<32x2xf32>
    %95 = math.exp %94 : vector<32x2xf32>
    %cst_41 = arith.constant 1.000000e+00 : f32
    %96 = vector.broadcast %cst_41 : f32 to vector<32x2xf32>
    %97 = arith.addf %96, %95 : vector<32x2xf32>
    %98 = tpu.reciprocal %97 {approx = true} : vector<32x2xf32> -> vector<32x2xf32>
    %99 = arith.mulf %89, %69 : vector<32x2xf32>
    %100 = arith.mulf %82, %91 : vector<32x2xf32>
    %101 = arith.addf %99, %100 : vector<32x2xf32>
    %102 = math.tanh %101 : vector<32x2xf32>
    %103 = arith.mulf %98, %102 : vector<32x2xf32>
    %104 = vector.extract_strided_slice %37 {offsets = [0, 4], sizes = [128, 2], strides = [1, 1]} : vector<128x16xf32> to vector<128x2xf32>
    %105 = arith.truncf %103 : vector<32x2xf32> to vector<32x2xbf16>
    %cst_42 = arith.constant dense<0.000000e+00> : vector<128x2xf32>
    %106 = tpu.matmul %31, %105, %cst_42 {dimension_numbers = #tpu.dot_dimension_numbers<[1], [0], [0], [1], [0, 0, 1, 1], [], []>} : vector<128x32xbf16>, vector<32x2xbf16>, vector<128x2xf32> -> vector<128x2xf32>
    %107 = arith.addf %104, %106 : vector<128x2xf32>
    %108 = vector.extract_strided_slice %107 {offsets = [0, 0], sizes = [32, 2], strides = [1, 1]} : vector<128x2xf32> to vector<32x2xf32>
    %cst_43 = arith.constant 0.000000e+00 : f32
    %109 = vector.broadcast %cst_43 : f32 to vector<32x2xf32>
    %110 = arith.subf %109, %108 : vector<32x2xf32>
    %111 = math.exp %110 : vector<32x2xf32>
    %cst_44 = arith.constant 1.000000e+00 : f32
    %112 = vector.broadcast %cst_44 : f32 to vector<32x2xf32>
    %113 = arith.addf %112, %111 : vector<32x2xf32>
    %114 = tpu.reciprocal %113 {approx = true} : vector<32x2xf32> -> vector<32x2xf32>
    %115 = vector.extract_strided_slice %107 {offsets = [32, 0], sizes = [32, 2], strides = [1, 1]} : vector<128x2xf32> to vector<32x2xf32>
    %cst_45 = arith.constant 0.000000e+00 : f32
    %116 = vector.broadcast %cst_45 : f32 to vector<32x2xf32>
    %117 = arith.subf %116, %115 : vector<32x2xf32>
    %118 = math.exp %117 : vector<32x2xf32>
    %cst_46 = arith.constant 1.000000e+00 : f32
    %119 = vector.broadcast %cst_46 : f32 to vector<32x2xf32>
    %120 = arith.addf %119, %118 : vector<32x2xf32>
    %121 = tpu.reciprocal %120 {approx = true} : vector<32x2xf32> -> vector<32x2xf32>
    %122 = vector.extract_strided_slice %107 {offsets = [64, 0], sizes = [32, 2], strides = [1, 1]} : vector<128x2xf32> to vector<32x2xf32>
    %123 = math.tanh %122 : vector<32x2xf32>
    %124 = vector.extract_strided_slice %107 {offsets = [96, 0], sizes = [32, 2], strides = [1, 1]} : vector<128x2xf32> to vector<32x2xf32>
    %cst_47 = arith.constant 0.000000e+00 : f32
    %125 = vector.broadcast %cst_47 : f32 to vector<32x2xf32>
    %126 = arith.subf %125, %124 : vector<32x2xf32>
    %127 = math.exp %126 : vector<32x2xf32>
    %cst_48 = arith.constant 1.000000e+00 : f32
    %128 = vector.broadcast %cst_48 : f32 to vector<32x2xf32>
    %129 = arith.addf %128, %127 : vector<32x2xf32>
    %130 = tpu.reciprocal %129 {approx = true} : vector<32x2xf32> -> vector<32x2xf32>
    %131 = arith.mulf %121, %101 : vector<32x2xf32>
    %132 = arith.mulf %114, %123 : vector<32x2xf32>
    %133 = arith.addf %131, %132 : vector<32x2xf32>
    %134 = math.tanh %133 : vector<32x2xf32>
    %135 = arith.mulf %130, %134 : vector<32x2xf32>
    %136 = vector.extract_strided_slice %37 {offsets = [0, 6], sizes = [128, 2], strides = [1, 1]} : vector<128x16xf32> to vector<128x2xf32>
    %137 = arith.truncf %135 : vector<32x2xf32> to vector<32x2xbf16>
    %cst_49 = arith.constant dense<0.000000e+00> : vector<128x2xf32>
    %138 = tpu.matmul %31, %137, %cst_49 {dimension_numbers = #tpu.dot_dimension_numbers<[1], [0], [0], [1], [0, 0, 1, 1], [], []>} : vector<128x32xbf16>, vector<32x2xbf16>, vector<128x2xf32> -> vector<128x2xf32>
    %139 = arith.addf %136, %138 : vector<128x2xf32>
    %140 = vector.extract_strided_slice %139 {offsets = [0, 0], sizes = [32, 2], strides = [1, 1]} : vector<128x2xf32> to vector<32x2xf32>
    %cst_50 = arith.constant 0.000000e+00 : f32
    %141 = vector.broadcast %cst_50 : f32 to vector<32x2xf32>
    %142 = arith.subf %141, %140 : vector<32x2xf32>
    %143 = math.exp %142 : vector<32x2xf32>
    %cst_51 = arith.constant 1.000000e+00 : f32
    %144 = vector.broadcast %cst_51 : f32 to vector<32x2xf32>
    %145 = arith.addf %144, %143 : vector<32x2xf32>
    %146 = tpu.reciprocal %145 {approx = true} : vector<32x2xf32> -> vector<32x2xf32>
    %147 = vector.extract_strided_slice %139 {offsets = [32, 0], sizes = [32, 2], strides = [1, 1]} : vector<128x2xf32> to vector<32x2xf32>
    %cst_52 = arith.constant 0.000000e+00 : f32
    %148 = vector.broadcast %cst_52 : f32 to vector<32x2xf32>
    %149 = arith.subf %148, %147 : vector<32x2xf32>
    %150 = math.exp %149 : vector<32x2xf32>
    %cst_53 = arith.constant 1.000000e+00 : f32
    %151 = vector.broadcast %cst_53 : f32 to vector<32x2xf32>
    %152 = arith.addf %151, %150 : vector<32x2xf32>
    %153 = tpu.reciprocal %152 {approx = true} : vector<32x2xf32> -> vector<32x2xf32>
    %154 = vector.extract_strided_slice %139 {offsets = [64, 0], sizes = [32, 2], strides = [1, 1]} : vector<128x2xf32> to vector<32x2xf32>
    %155 = math.tanh %154 : vector<32x2xf32>
    %156 = vector.extract_strided_slice %139 {offsets = [96, 0], sizes = [32, 2], strides = [1, 1]} : vector<128x2xf32> to vector<32x2xf32>
    %cst_54 = arith.constant 0.000000e+00 : f32
    %157 = vector.broadcast %cst_54 : f32 to vector<32x2xf32>
    %158 = arith.subf %157, %156 : vector<32x2xf32>
    %159 = math.exp %158 : vector<32x2xf32>
    %cst_55 = arith.constant 1.000000e+00 : f32
    %160 = vector.broadcast %cst_55 : f32 to vector<32x2xf32>
    %161 = arith.addf %160, %159 : vector<32x2xf32>
    %162 = tpu.reciprocal %161 {approx = true} : vector<32x2xf32> -> vector<32x2xf32>
    %163 = arith.mulf %153, %133 : vector<32x2xf32>
    %164 = arith.mulf %146, %155 : vector<32x2xf32>
    %165 = arith.addf %163, %164 : vector<32x2xf32>
    %166 = math.tanh %165 : vector<32x2xf32>
    %167 = arith.mulf %162, %166 : vector<32x2xf32>
    %168 = vector.extract_strided_slice %37 {offsets = [0, 8], sizes = [128, 2], strides = [1, 1]} : vector<128x16xf32> to vector<128x2xf32>
    %169 = arith.truncf %167 : vector<32x2xf32> to vector<32x2xbf16>
    %cst_56 = arith.constant dense<0.000000e+00> : vector<128x2xf32>
    %170 = tpu.matmul %31, %169, %cst_56 {dimension_numbers = #tpu.dot_dimension_numbers<[1], [0], [0], [1], [0, 0, 1, 1], [], []>} : vector<128x32xbf16>, vector<32x2xbf16>, vector<128x2xf32> -> vector<128x2xf32>
    %171 = arith.addf %168, %170 : vector<128x2xf32>
    %172 = vector.extract_strided_slice %171 {offsets = [0, 0], sizes = [32, 2], strides = [1, 1]} : vector<128x2xf32> to vector<32x2xf32>
    %cst_57 = arith.constant 0.000000e+00 : f32
    %173 = vector.broadcast %cst_57 : f32 to vector<32x2xf32>
    %174 = arith.subf %173, %172 : vector<32x2xf32>
    %175 = math.exp %174 : vector<32x2xf32>
    %cst_58 = arith.constant 1.000000e+00 : f32
    %176 = vector.broadcast %cst_58 : f32 to vector<32x2xf32>
    %177 = arith.addf %176, %175 : vector<32x2xf32>
    %178 = tpu.reciprocal %177 {approx = true} : vector<32x2xf32> -> vector<32x2xf32>
    %179 = vector.extract_strided_slice %171 {offsets = [32, 0], sizes = [32, 2], strides = [1, 1]} : vector<128x2xf32> to vector<32x2xf32>
    %cst_59 = arith.constant 0.000000e+00 : f32
    %180 = vector.broadcast %cst_59 : f32 to vector<32x2xf32>
    %181 = arith.subf %180, %179 : vector<32x2xf32>
    %182 = math.exp %181 : vector<32x2xf32>
    %cst_60 = arith.constant 1.000000e+00 : f32
    %183 = vector.broadcast %cst_60 : f32 to vector<32x2xf32>
    %184 = arith.addf %183, %182 : vector<32x2xf32>
    %185 = tpu.reciprocal %184 {approx = true} : vector<32x2xf32> -> vector<32x2xf32>
    %186 = vector.extract_strided_slice %171 {offsets = [64, 0], sizes = [32, 2], strides = [1, 1]} : vector<128x2xf32> to vector<32x2xf32>
    %187 = math.tanh %186 : vector<32x2xf32>
    %188 = vector.extract_strided_slice %171 {offsets = [96, 0], sizes = [32, 2], strides = [1, 1]} : vector<128x2xf32> to vector<32x2xf32>
    %cst_61 = arith.constant 0.000000e+00 : f32
    %189 = vector.broadcast %cst_61 : f32 to vector<32x2xf32>
    %190 = arith.subf %189, %188 : vector<32x2xf32>
    %191 = math.exp %190 : vector<32x2xf32>
    %cst_62 = arith.constant 1.000000e+00 : f32
    %192 = vector.broadcast %cst_62 : f32 to vector<32x2xf32>
    %193 = arith.addf %192, %191 : vector<32x2xf32>
    %194 = tpu.reciprocal %193 {approx = true} : vector<32x2xf32> -> vector<32x2xf32>
    %195 = arith.mulf %185, %165 : vector<32x2xf32>
    %196 = arith.mulf %178, %187 : vector<32x2xf32>
    %197 = arith.addf %195, %196 : vector<32x2xf32>
    %198 = math.tanh %197 : vector<32x2xf32>
    %199 = arith.mulf %194, %198 : vector<32x2xf32>
    %200 = vector.extract_strided_slice %37 {offsets = [0, 10], sizes = [128, 2], strides = [1, 1]} : vector<128x16xf32> to vector<128x2xf32>
    %201 = arith.truncf %199 : vector<32x2xf32> to vector<32x2xbf16>
    %cst_63 = arith.constant dense<0.000000e+00> : vector<128x2xf32>
    %202 = tpu.matmul %31, %201, %cst_63 {dimension_numbers = #tpu.dot_dimension_numbers<[1], [0], [0], [1], [0, 0, 1, 1], [], []>} : vector<128x32xbf16>, vector<32x2xbf16>, vector<128x2xf32> -> vector<128x2xf32>
    %203 = arith.addf %200, %202 : vector<128x2xf32>
    %204 = vector.extract_strided_slice %203 {offsets = [0, 0], sizes = [32, 2], strides = [1, 1]} : vector<128x2xf32> to vector<32x2xf32>
    %cst_64 = arith.constant 0.000000e+00 : f32
    %205 = vector.broadcast %cst_64 : f32 to vector<32x2xf32>
    %206 = arith.subf %205, %204 : vector<32x2xf32>
    %207 = math.exp %206 : vector<32x2xf32>
    %cst_65 = arith.constant 1.000000e+00 : f32
    %208 = vector.broadcast %cst_65 : f32 to vector<32x2xf32>
    %209 = arith.addf %208, %207 : vector<32x2xf32>
    %210 = tpu.reciprocal %209 {approx = true} : vector<32x2xf32> -> vector<32x2xf32>
    %211 = vector.extract_strided_slice %203 {offsets = [32, 0], sizes = [32, 2], strides = [1, 1]} : vector<128x2xf32> to vector<32x2xf32>
    %cst_66 = arith.constant 0.000000e+00 : f32
    %212 = vector.broadcast %cst_66 : f32 to vector<32x2xf32>
    %213 = arith.subf %212, %211 : vector<32x2xf32>
    %214 = math.exp %213 : vector<32x2xf32>
    %cst_67 = arith.constant 1.000000e+00 : f32
    %215 = vector.broadcast %cst_67 : f32 to vector<32x2xf32>
    %216 = arith.addf %215, %214 : vector<32x2xf32>
    %217 = tpu.reciprocal %216 {approx = true} : vector<32x2xf32> -> vector<32x2xf32>
    %218 = vector.extract_strided_slice %203 {offsets = [64, 0], sizes = [32, 2], strides = [1, 1]} : vector<128x2xf32> to vector<32x2xf32>
    %219 = math.tanh %218 : vector<32x2xf32>
    %220 = vector.extract_strided_slice %203 {offsets = [96, 0], sizes = [32, 2], strides = [1, 1]} : vector<128x2xf32> to vector<32x2xf32>
    %cst_68 = arith.constant 0.000000e+00 : f32
    %221 = vector.broadcast %cst_68 : f32 to vector<32x2xf32>
    %222 = arith.subf %221, %220 : vector<32x2xf32>
    %223 = math.exp %222 : vector<32x2xf32>
    %cst_69 = arith.constant 1.000000e+00 : f32
    %224 = vector.broadcast %cst_69 : f32 to vector<32x2xf32>
    %225 = arith.addf %224, %223 : vector<32x2xf32>
    %226 = tpu.reciprocal %225 {approx = true} : vector<32x2xf32> -> vector<32x2xf32>
    %227 = arith.mulf %217, %197 : vector<32x2xf32>
    %228 = arith.mulf %210, %219 : vector<32x2xf32>
    %229 = arith.addf %227, %228 : vector<32x2xf32>
    %230 = math.tanh %229 : vector<32x2xf32>
    %231 = arith.mulf %226, %230 : vector<32x2xf32>
    %232 = vector.extract_strided_slice %37 {offsets = [0, 12], sizes = [128, 2], strides = [1, 1]} : vector<128x16xf32> to vector<128x2xf32>
    %233 = arith.truncf %231 : vector<32x2xf32> to vector<32x2xbf16>
    %cst_70 = arith.constant dense<0.000000e+00> : vector<128x2xf32>
    %234 = tpu.matmul %31, %233, %cst_70 {dimension_numbers = #tpu.dot_dimension_numbers<[1], [0], [0], [1], [0, 0, 1, 1], [], []>} : vector<128x32xbf16>, vector<32x2xbf16>, vector<128x2xf32> -> vector<128x2xf32>
    %235 = arith.addf %232, %234 : vector<128x2xf32>
    %236 = vector.extract_strided_slice %235 {offsets = [0, 0], sizes = [32, 2], strides = [1, 1]} : vector<128x2xf32> to vector<32x2xf32>
    %cst_71 = arith.constant 0.000000e+00 : f32
    %237 = vector.broadcast %cst_71 : f32 to vector<32x2xf32>
    %238 = arith.subf %237, %236 : vector<32x2xf32>
    %239 = math.exp %238 : vector<32x2xf32>
    %cst_72 = arith.constant 1.000000e+00 : f32
    %240 = vector.broadcast %cst_72 : f32 to vector<32x2xf32>
    %241 = arith.addf %240, %239 : vector<32x2xf32>
    %242 = tpu.reciprocal %241 {approx = true} : vector<32x2xf32> -> vector<32x2xf32>
    %243 = vector.extract_strided_slice %235 {offsets = [32, 0], sizes = [32, 2], strides = [1, 1]} : vector<128x2xf32> to vector<32x2xf32>
    %cst_73 = arith.constant 0.000000e+00 : f32
    %244 = vector.broadcast %cst_73 : f32 to vector<32x2xf32>
    %245 = arith.subf %244, %243 : vector<32x2xf32>
    %246 = math.exp %245 : vector<32x2xf32>
    %cst_74 = arith.constant 1.000000e+00 : f32
    %247 = vector.broadcast %cst_74 : f32 to vector<32x2xf32>
    %248 = arith.addf %247, %246 : vector<32x2xf32>
    %249 = tpu.reciprocal %248 {approx = true} : vector<32x2xf32> -> vector<32x2xf32>
    %250 = vector.extract_strided_slice %235 {offsets = [64, 0], sizes = [32, 2], strides = [1, 1]} : vector<128x2xf32> to vector<32x2xf32>
    %251 = math.tanh %250 : vector<32x2xf32>
    %252 = vector.extract_strided_slice %235 {offsets = [96, 0], sizes = [32, 2], strides = [1, 1]} : vector<128x2xf32> to vector<32x2xf32>
    %cst_75 = arith.constant 0.000000e+00 : f32
    %253 = vector.broadcast %cst_75 : f32 to vector<32x2xf32>
    %254 = arith.subf %253, %252 : vector<32x2xf32>
    %255 = math.exp %254 : vector<32x2xf32>
    %cst_76 = arith.constant 1.000000e+00 : f32
    %256 = vector.broadcast %cst_76 : f32 to vector<32x2xf32>
    %257 = arith.addf %256, %255 : vector<32x2xf32>
    %258 = tpu.reciprocal %257 {approx = true} : vector<32x2xf32> -> vector<32x2xf32>
    %259 = arith.mulf %249, %229 : vector<32x2xf32>
    %260 = arith.mulf %242, %251 : vector<32x2xf32>
    %261 = arith.addf %259, %260 : vector<32x2xf32>
    %262 = math.tanh %261 : vector<32x2xf32>
    %263 = arith.mulf %258, %262 : vector<32x2xf32>
    %264 = vector.extract_strided_slice %37 {offsets = [0, 14], sizes = [128, 2], strides = [1, 1]} : vector<128x16xf32> to vector<128x2xf32>
    %265 = arith.truncf %263 : vector<32x2xf32> to vector<32x2xbf16>
    %cst_77 = arith.constant dense<0.000000e+00> : vector<128x2xf32>
    %266 = tpu.matmul %31, %265, %cst_77 {dimension_numbers = #tpu.dot_dimension_numbers<[1], [0], [0], [1], [0, 0, 1, 1], [], []>} : vector<128x32xbf16>, vector<32x2xbf16>, vector<128x2xf32> -> vector<128x2xf32>
    %267 = arith.addf %264, %266 : vector<128x2xf32>
    %268 = vector.extract_strided_slice %267 {offsets = [0, 0], sizes = [32, 2], strides = [1, 1]} : vector<128x2xf32> to vector<32x2xf32>
    %cst_78 = arith.constant 0.000000e+00 : f32
    %269 = vector.broadcast %cst_78 : f32 to vector<32x2xf32>
    %270 = arith.subf %269, %268 : vector<32x2xf32>
    %271 = math.exp %270 : vector<32x2xf32>
    %cst_79 = arith.constant 1.000000e+00 : f32
    %272 = vector.broadcast %cst_79 : f32 to vector<32x2xf32>
    %273 = arith.addf %272, %271 : vector<32x2xf32>
    %274 = tpu.reciprocal %273 {approx = true} : vector<32x2xf32> -> vector<32x2xf32>
    %275 = vector.extract_strided_slice %267 {offsets = [32, 0], sizes = [32, 2], strides = [1, 1]} : vector<128x2xf32> to vector<32x2xf32>
    %cst_80 = arith.constant 0.000000e+00 : f32
    %276 = vector.broadcast %cst_80 : f32 to vector<32x2xf32>
    %277 = arith.subf %276, %275 : vector<32x2xf32>
    %278 = math.exp %277 : vector<32x2xf32>
    %cst_81 = arith.constant 1.000000e+00 : f32
    %279 = vector.broadcast %cst_81 : f32 to vector<32x2xf32>
    %280 = arith.addf %279, %278 : vector<32x2xf32>
    %281 = tpu.reciprocal %280 {approx = true} : vector<32x2xf32> -> vector<32x2xf32>
    %282 = vector.extract_strided_slice %267 {offsets = [64, 0], sizes = [32, 2], strides = [1, 1]} : vector<128x2xf32> to vector<32x2xf32>
    %283 = math.tanh %282 : vector<32x2xf32>
    %284 = vector.extract_strided_slice %267 {offsets = [96, 0], sizes = [32, 2], strides = [1, 1]} : vector<128x2xf32> to vector<32x2xf32>
    %cst_82 = arith.constant 0.000000e+00 : f32
    %285 = vector.broadcast %cst_82 : f32 to vector<32x2xf32>
    %286 = arith.subf %285, %284 : vector<32x2xf32>
    %287 = math.exp %286 : vector<32x2xf32>
    %cst_83 = arith.constant 1.000000e+00 : f32
    %288 = vector.broadcast %cst_83 : f32 to vector<32x2xf32>
    %289 = arith.addf %288, %287 : vector<32x2xf32>
    %290 = tpu.reciprocal %289 {approx = true} : vector<32x2xf32> -> vector<32x2xf32>
    %291 = arith.mulf %281, %261 : vector<32x2xf32>
    %292 = arith.mulf %274, %283 : vector<32x2xf32>
    %293 = arith.addf %291, %292 : vector<32x2xf32>
    %294 = math.tanh %293 : vector<32x2xf32>
    %295 = arith.mulf %290, %294 : vector<32x2xf32>
    %296 = tpu.concatenate %71, %103, %135, %167, %199, %231, %263, %295 in 1 : vector<32x2xf32>, vector<32x2xf32>, vector<32x2xf32>, vector<32x2xf32>, vector<32x2xf32>, vector<32x2xf32>, vector<32x2xf32>, vector<32x2xf32> -> vector<32x16xf32>
    %297 = arith.addf %296, %27 : vector<32x16xf32>
    %cst_84 = arith.constant 0.000000e+00 : f32
    %298 = vector.broadcast %cst_84 : f32 to vector<32x16xf32>
    %299 = arith.cmpf ogt, %297, %298 : vector<32x16xf32>
    %cst_85 = arith.constant 0.000000e+00 : f32
    %300 = vector.broadcast %cst_85 : f32 to vector<32x16xf32>
    %301 = arith.minimumf %297, %300 : vector<32x16xf32>
    %302 = math.exp %301 : vector<32x16xf32>
    %cst_86 = arith.constant 1.000000e+00 : f32
    %303 = vector.broadcast %cst_86 : f32 to vector<32x16xf32>
    %304 = arith.subf %302, %303 : vector<32x16xf32>
    %cst_87 = arith.constant 1.000000e+00 : f32
    %305 = vector.broadcast %cst_87 : f32 to vector<32x16xf32>
    %306 = arith.mulf %305, %304 : vector<32x16xf32>
    %307 = arith.select %299, %297, %306 : vector<32x16xi1>, vector<32x16xf32>
    %c1 = arith.constant 1 : index
    %c0_88 = arith.constant 0 : index
    %c0_89 = arith.constant 0 : index
    %308 = vector.load %arg3[%c1, %c0_88, %c0_89] : memref<8x32x128xbf16, #tpu.memory_space<vmem>>, vector<1x16x128xbf16>
    %309 = vector.shape_cast %308 : vector<1x16x128xbf16> to vector<16x128xbf16>
    %c0_90 = arith.constant 0 : index
    %c1_91 = arith.constant 1 : index
    %310 = vector.load %arg4[%c0_90, %c1_91] : memref<32x8xf32, #tpu.memory_space<vmem>>, vector<16x1xf32>
    %311 = arith.truncf %307 : vector<32x16xf32> to vector<32x16xbf16>
    %cst_92 = arith.constant dense<0.000000e+00> : vector<32x38xf32>
    %312 = tpu.matmul %311, %0, %cst_92 {dimension_numbers = #tpu.dot_dimension_numbers<[1], [0], [0], [1], [0, 0, 1, 1], [], []>} : vector<32x16xbf16>, vector<16x38xbf16>, vector<32x38xf32> -> vector<32x38xf32>
    %313 = vector.extract_strided_slice %312 {offsets = [0, 0], sizes = [32, 32], strides = [1, 1]} : vector<32x38xf32> to vector<32x32xf32>
    %314 = vector.extract_strided_slice %312 {offsets = [0, 2], sizes = [32, 32], strides = [1, 1]} : vector<32x38xf32> to vector<32x32xf32>
    %315 = vector.extract_strided_slice %312 {offsets = [0, 4], sizes = [32, 32], strides = [1, 1]} : vector<32x38xf32> to vector<32x32xf32>
    %316 = vector.extract_strided_slice %312 {offsets = [0, 6], sizes = [32, 32], strides = [1, 1]} : vector<32x38xf32> to vector<32x32xf32>
    %317 = tpu.concatenate %313, %314, %315, %316 in 0 : vector<32x32xf32>, vector<32x32xf32>, vector<32x32xf32>, vector<32x32xf32> -> vector<128x32xf32>
    %318 = arith.truncf %317 : vector<128x32xf32> to vector<128x32xbf16>
    %cst_93 = arith.constant dense<0.000000e+00> : vector<16x32xf32>
    %319 = tpu.matmul %309, %318, %cst_93 {dimension_numbers = #tpu.dot_dimension_numbers<[1], [0], [0], [1], [0, 0, 1, 1], [], []>} : vector<16x128xbf16>, vector<128x32xbf16>, vector<16x32xf32> -> vector<16x32xf32>
    %320 = vector.broadcast %310 : vector<16x1xf32> to vector<16x32xf32>
    %321 = arith.addf %319, %320 : vector<16x32xf32>
    %cst_94 = arith.constant 0.000000e+00 : f32
    %322 = vector.broadcast %cst_94 : f32 to vector<16x32xf32>
    %323 = arith.cmpf ogt, %321, %322 : vector<16x32xf32>
    %cst_95 = arith.constant 0.000000e+00 : f32
    %324 = vector.broadcast %cst_95 : f32 to vector<16x32xf32>
    %325 = arith.minimumf %321, %324 : vector<16x32xf32>
    %326 = math.exp %325 : vector<16x32xf32>
    %cst_96 = arith.constant 1.000000e+00 : f32
    %327 = vector.broadcast %cst_96 : f32 to vector<16x32xf32>
    %328 = arith.subf %326, %327 : vector<16x32xf32>
    %cst_97 = arith.constant 1.000000e+00 : f32
    %329 = vector.broadcast %cst_97 : f32 to vector<16x32xf32>
    %330 = arith.mulf %329, %328 : vector<16x32xf32>
    %331 = arith.select %323, %321, %330 : vector<16x32xi1>, vector<16x32xf32>
    %c2 = arith.constant 2 : index
    %c0_98 = arith.constant 0 : index
    %c0_99 = arith.constant 0 : index
    %332 = vector.load %arg3[%c2, %c0_98, %c0_99] : memref<8x32x128xbf16, #tpu.memory_space<vmem>>, vector<1x8x48xbf16>
    %333 = vector.shape_cast %332 : vector<1x8x48xbf16> to vector<8x48xbf16>
    %c0_100 = arith.constant 0 : index
    %c2_101 = arith.constant 2 : index
    %334 = vector.load %arg4[%c0_100, %c2_101] : memref<32x8xf32, #tpu.memory_space<vmem>>, vector<8x1xf32>
    %cst_102 = arith.constant 0.000000e+00 : f32
    %335 = vector.broadcast %cst_102 : f32 to vector<16x2xf32>
    %cst_103 = arith.constant 0.000000e+00 : f32
    %336 = vector.broadcast %cst_103 : f32 to vector<16x2xf32>
    %337 = tpu.concatenate %335, %331, %336 in 1 : vector<16x2xf32>, vector<16x32xf32>, vector<16x2xf32> -> vector<16x36xf32>
    %338 = vector.extract_strided_slice %337 {offsets = [0, 0], sizes = [16, 32], strides = [1, 1]} : vector<16x36xf32> to vector<16x32xf32>
    %339 = vector.extract_strided_slice %337 {offsets = [0, 2], sizes = [16, 32], strides = [1, 1]} : vector<16x36xf32> to vector<16x32xf32>
    %340 = vector.extract_strided_slice %337 {offsets = [0, 4], sizes = [16, 32], strides = [1, 1]} : vector<16x36xf32> to vector<16x32xf32>
    %341 = tpu.concatenate %338, %339, %340 in 0 : vector<16x32xf32>, vector<16x32xf32>, vector<16x32xf32> -> vector<48x32xf32>
    %342 = arith.truncf %341 : vector<48x32xf32> to vector<48x32xbf16>
    %cst_104 = arith.constant dense<0.000000e+00> : vector<8x32xf32>
    %343 = tpu.matmul %333, %342, %cst_104 {dimension_numbers = #tpu.dot_dimension_numbers<[1], [0], [0], [1], [0, 0, 1, 1], [], []>} : vector<8x48xbf16>, vector<48x32xbf16>, vector<8x32xf32> -> vector<8x32xf32>
    %344 = vector.broadcast %334 : vector<8x1xf32> to vector<8x32xf32>
    %345 = arith.addf %343, %344 : vector<8x32xf32>
    %cst_105 = arith.constant 0.000000e+00 : f32
    %346 = vector.broadcast %cst_105 : f32 to vector<8x32xf32>
    %347 = arith.cmpf ogt, %345, %346 : vector<8x32xf32>
    %cst_106 = arith.constant 0.000000e+00 : f32
    %348 = vector.broadcast %cst_106 : f32 to vector<8x32xf32>
    %349 = arith.minimumf %345, %348 : vector<8x32xf32>
    %350 = math.exp %349 : vector<8x32xf32>
    %cst_107 = arith.constant 1.000000e+00 : f32
    %351 = vector.broadcast %cst_107 : f32 to vector<8x32xf32>
    %352 = arith.subf %350, %351 : vector<8x32xf32>
    %cst_108 = arith.constant 1.000000e+00 : f32
    %353 = vector.broadcast %cst_108 : f32 to vector<8x32xf32>
    %354 = arith.mulf %353, %352 : vector<8x32xf32>
    %355 = arith.select %347, %345, %354 : vector<8x32xi1>, vector<8x32xf32>
    %c3 = arith.constant 3 : index
    %c0_109 = arith.constant 0 : index
    %c0_110 = arith.constant 0 : index
    %356 = vector.load %arg3[%c3, %c0_109, %c0_110] : memref<8x32x128xbf16, #tpu.memory_space<vmem>>, vector<1x16x8xbf16>
    %357 = vector.shape_cast %356 : vector<1x16x8xbf16> to vector<16x8xbf16>
    %c0_111 = arith.constant 0 : index
    %c3_112 = arith.constant 3 : index
    %358 = vector.load %arg4[%c0_111, %c3_112] : memref<32x8xf32, #tpu.memory_space<vmem>>, vector<16x1xf32>
    %359 = arith.truncf %355 : vector<8x32xf32> to vector<8x32xbf16>
    %cst_113 = arith.constant dense<0.000000e+00> : vector<16x32xf32>
    %360 = tpu.matmul %357, %359, %cst_113 {dimension_numbers = #tpu.dot_dimension_numbers<[1], [0], [0], [1], [0, 0, 1, 1], [], []>} : vector<16x8xbf16>, vector<8x32xbf16>, vector<16x32xf32> -> vector<16x32xf32>
    %361 = vector.broadcast %358 : vector<16x1xf32> to vector<16x32xf32>
    %362 = arith.addf %360, %361 : vector<16x32xf32>
    %363 = arith.addf %321, %362 : vector<16x32xf32>
    %cst_114 = arith.constant 0.000000e+00 : f32
    %364 = vector.broadcast %cst_114 : f32 to vector<16x32xf32>
    %365 = arith.cmpf ogt, %363, %364 : vector<16x32xf32>
    %cst_115 = arith.constant 0.000000e+00 : f32
    %366 = vector.broadcast %cst_115 : f32 to vector<16x32xf32>
    %367 = arith.minimumf %363, %366 : vector<16x32xf32>
    %368 = math.exp %367 : vector<16x32xf32>
    %cst_116 = arith.constant 1.000000e+00 : f32
    %369 = vector.broadcast %cst_116 : f32 to vector<16x32xf32>
    %370 = arith.subf %368, %369 : vector<16x32xf32>
    %cst_117 = arith.constant 1.000000e+00 : f32
    %371 = vector.broadcast %cst_117 : f32 to vector<16x32xf32>
    %372 = arith.mulf %371, %370 : vector<16x32xf32>
    %373 = arith.select %365, %363, %372 : vector<16x32xi1>, vector<16x32xf32>
    %c4 = arith.constant 4 : index
    %c0_118 = arith.constant 0 : index
    %c0_119 = arith.constant 0 : index
    %374 = vector.load %arg3[%c4, %c0_118, %c0_119] : memref<8x32x128xbf16, #tpu.memory_space<vmem>>, vector<1x8x64xbf16>
    %375 = vector.shape_cast %374 : vector<1x8x64xbf16> to vector<8x64xbf16>
    %c0_120 = arith.constant 0 : index
    %c4_121 = arith.constant 4 : index
    %376 = vector.load %arg4[%c0_120, %c4_121] : memref<32x8xf32, #tpu.memory_space<vmem>>, vector<8x1xf32>
    %377 = arith.truncf %373 : vector<16x32xf32> to vector<16x32xbf16>
    %cst_122 = arith.constant dense<0.000000e+00> : vector<16x70xf32>
    %378 = tpu.matmul %377, %1, %cst_122 {dimension_numbers = #tpu.dot_dimension_numbers<[1], [0], [0], [1], [0, 0, 1, 1], [], []>} : vector<16x32xbf16>, vector<32x70xbf16>, vector<16x70xf32> -> vector<16x70xf32>
    %379 = vector.extract_strided_slice %378 {offsets = [0, 0], sizes = [16, 64], strides = [1, 1]} : vector<16x70xf32> to vector<16x64xf32>
    %380 = vector.extract_strided_slice %378 {offsets = [0, 2], sizes = [16, 64], strides = [1, 1]} : vector<16x70xf32> to vector<16x64xf32>
    %381 = vector.extract_strided_slice %378 {offsets = [0, 4], sizes = [16, 64], strides = [1, 1]} : vector<16x70xf32> to vector<16x64xf32>
    %382 = vector.extract_strided_slice %378 {offsets = [0, 6], sizes = [16, 64], strides = [1, 1]} : vector<16x70xf32> to vector<16x64xf32>
    %383 = tpu.concatenate %379, %380, %381, %382 in 0 : vector<16x64xf32>, vector<16x64xf32>, vector<16x64xf32>, vector<16x64xf32> -> vector<64x64xf32>
    %384 = arith.truncf %383 : vector<64x64xf32> to vector<64x64xbf16>
    %cst_123 = arith.constant dense<0.000000e+00> : vector<8x64xf32>
    %385 = tpu.matmul %375, %384, %cst_123 {dimension_numbers = #tpu.dot_dimension_numbers<[1], [0], [0], [1], [0, 0, 1, 1], [], []>} : vector<8x64xbf16>, vector<64x64xbf16>, vector<8x64xf32> -> vector<8x64xf32>
    %386 = vector.broadcast %376 : vector<8x1xf32> to vector<8x64xf32>
    %387 = arith.addf %385, %386 : vector<8x64xf32>
    %cst_124 = arith.constant 0.000000e+00 : f32
    %388 = vector.broadcast %cst_124 : f32 to vector<8x64xf32>
    %389 = arith.cmpf ogt, %387, %388 : vector<8x64xf32>
    %cst_125 = arith.constant 0.000000e+00 : f32
    %390 = vector.broadcast %cst_125 : f32 to vector<8x64xf32>
    %391 = arith.minimumf %387, %390 : vector<8x64xf32>
    %392 = math.exp %391 : vector<8x64xf32>
    %cst_126 = arith.constant 1.000000e+00 : f32
    %393 = vector.broadcast %cst_126 : f32 to vector<8x64xf32>
    %394 = arith.subf %392, %393 : vector<8x64xf32>
    %cst_127 = arith.constant 1.000000e+00 : f32
    %395 = vector.broadcast %cst_127 : f32 to vector<8x64xf32>
    %396 = arith.mulf %395, %394 : vector<8x64xf32>
    %397 = arith.select %389, %387, %396 : vector<8x64xi1>, vector<8x64xf32>
    %c5 = arith.constant 5 : index
    %c0_128 = arith.constant 0 : index
    %c0_129 = arith.constant 0 : index
    %398 = vector.load %arg3[%c5, %c0_128, %c0_129] : memref<8x32x128xbf16, #tpu.memory_space<vmem>>, vector<1x4x24xbf16>
    %399 = vector.shape_cast %398 : vector<1x4x24xbf16> to vector<4x24xbf16>
    %c0_130 = arith.constant 0 : index
    %c5_131 = arith.constant 5 : index
    %400 = vector.load %arg4[%c0_130, %c5_131] : memref<32x8xf32, #tpu.memory_space<vmem>>, vector<4x1xf32>
    %cst_132 = arith.constant 0.000000e+00 : f32
    %401 = vector.broadcast %cst_132 : f32 to vector<8x2xf32>
    %cst_133 = arith.constant 0.000000e+00 : f32
    %402 = vector.broadcast %cst_133 : f32 to vector<8x2xf32>
    %403 = tpu.concatenate %401, %397, %402 in 1 : vector<8x2xf32>, vector<8x64xf32>, vector<8x2xf32> -> vector<8x68xf32>
    %404 = vector.extract_strided_slice %403 {offsets = [0, 0], sizes = [8, 64], strides = [1, 1]} : vector<8x68xf32> to vector<8x64xf32>
    %405 = vector.extract_strided_slice %403 {offsets = [0, 2], sizes = [8, 64], strides = [1, 1]} : vector<8x68xf32> to vector<8x64xf32>
    %406 = vector.extract_strided_slice %403 {offsets = [0, 4], sizes = [8, 64], strides = [1, 1]} : vector<8x68xf32> to vector<8x64xf32>
    %407 = tpu.concatenate %404, %405, %406 in 0 : vector<8x64xf32>, vector<8x64xf32>, vector<8x64xf32> -> vector<24x64xf32>
    %408 = arith.truncf %407 : vector<24x64xf32> to vector<24x64xbf16>
    %cst_134 = arith.constant dense<0.000000e+00> : vector<4x64xf32>
    %409 = tpu.matmul %399, %408, %cst_134 {dimension_numbers = #tpu.dot_dimension_numbers<[1], [0], [0], [1], [0, 0, 1, 1], [], []>} : vector<4x24xbf16>, vector<24x64xbf16>, vector<4x64xf32> -> vector<4x64xf32>
    %410 = vector.broadcast %400 : vector<4x1xf32> to vector<4x64xf32>
    %411 = arith.addf %409, %410 : vector<4x64xf32>
    %cst_135 = arith.constant 0.000000e+00 : f32
    %412 = vector.broadcast %cst_135 : f32 to vector<4x64xf32>
    %413 = arith.cmpf ogt, %411, %412 : vector<4x64xf32>
    %cst_136 = arith.constant 0.000000e+00 : f32
    %414 = vector.broadcast %cst_136 : f32 to vector<4x64xf32>
    %415 = arith.minimumf %411, %414 : vector<4x64xf32>
    %416 = math.exp %415 : vector<4x64xf32>
    %cst_137 = arith.constant 1.000000e+00 : f32
    %417 = vector.broadcast %cst_137 : f32 to vector<4x64xf32>
    %418 = arith.subf %416, %417 : vector<4x64xf32>
    %cst_138 = arith.constant 1.000000e+00 : f32
    %419 = vector.broadcast %cst_138 : f32 to vector<4x64xf32>
    %420 = arith.mulf %419, %418 : vector<4x64xf32>
    %421 = arith.select %413, %411, %420 : vector<4x64xi1>, vector<4x64xf32>
    %c6 = arith.constant 6 : index
    %c0_139 = arith.constant 0 : index
    %c0_140 = arith.constant 0 : index
    %422 = vector.load %arg3[%c6, %c0_139, %c0_140] : memref<8x32x128xbf16, #tpu.memory_space<vmem>>, vector<1x8x4xbf16>
    %423 = vector.shape_cast %422 : vector<1x8x4xbf16> to vector<8x4xbf16>
    %c0_141 = arith.constant 0 : index
    %c6_142 = arith.constant 6 : index
    %424 = vector.load %arg4[%c0_141, %c6_142] : memref<32x8xf32, #tpu.memory_space<vmem>>, vector<8x1xf32>
    %425 = arith.truncf %421 : vector<4x64xf32> to vector<4x64xbf16>
    %cst_143 = arith.constant dense<0.000000e+00> : vector<8x64xf32>
    %426 = tpu.matmul %423, %425, %cst_143 {dimension_numbers = #tpu.dot_dimension_numbers<[1], [0], [0], [1], [0, 0, 1, 1], [], []>} : vector<8x4xbf16>, vector<4x64xbf16>, vector<8x64xf32> -> vector<8x64xf32>
    %427 = vector.broadcast %424 : vector<8x1xf32> to vector<8x64xf32>
    %428 = arith.addf %426, %427 : vector<8x64xf32>
    %429 = arith.addf %387, %428 : vector<8x64xf32>
    %cst_144 = arith.constant 0.000000e+00 : f32
    %430 = vector.broadcast %cst_144 : f32 to vector<8x64xf32>
    %431 = arith.cmpf ogt, %429, %430 : vector<8x64xf32>
    %cst_145 = arith.constant 0.000000e+00 : f32
    %432 = vector.broadcast %cst_145 : f32 to vector<8x64xf32>
    %433 = arith.minimumf %429, %432 : vector<8x64xf32>
    %434 = math.exp %433 : vector<8x64xf32>
    %cst_146 = arith.constant 1.000000e+00 : f32
    %435 = vector.broadcast %cst_146 : f32 to vector<8x64xf32>
    %436 = arith.subf %434, %435 : vector<8x64xf32>
    %cst_147 = arith.constant 1.000000e+00 : f32
    %437 = vector.broadcast %cst_147 : f32 to vector<8x64xf32>
    %438 = arith.mulf %437, %436 : vector<8x64xf32>
    %439 = arith.select %431, %429, %438 : vector<8x64xi1>, vector<8x64xf32>
    %c7 = arith.constant 7 : index
    %c0_148 = arith.constant 0 : index
    %c0_149 = arith.constant 0 : index
    %440 = vector.load %arg3[%c7, %c0_148, %c0_149] : memref<8x32x128xbf16, #tpu.memory_space<vmem>>, vector<1x1x56xbf16>
    %441 = vector.shape_cast %440 : vector<1x1x56xbf16> to vector<1x56xbf16>
    %c0_150 = arith.constant 0 : index
    %c7_151 = arith.constant 7 : index
    %442 = vector.load %arg4[%c0_150, %c7_151] : memref<32x8xf32, #tpu.memory_space<vmem>>, vector<1x1xf32>
    %cst_152 = arith.constant 0.000000e+00 : f32
    %443 = vector.broadcast %cst_152 : f32 to vector<8x6xf32>
    %cst_153 = arith.constant 0.000000e+00 : f32
    %444 = vector.broadcast %cst_153 : f32 to vector<8x6xf32>
    %445 = tpu.concatenate %443, %439, %444 in 1 : vector<8x6xf32>, vector<8x64xf32>, vector<8x6xf32> -> vector<8x76xf32>
    %446 = vector.extract_strided_slice %445 {offsets = [0, 0], sizes = [8, 64], strides = [1, 1]} : vector<8x76xf32> to vector<8x64xf32>
    %447 = vector.extract_strided_slice %445 {offsets = [0, 2], sizes = [8, 64], strides = [1, 1]} : vector<8x76xf32> to vector<8x64xf32>
    %448 = vector.extract_strided_slice %445 {offsets = [0, 4], sizes = [8, 64], strides = [1, 1]} : vector<8x76xf32> to vector<8x64xf32>
    %449 = vector.extract_strided_slice %445 {offsets = [0, 6], sizes = [8, 64], strides = [1, 1]} : vector<8x76xf32> to vector<8x64xf32>
    %450 = vector.extract_strided_slice %445 {offsets = [0, 8], sizes = [8, 64], strides = [1, 1]} : vector<8x76xf32> to vector<8x64xf32>
    %451 = vector.extract_strided_slice %445 {offsets = [0, 10], sizes = [8, 64], strides = [1, 1]} : vector<8x76xf32> to vector<8x64xf32>
    %452 = vector.extract_strided_slice %445 {offsets = [0, 12], sizes = [8, 64], strides = [1, 1]} : vector<8x76xf32> to vector<8x64xf32>
    %453 = tpu.concatenate %446, %447, %448, %449, %450, %451, %452 in 0 : vector<8x64xf32>, vector<8x64xf32>, vector<8x64xf32>, vector<8x64xf32>, vector<8x64xf32>, vector<8x64xf32>, vector<8x64xf32> -> vector<56x64xf32>
    %454 = arith.truncf %453 : vector<56x64xf32> to vector<56x64xbf16>
    %cst_154 = arith.constant dense<0.000000e+00> : vector<1x64xf32>
    %455 = tpu.matmul %441, %454, %cst_154 {dimension_numbers = #tpu.dot_dimension_numbers<[1], [0], [0], [1], [0, 0, 1, 1], [], []>} : vector<1x56xbf16>, vector<56x64xbf16>, vector<1x64xf32> -> vector<1x64xf32>
    %456 = vector.broadcast %442 : vector<1x1xf32> to vector<1x64xf32>
    %457 = arith.addf %455, %456 : vector<1x64xf32>
    %458 = math.tanh %457 : vector<1x64xf32>
    %c0_155 = arith.constant 0 : index
    %c0_156 = arith.constant 0 : index
    %459 = vector.load %arg9[%c0_155, %c0_156] : memref<1x64xf32, #tpu.memory_space<vmem>>, vector<1x64xf32>
    tpu.vector_store %arg9[%c0_155, %c0_156], %458 {strides = array<i32>} : memref<1x64xf32, #tpu.memory_space<vmem>>, vector<1x64xf32>,
    return
  }
}

</mosaic_0001>

<llo_original>
// kernel: vae2_forward.3
$region0: #{vae2_forward.3}
  #allocation0 [shape = 'u32[]', space=smem, size = 0x4, offset = 0x4, fixed_abs, tag = 'smem constant byte address 0x4 - core index']
  #allocation1 [shape = 'u32[144,128]{1,0:T(1,128)}', space=vmem, size = 0x12000, scoped, tag = 'internal scratch']
  %s0 = inlined_call_operand.vmem [shape: f32[16,16], index: 0, kind: input, shape index: {}]
  %s1 = inlined_call_operand.vmem [shape: f32[16,16], index: 1, kind: input, shape index: {}]
  %s2 = inlined_call_operand.vmem [shape: f32[16,16], index: 2, kind: input, shape index: {}]
  %s3 = inlined_call_operand.vmem [shape: bf16[8,32,128], index: 3, kind: input, shape index: {}]
  %s4 = inlined_call_operand.vmem [shape: f32[32,8], index: 4, kind: input, shape index: {}]
  %s5 = inlined_call_operand.vmem [shape: bf16[1,128,64], index: 5, kind: input, shape index: {}]
  %s6 = inlined_call_operand.vmem [shape: f32[1,128,1], index: 6, kind: input, shape index: {}]
  %s7 = inlined_call_operand.vmem [shape: bf16[16,38], index: 7, kind: input, shape index: {}]
  %s8 = inlined_call_operand.vmem [shape: bf16[32,70], index: 8, kind: input, shape index: {}]
  %s9 = inlined_call_operand.vmem [shape: f32[1,64], index: 9, kind: output, shape index: {}]
  %s10 = sld [smem:[#allocation0]]
  $region46: #{vae2_forward.3} parent=0
    _
  %s12 = ssub.s32 1, %s10
  %s13 = scalar_select 0, %s12, %s10
  // Predicated region
  $region2: #{vae2_forward.3} parent=0 // pred_check
    _
  $region3: #{vae2_forward.3} parent=0 // pred_check_branch
    %15 = sbr.rel (0) target = $region5
  $region4: #{vae2_forward.3} parent=0 // pred_region
    _
  $region5: #{vae2_forward.3} parent=0 // pred_fallthru
    _
  // Predicated region
  $region6: #{vae2_forward.3} parent=0 // pred_check
    _
  $region7: #{vae2_forward.3} parent=0 // pred_check_branch
    %17 = sbr.rel (0) target = $region9
  $region8: #{vae2_forward.3} parent=0 // pred_region
    _
  $region9: #{vae2_forward.3} parent=0 // pred_fallthru
    _
  // Predicated region
  $region10: #{vae2_forward.3} parent=0 // pred_check
    _
  $region11: #{vae2_forward.3} parent=0 // pred_check_branch
    %19 = sbr.rel (0) target = $region13
  $region12: #{vae2_forward.3} parent=0 // pred_region
    _
  $region13: #{vae2_forward.3} parent=0 // pred_fallthru
    _
  // Predicated region
  $region14: #{vae2_forward.3} parent=0 // pred_check
    _
  $region15: #{vae2_forward.3} parent=0 // pred_check_branch
    %21 = sbr.rel (0) target = $region17
  $region16: #{vae2_forward.3} parent=0 // pred_region
    _
  $region17: #{vae2_forward.3} parent=0 // pred_fallthru
    _
  // Predicated region
  $region18: #{vae2_forward.3} parent=0 // pred_check
    _
  $region19: #{vae2_forward.3} parent=0 // pred_check_branch
    %23 = sbr.rel (0) target = $region21
  $region20: #{vae2_forward.3} parent=0 // pred_region
    _
  $region21: #{vae2_forward.3} parent=0 // pred_fallthru
    _
  // Predicated region
  $region22: #{vae2_forward.3} parent=0 // pred_check
    _
  $region23: #{vae2_forward.3} parent=0 // pred_check_branch
    %25 = sbr.rel (0) target = $region25
  $region24: #{vae2_forward.3} parent=0 // pred_region
    _
  $region25: #{vae2_forward.3} parent=0 // pred_fallthru
    _
  // Predicated region
  $region26: #{vae2_forward.3} parent=0 // pred_check
    _
  $region27: #{vae2_forward.3} parent=0 // pred_check_branch
    %27 = sbr.rel (0) target = $region29
  $region28: #{vae2_forward.3} parent=0 // pred_region
    _
  $region29: #{vae2_forward.3} parent=0 // pred_fallthru
    _
  // Predicated region
  $region30: #{vae2_forward.3} parent=0 // pred_check
    _
  $region31: #{vae2_forward.3} parent=0 // pred_check_branch
    %29 = sbr.rel (0) target = $region33
  $region32: #{vae2_forward.3} parent=0 // pred_region
    _
  $region33: #{vae2_forward.3} parent=0 // pred_fallthru
    _
  // Predicated region
  $region34: #{vae2_forward.3} parent=0 // pred_check
    _
  $region35: #{vae2_forward.3} parent=0 // pred_check_branch
    %31 = sbr.rel (0) target = $region37
  $region36: #{vae2_forward.3} parent=0 // pred_region
    _
  $region37: #{vae2_forward.3} parent=0 // pred_fallthru
    _
  %v33 = vld [vmem:[%s7] sm:$0xf]
  %v34 = vld [vmem:[%s7 + $0x4] sm:$0xf]
  %v35 = vld [vmem:[%s8] sm:$0xf]
  %v36 = vld [vmem:[%s8 + $0x4] sm:$0xf]
  %v37 = vld [vmem:[%s8 + $0x8] sm:$0xf]
  %v38 = vld [vmem:[%s8 + $0xc] sm:$0xf]
  %v39 = vld [vmem:[%s0] sm:$0xff]
  %v40 = vld [vmem:[%s0 + $0x8] sm:$0xff]
  %v41 = vld [vmem:[%s2] sm:$0xff]
  %v42 = vld [vmem:[%s2 + $0x8] sm:$0xff]
  %v43 = vld [vmem:[%s1] sm:$0xff]
  %v44 = vld [vmem:[%s1 + $0x8] sm:$0xff]
  %v45 = vmul.f32 %v43, 0.5
  %v46 = vmul.f32 %v44, 0.5
  %v47 = vmul.f32 %v45, 1.442695
  %v48 = vpow.pop %v47
  %v49 = vmul.f32 %v46, 1.442695
  %v50 = vpow.pop %v49
  %v51 = vmul.f32 %v41, %v48
  %v52 = vmul.f32 %v42, %v50
  %v53 = vadd.f32 %v39, %v51
  %v54 = vadd.f32 %v40, %v52
  %v55 = vld [vmem:[%s3] sm:$0xf]
  %v56 = vld [vmem:[%s3 + $0x4] sm:$0xf]
  %v57 = vld [vmem:[%s3 + $0x8] sm:$0xf]
  %v58 = vld [vmem:[%s3 + $0xc] sm:$0xf]
  %v59 = vld [vmem:[%s4] sm:$0xff]
  %v60 = vld [vmem:[%s4 + $0x8] sm:$0xff]
  %v61 = vld [vmem:[%s4 + $0x10] sm:$0xff]
  %v62 = vld [vmem:[%s4 + $0x18] sm:$0xff]
  %65 = vrot.lane.b32.xlu0 %v53, 6
  %v66 = vpop.permute.xlu0 %65
  %67 = vrot.lane.b32.xlu0 %v54, 6
  %v68 = vpop.permute.xlu0 %67
  %vm71 = vcmask 48128
  %v72 = vsel %vm71, 0.0, %v66
  %v73 = vsel %vm71, 0.0, %v68
  %vm74 = vcmask 179200
  %v75 = vsel %vm74, %v72, 0.0
  %v76 = vsel %vm74, %v73, 0.0
  %79 = vrot.lane.b32.xlu0 %v75, 126
  %v80 = vpop.permute.xlu0 %79
  %81 = vrot.lane.b32.xlu0 %v76, 126
  %v82 = vpop.permute.xlu0 %81
  %85 = vrot.lane.b32.xlu0 %v75, 124
  %v86 = vpop.permute.xlu0 %85
  %87 = vrot.lane.b32.xlu0 %v76, 124
  %v88 = vpop.permute.xlu0 %87
  %91 = vrot.lane.b32.xlu0 %v75, 122
  %v92 = vpop.permute.xlu0 %91
  %93 = vrot.lane.b32.xlu0 %v76, 122
  %v94 = vpop.permute.xlu0 %93
  %97 = vrot.lane.b32.xlu0 %v75, 120
  %v98 = vpop.permute.xlu0 %97
  %99 = vrot.lane.b32.xlu0 %v76, 120
  %v100 = vpop.permute.xlu0 %99
  %103 = vrot.lane.b32.xlu0 %v75, 118
  %v104 = vpop.permute.xlu0 %103
  %105 = vrot.lane.b32.xlu0 %v76, 118
  %v106 = vpop.permute.xlu0 %105
  %109 = vrot.lane.b32.xlu0 %v75, 116
  %v110 = vpop.permute.xlu0 %109
  %111 = vrot.lane.b32.xlu0 %v76, 116
  %v112 = vpop.permute.xlu0 %111
  %v115 = vpack.c.bf16 %v76, %v75
  %v116 = vpack.c.bf16 %v82, %v80
  %v117 = vpack.c.bf16 %v88, %v86
  %v118 = vpack.c.bf16 %v94, %v92
  %v119 = vpack.c.bf16 %v100, %v98
  %v120 = vpack.c.bf16 %v106, %v104
  %v121 = vpack.c.bf16 %v112, %v110
  %123 = vset.pattern.permute.xlu0 0
  %124 = vperm.xlu0 %123, %v59
  %v125 = vpop.permute.xlu0 %124
  %128 = vset.pattern.permute.xlu0 0
  %129 = vperm.xlu0 %128, %v60
  %v130 = vpop.permute.xlu0 %129
  %133 = vset.pattern.permute.xlu0 0
  %134 = vperm.xlu0 %133, %v61
  %v135 = vpop.permute.xlu0 %134
  %138 = vset.pattern.permute.xlu0 0
  %139 = vperm.xlu0 %138, %v62
  %v140 = vpop.permute.xlu0 %139
  %v146 = vunpack.c.l.b16 %v55
  %v147 = vunpack.c.l.b16 %v56
  %v148 = vunpack.c.l.b16 %v57
  %v149 = vunpack.c.l.b16 %v58
  %v150 = vpack.c.b16 %v147, %v146
  %v151 = vpack.c.b16 %v149, %v148
  %vm152 = vcmask 916480
  %v154 = vsel %vm152, %v150, 0
  %v157 = vsel %vm152, %v151, 0
  %159 = vmatprep.subr.bf16.mxu0 0
  %160 = vmatpush1.bf16.msra.mxu0 0
  %161 = vmatprep.subr.bf16.mxu0 0
  %162 = vmatpush1.bf16.msra.mxu0 %v121
  %163 = vmatprep.subr.bf16.mxu0 0
  %164 = vmatpush1.bf16.msra.mxu0 %v120
  %165 = vmatprep.subr.bf16.mxu0 0
  %166 = vmatpush1.bf16.msra.mxu0 %v119
  %167 = vmatprep.subr.bf16.mxu0 0
  %168 = vmatpush1.bf16.msra.mxu0 %v118
  %169 = vmatprep.subr.bf16.mxu0 0
  %170 = vmatpush1.bf16.msra.mxu0 %v117
  %171 = vmatprep.subr.bf16.mxu0 0
  %172 = vmatpush1.bf16.msra.mxu0 %v116
  %173 = vmatprep.subr.bf16.mxu0 0
  %174 = vmatpush1.bf16.msra.mxu0 %v115
  %175 = vmatprep.subr.bf16.mxu0 0
  %176 = vmatpush2.bf16.msra.mxu0 0
  %177 = vmatprep.subr.bf16.mxu0 0
  %178 = vmatpush2.bf16.msra.mxu0 0
  %179 = vmatprep.subr.bf16.mxu0 0
  %180 = vmatpush2.bf16.msra.mxu0 0
  %181 = vmatprep.subr.bf16.mxu0 0
  %182 = vmatpush2.bf16.msra.mxu0 0
  %183 = vmatprep.subr.bf16.mxu0 0
  %184 = vmatpush2.bf16.msra.mxu0 0
  %185 = vmatprep.subr.bf16.mxu0 0
  %186 = vmatpush2.bf16.msra.mxu0 0
  %187 = vmatprep.subr.bf16.mxu0 0
  %188 = vmatpush2.bf16.msra.mxu0 0
  %189 = vmatprep.subr.bf16.mxu0 0
  %190 = vmatpush2.bf16.msra.mxu0 0
  %191 = vmatprep.mubr.bf16.mxu0 0
  %192 = vmatmul.mubr.bf16.gmra.mxu0 %v154
  %v193 = vpop.f32.mrf.mxu0
  %v194 = vadd.f32 %v125, %v193
  %v195 = vpop.f32.mrf.mxu0
  %v196 = vpop.f32.mrf.mxu0
  %v197 = vadd.f32 %v130, %v196
  %v198 = vpop.f32.mrf.mxu0
  %199 = vmatprep.mubr.bf16.mxu0 0
  %200 = vmatmul.mubr.bf16.gmra.mxu0 %v157
  %v201 = vpop.f32.mrf.mxu0
  %v202 = vadd.f32 %v135, %v201
  %v203 = vpop.f32.mrf.mxu0
  %v204 = vpop.f32.mrf.mxu0
  %v205 = vadd.f32 %v140, %v204
  %v206 = vpop.f32.mrf.mxu0
  %207 = vdwg.mxu0
  %v208 = vld [vmem:[%s5] sm:$0xf]
  %v209 = vld [vmem:[%s5 + $0x4] sm:$0xf]
  %v210 = vld [vmem:[%s5 + $0x8] sm:$0xf]
  %v211 = vld [vmem:[%s5 + $0xc] sm:$0xf]
  %v212 = vld [vmem:[%s5 + $0x10] sm:$0xf]
  %v213 = vld [vmem:[%s5 + $0x14] sm:$0xf]
  %v214 = vld [vmem:[%s5 + $0x18] sm:$0xf]
  %v215 = vld [vmem:[%s5 + $0x1c] sm:$0xf]
  %v216 = vld [vmem:[%s5 + $0x20] sm:$0xf]
  %v217 = vld [vmem:[%s5 + $0x24] sm:$0xf]
  %v218 = vld [vmem:[%s5 + $0x28] sm:$0xf]
  %v219 = vld [vmem:[%s5 + $0x2c] sm:$0xf]
  %v220 = vld [vmem:[%s5 + $0x30] sm:$0xf]
  %v221 = vld [vmem:[%s5 + $0x34] sm:$0xf]
  %v222 = vld [vmem:[%s5 + $0x38] sm:$0xf]
  %v223 = vld [vmem:[%s5 + $0x3c] sm:$0xf]
  %v224 = vld [vmem:[%s6] sm:$0xff]
  %v225 = vld [vmem:[%s6 + $0x8] sm:$0xff]
  %v226 = vld [vmem:[%s6 + $0x10] sm:$0xff]
  %v227 = vld [vmem:[%s6 + $0x18] sm:$0xff]
  %v228 = vld [vmem:[%s6 + $0x20] sm:$0xff]
  %v229 = vld [vmem:[%s6 + $0x28] sm:$0xff]
  %v230 = vld [vmem:[%s6 + $0x30] sm:$0xff]
  %v231 = vld [vmem:[%s6 + $0x38] sm:$0xff]
  %v232 = vld [vmem:[%s6 + $0x40] sm:$0xff]
  %v233 = vld [vmem:[%s6 + $0x48] sm:$0xff]
  %v234 = vld [vmem:[%s6 + $0x50] sm:$0xff]
  %v235 = vld [vmem:[%s6 + $0x58] sm:$0xff]
  %v236 = vld [vmem:[%s6 + $0x60] sm:$0xff]
  %v237 = vld [vmem:[%s6 + $0x68] sm:$0xff]
  %v238 = vld [vmem:[%s6 + $0x70] sm:$0xff]
  %v239 = vld [vmem:[%s6 + $0x78] sm:$0xff]
  %v240 = vpack.c.bf16 %v197, %v194
  %v241 = vpack.c.bf16 %v205, %v202
  %243 = vset.pattern.permute.xlu0 0
  %244 = vperm.xlu0 %243, %v224
  %v245 = vpop.permute.xlu0 %244
  %248 = vset.pattern.permute.xlu0 0
  %249 = vperm.xlu0 %248, %v225
  %v250 = vpop.permute.xlu0 %249
  %253 = vset.pattern.permute.xlu0 0
  %254 = vperm.xlu0 %253, %v226
  %v255 = vpop.permute.xlu0 %254
  %258 = vset.pattern.permute.xlu0 0
  %259 = vperm.xlu0 %258, %v227
  %v260 = vpop.permute.xlu0 %259
  %263 = vset.pattern.permute.xlu0 0
  %264 = vperm.xlu0 %263, %v228
  %v265 = vpop.permute.xlu0 %264
  %268 = vset.pattern.permute.xlu0 0
  %269 = vperm.xlu0 %268, %v229
  %v270 = vpop.permute.xlu0 %269
  %273 = vset.pattern.permute.xlu0 0
  %274 = vperm.xlu0 %273, %v230
  %v275 = vpop.permute.xlu0 %274
  %278 = vset.pattern.permute.xlu0 0
  %279 = vperm.xlu0 %278, %v231
  %v280 = vpop.permute.xlu0 %279
  %283 = vset.pattern.permute.xlu0 0
  %284 = vperm.xlu0 %283, %v232
  %v285 = vpop.permute.xlu0 %284
  %288 = vset.pattern.permute.xlu0 0
  %289 = vperm.xlu0 %288, %v233
  %v290 = vpop.permute.xlu0 %289
  %293 = vset.pattern.permute.xlu0 0
  %294 = vperm.xlu0 %293, %v234
  %v295 = vpop.permute.xlu0 %294
  %298 = vset.pattern.permute.xlu0 0
  %299 = vperm.xlu0 %298, %v235
  %v300 = vpop.permute.xlu0 %299
  %303 = vset.pattern.permute.xlu0 0
  %304 = vperm.xlu0 %303, %v236
  %v305 = vpop.permute.xlu0 %304
  %308 = vset.pattern.permute.xlu0 0
  %309 = vperm.xlu0 %308, %v237
  %v310 = vpop.permute.xlu0 %309
  %313 = vset.pattern.permute.xlu0 0
  %314 = vperm.xlu0 %313, %v238
  %v315 = vpop.permute.xlu0 %314
  %318 = vset.pattern.permute.xlu0 0
  %319 = vperm.xlu0 %318, %v239
  %v320 = vpop.permute.xlu0 %319
  %v338 = vunpack.c.l.b16 %v208
  %v339 = vunpack.c.l.b16 %v209
  %v340 = vunpack.c.l.b16 %v210
  %v341 = vunpack.c.l.b16 %v211
  %v342 = vunpack.c.l.b16 %v212
  %v343 = vunpack.c.l.b16 %v213
  %v344 = vunpack.c.l.b16 %v214
  %v345 = vunpack.c.l.b16 %v215
  %v346 = vunpack.c.l.b16 %v216
  %v347 = vunpack.c.l.b16 %v217
  %v348 = vunpack.c.l.b16 %v218
  %v349 = vunpack.c.l.b16 %v219
  %v350 = vunpack.c.l.b16 %v220
  %v351 = vunpack.c.l.b16 %v221
  %v352 = vunpack.c.l.b16 %v222
  %v353 = vunpack.c.l.b16 %v223
  %v354 = vpack.c.b16 %v339, %v338
  %v355 = vpack.c.b16 %v341, %v340
  %v356 = vpack.c.b16 %v343, %v342
  %v357 = vpack.c.b16 %v345, %v344
  %v358 = vpack.c.b16 %v347, %v346
  %v359 = vpack.c.b16 %v349, %v348
  %v360 = vpack.c.b16 %v351, %v350
  %v361 = vpack.c.b16 %v353, %v352
  %vm362 = vcmask 261120
  %v364 = vsel %vm362, %v354, 0
  %v367 = vsel %vm362, %v355, 0
  %v370 = vsel %vm362, %v356, 0
  %v373 = vsel %vm362, %v357, 0
  %v376 = vsel %vm362, %v358, 0
  %v379 = vsel %vm362, %v359, 0
  %v382 = vsel %vm362, %v360, 0
  %v385 = vsel %vm362, %v361, 0
  %387 = vmatprep.subr.bf16.mxu0 0
  %388 = vmatpush1.bf16.msra.mxu0 0
  %389 = vmatprep.subr.bf16.mxu0 0
  %390 = vmatpush1.bf16.msra.mxu0 0
  %391 = vmatprep.subr.bf16.mxu0 0
  %392 = vmatpush1.bf16.msra.mxu0 0
  %393 = vmatprep.subr.bf16.mxu0 0
  %394 = vmatpush1.bf16.msra.mxu0 0
  %395 = vmatprep.subr.bf16.mxu0 0
  %396 = vmatpush1.bf16.msra.mxu0 0
  %397 = vmatprep.subr.bf16.mxu0 0
  %398 = vmatpush1.bf16.msra.mxu0 0
  %399 = vmatprep.subr.bf16.mxu0 0
  %400 = vmatpush1.bf16.msra.mxu0 %v241
  %401 = vmatprep.subr.bf16.mxu0 0
  %402 = vmatpush1.bf16.msra.mxu0 %v240
  %403 = vmatprep.subr.bf16.mxu0 0
  %404 = vmatpush2.bf16.msra.mxu0 0
  %405 = vmatprep.subr.bf16.mxu0 0
  %406 = vmatpush2.bf16.msra.mxu0 0
  %407 = vmatprep.subr.bf16.mxu0 0
  %408 = vmatpush2.bf16.msra.mxu0 0
  %409 = vmatprep.subr.bf16.mxu0 0
  %410 = vmatpush2.bf16.msra.mxu0 0
  %411 = vmatprep.subr.bf16.mxu0 0
  %412 = vmatpush2.bf16.msra.mxu0 0
  %413 = vmatprep.subr.bf16.mxu0 0
  %414 = vmatpush2.bf16.msra.mxu0 0
  %415 = vmatprep.subr.bf16.mxu0 0
  %416 = vmatpush2.bf16.msra.mxu0 0
  %417 = vmatprep.subr.bf16.mxu0 0
  %418 = vmatpush2.bf16.msra.mxu0 0
  %419 = vmatprep.mubr.bf16.mxu0 0
  %420 = vmatmul.mubr.bf16.gmra.mxu0 %v364
  %v421 = vpop.f32.mrf.mxu0
  %v422 = vadd.f32 %v245, %v421
  %v423 = vpop.f32.mrf.mxu0
  %v424 = vpop.f32.mrf.mxu0
  %v425 = vadd.f32 %v250, %v424
  %v426 = vpop.f32.mrf.mxu0
  %427 = vmatprep.mubr.bf16.mxu0 0
  %428 = vmatmul.mubr.bf16.gmra.mxu0 %v367
  %v429 = vpop.f32.mrf.mxu0
  %v430 = vadd.f32 %v255, %v429
  %v431 = vpop.f32.mrf.mxu0
  %v432 = vpop.f32.mrf.mxu0
  %v433 = vadd.f32 %v260, %v432
  %v434 = vpop.f32.mrf.mxu0
  %435 = vmatprep.mubr.bf16.mxu0 0
  %436 = vmatmul.mubr.bf16.gmra.mxu0 %v370
  %v437 = vpop.f32.mrf.mxu0
  %v438 = vadd.f32 %v265, %v437
  %v439 = vpop.f32.mrf.mxu0
  %v440 = vpop.f32.mrf.mxu0
  %v441 = vadd.f32 %v270, %v440
  %v442 = vpop.f32.mrf.mxu0
  %443 = vmatprep.mubr.bf16.mxu0 0
  %444 = vmatmul.mubr.bf16.gmra.mxu0 %v373
  %v445 = vpop.f32.mrf.mxu0
  %v446 = vadd.f32 %v275, %v445
  %v447 = vpop.f32.mrf.mxu0
  %v448 = vpop.f32.mrf.mxu0
  %v449 = vadd.f32 %v280, %v448
  %v450 = vpop.f32.mrf.mxu0
  %451 = vmatprep.mubr.bf16.mxu0 0
  %452 = vmatmul.mubr.bf16.gmra.mxu0 %v376
  %v453 = vpop.f32.mrf.mxu0
  %v454 = vadd.f32 %v285, %v453
  %v455 = vpop.f32.mrf.mxu0
  %v456 = vpop.f32.mrf.mxu0
  %v457 = vadd.f32 %v290, %v456
  %v458 = vpop.f32.mrf.mxu0
  %459 = vmatprep.mubr.bf16.mxu0 0
  %460 = vmatmul.mubr.bf16.gmra.mxu0 %v379
  %v461 = vpop.f32.mrf.mxu0
  %v462 = vadd.f32 %v295, %v461
  %v463 = vpop.f32.mrf.mxu0
  %v464 = vpop.f32.mrf.mxu0
  %v465 = vadd.f32 %v300, %v464
  %v466 = vpop.f32.mrf.mxu0
  %467 = vmatprep.mubr.bf16.mxu0 0
  %468 = vmatmul.mubr.bf16.gmra.mxu0 %v382
  %v469 = vpop.f32.mrf.mxu0
  %v470 = vadd.f32 %v305, %v469
  %v471 = vpop.f32.mrf.mxu0
  %v472 = vpop.f32.mrf.mxu0
  %v473 = vadd.f32 %v310, %v472
  %v474 = vpop.f32.mrf.mxu0
  %475 = vmatprep.mubr.bf16.mxu0 0
  %476 = vmatmul.mubr.bf16.gmra.mxu0 %v385
  %v477 = vpop.f32.mrf.mxu0
  %v478 = vadd.f32 %v315, %v477
  %v479 = vpop.f32.mrf.mxu0
  %v480 = vpop.f32.mrf.mxu0
  %v481 = vadd.f32 %v320, %v480
  %v482 = vpop.f32.mrf.mxu0
  %483 = vdwg.mxu0
  %484 = vrot.lane.b32.xlu0 %v354, 96
  %v485 = vpop.permute.xlu0 %484
  %486 = vrot.lane.b32.xlu0 %v355, 96
  %v487 = vpop.permute.xlu0 %486
  %488 = vrot.lane.b32.xlu0 %v356, 96
  %v489 = vpop.permute.xlu0 %488
  %490 = vrot.lane.b32.xlu0 %v357, 96
  %v491 = vpop.permute.xlu0 %490
  %492 = vrot.lane.b32.xlu0 %v358, 96
  %v493 = vpop.permute.xlu0 %492
  %494 = vrot.lane.b32.xlu0 %v359, 96
  %v495 = vpop.permute.xlu0 %494
  %496 = vrot.lane.b32.xlu0 %v360, 96
  %v497 = vpop.permute.xlu0 %496
  %498 = vrot.lane.b32.xlu0 %v361, 96
  %v499 = vpop.permute.xlu0 %498
  %v501 = vsel %vm362, %v485, 0
  %v504 = vsel %vm362, %v487, 0
  %v507 = vsel %vm362, %v489, 0
  %v510 = vsel %vm362, %v491, 0
  %v513 = vsel %vm362, %v493, 0
  %v516 = vsel %vm362, %v495, 0
  %v519 = vsel %vm362, %v497, 0
  %v522 = vsel %vm362, %v499, 0
  %524 = vmatprep.subr.bf16.mxu0 0
  %525 = vmatpush1.bf16.msra.mxu0 0
  %526 = vmatprep.subr.bf16.mxu0 0
  %527 = vmatpush1.bf16.msra.mxu0 0
  %528 = vmatprep.subr.bf16.mxu0 0
  %529 = vmatpush1.bf16.msra.mxu0 0
  %530 = vmatprep.subr.bf16.mxu0 0
  %531 = vmatpush1.bf16.msra.mxu0 0
  %532 = vmatprep.subr.bf16.mxu0 0
  %533 = vmatpush1.bf16.msra.mxu0 0
  %534 = vmatprep.subr.bf16.mxu0 0
  %535 = vmatpush1.bf16.msra.mxu0 0
  %536 = vmatprep.subr.bf16.mxu0 0
  %537 = vmatpush1.bf16.msra.mxu0 0
  %538 = vmatprep.subr.bf16.mxu0 0
  %539 = vmatpush1.bf16.msra.mxu0 0
  %540 = vmatprep.subr.bf16.mxu0 0
  %541 = vmatpush2.bf16.msra.mxu0 0
  %542 = vmatprep.subr.bf16.mxu0 0
  %543 = vmatpush2.bf16.msra.mxu0 0
  %544 = vmatprep.subr.bf16.mxu0 0
  %545 = vmatpush2.bf16.msra.mxu0 0
  %546 = vmatprep.subr.bf16.mxu0 0
  %547 = vmatpush2.bf16.msra.mxu0 0
  %548 = vmatprep.subr.bf16.mxu0 0
  %549 = vmatpush2.bf16.msra.mxu0 0
  %550 = vmatprep.subr.bf16.mxu0 0
  %551 = vmatpush2.bf16.msra.mxu0 0
  %552 = vmatprep.subr.bf16.mxu0 0
  %553 = vmatpush2.bf16.msra.mxu0 0
  %554 = vmatprep.subr.bf16.mxu0 0
  %555 = vmatpush2.bf16.msra.mxu0 0
  %556 = vmatprep.mubr.bf16.mxu0 0
  %557 = vmatmul.mubr.bf16.gmra.mxu0 %v501
  %v558 = vpop.f32.mrf.mxu0
  %v559 = vadd.f32 0.0, %v558
  %v560 = vpop.f32.mrf.mxu0
  %v561 = vpop.f32.mrf.mxu0
  %v562 = vadd.f32 0.0, %v561
  %v563 = vpop.f32.mrf.mxu0
  %564 = vmatprep.mubr.bf16.mxu0 0
  %565 = vmatmul.mubr.bf16.gmra.mxu0 %v504
  %v566 = vpop.f32.mrf.mxu0
  %v567 = vadd.f32 0.0, %v566
  %v568 = vpop.f32.mrf.mxu0
  %v569 = vpop.f32.mrf.mxu0
  %v570 = vadd.f32 0.0, %v569
  %v571 = vpop.f32.mrf.mxu0
  %572 = vmatprep.mubr.bf16.mxu0 0
  %573 = vmatmul.mubr.bf16.gmra.mxu0 %v507
  %v574 = vpop.f32.mrf.mxu0
  %v575 = vadd.f32 0.0, %v574
  %v576 = vpop.f32.mrf.mxu0
  %v577 = vpop.f32.mrf.mxu0
  %v578 = vadd.f32 0.0, %v577
  %v579 = vpop.f32.mrf.mxu0
  %580 = vmatprep.mubr.bf16.mxu0 0
  %581 = vmatmul.mubr.bf16.gmra.mxu0 %v510
  %v582 = vpop.f32.mrf.mxu0
  %v583 = vadd.f32 0.0, %v582
  %v584 = vpop.f32.mrf.mxu0
  %v585 = vpop.f32.mrf.mxu0
  %v586 = vadd.f32 0.0, %v585
  %v587 = vpop.f32.mrf.mxu0
  %588 = vmatprep.mubr.bf16.mxu0 0
  %589 = vmatmul.mubr.bf16.gmra.mxu0 %v513
  %v590 = vpop.f32.mrf.mxu0
  %v591 = vadd.f32 0.0, %v590
  %v592 = vpop.f32.mrf.mxu0
  %v593 = vpop.f32.mrf.mxu0
  %v594 = vadd.f32 0.0, %v593
  %v595 = vpop.f32.mrf.mxu0
  %596 = vmatprep.mubr.bf16.mxu0 0
  %597 = vmatmul.mubr.bf16.gmra.mxu0 %v516
  %v598 = vpop.f32.mrf.mxu0
  %v599 = vadd.f32 0.0, %v598
  %v600 = vpop.f32.mrf.mxu0
  %v601 = vpop.f32.mrf.mxu0
  %v602 = vadd.f32 0.0, %v601
  %v603 = vpop.f32.mrf.mxu0
  %604 = vmatprep.mubr.bf16.mxu0 0
  %605 = vmatmul.mubr.bf16.gmra.mxu0 %v519
  %v606 = vpop.f32.mrf.mxu0
  %v607 = vadd.f32 0.0, %v606
  %v608 = vpop.f32.mrf.mxu0
  %v609 = vpop.f32.mrf.mxu0
  %v610 = vadd.f32 0.0, %v609
  %v611 = vpop.f32.mrf.mxu0
  %612 = vmatprep.mubr.bf16.mxu0 0
  %613 = vmatmul.mubr.bf16.gmra.mxu0 %v522
  %v614 = vpop.f32.mrf.mxu0
  %v615 = vadd.f32 0.0, %v614
  %v616 = vpop.f32.mrf.mxu0
  %v617 = vpop.f32.mrf.mxu0
  %v618 = vadd.f32 0.0, %v617
  %v619 = vpop.f32.mrf.mxu0
  %620 = vdwg.mxu0
  %v621 = vadd.f32 %v422, %v559
  %v622 = vadd.f32 %v425, %v562
  %v623 = vadd.f32 %v430, %v567
  %v624 = vadd.f32 %v433, %v570
  %v625 = vadd.f32 %v438, %v575
  %v626 = vadd.f32 %v441, %v578
  %v627 = vadd.f32 %v446, %v583
  %v628 = vadd.f32 %v449, %v586
  %v629 = vadd.f32 %v454, %v591
  %v630 = vadd.f32 %v457, %v594
  %v631 = vadd.f32 %v462, %v599
  %v632 = vadd.f32 %v465, %v602
  %v633 = vadd.f32 %v470, %v607
  %v634 = vadd.f32 %v473, %v610
  %v635 = vadd.f32 %v478, %v615
  %v636 = vadd.f32 %v481, %v618
  %v637 = vsub.f32 0.0, %v621
  %v638 = vsub.f32 0.0, %v622
  %v639 = vsub.f32 0.0, %v623
  %v640 = vsub.f32 0.0, %v624
  %v641 = vmul.f32 %v637, 1.442695
  %v642 = vpow.pop %v641
  %v643 = vmul.f32 %v638, 1.442695
  %v644 = vpow.pop %v643
  %v645 = vmul.f32 %v639, 1.442695
  %v646 = vpow.pop %v645
  %v647 = vmul.f32 %v640, 1.442695
  %v648 = vpow.pop %v647
  %v649 = vadd.f32 %v642, 1.0
  %v650 = vadd.f32 %v644, 1.0
  %v651 = vadd.f32 %v646, 1.0
  %v652 = vadd.f32 %v648, 1.0
  %v653 = vrcp.pop %v649
  %v654 = vrcp.pop %v650
  %v655 = vrcp.pop %v651
  %v656 = vrcp.pop %v652
  %v657 = vsub.f32 0.0, %v625
  %v658 = vsub.f32 0.0, %v626
  %v659 = vsub.f32 0.0, %v627
  %v660 = vsub.f32 0.0, %v628
  %v661 = vmul.f32 %v657, 1.442695
  %v662 = vpow.pop %v661
  %v663 = vmul.f32 %v658, 1.442695
  %v664 = vpow.pop %v663
  %v665 = vmul.f32 %v659, 1.442695
  %v666 = vpow.pop %v665
  %v667 = vmul.f32 %v660, 1.442695
  %v668 = vpow.pop %v667
  %v669 = vadd.f32 %v662, 1.0
  %v670 = vadd.f32 %v664, 1.0
  %v671 = vadd.f32 %v666, 1.0
  %v672 = vadd.f32 %v668, 1.0
  %v673 = vrcp.pop %v669
  %v674 = vrcp.pop %v670
  %v675 = vrcp.pop %v671
  %v676 = vrcp.pop %v672
  %v677 = vtanh.pop %v629
  %v678 = vtanh.pop %v630
  %v679 = vtanh.pop %v631
  %v680 = vtanh.pop %v632
  %v681 = vsub.f32 0.0, %v633
  %v682 = vsub.f32 0.0, %v634
  %v683 = vsub.f32 0.0, %v635
  %v684 = vsub.f32 0.0, %v636
  %v685 = vmul.f32 %v681, 1.442695
  %v686 = vpow.pop %v685
  %v687 = vmul.f32 %v682, 1.442695
  %v688 = vpow.pop %v687
  %v689 = vmul.f32 %v683, 1.442695
  %v690 = vpow.pop %v689
  %v691 = vmul.f32 %v684, 1.442695
  %v692 = vpow.pop %v691
  %v693 = vadd.f32 %v686, 1.0
  %v694 = vadd.f32 %v688, 1.0
  %v695 = vadd.f32 %v690, 1.0
  %v696 = vadd.f32 %v692, 1.0
  %v697 = vrcp.pop %v693
  %v698 = vrcp.pop %v694
  %v699 = vrcp.pop %v695
  %v700 = vrcp.pop %v696
  %v701 = vmul.f32 %v673, 0.0
  %v702 = vmul.f32 %v674, 0.0
  %v703 = vmul.f32 %v675, 0.0
  %v704 = vmul.f32 %v676, 0.0
  %v705 = vmul.f32 %v653, %v677
  %v706 = vmul.f32 %v654, %v678
  %v707 = vmul.f32 %v655, %v679
  %v708 = vmul.f32 %v656, %v680
  %v709 = vadd.f32 %v701, %v705
  %v710 = vadd.f32 %v702, %v706
  %v711 = vadd.f32 %v703, %v707
  %v712 = vadd.f32 %v704, %v708
  %v713 = vtanh.pop %v709
  %v714 = vtanh.pop %v710
  %v715 = vtanh.pop %v711
  %v716 = vtanh.pop %v712
  %v717 = vmul.f32 %v697, %v713
  %v718 = vmul.f32 %v698, %v714
  %v719 = vmul.f32 %v699, %v715
  %v720 = vmul.f32 %v700, %v716
  %v721 = vpack.c.bf16 %v718, %v717
  %v722 = vpack.c.bf16 %v720, %v719
  %723 = vmatprep.subr.bf16.mxu0 0
  %724 = vmatpush1.bf16.msra.mxu0 0
  %725 = vmatprep.subr.bf16.mxu0 0
  %726 = vmatpush1.bf16.msra.mxu0 0
  %727 = vmatprep.subr.bf16.mxu0 0
  %728 = vmatpush1.bf16.msra.mxu0 0
  %729 = vmatprep.subr.bf16.mxu0 0
  %730 = vmatpush1.bf16.msra.mxu0 0
  %731 = vmatprep.subr.bf16.mxu0 0
  %732 = vmatpush1.bf16.msra.mxu0 0
  %733 = vmatprep.subr.bf16.mxu0 0
  %734 = vmatpush1.bf16.msra.mxu0 0
  %735 = vmatprep.subr.bf16.mxu0 0
  %736 = vmatpush1.bf16.msra.mxu0 %v722
  %737 = vmatprep.subr.bf16.mxu0 0
  %738 = vmatpush1.bf16.msra.mxu0 %v721
  %739 = vmatprep.subr.bf16.mxu0 0
  %740 = vmatpush2.bf16.msra.mxu0 0
  %741 = vmatprep.subr.bf16.mxu0 0
  %742 = vmatpush2.bf16.msra.mxu0 0
  %743 = vmatprep.subr.bf16.mxu0 0
  %744 = vmatpush2.bf16.msra.mxu0 0
  %745 = vmatprep.subr.bf16.mxu0 0
  %746 = vmatpush2.bf16.msra.mxu0 0
  %747 = vmatprep.subr.bf16.mxu0 0
  %748 = vmatpush2.bf16.msra.mxu0 0
  %749 = vmatprep.subr.bf16.mxu0 0
  %750 = vmatpush2.bf16.msra.mxu0 0
  %751 = vmatprep.subr.bf16.mxu0 0
  %752 = vmatpush2.bf16.msra.mxu0 0
  %753 = vmatprep.subr.bf16.mxu0 0
  %754 = vmatpush2.bf16.msra.mxu0 0
  %755 = vmatprep.mubr.bf16.mxu0 0
  %756 = vmatmul.mubr.bf16.gmra.mxu0 %v501
  %v757 = vpop.f32.mrf.mxu0
  %v758 = vadd.f32 0.0, %v757
  %v759 = vpop.f32.mrf.mxu0
  %v760 = vpop.f32.mrf.mxu0
  %v761 = vadd.f32 0.0, %v760
  %v762 = vpop.f32.mrf.mxu0
  %763 = vmatprep.mubr.bf16.mxu0 0
  %764 = vmatmul.mubr.bf16.gmra.mxu0 %v504
  %v765 = vpop.f32.mrf.mxu0
  %v766 = vadd.f32 0.0, %v765
  %v767 = vpop.f32.mrf.mxu0
  %v768 = vpop.f32.mrf.mxu0
  %v769 = vadd.f32 0.0, %v768
  %v770 = vpop.f32.mrf.mxu0
  %771 = vmatprep.mubr.bf16.mxu0 0
  %772 = vmatmul.mubr.bf16.gmra.mxu0 %v507
  %v773 = vpop.f32.mrf.mxu0
  %v774 = vadd.f32 0.0, %v773
  %v775 = vpop.f32.mrf.mxu0
  %v776 = vpop.f32.mrf.mxu0
  %v777 = vadd.f32 0.0, %v776
  %v778 = vpop.f32.mrf.mxu0
  %779 = vmatprep.mubr.bf16.mxu0 0
  %780 = vmatmul.mubr.bf16.gmra.mxu0 %v510
  %v781 = vpop.f32.mrf.mxu0
  %v782 = vadd.f32 0.0, %v781
  %v783 = vpop.f32.mrf.mxu0
  %v784 = vpop.f32.mrf.mxu0
  %v785 = vadd.f32 0.0, %v784
  %v786 = vpop.f32.mrf.mxu0
  %787 = vmatprep.mubr.bf16.mxu0 0
  %788 = vmatmul.mubr.bf16.gmra.mxu0 %v513
  %v789 = vpop.f32.mrf.mxu0
  %v790 = vadd.f32 0.0, %v789
  %v791 = vpop.f32.mrf.mxu0
  %v792 = vpop.f32.mrf.mxu0
  %v793 = vadd.f32 0.0, %v792
  %v794 = vpop.f32.mrf.mxu0
  %795 = vmatprep.mubr.bf16.mxu0 0
  %796 = vmatmul.mubr.bf16.gmra.mxu0 %v516
  %v797 = vpop.f32.mrf.mxu0
  %v798 = vadd.f32 0.0, %v797
  %v799 = vpop.f32.mrf.mxu0
  %v800 = vpop.f32.mrf.mxu0
  %v801 = vadd.f32 0.0, %v800
  %v802 = vpop.f32.mrf.mxu0
  %803 = vmatprep.mubr.bf16.mxu0 0
  %804 = vmatmul.mubr.bf16.gmra.mxu0 %v519
  %v805 = vpop.f32.mrf.mxu0
  %v806 = vadd.f32 0.0, %v805
  %v807 = vpop.f32.mrf.mxu0
  %v808 = vpop.f32.mrf.mxu0
  %v809 = vadd.f32 0.0, %v808
  %v810 = vpop.f32.mrf.mxu0
  %811 = vmatprep.mubr.bf16.mxu0 0
  %812 = vmatmul.mubr.bf16.gmra.mxu0 %v522
  %v813 = vpop.f32.mrf.mxu0
  %v814 = vadd.f32 0.0, %v813
  %v815 = vpop.f32.mrf.mxu0
  %v816 = vpop.f32.mrf.mxu0
  %v817 = vadd.f32 0.0, %v816
  %v818 = vpop.f32.mrf.mxu0
  %819 = vdwg.mxu0
  %836 = vrot.lane.b32.xlu0 %v758, 2
  %v837 = vpop.permute.xlu0 %836
  %838 = vrot.lane.b32.xlu0 %v761, 2
  %v839 = vpop.permute.xlu0 %838
  %840 = vrot.lane.b32.xlu0 %v766, 2
  %v841 = vpop.permute.xlu0 %840
  %842 = vrot.lane.b32.xlu0 %v769, 2
  %v843 = vpop.permute.xlu0 %842
  %844 = vrot.lane.b32.xlu0 %v774, 2
  %v845 = vpop.permute.xlu0 %844
  %846 = vrot.lane.b32.xlu0 %v777, 2
  %v847 = vpop.permute.xlu0 %846
  %848 = vrot.lane.b32.xlu0 %v782, 2
  %v849 = vpop.permute.xlu0 %848
  %850 = vrot.lane.b32.xlu0 %v785, 2
  %v851 = vpop.permute.xlu0 %850
  %852 = vrot.lane.b32.xlu0 %v790, 2
  %v853 = vpop.permute.xlu0 %852
  %854 = vrot.lane.b32.xlu0 %v793, 2
  %v855 = vpop.permute.xlu0 %854
  %856 = vrot.lane.b32.xlu0 %v798, 2
  %v857 = vpop.permute.xlu0 %856
  %858 = vrot.lane.b32.xlu0 %v801, 2
  %v859 = vpop.permute.xlu0 %858
  %860 = vrot.lane.b32.xlu0 %v806, 2
  %v861 = vpop.permute.xlu0 %860
  %862 = vrot.lane.b32.xlu0 %v809, 2
  %v863 = vpop.permute.xlu0 %862
  %864 = vrot.lane.b32.xlu0 %v814, 2
  %v865 = vpop.permute.xlu0 %864
  %866 = vrot.lane.b32.xlu0 %v817, 2
  %v867 = vpop.permute.xlu0 %866
  %v884 = vadd.f32 %v422, %v837
  %v885 = vadd.f32 %v425, %v839
  %v886 = vadd.f32 %v430, %v841
  %v887 = vadd.f32 %v433, %v843
  %v888 = vadd.f32 %v438, %v845
  %v889 = vadd.f32 %v441, %v847
  %v890 = vadd.f32 %v446, %v849
  %v891 = vadd.f32 %v449, %v851
  %v892 = vadd.f32 %v454, %v853
  %v893 = vadd.f32 %v457, %v855
  %v894 = vadd.f32 %v462, %v857
  %v895 = vadd.f32 %v465, %v859
  %v896 = vadd.f32 %v470, %v861
  %v897 = vadd.f32 %v473, %v863
  %v898 = vadd.f32 %v478, %v865
  %v899 = vadd.f32 %v481, %v867
  %v900 = vsub.f32 0.0, %v884
  %v901 = vsub.f32 0.0, %v885
  %v902 = vsub.f32 0.0, %v886
  %v903 = vsub.f32 0.0, %v887
  %v904 = vmul.f32 %v900, 1.442695
  %v905 = vpow.pop %v904
  %v906 = vmul.f32 %v901, 1.442695
  %v907 = vpow.pop %v906
  %v908 = vmul.f32 %v902, 1.442695
  %v909 = vpow.pop %v908
  %v910 = vmul.f32 %v903, 1.442695
  %v911 = vpow.pop %v910
  %v912 = vadd.f32 %v905, 1.0
  %v913 = vadd.f32 %v907, 1.0
  %v914 = vadd.f32 %v909, 1.0
  %v915 = vadd.f32 %v911, 1.0
  %v916 = vrcp.pop %v912
  %v917 = vrcp.pop %v913
  %v918 = vrcp.pop %v914
  %v919 = vrcp.pop %v915
  %v920 = vsub.f32 0.0, %v888
  %v921 = vsub.f32 0.0, %v889
  %v922 = vsub.f32 0.0, %v890
  %v923 = vsub.f32 0.0, %v891
  %v924 = vmul.f32 %v920, 1.442695
  %v925 = vpow.pop %v924
  %v926 = vmul.f32 %v921, 1.442695
  %v927 = vpow.pop %v926
  %v928 = vmul.f32 %v922, 1.442695
  %v929 = vpow.pop %v928
  %v930 = vmul.f32 %v923, 1.442695
  %v931 = vpow.pop %v930
  %v932 = vadd.f32 %v925, 1.0
  %v933 = vadd.f32 %v927, 1.0
  %v934 = vadd.f32 %v929, 1.0
  %v935 = vadd.f32 %v931, 1.0
  %v936 = vrcp.pop %v932
  %v937 = vrcp.pop %v933
  %v938 = vrcp.pop %v934
  %v939 = vrcp.pop %v935
  %v940 = vtanh.pop %v892
  %v941 = vtanh.pop %v893
  %v942 = vtanh.pop %v894
  %v943 = vtanh.pop %v895
  %v944 = vsub.f32 0.0, %v896
  %v945 = vsub.f32 0.0, %v897
  %v946 = vsub.f32 0.0, %v898
  %v947 = vsub.f32 0.0, %v899
  %v948 = vmul.f32 %v944, 1.442695
  %v949 = vpow.pop %v948
  %v950 = vmul.f32 %v945, 1.442695
  %v951 = vpow.pop %v950
  %v952 = vmul.f32 %v946, 1.442695
  %v953 = vpow.pop %v952
  %v954 = vmul.f32 %v947, 1.442695
  %v955 = vpow.pop %v954
  %v956 = vadd.f32 %v949, 1.0
  %v957 = vadd.f32 %v951, 1.0
  %v958 = vadd.f32 %v953, 1.0
  %v959 = vadd.f32 %v955, 1.0
  %v960 = vrcp.pop %v956
  %v961 = vrcp.pop %v957
  %v962 = vrcp.pop %v958
  %v963 = vrcp.pop %v959
  %968 = vrot.lane.b32.xlu0 %v709, 2
  %v969 = vpop.permute.xlu0 %968
  %970 = vrot.lane.b32.xlu0 %v710, 2
  %v971 = vpop.permute.xlu0 %970
  %972 = vrot.lane.b32.xlu0 %v711, 2
  %v973 = vpop.permute.xlu0 %972
  %974 = vrot.lane.b32.xlu0 %v712, 2
  %v975 = vpop.permute.xlu0 %974
  %v980 = vmul.f32 %v936, %v969
  %v981 = vmul.f32 %v937, %v971
  %v982 = vmul.f32 %v938, %v973
  %v983 = vmul.f32 %v939, %v975
  %v984 = vmul.f32 %v916, %v940
  %v985 = vmul.f32 %v917, %v941
  %v986 = vmul.f32 %v918, %v942
  %v987 = vmul.f32 %v919, %v943
  %v988 = vadd.f32 %v980, %v984
  %v989 = vadd.f32 %v981, %v985
  %v990 = vadd.f32 %v982, %v986
  %v991 = vadd.f32 %v983, %v987
  %v992 = vtanh.pop %v988
  %v993 = vtanh.pop %v989
  %v994 = vtanh.pop %v990
  %v995 = vtanh.pop %v991
  %v996 = vmul.f32 %v960, %v992
  %v997 = vmul.f32 %v961, %v993
  %v998 = vmul.f32 %v962, %v994
  %v999 = vmul.f32 %v963, %v995
  %v1000 = vpack.c.bf16 %v997, %v996
  %v1001 = vpack.c.bf16 %v999, %v998
  %1004 = vrot.lane.b32.xlu0 %v1000, 126
  %v1005 = vpop.permute.xlu0 %1004
  %1006 = vrot.lane.b32.xlu0 %v1001, 126
  %v1007 = vpop.permute.xlu0 %1006
  %1010 = vmatprep.subr.bf16.mxu0 0
  %1011 = vmatpush1.bf16.msra.mxu0 0
  %1012 = vmatprep.subr.bf16.mxu0 0
  %1013 = vmatpush1.bf16.msra.mxu0 0
  %1014 = vmatprep.subr.bf16.mxu0 0
  %1015 = vmatpush1.bf16.msra.mxu0 0
  %1016 = vmatprep.subr.bf16.mxu0 0
  %1017 = vmatpush1.bf16.msra.mxu0 0
  %1018 = vmatprep.subr.bf16.mxu0 0
  %1019 = vmatpush1.bf16.msra.mxu0 0
  %1020 = vmatprep.subr.bf16.mxu0 0
  %1021 = vmatpush1.bf16.msra.mxu0 0
  %1022 = vmatprep.subr.bf16.mxu0 0
  %1023 = vmatpush1.bf16.msra.mxu0 %v1007
  %1024 = vmatprep.subr.bf16.mxu0 0
  %1025 = vmatpush1.bf16.msra.mxu0 %v1005
  %1026 = vmatprep.subr.bf16.mxu0 0
  %1027 = vmatpush2.bf16.msra.mxu0 0
  %1028 = vmatprep.subr.bf16.mxu0 0
  %1029 = vmatpush2.bf16.msra.mxu0 0
  %1030 = vmatprep.subr.bf16.mxu0 0
  %1031 = vmatpush2.bf16.msra.mxu0 0
  %1032 = vmatprep.subr.bf16.mxu0 0
  %1033 = vmatpush2.bf16.msra.mxu0 0
  %1034 = vmatprep.subr.bf16.mxu0 0
  %1035 = vmatpush2.bf16.msra.mxu0 0
  %1036 = vmatprep.subr.bf16.mxu0 0
  %1037 = vmatpush2.bf16.msra.mxu0 0
  %1038 = vmatprep.subr.bf16.mxu0 0
  %1039 = vmatpush2.bf16.msra.mxu0 0
  %1040 = vmatprep.subr.bf16.mxu0 0
  %1041 = vmatpush2.bf16.msra.mxu0 0
  %1042 = vmatprep.mubr.bf16.mxu0 0
  %1043 = vmatmul.mubr.bf16.gmra.mxu0 %v501
  %v1044 = vpop.f32.mrf.mxu0
  %v1045 = vadd.f32 0.0, %v1044
  %v1046 = vpop.f32.mrf.mxu0
  %v1047 = vpop.f32.mrf.mxu0
  %v1048 = vadd.f32 0.0, %v1047
  %v1049 = vpop.f32.mrf.mxu0
  %1050 = vmatprep.mubr.bf16.mxu0 0
  %1051 = vmatmul.mubr.bf16.gmra.mxu0 %v504
  %v1052 = vpop.f32.mrf.mxu0
  %v1053 = vadd.f32 0.0, %v1052
  %v1054 = vpop.f32.mrf.mxu0
  %v1055 = vpop.f32.mrf.mxu0
  %v1056 = vadd.f32 0.0, %v1055
  %v1057 = vpop.f32.mrf.mxu0
  %1058 = vmatprep.mubr.bf16.mxu0 0
  %1059 = vmatmul.mubr.bf16.gmra.mxu0 %v507
  %v1060 = vpop.f32.mrf.mxu0
  %v1061 = vadd.f32 0.0, %v1060
  %v1062 = vpop.f32.mrf.mxu0
  %v1063 = vpop.f32.mrf.mxu0
  %v1064 = vadd.f32 0.0, %v1063
  %v1065 = vpop.f32.mrf.mxu0
  %1066 = vmatprep.mubr.bf16.mxu0 0
  %1067 = vmatmul.mubr.bf16.gmra.mxu0 %v510
  %v1068 = vpop.f32.mrf.mxu0
  %v1069 = vadd.f32 0.0, %v1068
  %v1070 = vpop.f32.mrf.mxu0
  %v1071 = vpop.f32.mrf.mxu0
  %v1072 = vadd.f32 0.0, %v1071
  %v1073 = vpop.f32.mrf.mxu0
  %1074 = vmatprep.mubr.bf16.mxu0 0
  %1075 = vmatmul.mubr.bf16.gmra.mxu0 %v513
  %v1076 = vpop.f32.mrf.mxu0
  %v1077 = vadd.f32 0.0, %v1076
  %v1078 = vpop.f32.mrf.mxu0
  %v1079 = vpop.f32.mrf.mxu0
  %v1080 = vadd.f32 0.0, %v1079
  %v1081 = vpop.f32.mrf.mxu0
  %1082 = vmatprep.mubr.bf16.mxu0 0
  %1083 = vmatmul.mubr.bf16.gmra.mxu0 %v516
  %v1084 = vpop.f32.mrf.mxu0
  %v1085 = vadd.f32 0.0, %v1084
  %v1086 = vpop.f32.mrf.mxu0
  %v1087 = vpop.f32.mrf.mxu0
  %v1088 = vadd.f32 0.0, %v1087
  %v1089 = vpop.f32.mrf.mxu0
  %1090 = vmatprep.mubr.bf16.mxu0 0
  %1091 = vmatmul.mubr.bf16.gmra.mxu0 %v519
  %v1092 = vpop.f32.mrf.mxu0
  %v1093 = vadd.f32 0.0, %v1092
  %v1094 = vpop.f32.mrf.mxu0
  %v1095 = vpop.f32.mrf.mxu0
  %v1096 = vadd.f32 0.0, %v1095
  %v1097 = vpop.f32.mrf.mxu0
  %1098 = vmatprep.mubr.bf16.mxu0 0
  %1099 = vmatmul.mubr.bf16.gmra.mxu0 %v522
  %v1100 = vpop.f32.mrf.mxu0
  %v1101 = vadd.f32 0.0, %v1100
  %v1102 = vpop.f32.mrf.mxu0
  %v1103 = vpop.f32.mrf.mxu0
  %v1104 = vadd.f32 0.0, %v1103
  %v1105 = vpop.f32.mrf.mxu0
  %1106 = vdwg.mxu0
  %1123 = vrot.lane.b32.xlu0 %v1045, 4
  %v1124 = vpop.permute.xlu0 %1123
  %1125 = vrot.lane.b32.xlu0 %v1048, 4
  %v1126 = vpop.permute.xlu0 %1125
  %1127 = vrot.lane.b32.xlu0 %v1053, 4
  %v1128 = vpop.permute.xlu0 %1127
  %1129 = vrot.lane.b32.xlu0 %v1056, 4
  %v1130 = vpop.permute.xlu0 %1129
  %1131 = vrot.lane.b32.xlu0 %v1061, 4
  %v1132 = vpop.permute.xlu0 %1131
  %1133 = vrot.lane.b32.xlu0 %v1064, 4
  %v1134 = vpop.permute.xlu0 %1133
  %1135 = vrot.lane.b32.xlu0 %v1069, 4
  %v1136 = vpop.permute.xlu0 %1135
  %1137 = vrot.lane.b32.xlu0 %v1072, 4
  %v1138 = vpop.permute.xlu0 %1137
  %1139 = vrot.lane.b32.xlu0 %v1077, 4
  %v1140 = vpop.permute.xlu0 %1139
  %1141 = vrot.lane.b32.xlu0 %v1080, 4
  %v1142 = vpop.permute.xlu0 %1141
  %1143 = vrot.lane.b32.xlu0 %v1085, 4
  %v1144 = vpop.permute.xlu0 %1143
  %1145 = vrot.lane.b32.xlu0 %v1088, 4
  %v1146 = vpop.permute.xlu0 %1145
  %1147 = vrot.lane.b32.xlu0 %v1093, 4
  %v1148 = vpop.permute.xlu0 %1147
  %1149 = vrot.lane.b32.xlu0 %v1096, 4
  %v1150 = vpop.permute.xlu0 %1149
  %1151 = vrot.lane.b32.xlu0 %v1101, 4
  %v1152 = vpop.permute.xlu0 %1151
  %1153 = vrot.lane.b32.xlu0 %v1104, 4
  %v1154 = vpop.permute.xlu0 %1153
  %v1171 = vadd.f32 %v422, %v1124
  %v1172 = vadd.f32 %v425, %v1126
  %v1173 = vadd.f32 %v430, %v1128
  %v1174 = vadd.f32 %v433, %v1130
  %v1175 = vadd.f32 %v438, %v1132
  %v1176 = vadd.f32 %v441, %v1134
  %v1177 = vadd.f32 %v446, %v1136
  %v1178 = vadd.f32 %v449, %v1138
  %v1179 = vadd.f32 %v454, %v1140
  %v1180 = vadd.f32 %v457, %v1142
  %v1181 = vadd.f32 %v462, %v1144
  %v1182 = vadd.f32 %v465, %v1146
  %v1183 = vadd.f32 %v470, %v1148
  %v1184 = vadd.f32 %v473, %v1150
  %v1185 = vadd.f32 %v478, %v1152
  %v1186 = vadd.f32 %v481, %v1154
  %v1187 = vsub.f32 0.0, %v1171
  %v1188 = vsub.f32 0.0, %v1172
  %v1189 = vsub.f32 0.0, %v1173
  %v1190 = vsub.f32 0.0, %v1174
  %v1191 = vmul.f32 %v1187, 1.442695
  %v1192 = vpow.pop %v1191
  %v1193 = vmul.f32 %v1188, 1.442695
  %v1194 = vpow.pop %v1193
  %v1195 = vmul.f32 %v1189, 1.442695
  %v1196 = vpow.pop %v1195
  %v1197 = vmul.f32 %v1190, 1.442695
  %v1198 = vpow.pop %v1197
  %v1199 = vadd.f32 %v1192, 1.0
  %v1200 = vadd.f32 %v1194, 1.0
  %v1201 = vadd.f32 %v1196, 1.0
  %v1202 = vadd.f32 %v1198, 1.0
  %v1203 = vrcp.pop %v1199
  %v1204 = vrcp.pop %v1200
  %v1205 = vrcp.pop %v1201
  %v1206 = vrcp.pop %v1202
  %v1207 = vsub.f32 0.0, %v1175
  %v1208 = vsub.f32 0.0, %v1176
  %v1209 = vsub.f32 0.0, %v1177
  %v1210 = vsub.f32 0.0, %v1178
  %v1211 = vmul.f32 %v1207, 1.442695
  %v1212 = vpow.pop %v1211
  %v1213 = vmul.f32 %v1208, 1.442695
  %v1214 = vpow.pop %v1213
  %v1215 = vmul.f32 %v1209, 1.442695
  %v1216 = vpow.pop %v1215
  %v1217 = vmul.f32 %v1210, 1.442695
  %v1218 = vpow.pop %v1217
  %v1219 = vadd.f32 %v1212, 1.0
  %v1220 = vadd.f32 %v1214, 1.0
  %v1221 = vadd.f32 %v1216, 1.0
  %v1222 = vadd.f32 %v1218, 1.0
  %v1223 = vrcp.pop %v1219
  %v1224 = vrcp.pop %v1220
  %v1225 = vrcp.pop %v1221
  %v1226 = vrcp.pop %v1222
  %v1227 = vtanh.pop %v1179
  %v1228 = vtanh.pop %v1180
  %v1229 = vtanh.pop %v1181
  %v1230 = vtanh.pop %v1182
  %v1231 = vsub.f32 0.0, %v1183
  %v1232 = vsub.f32 0.0, %v1184
  %v1233 = vsub.f32 0.0, %v1185
  %v1234 = vsub.f32 0.0, %v1186
  %v1235 = vmul.f32 %v1231, 1.442695
  %v1236 = vpow.pop %v1235
  %v1237 = vmul.f32 %v1232, 1.442695
  %v1238 = vpow.pop %v1237
  %v1239 = vmul.f32 %v1233, 1.442695
  %v1240 = vpow.pop %v1239
  %v1241 = vmul.f32 %v1234, 1.442695
  %v1242 = vpow.pop %v1241
  %v1243 = vadd.f32 %v1236, 1.0
  %v1244 = vadd.f32 %v1238, 1.0
  %v1245 = vadd.f32 %v1240, 1.0
  %v1246 = vadd.f32 %v1242, 1.0
  %v1247 = vrcp.pop %v1243
  %v1248 = vrcp.pop %v1244
  %v1249 = vrcp.pop %v1245
  %v1250 = vrcp.pop %v1246
  %1255 = vrot.lane.b32.xlu0 %v988, 2
  %v1256 = vpop.permute.xlu0 %1255
  %1257 = vrot.lane.b32.xlu0 %v989, 2
  %v1258 = vpop.permute.xlu0 %1257
  %1259 = vrot.lane.b32.xlu0 %v990, 2
  %v1260 = vpop.permute.xlu0 %1259
  %1261 = vrot.lane.b32.xlu0 %v991, 2
  %v1262 = vpop.permute.xlu0 %1261
  %v1267 = vmul.f32 %v1223, %v1256
  %v1268 = vmul.f32 %v1224, %v1258
  %v1269 = vmul.f32 %v1225, %v1260
  %v1270 = vmul.f32 %v1226, %v1262
  %v1271 = vmul.f32 %v1203, %v1227
  %v1272 = vmul.f32 %v1204, %v1228
  %v1273 = vmul.f32 %v1205, %v1229
  %v1274 = vmul.f32 %v1206, %v1230
  %v1275 = vadd.f32 %v1267, %v1271
  %v1276 = vadd.f32 %v1268, %v1272
  %v1277 = vadd.f32 %v1269, %v1273
  %v1278 = vadd.f32 %v1270, %v1274
  %v1279 = vtanh.pop %v1275
  %v1280 = vtanh.pop %v1276
  %v1281 = vtanh.pop %v1277
  %v1282 = vtanh.pop %v1278
  %v1283 = vmul.f32 %v1247, %v1279
  %v1284 = vmul.f32 %v1248, %v1280
  %v1285 = vmul.f32 %v1249, %v1281
  %v1286 = vmul.f32 %v1250, %v1282
  %v1287 = vpack.c.bf16 %v1284, %v1283
  %v1288 = vpack.c.bf16 %v1286, %v1285
  %1291 = vrot.lane.b32.xlu0 %v1287, 124
  %v1292 = vpop.permute.xlu0 %1291
  %1293 = vrot.lane.b32.xlu0 %v1288, 124
  %v1294 = vpop.permute.xlu0 %1293
  %1297 = vmatprep.subr.bf16.mxu0 0
  %1298 = vmatpush1.bf16.msra.mxu0 0
  %1299 = vmatprep.subr.bf16.mxu0 0
  %1300 = vmatpush1.bf16.msra.mxu0 0
  %1301 = vmatprep.subr.bf16.mxu0 0
  %1302 = vmatpush1.bf16.msra.mxu0 0
  %1303 = vmatprep.subr.bf16.mxu0 0
  %1304 = vmatpush1.bf16.msra.mxu0 0
  %1305 = vmatprep.subr.bf16.mxu0 0
  %1306 = vmatpush1.bf16.msra.mxu0 0
  %1307 = vmatprep.subr.bf16.mxu0 0
  %1308 = vmatpush1.bf16.msra.mxu0 0
  %1309 = vmatprep.subr.bf16.mxu0 0
  %1310 = vmatpush1.bf16.msra.mxu0 %v1294
  %1311 = vmatprep.subr.bf16.mxu0 0
  %1312 = vmatpush1.bf16.msra.mxu0 %v1292
  %1313 = vmatprep.subr.bf16.mxu0 0
  %1314 = vmatpush2.bf16.msra.mxu0 0
  %1315 = vmatprep.subr.bf16.mxu0 0
  %1316 = vmatpush2.bf16.msra.mxu0 0
  %1317 = vmatprep.subr.bf16.mxu0 0
  %1318 = vmatpush2.bf16.msra.mxu0 0
  %1319 = vmatprep.subr.bf16.mxu0 0
  %1320 = vmatpush2.bf16.msra.mxu0 0
  %1321 = vmatprep.subr.bf16.mxu0 0
  %1322 = vmatpush2.bf16.msra.mxu0 0
  %1323 = vmatprep.subr.bf16.mxu0 0
  %1324 = vmatpush2.bf16.msra.mxu0 0
  %1325 = vmatprep.subr.bf16.mxu0 0
  %1326 = vmatpush2.bf16.msra.mxu0 0
  %1327 = vmatprep.subr.bf16.mxu0 0
  %1328 = vmatpush2.bf16.msra.mxu0 0
  %1329 = vmatprep.mubr.bf16.mxu0 0
  %1330 = vmatmul.mubr.bf16.gmra.mxu0 %v501
  %v1331 = vpop.f32.mrf.mxu0
  %v1332 = vadd.f32 0.0, %v1331
  %v1333 = vpop.f32.mrf.mxu0
  %v1334 = vpop.f32.mrf.mxu0
  %v1335 = vadd.f32 0.0, %v1334
  %v1336 = vpop.f32.mrf.mxu0
  %1337 = vmatprep.mubr.bf16.mxu0 0
  %1338 = vmatmul.mubr.bf16.gmra.mxu0 %v504
  %v1339 = vpop.f32.mrf.mxu0
  %v1340 = vadd.f32 0.0, %v1339
  %v1341 = vpop.f32.mrf.mxu0
  %v1342 = vpop.f32.mrf.mxu0
  %v1343 = vadd.f32 0.0, %v1342
  %v1344 = vpop.f32.mrf.mxu0
  %1345 = vmatprep.mubr.bf16.mxu0 0
  %1346 = vmatmul.mubr.bf16.gmra.mxu0 %v507
  %v1347 = vpop.f32.mrf.mxu0
  %v1348 = vadd.f32 0.0, %v1347
  %v1349 = vpop.f32.mrf.mxu0
  %v1350 = vpop.f32.mrf.mxu0
  %v1351 = vadd.f32 0.0, %v1350
  %v1352 = vpop.f32.mrf.mxu0
  %1353 = vmatprep.mubr.bf16.mxu0 0
  %1354 = vmatmul.mubr.bf16.gmra.mxu0 %v510
  %v1355 = vpop.f32.mrf.mxu0
  %v1356 = vadd.f32 0.0, %v1355
  %v1357 = vpop.f32.mrf.mxu0
  %v1358 = vpop.f32.mrf.mxu0
  %v1359 = vadd.f32 0.0, %v1358
  %v1360 = vpop.f32.mrf.mxu0
  %1361 = vmatprep.mubr.bf16.mxu0 0
  %1362 = vmatmul.mubr.bf16.gmra.mxu0 %v513
  %v1363 = vpop.f32.mrf.mxu0
  %v1364 = vadd.f32 0.0, %v1363
  %v1365 = vpop.f32.mrf.mxu0
  %v1366 = vpop.f32.mrf.mxu0
  %v1367 = vadd.f32 0.0, %v1366
  %v1368 = vpop.f32.mrf.mxu0
  %1369 = vmatprep.mubr.bf16.mxu0 0
  %1370 = vmatmul.mubr.bf16.gmra.mxu0 %v516
  %v1371 = vpop.f32.mrf.mxu0
  %v1372 = vadd.f32 0.0, %v1371
  %v1373 = vpop.f32.mrf.mxu0
  %v1374 = vpop.f32.mrf.mxu0
  %v1375 = vadd.f32 0.0, %v1374
  %v1376 = vpop.f32.mrf.mxu0
  %1377 = vmatprep.mubr.bf16.mxu0 0
  %1378 = vmatmul.mubr.bf16.gmra.mxu0 %v519
  %v1379 = vpop.f32.mrf.mxu0
  %v1380 = vadd.f32 0.0, %v1379
  %v1381 = vpop.f32.mrf.mxu0
  %v1382 = vpop.f32.mrf.mxu0
  %v1383 = vadd.f32 0.0, %v1382
  %v1384 = vpop.f32.mrf.mxu0
  %1385 = vmatprep.mubr.bf16.mxu0 0
  %1386 = vmatmul.mubr.bf16.gmra.mxu0 %v522
  %v1387 = vpop.f32.mrf.mxu0
  %v1388 = vadd.f32 0.0, %v1387
  %v1389 = vpop.f32.mrf.mxu0
  %v1390 = vpop.f32.mrf.mxu0
  %v1391 = vadd.f32 0.0, %v1390
  %v1392 = vpop.f32.mrf.mxu0
  %1393 = vdwg.mxu0
  %1410 = vrot.lane.b32.xlu0 %v1332, 6
  %v1411 = vpop.permute.xlu0 %1410
  %1412 = vrot.lane.b32.xlu0 %v1335, 6
  %v1413 = vpop.permute.xlu0 %1412
  %1414 = vrot.lane.b32.xlu0 %v1340, 6
  %v1415 = vpop.permute.xlu0 %1414
  %1416 = vrot.lane.b32.xlu0 %v1343, 6
  %v1417 = vpop.permute.xlu0 %1416
  %1418 = vrot.lane.b32.xlu0 %v1348, 6
  %v1419 = vpop.permute.xlu0 %1418
  %1420 = vrot.lane.b32.xlu0 %v1351, 6
  %v1421 = vpop.permute.xlu0 %1420
  %1422 = vrot.lane.b32.xlu0 %v1356, 6
  %v1423 = vpop.permute.xlu0 %1422
  %1424 = vrot.lane.b32.xlu0 %v1359, 6
  %v1425 = vpop.permute.xlu0 %1424
  %1426 = vrot.lane.b32.xlu0 %v1364, 6
  %v1427 = vpop.permute.xlu0 %1426
  %1428 = vrot.lane.b32.xlu0 %v1367, 6
  %v1429 = vpop.permute.xlu0 %1428
  %1430 = vrot.lane.b32.xlu0 %v1372, 6
  %v1431 = vpop.permute.xlu0 %1430
  %1432 = vrot.lane.b32.xlu0 %v1375, 6
  %v1433 = vpop.permute.xlu0 %1432
  %1434 = vrot.lane.b32.xlu0 %v1380, 6
  %v1435 = vpop.permute.xlu0 %1434
  %1436 = vrot.lane.b32.xlu0 %v1383, 6
  %v1437 = vpop.permute.xlu0 %1436
  %1438 = vrot.lane.b32.xlu0 %v1388, 6
  %v1439 = vpop.permute.xlu0 %1438
  %1440 = vrot.lane.b32.xlu0 %v1391, 6
  %v1441 = vpop.permute.xlu0 %1440
  %v1458 = vadd.f32 %v422, %v1411
  %v1459 = vadd.f32 %v425, %v1413
  %v1460 = vadd.f32 %v430, %v1415
  %v1461 = vadd.f32 %v433, %v1417
  %v1462 = vadd.f32 %v438, %v1419
  %v1463 = vadd.f32 %v441, %v1421
  %v1464 = vadd.f32 %v446, %v1423
  %v1465 = vadd.f32 %v449, %v1425
  %v1466 = vadd.f32 %v454, %v1427
  %v1467 = vadd.f32 %v457, %v1429
  %v1468 = vadd.f32 %v462, %v1431
  %v1469 = vadd.f32 %v465, %v1433
  %v1470 = vadd.f32 %v470, %v1435
  %v1471 = vadd.f32 %v473, %v1437
  %v1472 = vadd.f32 %v478, %v1439
  %v1473 = vadd.f32 %v481, %v1441
  %v1474 = vsub.f32 0.0, %v1458
  %v1475 = vsub.f32 0.0, %v1459
  %v1476 = vsub.f32 0.0, %v1460
  %v1477 = vsub.f32 0.0, %v1461
  %v1478 = vmul.f32 %v1474, 1.442695
  %v1479 = vpow.pop %v1478
  %v1480 = vmul.f32 %v1475, 1.442695
  %v1481 = vpow.pop %v1480
  %v1482 = vmul.f32 %v1476, 1.442695
  %v1483 = vpow.pop %v1482
  %v1484 = vmul.f32 %v1477, 1.442695
  %v1485 = vpow.pop %v1484
  %v1486 = vadd.f32 %v1479, 1.0
  %v1487 = vadd.f32 %v1481, 1.0
  %v1488 = vadd.f32 %v1483, 1.0
  %v1489 = vadd.f32 %v1485, 1.0
  %v1490 = vrcp.pop %v1486
  %v1491 = vrcp.pop %v1487
  %v1492 = vrcp.pop %v1488
  %v1493 = vrcp.pop %v1489
  %v1494 = vsub.f32 0.0, %v1462
  %v1495 = vsub.f32 0.0, %v1463
  %v1496 = vsub.f32 0.0, %v1464
  %v1497 = vsub.f32 0.0, %v1465
  %v1498 = vmul.f32 %v1494, 1.442695
  %v1499 = vpow.pop %v1498
  %v1500 = vmul.f32 %v1495, 1.442695
  %v1501 = vpow.pop %v1500
  %v1502 = vmul.f32 %v1496, 1.442695
  %v1503 = vpow.pop %v1502
  %v1504 = vmul.f32 %v1497, 1.442695
  %v1505 = vpow.pop %v1504
  %v1506 = vadd.f32 %v1499, 1.0
  %v1507 = vadd.f32 %v1501, 1.0
  %v1508 = vadd.f32 %v1503, 1.0
  %v1509 = vadd.f32 %v1505, 1.0
  %v1510 = vrcp.pop %v1506
  %v1511 = vrcp.pop %v1507
  %v1512 = vrcp.pop %v1508
  %v1513 = vrcp.pop %v1509
  %v1514 = vtanh.pop %v1466
  %v1515 = vtanh.pop %v1467
  %v1516 = vtanh.pop %v1468
  %v1517 = vtanh.pop %v1469
  %v1518 = vsub.f32 0.0, %v1470
  %v1519 = vsub.f32 0.0, %v1471
  %v1520 = vsub.f32 0.0, %v1472
  %v1521 = vsub.f32 0.0, %v1473
  %v1522 = vmul.f32 %v1518, 1.442695
  %v1523 = vpow.pop %v1522
  %v1524 = vmul.f32 %v1519, 1.442695
  %v1525 = vpow.pop %v1524
  %v1526 = vmul.f32 %v1520, 1.442695
  %v1527 = vpow.pop %v1526
  %v1528 = vmul.f32 %v1521, 1.442695
  %v1529 = vpow.pop %v1528
  %v1530 = vadd.f32 %v1523, 1.0
  %v1531 = vadd.f32 %v1525, 1.0
  %v1532 = vadd.f32 %v1527, 1.0
  %v1533 = vadd.f32 %v1529, 1.0
  %v1534 = vrcp.pop %v1530
  %v1535 = vrcp.pop %v1531
  %v1536 = vrcp.pop %v1532
  %v1537 = vrcp.pop %v1533
  %1542 = vrot.lane.b32.xlu0 %v1275, 2
  %v1543 = vpop.permute.xlu0 %1542
  %1544 = vrot.lane.b32.xlu0 %v1276, 2
  %v1545 = vpop.permute.xlu0 %1544
  %1546 = vrot.lane.b32.xlu0 %v1277, 2
  %v1547 = vpop.permute.xlu0 %1546
  %1548 = vrot.lane.b32.xlu0 %v1278, 2
  %v1549 = vpop.permute.xlu0 %1548
  %v1554 = vmul.f32 %v1510, %v1543
  %v1555 = vmul.f32 %v1511, %v1545
  %v1556 = vmul.f32 %v1512, %v1547
  %v1557 = vmul.f32 %v1513, %v1549
  %v1558 = vmul.f32 %v1490, %v1514
  %v1559 = vmul.f32 %v1491, %v1515
  %v1560 = vmul.f32 %v1492, %v1516
  %v1561 = vmul.f32 %v1493, %v1517
  %v1562 = vadd.f32 %v1554, %v1558
  %v1563 = vadd.f32 %v1555, %v1559
  %v1564 = vadd.f32 %v1556, %v1560
  %v1565 = vadd.f32 %v1557, %v1561
  %v1566 = vtanh.pop %v1562
  %v1567 = vtanh.pop %v1563
  %v1568 = vtanh.pop %v1564
  %v1569 = vtanh.pop %v1565
  %v1570 = vmul.f32 %v1534, %v1566
  %v1571 = vmul.f32 %v1535, %v1567
  %v1572 = vmul.f32 %v1536, %v1568
  %v1573 = vmul.f32 %v1537, %v1569
  %v1574 = vpack.c.bf16 %v1571, %v1570
  %v1575 = vpack.c.bf16 %v1573, %v1572
  %1578 = vrot.lane.b32.xlu0 %v1574, 122
  %v1579 = vpop.permute.xlu0 %1578
  %1580 = vrot.lane.b32.xlu0 %v1575, 122
  %v1581 = vpop.permute.xlu0 %1580
  %1584 = vmatprep.subr.bf16.mxu0 0
  %1585 = vmatpush1.bf16.msra.mxu0 0
  %1586 = vmatprep.subr.bf16.mxu0 0
  %1587 = vmatpush1.bf16.msra.mxu0 0
  %1588 = vmatprep.subr.bf16.mxu0 0
  %1589 = vmatpush1.bf16.msra.mxu0 0
  %1590 = vmatprep.subr.bf16.mxu0 0
  %1591 = vmatpush1.bf16.msra.mxu0 0
  %1592 = vmatprep.subr.bf16.mxu0 0
  %1593 = vmatpush1.bf16.msra.mxu0 0
  %1594 = vmatprep.subr.bf16.mxu0 0
  %1595 = vmatpush1.bf16.msra.mxu0 0
  %1596 = vmatprep.subr.bf16.mxu0 0
  %1597 = vmatpush1.bf16.msra.mxu0 %v1581
  %1598 = vmatprep.subr.bf16.mxu0 0
  %1599 = vmatpush1.bf16.msra.mxu0 %v1579
  %1600 = vmatprep.subr.bf16.mxu0 0
  %1601 = vmatpush2.bf16.msra.mxu0 0
  %1602 = vmatprep.subr.bf16.mxu0 0
  %1603 = vmatpush2.bf16.msra.mxu0 0
  %1604 = vmatprep.subr.bf16.mxu0 0
  %1605 = vmatpush2.bf16.msra.mxu0 0
  %1606 = vmatprep.subr.bf16.mxu0 0
  %1607 = vmatpush2.bf16.msra.mxu0 0
  %1608 = vmatprep.subr.bf16.mxu0 0
  %1609 = vmatpush2.bf16.msra.mxu0 0
  %1610 = vmatprep.subr.bf16.mxu0 0
  %1611 = vmatpush2.bf16.msra.mxu0 0
  %1612 = vmatprep.subr.bf16.mxu0 0
  %1613 = vmatpush2.bf16.msra.mxu0 0
  %1614 = vmatprep.subr.bf16.mxu0 0
  %1615 = vmatpush2.bf16.msra.mxu0 0
  %1616 = vmatprep.mubr.bf16.mxu0 0
  %1617 = vmatmul.mubr.bf16.gmra.mxu0 %v501
  %v1618 = vpop.f32.mrf.mxu0
  %v1619 = vadd.f32 0.0, %v1618
  %v1620 = vpop.f32.mrf.mxu0
  %v1621 = vpop.f32.mrf.mxu0
  %v1622 = vadd.f32 0.0, %v1621
  %v1623 = vpop.f32.mrf.mxu0
  %1624 = vmatprep.mubr.bf16.mxu0 0
  %1625 = vmatmul.mubr.bf16.gmra.mxu0 %v504
  %v1626 = vpop.f32.mrf.mxu0
  %v1627 = vadd.f32 0.0, %v1626
  %v1628 = vpop.f32.mrf.mxu0
  %v1629 = vpop.f32.mrf.mxu0
  %v1630 = vadd.f32 0.0, %v1629
  %v1631 = vpop.f32.mrf.mxu0
  %1632 = vmatprep.mubr.bf16.mxu0 0
  %1633 = vmatmul.mubr.bf16.gmra.mxu0 %v507
  %v1634 = vpop.f32.mrf.mxu0
  %v1635 = vadd.f32 0.0, %v1634
  %v1636 = vpop.f32.mrf.mxu0
  %v1637 = vpop.f32.mrf.mxu0
  %v1638 = vadd.f32 0.0, %v1637
  %v1639 = vpop.f32.mrf.mxu0
  %1640 = vmatprep.mubr.bf16.mxu0 0
  %1641 = vmatmul.mubr.bf16.gmra.mxu0 %v510
  %v1642 = vpop.f32.mrf.mxu0
  %v1643 = vadd.f32 0.0, %v1642
  %v1644 = vpop.f32.mrf.mxu0
  %v1645 = vpop.f32.mrf.mxu0
  %v1646 = vadd.f32 0.0, %v1645
  %v1647 = vpop.f32.mrf.mxu0
  %1648 = vmatprep.mubr.bf16.mxu0 0
  %1649 = vmatmul.mubr.bf16.gmra.mxu0 %v513
  %v1650 = vpop.f32.mrf.mxu0
  %v1651 = vadd.f32 0.0, %v1650
  %v1652 = vpop.f32.mrf.mxu0
  %v1653 = vpop.f32.mrf.mxu0
  %v1654 = vadd.f32 0.0, %v1653
  %v1655 = vpop.f32.mrf.mxu0
  %1656 = vmatprep.mubr.bf16.mxu0 0
  %1657 = vmatmul.mubr.bf16.gmra.mxu0 %v516
  %v1658 = vpop.f32.mrf.mxu0
  %v1659 = vadd.f32 0.0, %v1658
  %v1660 = vpop.f32.mrf.mxu0
  %v1661 = vpop.f32.mrf.mxu0
  %v1662 = vadd.f32 0.0, %v1661
  %v1663 = vpop.f32.mrf.mxu0
  %1664 = vmatprep.mubr.bf16.mxu0 0
  %1665 = vmatmul.mubr.bf16.gmra.mxu0 %v519
  %v1666 = vpop.f32.mrf.mxu0
  %v1667 = vadd.f32 0.0, %v1666
  %v1668 = vpop.f32.mrf.mxu0
  %v1669 = vpop.f32.mrf.mxu0
  %v1670 = vadd.f32 0.0, %v1669
  %v1671 = vpop.f32.mrf.mxu0
  %1672 = vmatprep.mubr.bf16.mxu0 0
  %1673 = vmatmul.mubr.bf16.gmra.mxu0 %v522
  %v1674 = vpop.f32.mrf.mxu0
  %v1675 = vadd.f32 0.0, %v1674
  %v1676 = vpop.f32.mrf.mxu0
  %v1677 = vpop.f32.mrf.mxu0
  %v1678 = vadd.f32 0.0, %v1677
  %v1679 = vpop.f32.mrf.mxu0
  %1680 = vdwg.mxu0
  %1697 = vrot.lane.b32.xlu0 %v1619, 8
  %v1698 = vpop.permute.xlu0 %1697
  %1699 = vrot.lane.b32.xlu0 %v1622, 8
  %v1700 = vpop.permute.xlu0 %1699
  %1701 = vrot.lane.b32.xlu0 %v1627, 8
  %v1702 = vpop.permute.xlu0 %1701
  %1703 = vrot.lane.b32.xlu0 %v1630, 8
  %v1704 = vpop.permute.xlu0 %1703
  %1705 = vrot.lane.b32.xlu0 %v1635, 8
  %v1706 = vpop.permute.xlu0 %1705
  %1707 = vrot.lane.b32.xlu0 %v1638, 8
  %v1708 = vpop.permute.xlu0 %1707
  %1709 = vrot.lane.b32.xlu0 %v1643, 8
  %v1710 = vpop.permute.xlu0 %1709
  %1711 = vrot.lane.b32.xlu0 %v1646, 8
  %v1712 = vpop.permute.xlu0 %1711
  %1713 = vrot.lane.b32.xlu0 %v1651, 8
  %v1714 = vpop.permute.xlu0 %1713
  %1715 = vrot.lane.b32.xlu0 %v1654, 8
  %v1716 = vpop.permute.xlu0 %1715
  %1717 = vrot.lane.b32.xlu0 %v1659, 8
  %v1718 = vpop.permute.xlu0 %1717
  %1719 = vrot.lane.b32.xlu0 %v1662, 8
  %v1720 = vpop.permute.xlu0 %1719
  %1721 = vrot.lane.b32.xlu0 %v1667, 8
  %v1722 = vpop.permute.xlu0 %1721
  %1723 = vrot.lane.b32.xlu0 %v1670, 8
  %v1724 = vpop.permute.xlu0 %1723
  %1725 = vrot.lane.b32.xlu0 %v1675, 8
  %v1726 = vpop.permute.xlu0 %1725
  %1727 = vrot.lane.b32.xlu0 %v1678, 8
  %v1728 = vpop.permute.xlu0 %1727
  %v1745 = vadd.f32 %v422, %v1698
  %v1746 = vadd.f32 %v425, %v1700
  %v1747 = vadd.f32 %v430, %v1702
  %v1748 = vadd.f32 %v433, %v1704
  %v1749 = vadd.f32 %v438, %v1706
  %v1750 = vadd.f32 %v441, %v1708
  %v1751 = vadd.f32 %v446, %v1710
  %v1752 = vadd.f32 %v449, %v1712
  %v1753 = vadd.f32 %v454, %v1714
  %v1754 = vadd.f32 %v457, %v1716
  %v1755 = vadd.f32 %v462, %v1718
  %v1756 = vadd.f32 %v465, %v1720
  %v1757 = vadd.f32 %v470, %v1722
  %v1758 = vadd.f32 %v473, %v1724
  %v1759 = vadd.f32 %v478, %v1726
  %v1760 = vadd.f32 %v481, %v1728
  %v1761 = vsub.f32 0.0, %v1745
  %v1762 = vsub.f32 0.0, %v1746
  %v1763 = vsub.f32 0.0, %v1747
  %v1764 = vsub.f32 0.0, %v1748
  %v1765 = vmul.f32 %v1761, 1.442695
  %v1766 = vpow.pop %v1765
  %v1767 = vmul.f32 %v1762, 1.442695
  %v1768 = vpow.pop %v1767
  %v1769 = vmul.f32 %v1763, 1.442695
  %v1770 = vpow.pop %v1769
  %v1771 = vmul.f32 %v1764, 1.442695
  %v1772 = vpow.pop %v1771
  %v1773 = vadd.f32 %v1766, 1.0
  %v1774 = vadd.f32 %v1768, 1.0
  %v1775 = vadd.f32 %v1770, 1.0
  %v1776 = vadd.f32 %v1772, 1.0
  %v1777 = vrcp.pop %v1773
  %v1778 = vrcp.pop %v1774
  %v1779 = vrcp.pop %v1775
  %v1780 = vrcp.pop %v1776
  %v1781 = vsub.f32 0.0, %v1749
  %v1782 = vsub.f32 0.0, %v1750
  %v1783 = vsub.f32 0.0, %v1751
  %v1784 = vsub.f32 0.0, %v1752
  %v1785 = vmul.f32 %v1781, 1.442695
  %v1786 = vpow.pop %v1785
  %v1787 = vmul.f32 %v1782, 1.442695
  %v1788 = vpow.pop %v1787
  %v1789 = vmul.f32 %v1783, 1.442695
  %v1790 = vpow.pop %v1789
  %v1791 = vmul.f32 %v1784, 1.442695
  %v1792 = vpow.pop %v1791
  %v1793 = vadd.f32 %v1786, 1.0
  %v1794 = vadd.f32 %v1788, 1.0
  %v1795 = vadd.f32 %v1790, 1.0
  %v1796 = vadd.f32 %v1792, 1.0
  %v1797 = vrcp.pop %v1793
  %v1798 = vrcp.pop %v1794
  %v1799 = vrcp.pop %v1795
  %v1800 = vrcp.pop %v1796
  %v1801 = vtanh.pop %v1753
  %v1802 = vtanh.pop %v1754
  %v1803 = vtanh.pop %v1755
  %v1804 = vtanh.pop %v1756
  %v1805 = vsub.f32 0.0, %v1757
  %v1806 = vsub.f32 0.0, %v1758
  %v1807 = vsub.f32 0.0, %v1759
  %v1808 = vsub.f32 0.0, %v1760
  %v1809 = vmul.f32 %v1805, 1.442695
  %v1810 = vpow.pop %v1809
  %v1811 = vmul.f32 %v1806, 1.442695
  %v1812 = vpow.pop %v1811
  %v1813 = vmul.f32 %v1807, 1.442695
  %v1814 = vpow.pop %v1813
  %v1815 = vmul.f32 %v1808, 1.442695
  %v1816 = vpow.pop %v1815
  %v1817 = vadd.f32 %v1810, 1.0
  %v1818 = vadd.f32 %v1812, 1.0
  %v1819 = vadd.f32 %v1814, 1.0
  %v1820 = vadd.f32 %v1816, 1.0
  %v1821 = vrcp.pop %v1817
  %v1822 = vrcp.pop %v1818
  %v1823 = vrcp.pop %v1819
  %v1824 = vrcp.pop %v1820
  %1829 = vrot.lane.b32.xlu0 %v1562, 2
  %v1830 = vpop.permute.xlu0 %1829
  %1831 = vrot.lane.b32.xlu0 %v1563, 2
  %v1832 = vpop.permute.xlu0 %1831
  %1833 = vrot.lane.b32.xlu0 %v1564, 2
  %v1834 = vpop.permute.xlu0 %1833
  %1835 = vrot.lane.b32.xlu0 %v1565, 2
  %v1836 = vpop.permute.xlu0 %1835
  %v1841 = vmul.f32 %v1797, %v1830
  %v1842 = vmul.f32 %v1798, %v1832
  %v1843 = vmul.f32 %v1799, %v1834
  %v1844 = vmul.f32 %v1800, %v1836
  %v1845 = vmul.f32 %v1777, %v1801
  %v1846 = vmul.f32 %v1778, %v1802
  %v1847 = vmul.f32 %v1779, %v1803
  %v1848 = vmul.f32 %v1780, %v1804
  %v1849 = vadd.f32 %v1841, %v1845
  %v1850 = vadd.f32 %v1842, %v1846
  %v1851 = vadd.f32 %v1843, %v1847
  %v1852 = vadd.f32 %v1844, %v1848
  %v1853 = vtanh.pop %v1849
  %v1854 = vtanh.pop %v1850
  %v1855 = vtanh.pop %v1851
  %v1856 = vtanh.pop %v1852
  %v1857 = vmul.f32 %v1821, %v1853
  %v1858 = vmul.f32 %v1822, %v1854
  %v1859 = vmul.f32 %v1823, %v1855
  %v1860 = vmul.f32 %v1824, %v1856
  %v1861 = vpack.c.bf16 %v1858, %v1857
  %v1862 = vpack.c.bf16 %v1860, %v1859
  %1865 = vrot.lane.b32.xlu0 %v1861, 120
  %v1866 = vpop.permute.xlu0 %1865
  %1867 = vrot.lane.b32.xlu0 %v1862, 120
  %v1868 = vpop.permute.xlu0 %1867
  %1871 = vmatprep.subr.bf16.mxu0 0
  %1872 = vmatpush1.bf16.msra.mxu0 0
  %1873 = vmatprep.subr.bf16.mxu0 0
  %1874 = vmatpush1.bf16.msra.mxu0 0
  %1875 = vmatprep.subr.bf16.mxu0 0
  %1876 = vmatpush1.bf16.msra.mxu0 0
  %1877 = vmatprep.subr.bf16.mxu0 0
  %1878 = vmatpush1.bf16.msra.mxu0 0
  %1879 = vmatprep.subr.bf16.mxu0 0
  %1880 = vmatpush1.bf16.msra.mxu0 0
  %1881 = vmatprep.subr.bf16.mxu0 0
  %1882 = vmatpush1.bf16.msra.mxu0 0
  %1883 = vmatprep.subr.bf16.mxu0 0
  %1884 = vmatpush1.bf16.msra.mxu0 %v1868
  %1885 = vmatprep.subr.bf16.mxu0 0
  %1886 = vmatpush1.bf16.msra.mxu0 %v1866
  %1887 = vmatprep.subr.bf16.mxu0 0
  %1888 = vmatpush2.bf16.msra.mxu0 0
  %1889 = vmatprep.subr.bf16.mxu0 0
  %1890 = vmatpush2.bf16.msra.mxu0 0
  %1891 = vmatprep.subr.bf16.mxu0 0
  %1892 = vmatpush2.bf16.msra.mxu0 0
  %1893 = vmatprep.subr.bf16.mxu0 0
  %1894 = vmatpush2.bf16.msra.mxu0 0
  %1895 = vmatprep.subr.bf16.mxu0 0
  %1896 = vmatpush2.bf16.msra.mxu0 0
  %1897 = vmatprep.subr.bf16.mxu0 0
  %1898 = vmatpush2.bf16.msra.mxu0 0
  %1899 = vmatprep.subr.bf16.mxu0 0
  %1900 = vmatpush2.bf16.msra.mxu0 0
  %1901 = vmatprep.subr.bf16.mxu0 0
  %1902 = vmatpush2.bf16.msra.mxu0 0
  %1903 = vmatprep.mubr.bf16.mxu0 0
  %1904 = vmatmul.mubr.bf16.gmra.mxu0 %v501
  %v1905 = vpop.f32.mrf.mxu0
  %v1906 = vadd.f32 0.0, %v1905
  %v1907 = vpop.f32.mrf.mxu0
  %v1908 = vpop.f32.mrf.mxu0
  %v1909 = vadd.f32 0.0, %v1908
  %v1910 = vpop.f32.mrf.mxu0
  %1911 = vmatprep.mubr.bf16.mxu0 0
  %1912 = vmatmul.mubr.bf16.gmra.mxu0 %v504
  %v1913 = vpop.f32.mrf.mxu0
  %v1914 = vadd.f32 0.0, %v1913
  %v1915 = vpop.f32.mrf.mxu0
  %v1916 = vpop.f32.mrf.mxu0
  %v1917 = vadd.f32 0.0, %v1916
  %v1918 = vpop.f32.mrf.mxu0
  %1919 = vmatprep.mubr.bf16.mxu0 0
  %1920 = vmatmul.mubr.bf16.gmra.mxu0 %v507
  %v1921 = vpop.f32.mrf.mxu0
  %v1922 = vadd.f32 0.0, %v1921
  %v1923 = vpop.f32.mrf.mxu0
  %v1924 = vpop.f32.mrf.mxu0
  %v1925 = vadd.f32 0.0, %v1924
  %v1926 = vpop.f32.mrf.mxu0
  %1927 = vmatprep.mubr.bf16.mxu0 0
  %1928 = vmatmul.mubr.bf16.gmra.mxu0 %v510
  %v1929 = vpop.f32.mrf.mxu0
  %v1930 = vadd.f32 0.0, %v1929
  %v1931 = vpop.f32.mrf.mxu0
  %v1932 = vpop.f32.mrf.mxu0
  %v1933 = vadd.f32 0.0, %v1932
  %v1934 = vpop.f32.mrf.mxu0
  %1935 = vmatprep.mubr.bf16.mxu0 0
  %1936 = vmatmul.mubr.bf16.gmra.mxu0 %v513
  %v1937 = vpop.f32.mrf.mxu0
  %v1938 = vadd.f32 0.0, %v1937
  %v1939 = vpop.f32.mrf.mxu0
  %v1940 = vpop.f32.mrf.mxu0
  %v1941 = vadd.f32 0.0, %v1940
  %v1942 = vpop.f32.mrf.mxu0
  %1943 = vmatprep.mubr.bf16.mxu0 0
  %1944 = vmatmul.mubr.bf16.gmra.mxu0 %v516
  %v1945 = vpop.f32.mrf.mxu0
  %v1946 = vadd.f32 0.0, %v1945
  %v1947 = vpop.f32.mrf.mxu0
  %v1948 = vpop.f32.mrf.mxu0
  %v1949 = vadd.f32 0.0, %v1948
  %v1950 = vpop.f32.mrf.mxu0
  %1951 = vmatprep.mubr.bf16.mxu0 0
  %1952 = vmatmul.mubr.bf16.gmra.mxu0 %v519
  %v1953 = vpop.f32.mrf.mxu0
  %v1954 = vadd.f32 0.0, %v1953
  %v1955 = vpop.f32.mrf.mxu0
  %v1956 = vpop.f32.mrf.mxu0
  %v1957 = vadd.f32 0.0, %v1956
  %v1958 = vpop.f32.mrf.mxu0
  %1959 = vmatprep.mubr.bf16.mxu0 0
  %1960 = vmatmul.mubr.bf16.gmra.mxu0 %v522
  %v1961 = vpop.f32.mrf.mxu0
  %v1962 = vadd.f32 0.0, %v1961
  %v1963 = vpop.f32.mrf.mxu0
  %v1964 = vpop.f32.mrf.mxu0
  %v1965 = vadd.f32 0.0, %v1964
  %v1966 = vpop.f32.mrf.mxu0
  %1967 = vdwg.mxu0
  %1984 = vrot.lane.b32.xlu0 %v1906, 10
  %v1985 = vpop.permute.xlu0 %1984
  %1986 = vrot.lane.b32.xlu0 %v1909, 10
  %v1987 = vpop.permute.xlu0 %1986
  %1988 = vrot.lane.b32.xlu0 %v1914, 10
  %v1989 = vpop.permute.xlu0 %1988
  %1990 = vrot.lane.b32.xlu0 %v1917, 10
  %v1991 = vpop.permute.xlu0 %1990
  %1992 = vrot.lane.b32.xlu0 %v1922, 10
  %v1993 = vpop.permute.xlu0 %1992
  %1994 = vrot.lane.b32.xlu0 %v1925, 10
  %v1995 = vpop.permute.xlu0 %1994
  %1996 = vrot.lane.b32.xlu0 %v1930, 10
  %v1997 = vpop.permute.xlu0 %1996
  %1998 = vrot.lane.b32.xlu0 %v1933, 10
  %v1999 = vpop.permute.xlu0 %1998
  %2000 = vrot.lane.b32.xlu0 %v1938, 10
  %v2001 = vpop.permute.xlu0 %2000
  %2002 = vrot.lane.b32.xlu0 %v1941, 10
  %v2003 = vpop.permute.xlu0 %2002
  %2004 = vrot.lane.b32.xlu0 %v1946, 10
  %v2005 = vpop.permute.xlu0 %2004
  %2006 = vrot.lane.b32.xlu0 %v1949, 10
  %v2007 = vpop.permute.xlu0 %2006
  %2008 = vrot.lane.b32.xlu0 %v1954, 10
  %v2009 = vpop.permute.xlu0 %2008
  %2010 = vrot.lane.b32.xlu0 %v1957, 10
  %v2011 = vpop.permute.xlu0 %2010
  %2012 = vrot.lane.b32.xlu0 %v1962, 10
  %v2013 = vpop.permute.xlu0 %2012
  %2014 = vrot.lane.b32.xlu0 %v1965, 10
  %v2015 = vpop.permute.xlu0 %2014
  %v2032 = vadd.f32 %v422, %v1985
  %v2033 = vadd.f32 %v425, %v1987
  %v2034 = vadd.f32 %v430, %v1989
  %v2035 = vadd.f32 %v433, %v1991
  %v2036 = vadd.f32 %v438, %v1993
  %v2037 = vadd.f32 %v441, %v1995
  %v2038 = vadd.f32 %v446, %v1997
  %v2039 = vadd.f32 %v449, %v1999
  %v2040 = vadd.f32 %v454, %v2001
  %v2041 = vadd.f32 %v457, %v2003
  %v2042 = vadd.f32 %v462, %v2005
  %v2043 = vadd.f32 %v465, %v2007
  %v2044 = vadd.f32 %v470, %v2009
  %v2045 = vadd.f32 %v473, %v2011
  %v2046 = vadd.f32 %v478, %v2013
  %v2047 = vadd.f32 %v481, %v2015
  %v2048 = vsub.f32 0.0, %v2032
  %v2049 = vsub.f32 0.0, %v2033
  %v2050 = vsub.f32 0.0, %v2034
  %v2051 = vsub.f32 0.0, %v2035
  %v2052 = vmul.f32 %v2048, 1.442695
  %v2053 = vpow.pop %v2052
  %v2054 = vmul.f32 %v2049, 1.442695
  %v2055 = vpow.pop %v2054
  %v2056 = vmul.f32 %v2050, 1.442695
  %v2057 = vpow.pop %v2056
  %v2058 = vmul.f32 %v2051, 1.442695
  %v2059 = vpow.pop %v2058
  %v2060 = vadd.f32 %v2053, 1.0
  %v2061 = vadd.f32 %v2055, 1.0
  %v2062 = vadd.f32 %v2057, 1.0
  %v2063 = vadd.f32 %v2059, 1.0
  %v2064 = vrcp.pop %v2060
  %v2065 = vrcp.pop %v2061
  %v2066 = vrcp.pop %v2062
  %v2067 = vrcp.pop %v2063
  %v2068 = vsub.f32 0.0, %v2036
  %v2069 = vsub.f32 0.0, %v2037
  %v2070 = vsub.f32 0.0, %v2038
  %v2071 = vsub.f32 0.0, %v2039
  %v2072 = vmul.f32 %v2068, 1.442695
  %v2073 = vpow.pop %v2072
  %v2074 = vmul.f32 %v2069, 1.442695
  %v2075 = vpow.pop %v2074
  %v2076 = vmul.f32 %v2070, 1.442695
  %v2077 = vpow.pop %v2076
  %v2078 = vmul.f32 %v2071, 1.442695
  %v2079 = vpow.pop %v2078
  %v2080 = vadd.f32 %v2073, 1.0
  %v2081 = vadd.f32 %v2075, 1.0
  %v2082 = vadd.f32 %v2077, 1.0
  %v2083 = vadd.f32 %v2079, 1.0
  %v2084 = vrcp.pop %v2080
  %v2085 = vrcp.pop %v2081
  %v2086 = vrcp.pop %v2082
  %v2087 = vrcp.pop %v2083
  %v2088 = vtanh.pop %v2040
  %v2089 = vtanh.pop %v2041
  %v2090 = vtanh.pop %v2042
  %v2091 = vtanh.pop %v2043
  %v2092 = vsub.f32 0.0, %v2044
  %v2093 = vsub.f32 0.0, %v2045
  %v2094 = vsub.f32 0.0, %v2046
  %v2095 = vsub.f32 0.0, %v2047
  %v2096 = vmul.f32 %v2092, 1.442695
  %v2097 = vpow.pop %v2096
  %v2098 = vmul.f32 %v2093, 1.442695
  %v2099 = vpow.pop %v2098
  %v2100 = vmul.f32 %v2094, 1.442695
  %v2101 = vpow.pop %v2100
  %v2102 = vmul.f32 %v2095, 1.442695
  %v2103 = vpow.pop %v2102
  %v2104 = vadd.f32 %v2097, 1.0
  %v2105 = vadd.f32 %v2099, 1.0
  %v2106 = vadd.f32 %v2101, 1.0
  %v2107 = vadd.f32 %v2103, 1.0
  %v2108 = vrcp.pop %v2104
  %v2109 = vrcp.pop %v2105
  %v2110 = vrcp.pop %v2106
  %v2111 = vrcp.pop %v2107
  %2116 = vrot.lane.b32.xlu0 %v1849, 2
  %v2117 = vpop.permute.xlu0 %2116
  %2118 = vrot.lane.b32.xlu0 %v1850, 2
  %v2119 = vpop.permute.xlu0 %2118
  %2120 = vrot.lane.b32.xlu0 %v1851, 2
  %v2121 = vpop.permute.xlu0 %2120
  %2122 = vrot.lane.b32.xlu0 %v1852, 2
  %v2123 = vpop.permute.xlu0 %2122
  %v2128 = vmul.f32 %v2084, %v2117
  %v2129 = vmul.f32 %v2085, %v2119
  %v2130 = vmul.f32 %v2086, %v2121
  %v2131 = vmul.f32 %v2087, %v2123
  %v2132 = vmul.f32 %v2064, %v2088
  %v2133 = vmul.f32 %v2065, %v2089
  %v2134 = vmul.f32 %v2066, %v2090
  %v2135 = vmul.f32 %v2067, %v2091
  %v2136 = vadd.f32 %v2128, %v2132
  %v2137 = vadd.f32 %v2129, %v2133
  %v2138 = vadd.f32 %v2130, %v2134
  %v2139 = vadd.f32 %v2131, %v2135
  %v2140 = vtanh.pop %v2136
  %v2141 = vtanh.pop %v2137
  %v2142 = vtanh.pop %v2138
  %v2143 = vtanh.pop %v2139
  %v2144 = vmul.f32 %v2108, %v2140
  %v2145 = vmul.f32 %v2109, %v2141
  %v2146 = vmul.f32 %v2110, %v2142
  %v2147 = vmul.f32 %v2111, %v2143
  %v2148 = vpack.c.bf16 %v2145, %v2144
  %v2149 = vpack.c.bf16 %v2147, %v2146
  %2152 = vrot.lane.b32.xlu0 %v2148, 118
  %v2153 = vpop.permute.xlu0 %2152
  %2154 = vrot.lane.b32.xlu0 %v2149, 118
  %v2155 = vpop.permute.xlu0 %2154
  %2158 = vmatprep.subr.bf16.mxu0 0
  %2159 = vmatpush1.bf16.msra.mxu0 0
  %2160 = vmatprep.subr.bf16.mxu0 0
  %2161 = vmatpush1.bf16.msra.mxu0 0
  %2162 = vmatprep.subr.bf16.mxu0 0
  %2163 = vmatpush1.bf16.msra.mxu0 0
  %2164 = vmatprep.subr.bf16.mxu0 0
  %2165 = vmatpush1.bf16.msra.mxu0 0
  %2166 = vmatprep.subr.bf16.mxu0 0
  %2167 = vmatpush1.bf16.msra.mxu0 0
  %2168 = vmatprep.subr.bf16.mxu0 0
  %2169 = vmatpush1.bf16.msra.mxu0 0
  %2170 = vmatprep.subr.bf16.mxu0 0
  %2171 = vmatpush1.bf16.msra.mxu0 %v2155
  %2172 = vmatprep.subr.bf16.mxu0 0
  %2173 = vmatpush1.bf16.msra.mxu0 %v2153
  %2174 = vmatprep.subr.bf16.mxu0 0
  %2175 = vmatpush2.bf16.msra.mxu0 0
  %2176 = vmatprep.subr.bf16.mxu0 0
  %2177 = vmatpush2.bf16.msra.mxu0 0
  %2178 = vmatprep.subr.bf16.mxu0 0
  %2179 = vmatpush2.bf16.msra.mxu0 0
  %2180 = vmatprep.subr.bf16.mxu0 0
  %2181 = vmatpush2.bf16.msra.mxu0 0
  %2182 = vmatprep.subr.bf16.mxu0 0
  %2183 = vmatpush2.bf16.msra.mxu0 0
  %2184 = vmatprep.subr.bf16.mxu0 0
  %2185 = vmatpush2.bf16.msra.mxu0 0
  %2186 = vmatprep.subr.bf16.mxu0 0
  %2187 = vmatpush2.bf16.msra.mxu0 0
  %2188 = vmatprep.subr.bf16.mxu0 0
  %2189 = vmatpush2.bf16.msra.mxu0 0
  %2190 = vmatprep.mubr.bf16.mxu0 0
  %2191 = vmatmul.mubr.bf16.gmra.mxu0 %v501
  %v2192 = vpop.f32.mrf.mxu0
  %v2193 = vadd.f32 0.0, %v2192
  %v2194 = vpop.f32.mrf.mxu0
  %v2195 = vpop.f32.mrf.mxu0
  %v2196 = vadd.f32 0.0, %v2195
  %v2197 = vpop.f32.mrf.mxu0
  %2198 = vmatprep.mubr.bf16.mxu0 0
  %2199 = vmatmul.mubr.bf16.gmra.mxu0 %v504
  %v2200 = vpop.f32.mrf.mxu0
  %v2201 = vadd.f32 0.0, %v2200
  %v2202 = vpop.f32.mrf.mxu0
  %v2203 = vpop.f32.mrf.mxu0
  %v2204 = vadd.f32 0.0, %v2203
  %v2205 = vpop.f32.mrf.mxu0
  %2206 = vmatprep.mubr.bf16.mxu0 0
  %2207 = vmatmul.mubr.bf16.gmra.mxu0 %v507
  %v2208 = vpop.f32.mrf.mxu0
  %v2209 = vadd.f32 0.0, %v2208
  %v2210 = vpop.f32.mrf.mxu0
  %v2211 = vpop.f32.mrf.mxu0
  %v2212 = vadd.f32 0.0, %v2211
  %v2213 = vpop.f32.mrf.mxu0
  %2214 = vmatprep.mubr.bf16.mxu0 0
  %2215 = vmatmul.mubr.bf16.gmra.mxu0 %v510
  %v2216 = vpop.f32.mrf.mxu0
  %v2217 = vadd.f32 0.0, %v2216
  %v2218 = vpop.f32.mrf.mxu0
  %v2219 = vpop.f32.mrf.mxu0
  %v2220 = vadd.f32 0.0, %v2219
  %v2221 = vpop.f32.mrf.mxu0
  %2222 = vmatprep.mubr.bf16.mxu0 0
  %2223 = vmatmul.mubr.bf16.gmra.mxu0 %v513
  %v2224 = vpop.f32.mrf.mxu0
  %v2225 = vadd.f32 0.0, %v2224
  %v2226 = vpop.f32.mrf.mxu0
  %v2227 = vpop.f32.mrf.mxu0
  %v2228 = vadd.f32 0.0, %v2227
  %v2229 = vpop.f32.mrf.mxu0
  %2230 = vmatprep.mubr.bf16.mxu0 0
  %2231 = vmatmul.mubr.bf16.gmra.mxu0 %v516
  %v2232 = vpop.f32.mrf.mxu0
  %v2233 = vadd.f32 0.0, %v2232
  %v2234 = vpop.f32.mrf.mxu0
  %v2235 = vpop.f32.mrf.mxu0
  %v2236 = vadd.f32 0.0, %v2235
  %v2237 = vpop.f32.mrf.mxu0
  %2238 = vmatprep.mubr.bf16.mxu0 0
  %2239 = vmatmul.mubr.bf16.gmra.mxu0 %v519
  %v2240 = vpop.f32.mrf.mxu0
  %v2241 = vadd.f32 0.0, %v2240
  %v2242 = vpop.f32.mrf.mxu0
  %v2243 = vpop.f32.mrf.mxu0
  %v2244 = vadd.f32 0.0, %v2243
  %v2245 = vpop.f32.mrf.mxu0
  %2246 = vmatprep.mubr.bf16.mxu0 0
  %2247 = vmatmul.mubr.bf16.gmra.mxu0 %v522
  %v2248 = vpop.f32.mrf.mxu0
  %v2249 = vadd.f32 0.0, %v2248
  %v2250 = vpop.f32.mrf.mxu0
  %v2251 = vpop.f32.mrf.mxu0
  %v2252 = vadd.f32 0.0, %v2251
  %v2253 = vpop.f32.mrf.mxu0
  %2254 = vdwg.mxu0
  %2271 = vrot.lane.b32.xlu0 %v2193, 12
  %v2272 = vpop.permute.xlu0 %2271
  %2273 = vrot.lane.b32.xlu0 %v2196, 12
  %v2274 = vpop.permute.xlu0 %2273
  %2275 = vrot.lane.b32.xlu0 %v2201, 12
  %v2276 = vpop.permute.xlu0 %2275
  %2277 = vrot.lane.b32.xlu0 %v2204, 12
  %v2278 = vpop.permute.xlu0 %2277
  %2279 = vrot.lane.b32.xlu0 %v2209, 12
  %v2280 = vpop.permute.xlu0 %2279
  %2281 = vrot.lane.b32.xlu0 %v2212, 12
  %v2282 = vpop.permute.xlu0 %2281
  %2283 = vrot.lane.b32.xlu0 %v2217, 12
  %v2284 = vpop.permute.xlu0 %2283
  %2285 = vrot.lane.b32.xlu0 %v2220, 12
  %v2286 = vpop.permute.xlu0 %2285
  %2287 = vrot.lane.b32.xlu0 %v2225, 12
  %v2288 = vpop.permute.xlu0 %2287
  %2289 = vrot.lane.b32.xlu0 %v2228, 12
  %v2290 = vpop.permute.xlu0 %2289
  %2291 = vrot.lane.b32.xlu0 %v2233, 12
  %v2292 = vpop.permute.xlu0 %2291
  %2293 = vrot.lane.b32.xlu0 %v2236, 12
  %v2294 = vpop.permute.xlu0 %2293
  %2295 = vrot.lane.b32.xlu0 %v2241, 12
  %v2296 = vpop.permute.xlu0 %2295
  %2297 = vrot.lane.b32.xlu0 %v2244, 12
  %v2298 = vpop.permute.xlu0 %2297
  %2299 = vrot.lane.b32.xlu0 %v2249, 12
  %v2300 = vpop.permute.xlu0 %2299
  %2301 = vrot.lane.b32.xlu0 %v2252, 12
  %v2302 = vpop.permute.xlu0 %2301
  %v2319 = vadd.f32 %v422, %v2272
  %v2320 = vadd.f32 %v425, %v2274
  %v2321 = vadd.f32 %v430, %v2276
  %v2322 = vadd.f32 %v433, %v2278
  %v2323 = vadd.f32 %v438, %v2280
  %v2324 = vadd.f32 %v441, %v2282
  %v2325 = vadd.f32 %v446, %v2284
  %v2326 = vadd.f32 %v449, %v2286
  %v2327 = vadd.f32 %v454, %v2288
  %v2328 = vadd.f32 %v457, %v2290
  %v2329 = vadd.f32 %v462, %v2292
  %v2330 = vadd.f32 %v465, %v2294
  %v2331 = vadd.f32 %v470, %v2296
  %v2332 = vadd.f32 %v473, %v2298
  %v2333 = vadd.f32 %v478, %v2300
  %v2334 = vadd.f32 %v481, %v2302
  %v2335 = vsub.f32 0.0, %v2319
  %v2336 = vsub.f32 0.0, %v2320
  %v2337 = vsub.f32 0.0, %v2321
  %v2338 = vsub.f32 0.0, %v2322
  %v2339 = vmul.f32 %v2335, 1.442695
  %v2340 = vpow.pop %v2339
  %v2341 = vmul.f32 %v2336, 1.442695
  %v2342 = vpow.pop %v2341
  %v2343 = vmul.f32 %v2337, 1.442695
  %v2344 = vpow.pop %v2343
  %v2345 = vmul.f32 %v2338, 1.442695
  %v2346 = vpow.pop %v2345
  %v2347 = vadd.f32 %v2340, 1.0
  %v2348 = vadd.f32 %v2342, 1.0
  %v2349 = vadd.f32 %v2344, 1.0
  %v2350 = vadd.f32 %v2346, 1.0
  %v2351 = vrcp.pop %v2347
  %v2352 = vrcp.pop %v2348
  %v2353 = vrcp.pop %v2349
  %v2354 = vrcp.pop %v2350
  %v2355 = vsub.f32 0.0, %v2323
  %v2356 = vsub.f32 0.0, %v2324
  %v2357 = vsub.f32 0.0, %v2325
  %v2358 = vsub.f32 0.0, %v2326
  %v2359 = vmul.f32 %v2355, 1.442695
  %v2360 = vpow.pop %v2359
  %v2361 = vmul.f32 %v2356, 1.442695
  %v2362 = vpow.pop %v2361
  %v2363 = vmul.f32 %v2357, 1.442695
  %v2364 = vpow.pop %v2363
  %v2365 = vmul.f32 %v2358, 1.442695
  %v2366 = vpow.pop %v2365
  %v2367 = vadd.f32 %v2360, 1.0
  %v2368 = vadd.f32 %v2362, 1.0
  %v2369 = vadd.f32 %v2364, 1.0
  %v2370 = vadd.f32 %v2366, 1.0
  %v2371 = vrcp.pop %v2367
  %v2372 = vrcp.pop %v2368
  %v2373 = vrcp.pop %v2369
  %v2374 = vrcp.pop %v2370
  %v2375 = vtanh.pop %v2327
  %v2376 = vtanh.pop %v2328
  %v2377 = vtanh.pop %v2329
  %v2378 = vtanh.pop %v2330
  %v2379 = vsub.f32 0.0, %v2331
  %v2380 = vsub.f32 0.0, %v2332
  %v2381 = vsub.f32 0.0, %v2333
  %v2382 = vsub.f32 0.0, %v2334
  %v2383 = vmul.f32 %v2379, 1.442695
  %v2384 = vpow.pop %v2383
  %v2385 = vmul.f32 %v2380, 1.442695
  %v2386 = vpow.pop %v2385
  %v2387 = vmul.f32 %v2381, 1.442695
  %v2388 = vpow.pop %v2387
  %v2389 = vmul.f32 %v2382, 1.442695
  %v2390 = vpow.pop %v2389
  %v2391 = vadd.f32 %v2384, 1.0
  %v2392 = vadd.f32 %v2386, 1.0
  %v2393 = vadd.f32 %v2388, 1.0
  %v2394 = vadd.f32 %v2390, 1.0
  %v2395 = vrcp.pop %v2391
  %v2396 = vrcp.pop %v2392
  %v2397 = vrcp.pop %v2393
  %v2398 = vrcp.pop %v2394
  %2403 = vrot.lane.b32.xlu0 %v2136, 2
  %v2404 = vpop.permute.xlu0 %2403
  %2405 = vrot.lane.b32.xlu0 %v2137, 2
  %v2406 = vpop.permute.xlu0 %2405
  %2407 = vrot.lane.b32.xlu0 %v2138, 2
  %v2408 = vpop.permute.xlu0 %2407
  %2409 = vrot.lane.b32.xlu0 %v2139, 2
  %v2410 = vpop.permute.xlu0 %2409
  %v2415 = vmul.f32 %v2371, %v2404
  %v2416 = vmul.f32 %v2372, %v2406
  %v2417 = vmul.f32 %v2373, %v2408
  %v2418 = vmul.f32 %v2374, %v2410
  %v2419 = vmul.f32 %v2351, %v2375
  %v2420 = vmul.f32 %v2352, %v2376
  %v2421 = vmul.f32 %v2353, %v2377
  %v2422 = vmul.f32 %v2354, %v2378
  %v2423 = vadd.f32 %v2415, %v2419
  %v2424 = vadd.f32 %v2416, %v2420
  %v2425 = vadd.f32 %v2417, %v2421
  %v2426 = vadd.f32 %v2418, %v2422
  %v2427 = vtanh.pop %v2423
  %v2428 = vtanh.pop %v2424
  %v2429 = vtanh.pop %v2425
  %v2430 = vtanh.pop %v2426
  %v2431 = vmul.f32 %v2395, %v2427
  %v2432 = vmul.f32 %v2396, %v2428
  %v2433 = vmul.f32 %v2397, %v2429
  %v2434 = vmul.f32 %v2398, %v2430
  %v2435 = vpack.c.bf16 %v2432, %v2431
  %v2436 = vpack.c.bf16 %v2434, %v2433
  %2439 = vrot.lane.b32.xlu0 %v2435, 116
  %v2440 = vpop.permute.xlu0 %2439
  %2441 = vrot.lane.b32.xlu0 %v2436, 116
  %v2442 = vpop.permute.xlu0 %2441
  %2445 = vmatprep.subr.bf16.mxu0 0
  %2446 = vmatpush1.bf16.msra.mxu0 0
  %2447 = vmatprep.subr.bf16.mxu0 0
  %2448 = vmatpush1.bf16.msra.mxu0 0
  %2449 = vmatprep.subr.bf16.mxu0 0
  %2450 = vmatpush1.bf16.msra.mxu0 0
  %2451 = vmatprep.subr.bf16.mxu0 0
  %2452 = vmatpush1.bf16.msra.mxu0 0
  %2453 = vmatprep.subr.bf16.mxu0 0
  %2454 = vmatpush1.bf16.msra.mxu0 0
  %2455 = vmatprep.subr.bf16.mxu0 0
  %2456 = vmatpush1.bf16.msra.mxu0 0
  %2457 = vmatprep.subr.bf16.mxu0 0
  %2458 = vmatpush1.bf16.msra.mxu0 %v2442
  %2459 = vmatprep.subr.bf16.mxu0 0
  %2460 = vmatpush1.bf16.msra.mxu0 %v2440
  %2461 = vmatprep.subr.bf16.mxu0 0
  %2462 = vmatpush2.bf16.msra.mxu0 0
  %2463 = vmatprep.subr.bf16.mxu0 0
  %2464 = vmatpush2.bf16.msra.mxu0 0
  %2465 = vmatprep.subr.bf16.mxu0 0
  %2466 = vmatpush2.bf16.msra.mxu0 0
  %2467 = vmatprep.subr.bf16.mxu0 0
  %2468 = vmatpush2.bf16.msra.mxu0 0
  %2469 = vmatprep.subr.bf16.mxu0 0
  %2470 = vmatpush2.bf16.msra.mxu0 0
  %2471 = vmatprep.subr.bf16.mxu0 0
  %2472 = vmatpush2.bf16.msra.mxu0 0
  %2473 = vmatprep.subr.bf16.mxu0 0
  %2474 = vmatpush2.bf16.msra.mxu0 0
  %2475 = vmatprep.subr.bf16.mxu0 0
  %2476 = vmatpush2.bf16.msra.mxu0 0
  %2477 = vmatprep.mubr.bf16.mxu0 0
  %2478 = vmatmul.mubr.bf16.gmra.mxu0 %v501
  %v2479 = vpop.f32.mrf.mxu0
  %v2480 = vadd.f32 0.0, %v2479
  %v2481 = vpop.f32.mrf.mxu0
  %v2482 = vpop.f32.mrf.mxu0
  %v2483 = vadd.f32 0.0, %v2482
  %v2484 = vpop.f32.mrf.mxu0
  %2485 = vmatprep.mubr.bf16.mxu0 0
  %2486 = vmatmul.mubr.bf16.gmra.mxu0 %v504
  %v2487 = vpop.f32.mrf.mxu0
  %v2488 = vadd.f32 0.0, %v2487
  %v2489 = vpop.f32.mrf.mxu0
  %v2490 = vpop.f32.mrf.mxu0
  %v2491 = vadd.f32 0.0, %v2490
  %v2492 = vpop.f32.mrf.mxu0
  %2493 = vmatprep.mubr.bf16.mxu0 0
  %2494 = vmatmul.mubr.bf16.gmra.mxu0 %v507
  %v2495 = vpop.f32.mrf.mxu0
  %v2496 = vadd.f32 0.0, %v2495
  %v2497 = vpop.f32.mrf.mxu0
  %v2498 = vpop.f32.mrf.mxu0
  %v2499 = vadd.f32 0.0, %v2498
  %v2500 = vpop.f32.mrf.mxu0
  %2501 = vmatprep.mubr.bf16.mxu0 0
  %2502 = vmatmul.mubr.bf16.gmra.mxu0 %v510
  %v2503 = vpop.f32.mrf.mxu0
  %v2504 = vadd.f32 0.0, %v2503
  %v2505 = vpop.f32.mrf.mxu0
  %v2506 = vpop.f32.mrf.mxu0
  %v2507 = vadd.f32 0.0, %v2506
  %v2508 = vpop.f32.mrf.mxu0
  %2509 = vmatprep.mubr.bf16.mxu0 0
  %2510 = vmatmul.mubr.bf16.gmra.mxu0 %v513
  %v2511 = vpop.f32.mrf.mxu0
  %v2512 = vadd.f32 0.0, %v2511
  %v2513 = vpop.f32.mrf.mxu0
  %v2514 = vpop.f32.mrf.mxu0
  %v2515 = vadd.f32 0.0, %v2514
  %v2516 = vpop.f32.mrf.mxu0
  %2517 = vmatprep.mubr.bf16.mxu0 0
  %2518 = vmatmul.mubr.bf16.gmra.mxu0 %v516
  %v2519 = vpop.f32.mrf.mxu0
  %v2520 = vadd.f32 0.0, %v2519
  %v2521 = vpop.f32.mrf.mxu0
  %v2522 = vpop.f32.mrf.mxu0
  %v2523 = vadd.f32 0.0, %v2522
  %v2524 = vpop.f32.mrf.mxu0
  %2525 = vmatprep.mubr.bf16.mxu0 0
  %2526 = vmatmul.mubr.bf16.gmra.mxu0 %v519
  %v2527 = vpop.f32.mrf.mxu0
  %v2528 = vadd.f32 0.0, %v2527
  %v2529 = vpop.f32.mrf.mxu0
  %v2530 = vpop.f32.mrf.mxu0
  %v2531 = vadd.f32 0.0, %v2530
  %v2532 = vpop.f32.mrf.mxu0
  %2533 = vmatprep.mubr.bf16.mxu0 0
  %2534 = vmatmul.mubr.bf16.gmra.mxu0 %v522
  %v2535 = vpop.f32.mrf.mxu0
  %v2536 = vadd.f32 0.0, %v2535
  %v2537 = vpop.f32.mrf.mxu0
  %v2538 = vpop.f32.mrf.mxu0
  %v2539 = vadd.f32 0.0, %v2538
  %v2540 = vpop.f32.mrf.mxu0
  %2541 = vdwg.mxu0
  %2558 = vrot.lane.b32.xlu0 %v2480, 14
  %v2559 = vpop.permute.xlu0 %2558
  %2560 = vrot.lane.b32.xlu0 %v2483, 14
  %v2561 = vpop.permute.xlu0 %2560
  %2562 = vrot.lane.b32.xlu0 %v2488, 14
  %v2563 = vpop.permute.xlu0 %2562
  %2564 = vrot.lane.b32.xlu0 %v2491, 14
  %v2565 = vpop.permute.xlu0 %2564
  %2566 = vrot.lane.b32.xlu0 %v2496, 14
  %v2567 = vpop.permute.xlu0 %2566
  %2568 = vrot.lane.b32.xlu0 %v2499, 14
  %v2569 = vpop.permute.xlu0 %2568
  %2570 = vrot.lane.b32.xlu0 %v2504, 14
  %v2571 = vpop.permute.xlu0 %2570
  %2572 = vrot.lane.b32.xlu0 %v2507, 14
  %v2573 = vpop.permute.xlu0 %2572
  %2574 = vrot.lane.b32.xlu0 %v2512, 14
  %v2575 = vpop.permute.xlu0 %2574
  %2576 = vrot.lane.b32.xlu0 %v2515, 14
  %v2577 = vpop.permute.xlu0 %2576
  %2578 = vrot.lane.b32.xlu0 %v2520, 14
  %v2579 = vpop.permute.xlu0 %2578
  %2580 = vrot.lane.b32.xlu0 %v2523, 14
  %v2581 = vpop.permute.xlu0 %2580
  %2582 = vrot.lane.b32.xlu0 %v2528, 14
  %v2583 = vpop.permute.xlu0 %2582
  %2584 = vrot.lane.b32.xlu0 %v2531, 14
  %v2585 = vpop.permute.xlu0 %2584
  %2586 = vrot.lane.b32.xlu0 %v2536, 14
  %v2587 = vpop.permute.xlu0 %2586
  %2588 = vrot.lane.b32.xlu0 %v2539, 14
  %v2589 = vpop.permute.xlu0 %2588
  %v2606 = vadd.f32 %v422, %v2559
  %v2607 = vadd.f32 %v425, %v2561
  %v2608 = vadd.f32 %v430, %v2563
  %v2609 = vadd.f32 %v433, %v2565
  %v2610 = vadd.f32 %v438, %v2567
  %v2611 = vadd.f32 %v441, %v2569
  %v2612 = vadd.f32 %v446, %v2571
  %v2613 = vadd.f32 %v449, %v2573
  %v2614 = vadd.f32 %v454, %v2575
  %v2615 = vadd.f32 %v457, %v2577
  %v2616 = vadd.f32 %v462, %v2579
  %v2617 = vadd.f32 %v465, %v2581
  %v2618 = vadd.f32 %v470, %v2583
  %v2619 = vadd.f32 %v473, %v2585
  %v2620 = vadd.f32 %v478, %v2587
  %v2621 = vadd.f32 %v481, %v2589
  %v2622 = vsub.f32 0.0, %v2606
  %v2623 = vsub.f32 0.0, %v2607
  %v2624 = vsub.f32 0.0, %v2608
  %v2625 = vsub.f32 0.0, %v2609
  %v2626 = vmul.f32 %v2622, 1.442695
  %v2627 = vpow.pop %v2626
  %v2628 = vmul.f32 %v2623, 1.442695
  %v2629 = vpow.pop %v2628
  %v2630 = vmul.f32 %v2624, 1.442695
  %v2631 = vpow.pop %v2630
  %v2632 = vmul.f32 %v2625, 1.442695
  %v2633 = vpow.pop %v2632
  %v2634 = vadd.f32 %v2627, 1.0
  %v2635 = vadd.f32 %v2629, 1.0
  %v2636 = vadd.f32 %v2631, 1.0
  %v2637 = vadd.f32 %v2633, 1.0
  %v2638 = vrcp.pop %v2634
  %v2639 = vrcp.pop %v2635
  %v2640 = vrcp.pop %v2636
  %v2641 = vrcp.pop %v2637
  %v2642 = vsub.f32 0.0, %v2610
  %v2643 = vsub.f32 0.0, %v2611
  %v2644 = vsub.f32 0.0, %v2612
  %v2645 = vsub.f32 0.0, %v2613
  %v2646 = vmul.f32 %v2642, 1.442695
  %v2647 = vpow.pop %v2646
  %v2648 = vmul.f32 %v2643, 1.442695
  %v2649 = vpow.pop %v2648
  %v2650 = vmul.f32 %v2644, 1.442695
  %v2651 = vpow.pop %v2650
  %v2652 = vmul.f32 %v2645, 1.442695
  %v2653 = vpow.pop %v2652
  %v2654 = vadd.f32 %v2647, 1.0
  %v2655 = vadd.f32 %v2649, 1.0
  %v2656 = vadd.f32 %v2651, 1.0
  %v2657 = vadd.f32 %v2653, 1.0
  %v2658 = vrcp.pop %v2654
  %v2659 = vrcp.pop %v2655
  %v2660 = vrcp.pop %v2656
  %v2661 = vrcp.pop %v2657
  %v2662 = vtanh.pop %v2614
  %v2663 = vtanh.pop %v2615
  %v2664 = vtanh.pop %v2616
  %v2665 = vtanh.pop %v2617
  %v2666 = vsub.f32 0.0, %v2618
  %v2667 = vsub.f32 0.0, %v2619
  %v2668 = vsub.f32 0.0, %v2620
  %v2669 = vsub.f32 0.0, %v2621
  %v2670 = vmul.f32 %v2666, 1.442695
  %v2671 = vpow.pop %v2670
  %v2672 = vmul.f32 %v2667, 1.442695
  %v2673 = vpow.pop %v2672
  %v2674 = vmul.f32 %v2668, 1.442695
  %v2675 = vpow.pop %v2674
  %v2676 = vmul.f32 %v2669, 1.442695
  %v2677 = vpow.pop %v2676
  %v2678 = vadd.f32 %v2671, 1.0
  %v2679 = vadd.f32 %v2673, 1.0
  %v2680 = vadd.f32 %v2675, 1.0
  %v2681 = vadd.f32 %v2677, 1.0
  %v2682 = vrcp.pop %v2678
  %v2683 = vrcp.pop %v2679
  %v2684 = vrcp.pop %v2680
  %v2685 = vrcp.pop %v2681
  %2690 = vrot.lane.b32.xlu0 %v2423, 2
  %v2691 = vpop.permute.xlu0 %2690
  %2692 = vrot.lane.b32.xlu0 %v2424, 2
  %v2693 = vpop.permute.xlu0 %2692
  %2694 = vrot.lane.b32.xlu0 %v2425, 2
  %v2695 = vpop.permute.xlu0 %2694
  %2696 = vrot.lane.b32.xlu0 %v2426, 2
  %v2697 = vpop.permute.xlu0 %2696
  %v2702 = vmul.f32 %v2658, %v2691
  %v2703 = vmul.f32 %v2659, %v2693
  %v2704 = vmul.f32 %v2660, %v2695
  %v2705 = vmul.f32 %v2661, %v2697
  %v2706 = vmul.f32 %v2638, %v2662
  %v2707 = vmul.f32 %v2639, %v2663
  %v2708 = vmul.f32 %v2640, %v2664
  %v2709 = vmul.f32 %v2641, %v2665
  %v2710 = vadd.f32 %v2702, %v2706
  %v2711 = vadd.f32 %v2703, %v2707
  %v2712 = vadd.f32 %v2704, %v2708
  %v2713 = vadd.f32 %v2705, %v2709
  %v2714 = vtanh.pop %v2710
  %v2715 = vtanh.pop %v2711
  %v2716 = vtanh.pop %v2712
  %v2717 = vtanh.pop %v2713
  %v2718 = vmul.f32 %v2682, %v2714
  %v2719 = vmul.f32 %v2683, %v2715
  %v2720 = vmul.f32 %v2684, %v2716
  %v2721 = vmul.f32 %v2685, %v2717
  %vm2722 = vcmask 15360
  %v2723 = vsel %vm2722, %v717, %v996
  %v2724 = vsel %vm2722, %v718, %v997
  %v2725 = vsel %vm2722, %v719, %v998
  %v2726 = vsel %vm2722, %v720, %v999
  %vm2727 = vcmask 31744
  %v2728 = vsel %vm2727, %v2723, %v1283
  %v2729 = vsel %vm2727, %v2724, %v1284
  %v2730 = vsel %vm2727, %v2725, %v1285
  %v2731 = vsel %vm2727, %v2726, %v1286
  %v2732 = vsel %vm71, %v2728, %v1570
  %v2733 = vsel %vm71, %v2729, %v1571
  %v2734 = vsel %vm71, %v2730, %v1572
  %v2735 = vsel %vm71, %v2731, %v1573
  %vm2736 = vcmask 64512
  %v2737 = vsel %vm2736, %v2732, %v1857
  %v2738 = vsel %vm2736, %v2733, %v1858
  %v2739 = vsel %vm2736, %v2734, %v1859
  %v2740 = vsel %vm2736, %v2735, %v1860
  %vm2741 = vcmask 80896
  %v2742 = vsel %vm2741, %v2737, %v2144
  %v2743 = vsel %vm2741, %v2738, %v2145
  %v2744 = vsel %vm2741, %v2739, %v2146
  %v2745 = vsel %vm2741, %v2740, %v2147
  %vm2746 = vcmask 97280
  %v2747 = vsel %vm2746, %v2742, %v2431
  %v2748 = vsel %vm2746, %v2743, %v2432
  %v2749 = vsel %vm2746, %v2744, %v2433
  %v2750 = vsel %vm2746, %v2745, %v2434
  %vm2751 = vcmask 113664
  %v2752 = vsel %vm2751, %v2747, %v2718
  %v2753 = vsel %vm2751, %v2748, %v2719
  %v2754 = vsel %vm2751, %v2749, %v2720
  %v2755 = vsel %vm2751, %v2750, %v2721
  %v2756 = vadd.f32 %v2752, %v194
  %v2757 = vadd.f32 %v2753, %v197
  %v2758 = vadd.f32 %v2754, %v202
  %v2759 = vadd.f32 %v2755, %v205
  %vm2760 = vcmp.gt.f32.partialorder %v2756, 0.0
  %vm2761 = vcmp.gt.f32.partialorder %v2757, 0.0
  %vm2762 = vcmp.gt.f32.partialorder %v2758, 0.0
  %vm2763 = vcmp.gt.f32.partialorder %v2759, 0.0
  %v2764 = vmin.f32 %v2756, 0.0
  %v2765 = vmin.f32 %v2757, 0.0
  %v2766 = vmin.f32 %v2758, 0.0
  %v2767 = vmin.f32 %v2759, 0.0
  %v2768 = vmul.f32 %v2764, 1.442695
  %v2769 = vpow.pop %v2768
  %v2770 = vmul.f32 %v2765, 1.442695
  %v2771 = vpow.pop %v2770
  %v2772 = vmul.f32 %v2766, 1.442695
  %v2773 = vpow.pop %v2772
  %v2774 = vmul.f32 %v2767, 1.442695
  %v2775 = vpow.pop %v2774
  %v2776 = vsub.f32 %v2769, 1.0
  %v2777 = vsub.f32 %v2771, 1.0
  %v2778 = vsub.f32 %v2773, 1.0
  %v2779 = vsub.f32 %v2775, 1.0
  %v2780 = vsel %vm2760, %v2756, %v2776
  %v2781 = vsel %vm2761, %v2757, %v2777
  %v2782 = vsel %vm2762, %v2758, %v2778
  %v2783 = vsel %vm2763, %v2759, %v2779
  %s2784 = scalar_lea.vmem %s3, 16
  %v2785 = vld [vmem:[%s2784] sm:$0xf]
  %v2786 = vld [vmem:[%s2784 + $0x4] sm:$0xf]
  %v2787 = vld [vmem:[%s4] sm:$0xff]
  %v2788 = vld [vmem:[%s4 + $0x8] sm:$0xff]
  %v2789 = vpack.c.bf16 %v2781, %v2780
  %v2790 = vpack.c.bf16 %v2783, %v2782
  %v2793 = vunpack.c.l.b16 %v33
  %v2794 = vunpack.c.l.b16 %v34
  %v2795 = vpack.c.b16 %v2794, %v2793
  %vm2797 = vcmask 130048
  %v2799 = vsel %vm2797, %v2789, 0
  %v2802 = vsel %vm2797, %v2790, 0
  %2804 = vmatprep.subr.bf16.mxu0 0
  %2805 = vmatpush1.bf16.msra.mxu0 0
  %2806 = vmatprep.subr.bf16.mxu0 0
  %2807 = vmatpush1.bf16.msra.mxu0 0
  %2808 = vmatprep.subr.bf16.mxu0 0
  %2809 = vmatpush1.bf16.msra.mxu0 0
  %2810 = vmatprep.subr.bf16.mxu0 0
  %2811 = vmatpush1.bf16.msra.mxu0 0
  %2812 = vmatprep.subr.bf16.mxu0 0
  %2813 = vmatpush1.bf16.msra.mxu0 0
  %2814 = vmatprep.subr.bf16.mxu0 0
  %2815 = vmatpush1.bf16.msra.mxu0 0
  %2816 = vmatprep.subr.bf16.mxu0 0
  %2817 = vmatpush1.bf16.msra.mxu0 0
  %2818 = vmatprep.subr.bf16.mxu0 0
  %2819 = vmatpush1.bf16.msra.mxu0 %v2795
  %2820 = vmatprep.subr.bf16.mxu0 0
  %2821 = vmatpush2.bf16.msra.mxu0 0
  %2822 = vmatprep.subr.bf16.mxu0 0
  %2823 = vmatpush2.bf16.msra.mxu0 0
  %2824 = vmatprep.subr.bf16.mxu0 0
  %2825 = vmatpush2.bf16.msra.mxu0 0
  %2826 = vmatprep.subr.bf16.mxu0 0
  %2827 = vmatpush2.bf16.msra.mxu0 0
  %2828 = vmatprep.subr.bf16.mxu0 0
  %2829 = vmatpush2.bf16.msra.mxu0 0
  %2830 = vmatprep.subr.bf16.mxu0 0
  %2831 = vmatpush2.bf16.msra.mxu0 0
  %2832 = vmatprep.subr.bf16.mxu0 0
  %2833 = vmatpush2.bf16.msra.mxu0 0
  %2834 = vmatprep.subr.bf16.mxu0 0
  %2835 = vmatpush2.bf16.msra.mxu0 0
  %2836 = vmatprep.mubr.bf16.mxu0 0
  %2837 = vmatmul.mubr.bf16.gmra.mxu0 %v2799
  %v2838 = vpop.f32.mrf.mxu0
  %v2839 = vadd.f32 0.0, %v2838
  %v2840 = vpop.f32.mrf.mxu0
  %v2841 = vpop.f32.mrf.mxu0
  %v2842 = vadd.f32 0.0, %v2841
  %v2843 = vpop.f32.mrf.mxu0
  %2844 = vmatprep.mubr.bf16.mxu0 0
  %2845 = vmatmul.mubr.bf16.gmra.mxu0 %v2802
  %v2846 = vpop.f32.mrf.mxu0
  %v2847 = vadd.f32 0.0, %v2846
  %v2848 = vpop.f32.mrf.mxu0
  %v2849 = vpop.f32.mrf.mxu0
  %v2850 = vadd.f32 0.0, %v2849
  %v2851 = vpop.f32.mrf.mxu0
  %2852 = vdwg.mxu0
  %2857 = vrot.lane.b32.xlu0 %v2839, 126
  %v2858 = vpop.permute.xlu0 %2857
  %2859 = vrot.lane.b32.xlu0 %v2842, 126
  %v2860 = vpop.permute.xlu0 %2859
  %2861 = vrot.lane.b32.xlu0 %v2847, 126
  %v2862 = vpop.permute.xlu0 %2861
  %2863 = vrot.lane.b32.xlu0 %v2850, 126
  %v2864 = vpop.permute.xlu0 %2863
  %2869 = vrot.lane.b32.xlu0 %v2839, 124
  %v2870 = vpop.permute.xlu0 %2869
  %2871 = vrot.lane.b32.xlu0 %v2842, 124
  %v2872 = vpop.permute.xlu0 %2871
  %2873 = vrot.lane.b32.xlu0 %v2847, 124
  %v2874 = vpop.permute.xlu0 %2873
  %2875 = vrot.lane.b32.xlu0 %v2850, 124
  %v2876 = vpop.permute.xlu0 %2875
  %2881 = vrot.lane.b32.xlu0 %v2839, 122
  %v2882 = vpop.permute.xlu0 %2881
  %2883 = vrot.lane.b32.xlu0 %v2842, 122
  %v2884 = vpop.permute.xlu0 %2883
  %2885 = vrot.lane.b32.xlu0 %v2847, 122
  %v2886 = vpop.permute.xlu0 %2885
  %2887 = vrot.lane.b32.xlu0 %v2850, 122
  %v2888 = vpop.permute.xlu0 %2887
  %v2893 = vpack.c.bf16 %v2842, %v2839
  %v2894 = vpack.c.bf16 %v2850, %v2847
  %v2895 = vpack.c.bf16 %v2860, %v2858
  %v2896 = vpack.c.bf16 %v2864, %v2862
  %v2897 = vpack.c.bf16 %v2872, %v2870
  %v2898 = vpack.c.bf16 %v2876, %v2874
  %v2899 = vpack.c.bf16 %v2884, %v2882
  %v2900 = vpack.c.bf16 %v2888, %v2886
  %2902 = vset.pattern.permute.xlu0 1
  %2903 = vperm.xlu0 %2902, %v2787
  %v2904 = vpop.permute.xlu0 %2903
  %2907 = vset.pattern.permute.xlu0 1
  %2908 = vperm.xlu0 %2907, %v2788
  %v2909 = vpop.permute.xlu0 %2908
  %v2913 = vunpack.c.l.b16 %v2785
  %v2914 = vunpack.c.l.b16 %v2786
  %v2915 = vpack.c.b16 %v2914, %v2913
  %2917 = vmatprep.subr.bf16.mxu0 0
  %2918 = vmatpush1.bf16.msra.mxu0 %v2900
  %2919 = vmatprep.subr.bf16.mxu0 0
  %2920 = vmatpush1.bf16.msra.mxu0 %v2899
  %2921 = vmatprep.subr.bf16.mxu0 0
  %2922 = vmatpush1.bf16.msra.mxu0 %v2898
  %2923 = vmatprep.subr.bf16.mxu0 0
  %2924 = vmatpush1.bf16.msra.mxu0 %v2897
  %2925 = vmatprep.subr.bf16.mxu0 0
  %2926 = vmatpush1.bf16.msra.mxu0 %v2896
  %2927 = vmatprep.subr.bf16.mxu0 0
  %2928 = vmatpush1.bf16.msra.mxu0 %v2895
  %2929 = vmatprep.subr.bf16.mxu0 0
  %2930 = vmatpush1.bf16.msra.mxu0 %v2894
  %2931 = vmatprep.subr.bf16.mxu0 0
  %2932 = vmatpush1.bf16.msra.mxu0 %v2893
  %2933 = vmatprep.subr.bf16.mxu0 0
  %2934 = vmatpush2.bf16.msra.mxu0 0
  %2935 = vmatprep.subr.bf16.mxu0 0
  %2936 = vmatpush2.bf16.msra.mxu0 0
  %2937 = vmatprep.subr.bf16.mxu0 0
  %2938 = vmatpush2.bf16.msra.mxu0 0
  %2939 = vmatprep.subr.bf16.mxu0 0
  %2940 = vmatpush2.bf16.msra.mxu0 0
  %2941 = vmatprep.subr.bf16.mxu0 0
  %2942 = vmatpush2.bf16.msra.mxu0 0
  %2943 = vmatprep.subr.bf16.mxu0 0
  %2944 = vmatpush2.bf16.msra.mxu0 0
  %2945 = vmatprep.subr.bf16.mxu0 0
  %2946 = vmatpush2.bf16.msra.mxu0 0
  %2947 = vmatprep.subr.bf16.mxu0 0
  %2948 = vmatpush2.bf16.msra.mxu0 0
  %2949 = vmatprep.mubr.bf16.mxu0 0
  %2950 = vmatmul.mubr.bf16.gmra.mxu0 %v2915
  %v2951 = vpop.f32.mrf.mxu0
  %v2952 = vadd.f32 %v2904, %v2951
  %v2953 = vpop.f32.mrf.mxu0
  %v2954 = vpop.f32.mrf.mxu0
  %v2955 = vadd.f32 %v2909, %v2954
  %v2956 = vpop.f32.mrf.mxu0
  %2957 = vdwg.mxu0
  %vm2958 = vcmp.gt.f32.partialorder %v2952, 0.0
  %vm2959 = vcmp.gt.f32.partialorder %v2955, 0.0
  %v2960 = vmin.f32 %v2952, 0.0
  %v2961 = vmin.f32 %v2955, 0.0
  %v2962 = vmul.f32 %v2960, 1.442695
  %v2963 = vpow.pop %v2962
  %v2964 = vmul.f32 %v2961, 1.442695
  %v2965 = vpow.pop %v2964
  %v2966 = vsub.f32 %v2963, 1.0
  %v2967 = vsub.f32 %v2965, 1.0
  %v2968 = vsel %vm2958, %v2952, %v2966
  %v2969 = vsel %vm2959, %v2955, %v2967
  %s2970 = scalar_lea.vmem %s3, 32
  %v2971 = vld [vmem:[%s2970] sm:$0xf]
  %v2972 = vld [vmem:[%s4] sm:$0xff]
  %2975 = vrot.lane.b32.xlu0 %v2968, 2
  %v2976 = vpop.permute.xlu0 %2975
  %2977 = vrot.lane.b32.xlu0 %v2969, 2
  %v2978 = vpop.permute.xlu0 %2977
  %v2981 = vsel %vm2722, 0.0, %v2976
  %v2982 = vsel %vm2722, 0.0, %v2978
  %vm2983 = vcmask 277504
  %v2984 = vsel %vm2983, %v2981, 0.0
  %v2985 = vsel %vm2983, %v2982, 0.0
  %2988 = vrot.lane.b32.xlu0 %v2984, 126
  %v2989 = vpop.permute.xlu0 %2988
  %2990 = vrot.lane.b32.xlu0 %v2985, 126
  %v2991 = vpop.permute.xlu0 %2990
  %2994 = vrot.lane.b32.xlu0 %v2984, 124
  %v2995 = vpop.permute.xlu0 %2994
  %2996 = vrot.lane.b32.xlu0 %v2985, 124
  %v2997 = vpop.permute.xlu0 %2996
  %v3000 = vpack.c.bf16 %v2985, %v2984
  %v3001 = vpack.c.bf16 %v2991, %v2989
  %v3002 = vpack.c.bf16 %v2997, %v2995
  %3004 = vset.pattern.permute.xlu0 2
  %3005 = vperm.xlu0 %3004, %v2972
  %v3006 = vpop.permute.xlu0 %3005
  %vm3008 = vcmask 392192
  %v3010 = vsel %vm3008, %v2971, 0
  %3012 = vmatprep.subr.bf16.mxu0 0
  %3013 = vmatpush1.bf16.msra.mxu0 0
  %3014 = vmatprep.subr.bf16.mxu0 0
  %3015 = vmatpush1.bf16.msra.mxu0 0
  %3016 = vmatprep.subr.bf16.mxu0 0
  %3017 = vmatpush1.bf16.msra.mxu0 0
  %3018 = vmatprep.subr.bf16.mxu0 0
  %3019 = vmatpush1.bf16.msra.mxu0 0
  %3020 = vmatprep.subr.bf16.mxu0 0
  %3021 = vmatpush1.bf16.msra.mxu0 0
  %3022 = vmatprep.subr.bf16.mxu0 0
  %3023 = vmatpush1.bf16.msra.mxu0 %v3002
  %3024 = vmatprep.subr.bf16.mxu0 0
  %3025 = vmatpush1.bf16.msra.mxu0 %v3001
  %3026 = vmatprep.subr.bf16.mxu0 0
  %3027 = vmatpush1.bf16.msra.mxu0 %v3000
  %3028 = vmatprep.subr.bf16.mxu0 0
  %3029 = vmatpush2.bf16.msra.mxu0 0
  %3030 = vmatprep.subr.bf16.mxu0 0
  %3031 = vmatpush2.bf16.msra.mxu0 0
  %3032 = vmatprep.subr.bf16.mxu0 0
  %3033 = vmatpush2.bf16.msra.mxu0 0
  %3034 = vmatprep.subr.bf16.mxu0 0
  %3035 = vmatpush2.bf16.msra.mxu0 0
  %3036 = vmatprep.subr.bf16.mxu0 0
  %3037 = vmatpush2.bf16.msra.mxu0 0
  %3038 = vmatprep.subr.bf16.mxu0 0
  %3039 = vmatpush2.bf16.msra.mxu0 0
  %3040 = vmatprep.subr.bf16.mxu0 0
  %3041 = vmatpush2.bf16.msra.mxu0 0
  %3042 = vmatprep.subr.bf16.mxu0 0
  %3043 = vmatpush2.bf16.msra.mxu0 0
  %3044 = vmatprep.mubr.bf16.mxu0 0
  %3045 = vmatmul.mubr.bf16.gmra.mxu0 %v3010
  %v3046 = vpop.f32.mrf.mxu0
  %v3047 = vadd.f32 %v3006, %v3046
  %v3048 = vpop.f32.mrf.mxu0
  %v3049 = vpop.f32.mrf.mxu0
  %v3050 = vpop.f32.mrf.mxu0
  %3051 = vdwg.mxu0
  %vm3052 = vcmp.gt.f32.partialorder %v3047, 0.0
  %v3053 = vmin.f32 %v3047, 0.0
  %v3054 = vmul.f32 %v3053, 1.442695
  %v3055 = vpow.pop %v3054
  %v3056 = vsub.f32 %v3055, 1.0
  %v3057 = vsel %vm3052, %v3047, %v3056
  %s3058 = scalar_lea.vmem %s3, 48
  %v3059 = vld [vmem:[%s3058] sm:$0xf]
  %v3060 = vld [vmem:[%s3058 + $0x4] sm:$0xf]
  %v3061 = vpack.c.bf16 %v3057, %v3057
  %3062 = vset.pattern.permute.xlu0 3
  %3063 = vperm.xlu0 %3062, %v2787
  %v3064 = vpop.permute.xlu0 %3063
  %3066 = vset.pattern.permute.xlu0 3
  %3067 = vperm.xlu0 %3066, %v2788
  %v3068 = vpop.permute.xlu0 %3067
  %v3072 = vunpack.c.l.b16 %v3059
  %v3073 = vunpack.c.l.b16 %v3060
  %v3074 = vpack.c.b16 %v3073, %v3072
  %v3076 = vsel %vm2736, %v3074, 0
  %vm3078 = vcmask 1043456
  %v3080 = vsel %vm3078, %v3061, 0
  %3082 = vmatprep.subr.bf16.mxu0 0
  %3083 = vmatpush1.bf16.msra.mxu0 0
  %3084 = vmatprep.subr.bf16.mxu0 0
  %3085 = vmatpush1.bf16.msra.mxu0 0
  %3086 = vmatprep.subr.bf16.mxu0 0
  %3087 = vmatpush1.bf16.msra.mxu0 0
  %3088 = vmatprep.subr.bf16.mxu0 0
  %3089 = vmatpush1.bf16.msra.mxu0 0
  %3090 = vmatprep.subr.bf16.mxu0 0
  %3091 = vmatpush1.bf16.msra.mxu0 0
  %3092 = vmatprep.subr.bf16.mxu0 0
  %3093 = vmatpush1.bf16.msra.mxu0 0
  %3094 = vmatprep.subr.bf16.mxu0 0
  %3095 = vmatpush1.bf16.msra.mxu0 0
  %3096 = vmatprep.subr.bf16.mxu0 0
  %3097 = vmatpush1.bf16.msra.mxu0 %v3080
  %3098 = vmatprep.subr.bf16.mxu0 0
  %3099 = vmatpush2.bf16.msra.mxu0 0
  %3100 = vmatprep.subr.bf16.mxu0 0
  %3101 = vmatpush2.bf16.msra.mxu0 0
  %3102 = vmatprep.subr.bf16.mxu0 0
  %3103 = vmatpush2.bf16.msra.mxu0 0
  %3104 = vmatprep.subr.bf16.mxu0 0
  %3105 = vmatpush2.bf16.msra.mxu0 0
  %3106 = vmatprep.subr.bf16.mxu0 0
  %3107 = vmatpush2.bf16.msra.mxu0 0
  %3108 = vmatprep.subr.bf16.mxu0 0
  %3109 = vmatpush2.bf16.msra.mxu0 0
  %3110 = vmatprep.subr.bf16.mxu0 0
  %3111 = vmatpush2.bf16.msra.mxu0 0
  %3112 = vmatprep.subr.bf16.mxu0 0
  %3113 = vmatpush2.bf16.msra.mxu0 0
  %3114 = vmatprep.mubr.bf16.mxu0 0
  %3115 = vmatmul.mubr.bf16.gmra.mxu0 %v3076
  %v3116 = vpop.f32.mrf.mxu0
  %v3117 = vadd.f32 %v3064, %v3116
  %v3118 = vpop.f32.mrf.mxu0
  %v3119 = vpop.f32.mrf.mxu0
  %v3120 = vadd.f32 %v3068, %v3119
  %v3121 = vpop.f32.mrf.mxu0
  %3122 = vdwg.mxu0
  %v3123 = vadd.f32 %v2952, %v3117
  %v3124 = vadd.f32 %v2955, %v3120
  %vm3125 = vcmp.gt.f32.partialorder %v3123, 0.0
  %vm3126 = vcmp.gt.f32.partialorder %v3124, 0.0
  %v3127 = vmin.f32 %v3123, 0.0
  %v3128 = vmin.f32 %v3124, 0.0
  %v3129 = vmul.f32 %v3127, 1.442695
  %v3130 = vpow.pop %v3129
  %v3131 = vmul.f32 %v3128, 1.442695
  %v3132 = vpow.pop %v3131
  %v3133 = vsub.f32 %v3130, 1.0
  %v3134 = vsub.f32 %v3132, 1.0
  %v3135 = vsel %vm3125, %v3123, %v3133
  %v3136 = vsel %vm3126, %v3124, %v3134
  %s3137 = scalar_lea.vmem %s3, 64
  %v3138 = vld [vmem:[%s3137] sm:$0xf]
  %v3139 = vpack.c.bf16 %v3136, %v3135
  %v3144 = vunpack.c.l.b16 %v35
  %v3145 = vunpack.c.l.b16 %v36
  %v3146 = vunpack.c.l.b16 %v37
  %v3147 = vunpack.c.l.b16 %v38
  %v3148 = vpack.c.b16 %v3145, %v3144
  %v3149 = vpack.c.b16 %v3147, %v3146
  %v3153 = vsel %vm362, %v3139, 0
  %3155 = vmatprep.subr.bf16.mxu0 0
  %3156 = vmatpush1.bf16.msra.mxu0 0
  %3157 = vmatprep.subr.bf16.mxu0 0
  %3158 = vmatpush1.bf16.msra.mxu0 0
  %3159 = vmatprep.subr.bf16.mxu0 0
  %3160 = vmatpush1.bf16.msra.mxu0 0
  %3161 = vmatprep.subr.bf16.mxu0 0
  %3162 = vmatpush1.bf16.msra.mxu0 0
  %3163 = vmatprep.subr.bf16.mxu0 0
  %3164 = vmatpush1.bf16.msra.mxu0 0
  %3165 = vmatprep.subr.bf16.mxu0 0
  %3166 = vmatpush1.bf16.msra.mxu0 0
  %3167 = vmatprep.subr.bf16.mxu0 0
  %3168 = vmatpush1.bf16.msra.mxu0 %v3149
  %3169 = vmatprep.subr.bf16.mxu0 0
  %3170 = vmatpush1.bf16.msra.mxu0 %v3148
  %3171 = vmatprep.subr.bf16.mxu0 0
  %3172 = vmatpush2.bf16.msra.mxu0 0
  %3173 = vmatprep.subr.bf16.mxu0 0
  %3174 = vmatpush2.bf16.msra.mxu0 0
  %3175 = vmatprep.subr.bf16.mxu0 0
  %3176 = vmatpush2.bf16.msra.mxu0 0
  %3177 = vmatprep.subr.bf16.mxu0 0
  %3178 = vmatpush2.bf16.msra.mxu0 0
  %3179 = vmatprep.subr.bf16.mxu0 0
  %3180 = vmatpush2.bf16.msra.mxu0 0
  %3181 = vmatprep.subr.bf16.mxu0 0
  %3182 = vmatpush2.bf16.msra.mxu0 0
  %3183 = vmatprep.subr.bf16.mxu0 0
  %3184 = vmatpush2.bf16.msra.mxu0 0
  %3185 = vmatprep.subr.bf16.mxu0 0
  %3186 = vmatpush2.bf16.msra.mxu0 0
  %3187 = vmatprep.mubr.bf16.mxu0 0
  %3188 = vmatmul.mubr.bf16.gmra.mxu0 %v3153
  %v3189 = vpop.f32.mrf.mxu0
  %v3190 = vadd.f32 0.0, %v3189
  %v3191 = vpop.f32.mrf.mxu0
  %v3192 = vpop.f32.mrf.mxu0
  %v3193 = vadd.f32 0.0, %v3192
  %v3194 = vpop.f32.mrf.mxu0
  %3195 = vdwg.mxu0
  %3198 = vrot.lane.b32.xlu0 %v3190, 126
  %v3199 = vpop.permute.xlu0 %3198
  %3200 = vrot.lane.b32.xlu0 %v3193, 126
  %v3201 = vpop.permute.xlu0 %3200
  %3204 = vrot.lane.b32.xlu0 %v3190, 124
  %v3205 = vpop.permute.xlu0 %3204
  %3206 = vrot.lane.b32.xlu0 %v3193, 124
  %v3207 = vpop.permute.xlu0 %3206
  %3210 = vrot.lane.b32.xlu0 %v3190, 122
  %v3211 = vpop.permute.xlu0 %3210
  %3212 = vrot.lane.b32.xlu0 %v3193, 122
  %v3213 = vpop.permute.xlu0 %3212
  %v3216 = vpack.c.bf16 %v3193, %v3190
  %v3217 = vpack.c.bf16 %v3201, %v3199
  %v3218 = vpack.c.bf16 %v3207, %v3205
  %v3219 = vpack.c.bf16 %v3213, %v3211
  %3220 = vset.pattern.permute.xlu0 4
  %3221 = vperm.xlu0 %3220, %v2972
  %v3222 = vpop.permute.xlu0 %3221
  %vm3224 = vcmask 523264
  %v3226 = vsel %vm3224, %v3138, 0
  %3228 = vmatprep.subr.bf16.mxu0 0
  %3229 = vmatpush1.bf16.msra.mxu0 0
  %3230 = vmatprep.subr.bf16.mxu0 0
  %3231 = vmatpush1.bf16.msra.mxu0 0
  %3232 = vmatprep.subr.bf16.mxu0 0
  %3233 = vmatpush1.bf16.msra.mxu0 0
  %3234 = vmatprep.subr.bf16.mxu0 0
  %3235 = vmatpush1.bf16.msra.mxu0 0
  %3236 = vmatprep.subr.bf16.mxu0 0
  %3237 = vmatpush1.bf16.msra.mxu0 %v3219
  %3238 = vmatprep.subr.bf16.mxu0 0
  %3239 = vmatpush1.bf16.msra.mxu0 %v3218
  %3240 = vmatprep.subr.bf16.mxu0 0
  %3241 = vmatpush1.bf16.msra.mxu0 %v3217
  %3242 = vmatprep.subr.bf16.mxu0 0
  %3243 = vmatpush1.bf16.msra.mxu0 %v3216
  %3244 = vmatprep.subr.bf16.mxu0 0
  %3245 = vmatpush2.bf16.msra.mxu0 0
  %3246 = vmatprep.subr.bf16.mxu0 0
  %3247 = vmatpush2.bf16.msra.mxu0 0
  %3248 = vmatprep.subr.bf16.mxu0 0
  %3249 = vmatpush2.bf16.msra.mxu0 0
  %3250 = vmatprep.subr.bf16.mxu0 0
  %3251 = vmatpush2.bf16.msra.mxu0 0
  %3252 = vmatprep.subr.bf16.mxu0 0
  %3253 = vmatpush2.bf16.msra.mxu0 0
  %3254 = vmatprep.subr.bf16.mxu0 0
  %3255 = vmatpush2.bf16.msra.mxu0 0
  %3256 = vmatprep.subr.bf16.mxu0 0
  %3257 = vmatpush2.bf16.msra.mxu0 0
  %3258 = vmatprep.subr.bf16.mxu0 0
  %3259 = vmatpush2.bf16.msra.mxu0 0
  %3260 = vmatprep.mubr.bf16.mxu0 0
  %3261 = vmatmul.mubr.bf16.gmra.mxu0 %v3226
  %v3262 = vpop.f32.mrf.mxu0
  %v3263 = vadd.f32 %v3222, %v3262
  %v3264 = vpop.f32.mrf.mxu0
  %v3265 = vpop.f32.mrf.mxu0
  %v3266 = vpop.f32.mrf.mxu0
  %3267 = vdwg.mxu0
  %vm3268 = vcmp.gt.f32.partialorder %v3263, 0.0
  %v3269 = vmin.f32 %v3263, 0.0
  %v3270 = vmul.f32 %v3269, 1.442695
  %v3271 = vpow.pop %v3270
  %v3272 = vsub.f32 %v3271, 1.0
  %v3273 = vsel %vm3268, %v3263, %v3272
  %s3274 = scalar_lea.vmem %s3, 80
  %v3275 = vld [vmem:[%s3274] sm:$0x3]
  %v3276 = vld [vmem:[%s4] sm:$0xf]
  %3278 = vrot.lane.b32.xlu0 %v3273, 2
  %v3279 = vpop.permute.xlu0 %3278
  %v3281 = vsel %vm2722, 0.0, %v3279
  %vm3282 = vcmask 539648
  %v3283 = vsel %vm3282, %v3281, 0.0
  %3285 = vrot.lane.b32.xlu0 %v3283, 126
  %v3286 = vpop.permute.xlu0 %3285
  %3288 = vrot.lane.b32.xlu0 %v3283, 124
  %v3289 = vpop.permute.xlu0 %3288
  %v3291 = vpack.c.bf16 %v3286, %v3283
  %v3292 = vpack.c.bf16 %v3289, %v3289
  %3294 = vset.pattern.permute.xlu0 5
  %3295 = vperm.xlu0 %3294, %v3276
  %v3296 = vpop.permute.xlu0 %3295
  %vm3298 = vcmask 195584
  %v3300 = vsel %vm3298, %v3275, 0
  %v3303 = vsel %vm3078, %v3292, 0
  %3305 = vmatprep.subr.bf16.mxu0 0
  %3306 = vmatpush1.bf16.msra.mxu0 0
  %3307 = vmatprep.subr.bf16.mxu0 0
  %3308 = vmatpush1.bf16.msra.mxu0 0
  %3309 = vmatprep.subr.bf16.mxu0 0
  %3310 = vmatpush1.bf16.msra.mxu0 0
  %3311 = vmatprep.subr.bf16.mxu0 0
  %3312 = vmatpush1.bf16.msra.mxu0 0
  %3313 = vmatprep.subr.bf16.mxu0 0
  %3314 = vmatpush1.bf16.msra.mxu0 0
  %3315 = vmatprep.subr.bf16.mxu0 0
  %3316 = vmatpush1.bf16.msra.mxu0 0
  %3317 = vmatprep.subr.bf16.mxu0 0
  %3318 = vmatpush1.bf16.msra.mxu0 %v3303
  %3319 = vmatprep.subr.bf16.mxu0 0
  %3320 = vmatpush1.bf16.msra.mxu0 %v3291
  %3321 = vmatprep.subr.bf16.mxu0 0
  %3322 = vmatpush2.bf16.msra.mxu0 0
  %3323 = vmatprep.subr.bf16.mxu0 0
  %3324 = vmatpush2.bf16.msra.mxu0 0
  %3325 = vmatprep.subr.bf16.mxu0 0
  %3326 = vmatpush2.bf16.msra.mxu0 0
  %3327 = vmatprep.subr.bf16.mxu0 0
  %3328 = vmatpush2.bf16.msra.mxu0 0
  %3329 = vmatprep.subr.bf16.mxu0 0
  %3330 = vmatpush2.bf16.msra.mxu0 0
  %3331 = vmatprep.subr.bf16.mxu0 0
  %3332 = vmatpush2.bf16.msra.mxu0 0
  %3333 = vmatprep.subr.bf16.mxu0 0
  %3334 = vmatpush2.bf16.msra.mxu0 0
  %3335 = vmatprep.subr.bf16.mxu0 0
  %3336 = vmatpush2.bf16.msra.mxu0 0
  %3337 = vmatprep.mubr.bf16.mxu0 0
  %3338 = vmatmul.mubr.bf16.gmra.mxu0 %v3300
  %v3339 = vpop.f32.mrf.mxu0
  %v3340 = vadd.f32 %v3296, %v3339
  %v3341 = vpop.f32.mrf.mxu0
  %v3342 = vpop.f32.mrf.mxu0
  %v3343 = vpop.f32.mrf.mxu0
  %3344 = vdwg.mxu0
  %vm3345 = vcmp.gt.f32.partialorder %v3340, 0.0
  %v3346 = vmin.f32 %v3340, 0.0
  %v3347 = vmul.f32 %v3346, 1.442695
  %v3348 = vpow.pop %v3347
  %v3349 = vsub.f32 %v3348, 1.0
  %v3350 = vsel %vm3345, %v3340, %v3349
  %s3351 = scalar_lea.vmem %s3, 96
  %v3352 = vld [vmem:[%s3351] sm:$0xf]
  %v3353 = vpack.c.bf16 %v3350, %v3350
  %3354 = vset.pattern.permute.xlu0 6
  %3355 = vperm.xlu0 %3354, %v2972
  %v3356 = vpop.permute.xlu0 %3355
  %v3359 = vsel %vm2727, %v3352, 0
  %vm3361 = vcmask 1041408
  %v3363 = vsel %vm3361, %v3353, 0
  %3365 = vmatprep.subr.bf16.mxu0 0
  %3366 = vmatpush1.bf16.msra.mxu0 0
  %3367 = vmatprep.subr.bf16.mxu0 0
  %3368 = vmatpush1.bf16.msra.mxu0 0
  %3369 = vmatprep.subr.bf16.mxu0 0
  %3370 = vmatpush1.bf16.msra.mxu0 0
  %3371 = vmatprep.subr.bf16.mxu0 0
  %3372 = vmatpush1.bf16.msra.mxu0 0
  %3373 = vmatprep.subr.bf16.mxu0 0
  %3374 = vmatpush1.bf16.msra.mxu0 0
  %3375 = vmatprep.subr.bf16.mxu0 0
  %3376 = vmatpush1.bf16.msra.mxu0 0
  %3377 = vmatprep.subr.bf16.mxu0 0
  %3378 = vmatpush1.bf16.msra.mxu0 0
  %3379 = vmatprep.subr.bf16.mxu0 0
  %3380 = vmatpush1.bf16.msra.mxu0 %v3363
  %3381 = vmatprep.subr.bf16.mxu0 0
  %3382 = vmatpush2.bf16.msra.mxu0 0
  %3383 = vmatprep.subr.bf16.mxu0 0
  %3384 = vmatpush2.bf16.msra.mxu0 0
  %3385 = vmatprep.subr.bf16.mxu0 0
  %3386 = vmatpush2.bf16.msra.mxu0 0
  %3387 = vmatprep.subr.bf16.mxu0 0
  %3388 = vmatpush2.bf16.msra.mxu0 0
  %3389 = vmatprep.subr.bf16.mxu0 0
  %3390 = vmatpush2.bf16.msra.mxu0 0
  %3391 = vmatprep.subr.bf16.mxu0 0
  %3392 = vmatpush2.bf16.msra.mxu0 0
  %3393 = vmatprep.subr.bf16.mxu0 0
  %3394 = vmatpush2.bf16.msra.mxu0 0
  %3395 = vmatprep.subr.bf16.mxu0 0
  %3396 = vmatpush2.bf16.msra.mxu0 0
  %3397 = vmatprep.mubr.bf16.mxu0 0
  %3398 = vmatmul.mubr.bf16.gmra.mxu0 %v3359
  %v3399 = vpop.f32.mrf.mxu0
  %v3400 = vadd.f32 %v3356, %v3399
  %v3401 = vpop.f32.mrf.mxu0
  %v3402 = vpop.f32.mrf.mxu0
  %v3403 = vpop.f32.mrf.mxu0
  %3404 = vdwg.mxu0
  %v3405 = vadd.f32 %v3263, %v3400
  %vm3406 = vcmp.gt.f32.partialorder %v3405, 0.0
  %v3407 = vmin.f32 %v3405, 0.0
  %v3408 = vmul.f32 %v3407, 1.442695
  %v3409 = vpow.pop %v3408
  %v3410 = vsub.f32 %v3409, 1.0
  %v3411 = vsel %vm3406, %v3405, %v3410
  %s3412 = scalar_lea.vmem %s3, 112
  %v3413 = vld [vmem:[%s3412] sm:$0x1]
  %v3414 = vld [vmem:[%s4] sm:$0x1]
  %3416 = vrot.lane.b32.xlu0 %v3411, 6
  %v3417 = vpop.permute.xlu0 %3416
  %v3419 = vsel %vm71, 0.0, %v3417
  %vm3420 = vcmask 572416
  %v3421 = vsel %vm3420, %v3419, 0.0
  %3423 = vrot.lane.b32.xlu0 %v3421, 126
  %v3424 = vpop.permute.xlu0 %3423
  %3426 = vrot.lane.b32.xlu0 %v3421, 124
  %v3427 = vpop.permute.xlu0 %3426
  %3429 = vrot.lane.b32.xlu0 %v3421, 122
  %v3430 = vpop.permute.xlu0 %3429
  %3432 = vrot.lane.b32.xlu0 %v3421, 120
  %v3433 = vpop.permute.xlu0 %3432
  %3435 = vrot.lane.b32.xlu0 %v3421, 118
  %v3436 = vpop.permute.xlu0 %3435
  %3438 = vrot.lane.b32.xlu0 %v3421, 116
  %v3439 = vpop.permute.xlu0 %3438
  %v3441 = vpack.c.bf16 %v3424, %v3421
  %v3442 = vpack.c.bf16 %v3430, %v3427
  %v3443 = vpack.c.bf16 %v3436, %v3433
  %v3444 = vpack.c.bf16 %v3439, %v3439
  %3446 = vset.pattern.permute.xlu0 7
  %3447 = vperm.xlu0 %3446, %v3414
  %v3448 = vpop.permute.xlu0 %3447
  %vm3450 = vcmask 457728
  %v3452 = vsel %vm3450, %v3413, 0
  %v3455 = vsel %vm3078, %v3444, 0
  %3457 = vmatprep.subr.bf16.mxu0 0
  %3458 = vmatpush1.bf16.msra.mxu0 0
  %3459 = vmatprep.subr.bf16.mxu0 0
  %3460 = vmatpush1.bf16.msra.mxu0 0
  %3461 = vmatprep.subr.bf16.mxu0 0
  %3462 = vmatpush1.bf16.msra.mxu0 0
  %3463 = vmatprep.subr.bf16.mxu0 0
  %3464 = vmatpush1.bf16.msra.mxu0 0
  %3465 = vmatprep.subr.bf16.mxu0 0
  %3466 = vmatpush1.bf16.msra.mxu0 %v3455
  %3467 = vmatprep.subr.bf16.mxu0 0
  %3468 = vmatpush1.bf16.msra.mxu0 %v3443
  %3469 = vmatprep.subr.bf16.mxu0 0
  %3470 = vmatpush1.bf16.msra.mxu0 %v3442
  %3471 = vmatprep.subr.bf16.mxu0 0
  %3472 = vmatpush1.bf16.msra.mxu0 %v3441
  %3473 = vmatprep.subr.bf16.mxu0 0
  %3474 = vmatpush2.bf16.msra.mxu0 0
  %3475 = vmatprep.subr.bf16.mxu0 0
  %3476 = vmatpush2.bf16.msra.mxu0 0
  %3477 = vmatprep.subr.bf16.mxu0 0
  %3478 = vmatpush2.bf16.msra.mxu0 0
  %3479 = vmatprep.subr.bf16.mxu0 0
  %3480 = vmatpush2.bf16.msra.mxu0 0
  %3481 = vmatprep.subr.bf16.mxu0 0
  %3482 = vmatpush2.bf16.msra.mxu0 0
  %3483 = vmatprep.subr.bf16.mxu0 0
  %3484 = vmatpush2.bf16.msra.mxu0 0
  %3485 = vmatprep.subr.bf16.mxu0 0
  %3486 = vmatpush2.bf16.msra.mxu0 0
  %3487 = vmatprep.subr.bf16.mxu0 0
  %3488 = vmatpush2.bf16.msra.mxu0 0
  %3489 = vmatprep.mubr.bf16.mxu0 0
  %3490 = vmatmul.mubr.bf16.gmra.mxu0 %v3452
  %v3491 = vpop.f32.mrf.mxu0
  %v3492 = vadd.f32 %v3448, %v3491
  %v3493 = vpop.f32.mrf.mxu0
  %v3494 = vpop.f32.mrf.mxu0
  %v3495 = vpop.f32.mrf.mxu0
  %3496 = vdwg.mxu0
  %v3497 = vtanh.pop %v3492
  %vm3498 = vcmask 516096
  %3499 = vst.msk [vmem:[%s9] sm:$0x1] %vm3498, %v3497
  // Predicated region
  $region38: #{vae2_forward.3} parent=0 // pred_check
    _
  $region39: #{vae2_forward.3} parent=0 // pred_check_branch
    %3501 = sbr.rel (0) target = $region41
  $region40: #{vae2_forward.3} parent=0 // pred_region
    _
  $region41: #{vae2_forward.3} parent=0 // pred_fallthru
    _
  // Predicated region
  $region42: #{vae2_forward.3} parent=0 // pred_check
    _
  $region43: #{vae2_forward.3} parent=0 // pred_check_branch
    %3503 = sbr.rel (0) target = $region45
  $region44: #{vae2_forward.3} parent=0 // pred_region
    _
  $region45: #{vae2_forward.3} parent=0 // pred_fallthru
    _

// kernel: vae2_forward.2
$region0: #{vae2_forward.2}
  #allocation0 [shape = 'u32[]', space=smem, size = 0x4, offset = 0x4, fixed_abs, tag = 'smem constant byte address 0x4 - core index']
  #allocation1 [shape = 'u32[144,128]{1,0:T(1,128)}', space=vmem, size = 0x12000, scoped, tag = 'internal scratch']
  %s0 = inlined_call_operand.vmem [shape: f32[1,64], index: 0, kind: input, shape index: {}]
  %s1 = inlined_call_operand.vmem [shape: bf16[8,32,224], index: 1, kind: input, shape index: {}]
  %s2 = inlined_call_operand.vmem [shape: f32[32,8], index: 2, kind: input, shape index: {}]
  %s3 = inlined_call_operand.vmem [shape: bf16[1,128,64], index: 3, kind: input, shape index: {}]
  %s4 = inlined_call_operand.vmem [shape: f32[1,128,1], index: 4, kind: input, shape index: {}]
  %s5 = inlined_call_operand.vmem [shape: bf16[64,32], index: 5, kind: input, shape index: {}]
  %s6 = inlined_call_operand.vmem [shape: bf16[32,16], index: 6, kind: input, shape index: {}]
  %s7 = inlined_call_operand.vmem [shape: f32[32,16], index: 7, kind: output, shape index: {}]
  %s8 = sld [smem:[#allocation0]]
  $region38: #{vae2_forward.2} parent=0
    _
  %s10 = ssub.s32 1, %s8
  %s11 = scalar_select 0, %s10, %s8
  // Predicated region
  $region2: #{vae2_forward.2} parent=0 // pred_check
    _
  $region3: #{vae2_forward.2} parent=0 // pred_check_branch
    %13 = sbr.rel (0) target = $region5
  $region4: #{vae2_forward.2} parent=0 // pred_region
    _
  $region5: #{vae2_forward.2} parent=0 // pred_fallthru
    _
  // Predicated region
  $region6: #{vae2_forward.2} parent=0 // pred_check
    _
  $region7: #{vae2_forward.2} parent=0 // pred_check_branch
    %15 = sbr.rel (0) target = $region9
  $region8: #{vae2_forward.2} parent=0 // pred_region
    _
  $region9: #{vae2_forward.2} parent=0 // pred_fallthru
    _
  // Predicated region
  $region10: #{vae2_forward.2} parent=0 // pred_check
    _
  $region11: #{vae2_forward.2} parent=0 // pred_check_branch
    %17 = sbr.rel (0) target = $region13
  $region12: #{vae2_forward.2} parent=0 // pred_region
    _
  $region13: #{vae2_forward.2} parent=0 // pred_fallthru
    _
  // Predicated region
  $region14: #{vae2_forward.2} parent=0 // pred_check
    _
  $region15: #{vae2_forward.2} parent=0 // pred_check_branch
    %19 = sbr.rel (0) target = $region17
  $region16: #{vae2_forward.2} parent=0 // pred_region
    _
  $region17: #{vae2_forward.2} parent=0 // pred_fallthru
    _
  // Predicated region
  $region18: #{vae2_forward.2} parent=0 // pred_check
    _
  $region19: #{vae2_forward.2} parent=0 // pred_check_branch
    %21 = sbr.rel (0) target = $region21
  $region20: #{vae2_forward.2} parent=0 // pred_region
    _
  $region21: #{vae2_forward.2} parent=0 // pred_fallthru
    _
  // Predicated region
  $region22: #{vae2_forward.2} parent=0 // pred_check
    _
  $region23: #{vae2_forward.2} parent=0 // pred_check_branch
    %23 = sbr.rel (0) target = $region25
  $region24: #{vae2_forward.2} parent=0 // pred_region
    _
  $region25: #{vae2_forward.2} parent=0 // pred_fallthru
    _
  // Predicated region
  $region26: #{vae2_forward.2} parent=0 // pred_check
    _
  $region27: #{vae2_forward.2} parent=0 // pred_check_branch
    %25 = sbr.rel (0) target = $region29
  $region28: #{vae2_forward.2} parent=0 // pred_region
    _
  $region29: #{vae2_forward.2} parent=0 // pred_fallthru
    _
  %v27 = vld [vmem:[%s5] sm:$0xf]
  %v28 = vld [vmem:[%s5 + $0x4] sm:$0xf]
  %v29 = vld [vmem:[%s5 + $0x8] sm:$0xf]
  %v30 = vld [vmem:[%s5 + $0xc] sm:$0xf]
  %v31 = vld [vmem:[%s5 + $0x10] sm:$0xf]
  %v32 = vld [vmem:[%s5 + $0x14] sm:$0xf]
  %v33 = vld [vmem:[%s5 + $0x18] sm:$0xf]
  %v34 = vld [vmem:[%s5 + $0x1c] sm:$0xf]
  %v35 = vld [vmem:[%s6] sm:$0xf]
  %v36 = vld [vmem:[%s6 + $0x4] sm:$0xf]
  %v37 = vld [vmem:[%s6 + $0x8] sm:$0xf]
  %v38 = vld [vmem:[%s6 + $0xc] sm:$0xf]
  %v39 = vld [vmem:[%s0] sm:$0x1]
  %v40 = vld [vmem:[%s1] sm:$0xf]
  %v41 = vld [vmem:[%s2] sm:$0xff]
  %v43 = vlaneseq
  %v44 = vshrl.u32 %v43, 7
  %v45 = vsub.s32 0, %v44
  %v46 = vrot.slane %v39, %v45
  %47 = vrot.lane.b32.xlu0 %v46, 6
  %v48 = vpop.permute.xlu0 %47
  %vm50 = vcmask 48128
  %v51 = vsel %vm50, 0.0, %v48
  %vm52 = vcmask 572416
  %v53 = vsel %vm52, %v51, 0.0
  %v55 = vrot.slane %v53, 7
  %56 = vrot.lane.b32.xlu0 %v55, 126
  %v57 = vpop.permute.xlu0 %56
  %v59 = vrot.slane %v53, 6
  %60 = vrot.lane.b32.xlu0 %v59, 124
  %v61 = vpop.permute.xlu0 %60
  %v63 = vrot.slane %v53, 5
  %64 = vrot.lane.b32.xlu0 %v63, 122
  %v65 = vpop.permute.xlu0 %64
  %v67 = vrot.slane %v53, 4
  %68 = vrot.lane.b32.xlu0 %v67, 120
  %v69 = vpop.permute.xlu0 %68
  %v71 = vrot.slane %v53, 3
  %72 = vrot.lane.b32.xlu0 %v71, 118
  %v73 = vpop.permute.xlu0 %72
  %v75 = vrot.slane %v53, 2
  %76 = vrot.lane.b32.xlu0 %v75, 116
  %v77 = vpop.permute.xlu0 %76
  %vm79 = vcmask 1040384
  %v80 = vsel %vm79, %v53, %v57
  %vm81 = vcmask 1041408
  %v82 = vsel %vm81, %v80, %v61
  %vm83 = vcmask 1042432
  %v84 = vsel %vm83, %v82, %v65
  %vm85 = vcmask 1043456
  %v86 = vsel %vm85, %v84, %v69
  %vm87 = vcmask 1044480
  %v88 = vsel %vm87, %v86, %v73
  %vm89 = vcmask 1045504
  %v90 = vsel %vm89, %v88, %v77
  %v91 = vpack.c.bf16 %v90, %v90
  %93 = vset.pattern.permute.xlu0 0
  %94 = vperm.xlu0 %93, %v41
  %v95 = vpop.permute.xlu0 %94
  %vm97 = vcmask 56320
  %v99 = vsel %vm97, %v40, 0
  %v101 = vsel %vm83, 4294967295, 65535
  %v102 = vsel %vm85, %v101, 0
  %v104 = vand.u32 %v91, %v102
  %106 = vmatprep.subr.bf16.mxu0 0
  %107 = vmatpush1.bf16.msra.mxu0 0
  %108 = vmatprep.subr.bf16.mxu0 0
  %109 = vmatpush1.bf16.msra.mxu0 0
  %110 = vmatprep.subr.bf16.mxu0 0
  %111 = vmatpush1.bf16.msra.mxu0 0
  %112 = vmatprep.subr.bf16.mxu0 0
  %113 = vmatpush1.bf16.msra.mxu0 0
  %114 = vmatprep.subr.bf16.mxu0 0
  %115 = vmatpush1.bf16.msra.mxu0 0
  %116 = vmatprep.subr.bf16.mxu0 0
  %117 = vmatpush1.bf16.msra.mxu0 0
  %118 = vmatprep.subr.bf16.mxu0 0
  %119 = vmatpush1.bf16.msra.mxu0 0
  %120 = vmatprep.subr.bf16.mxu0 0
  %121 = vmatpush1.bf16.msra.mxu0 %v104
  %122 = vmatprep.subr.bf16.mxu0 0
  %123 = vmatpush2.bf16.msra.mxu0 0
  %124 = vmatprep.subr.bf16.mxu0 0
  %125 = vmatpush2.bf16.msra.mxu0 0
  %126 = vmatprep.subr.bf16.mxu0 0
  %127 = vmatpush2.bf16.msra.mxu0 0
  %128 = vmatprep.subr.bf16.mxu0 0
  %129 = vmatpush2.bf16.msra.mxu0 0
  %130 = vmatprep.subr.bf16.mxu0 0
  %131 = vmatpush2.bf16.msra.mxu0 0
  %132 = vmatprep.subr.bf16.mxu0 0
  %133 = vmatpush2.bf16.msra.mxu0 0
  %134 = vmatprep.subr.bf16.mxu0 0
  %135 = vmatpush2.bf16.msra.mxu0 0
  %136 = vmatprep.subr.bf16.mxu0 0
  %137 = vmatpush2.bf16.msra.mxu0 0
  %138 = vmatprep.mubr.bf16.mxu0 0
  %139 = vmatmul.mubr.bf16.gmra.mxu0 %v99
  %v140 = vpop.f32.mrf.mxu0
  %v141 = vadd.f32 %v95, %v140
  %v142 = vpop.f32.mrf.mxu0
  %v143 = vpop.f32.mrf.mxu0
  %v144 = vpop.f32.mrf.mxu0
  %145 = vdwg.mxu0
  %vm146 = vcmp.gt.f32.partialorder %v141, 0.0
  %v147 = vmin.f32 %v141, 0.0
  %v148 = vmul.f32 %v147, 1.442695
  %v149 = vpow.pop %v148
  %v150 = vsub.f32 %v149, 1.0
  %v151 = vsel %vm146, %v141, %v150
  %s152 = scalar_lea.vmem %s1, 32
  %v153 = vld [vmem:[%s152] sm:$0x3]
  %v154 = vld [vmem:[%s2] sm:$0xf]
  %156 = vrot.lane.b32.xlu0 %v151, 2
  %v157 = vpop.permute.xlu0 %156
  %vm159 = vcmask 15360
  %v160 = vsel %vm159, 0.0, %v157
  %vm161 = vcmask 539648
  %v162 = vsel %vm161, %v160, 0.0
  %164 = vrot.lane.b32.xlu0 %v162, 126
  %v165 = vpop.permute.xlu0 %164
  %167 = vrot.lane.b32.xlu0 %v162, 124
  %v168 = vpop.permute.xlu0 %167
  %v170 = vpack.c.bf16 %v165, %v162
  %v171 = vpack.c.bf16 %v168, %v168
  %173 = vset.pattern.permute.xlu0 1
  %174 = vperm.xlu0 %173, %v154
  %v175 = vpop.permute.xlu0 %174
  %vm177 = vcmask 195584
  %v179 = vsel %vm177, %v153, 0
  %v182 = vsel %vm85, %v171, 0
  %184 = vmatprep.subr.bf16.mxu0 0
  %185 = vmatpush1.bf16.msra.mxu0 0
  %186 = vmatprep.subr.bf16.mxu0 0
  %187 = vmatpush1.bf16.msra.mxu0 0
  %188 = vmatprep.subr.bf16.mxu0 0
  %189 = vmatpush1.bf16.msra.mxu0 0
  %190 = vmatprep.subr.bf16.mxu0 0
  %191 = vmatpush1.bf16.msra.mxu0 0
  %192 = vmatprep.subr.bf16.mxu0 0
  %193 = vmatpush1.bf16.msra.mxu0 0
  %194 = vmatprep.subr.bf16.mxu0 0
  %195 = vmatpush1.bf16.msra.mxu0 0
  %196 = vmatprep.subr.bf16.mxu0 0
  %197 = vmatpush1.bf16.msra.mxu0 %v182
  %198 = vmatprep.subr.bf16.mxu0 0
  %199 = vmatpush1.bf16.msra.mxu0 %v170
  %200 = vmatprep.subr.bf16.mxu0 0
  %201 = vmatpush2.bf16.msra.mxu0 0
  %202 = vmatprep.subr.bf16.mxu0 0
  %203 = vmatpush2.bf16.msra.mxu0 0
  %204 = vmatprep.subr.bf16.mxu0 0
  %205 = vmatpush2.bf16.msra.mxu0 0
  %206 = vmatprep.subr.bf16.mxu0 0
  %207 = vmatpush2.bf16.msra.mxu0 0
  %208 = vmatprep.subr.bf16.mxu0 0
  %209 = vmatpush2.bf16.msra.mxu0 0
  %210 = vmatprep.subr.bf16.mxu0 0
  %211 = vmatpush2.bf16.msra.mxu0 0
  %212 = vmatprep.subr.bf16.mxu0 0
  %213 = vmatpush2.bf16.msra.mxu0 0
  %214 = vmatprep.subr.bf16.mxu0 0
  %215 = vmatpush2.bf16.msra.mxu0 0
  %216 = vmatprep.mubr.bf16.mxu0 0
  %217 = vmatmul.mubr.bf16.gmra.mxu0 %v179
  %v218 = vpop.f32.mrf.mxu0
  %v219 = vadd.f32 %v175, %v218
  %v220 = vpop.f32.mrf.mxu0
  %v221 = vpop.f32.mrf.mxu0
  %v222 = vpop.f32.mrf.mxu0
  %223 = vdwg.mxu0
  %vm224 = vcmp.gt.f32.partialorder %v219, 0.0
  %v225 = vmin.f32 %v219, 0.0
  %v226 = vmul.f32 %v225, 1.442695
  %v227 = vpow.pop %v226
  %v228 = vsub.f32 %v227, 1.0
  %v229 = vsel %vm224, %v219, %v228
  %s230 = scalar_lea.vmem %s1, 64
  %v231 = vld [vmem:[%s230] sm:$0xf]
  %v232 = vpack.c.bf16 %v229, %v229
  %233 = vset.pattern.permute.xlu0 2
  %234 = vperm.xlu0 %233, %v41
  %v235 = vpop.permute.xlu0 %234
  %vm237 = vcmask 31744
  %v239 = vsel %vm237, %v231, 0
  %v242 = vsel %vm81, %v232, 0
  %244 = vmatprep.subr.bf16.mxu0 0
  %245 = vmatpush1.bf16.msra.mxu0 0
  %246 = vmatprep.subr.bf16.mxu0 0
  %247 = vmatpush1.bf16.msra.mxu0 0
  %248 = vmatprep.subr.bf16.mxu0 0
  %249 = vmatpush1.bf16.msra.mxu0 0
  %250 = vmatprep.subr.bf16.mxu0 0
  %251 = vmatpush1.bf16.msra.mxu0 0
  %252 = vmatprep.subr.bf16.mxu0 0
  %253 = vmatpush1.bf16.msra.mxu0 0
  %254 = vmatprep.subr.bf16.mxu0 0
  %255 = vmatpush1.bf16.msra.mxu0 0
  %256 = vmatprep.subr.bf16.mxu0 0
  %257 = vmatpush1.bf16.msra.mxu0 0
  %258 = vmatprep.subr.bf16.mxu0 0
  %259 = vmatpush1.bf16.msra.mxu0 %v242
  %260 = vmatprep.subr.bf16.mxu0 0
  %261 = vmatpush2.bf16.msra.mxu0 0
  %262 = vmatprep.subr.bf16.mxu0 0
  %263 = vmatpush2.bf16.msra.mxu0 0
  %264 = vmatprep.subr.bf16.mxu0 0
  %265 = vmatpush2.bf16.msra.mxu0 0
  %266 = vmatprep.subr.bf16.mxu0 0
  %267 = vmatpush2.bf16.msra.mxu0 0
  %268 = vmatprep.subr.bf16.mxu0 0
  %269 = vmatpush2.bf16.msra.mxu0 0
  %270 = vmatprep.subr.bf16.mxu0 0
  %271 = vmatpush2.bf16.msra.mxu0 0
  %272 = vmatprep.subr.bf16.mxu0 0
  %273 = vmatpush2.bf16.msra.mxu0 0
  %274 = vmatprep.subr.bf16.mxu0 0
  %275 = vmatpush2.bf16.msra.mxu0 0
  %276 = vmatprep.mubr.bf16.mxu0 0
  %277 = vmatmul.mubr.bf16.gmra.mxu0 %v239
  %v278 = vpop.f32.mrf.mxu0
  %v279 = vadd.f32 %v235, %v278
  %v280 = vpop.f32.mrf.mxu0
  %v281 = vpop.f32.mrf.mxu0
  %v282 = vpop.f32.mrf.mxu0
  %283 = vdwg.mxu0
  %v284 = vadd.f32 %v141, %v279
  %vm285 = vcmp.gt.f32.partialorder %v284, 0.0
  %v286 = vmin.f32 %v284, 0.0
  %v287 = vmul.f32 %v286, 1.442695
  %v288 = vpow.pop %v287
  %v289 = vsub.f32 %v288, 1.0
  %v290 = vsel %vm285, %v284, %v289
  %s291 = scalar_lea.vmem %s1, 96
  %v292 = vld [vmem:[%s291] sm:$0xf]
  %v293 = vld [vmem:[%s291 + $0x8] sm:$0xf]
  %v294 = vld [vmem:[%s2] sm:$0xff]
  %v295 = vld [vmem:[%s2 + $0x8] sm:$0xff]
  %297 = vrot.lane.b32.xlu0 %v290, 2
  %v298 = vpop.permute.xlu0 %297
  %v300 = vsel %vm159, 0.0, %v298
  %v301 = vsel %vm161, %v300, 0.0
  %303 = vrot.lane.b32.xlu0 %v301, 126
  %v304 = vpop.permute.xlu0 %303
  %306 = vrot.lane.b32.xlu0 %v301, 124
  %v307 = vpop.permute.xlu0 %306
  %309 = vrot.lane.b32.xlu0 %v301, 122
  %v310 = vpop.permute.xlu0 %309
  %v312 = vpack.c.bf16 %v304, %v301
  %v313 = vpack.c.bf16 %v310, %v307
  %v322 = vunpack.c.l.b16 %v27
  %v323 = vunpack.c.l.b16 %v28
  %v324 = vunpack.c.l.b16 %v29
  %v325 = vunpack.c.l.b16 %v30
  %v326 = vunpack.c.l.b16 %v31
  %v327 = vunpack.c.l.b16 %v32
  %v328 = vunpack.c.l.b16 %v33
  %v329 = vunpack.c.l.b16 %v34
  %v330 = vpack.c.b16 %v323, %v322
  %v331 = vpack.c.b16 %v325, %v324
  %v332 = vpack.c.b16 %v327, %v326
  %v333 = vpack.c.b16 %v329, %v328
  %vm338 = vcmask 523264
  %v340 = vsel %vm338, %v312, 0
  %v343 = vsel %vm338, %v313, 0
  %345 = vmatprep.subr.bf16.mxu0 0
  %346 = vmatpush1.bf16.msra.mxu0 0
  %347 = vmatprep.subr.bf16.mxu0 0
  %348 = vmatpush1.bf16.msra.mxu0 0
  %349 = vmatprep.subr.bf16.mxu0 0
  %350 = vmatpush1.bf16.msra.mxu0 0
  %351 = vmatprep.subr.bf16.mxu0 0
  %352 = vmatpush1.bf16.msra.mxu0 0
  %353 = vmatprep.subr.bf16.mxu0 0
  %354 = vmatpush1.bf16.msra.mxu0 %v333
  %355 = vmatprep.subr.bf16.mxu0 0
  %356 = vmatpush1.bf16.msra.mxu0 %v332
  %357 = vmatprep.subr.bf16.mxu0 0
  %358 = vmatpush1.bf16.msra.mxu0 %v331
  %359 = vmatprep.subr.bf16.mxu0 0
  %360 = vmatpush1.bf16.msra.mxu0 %v330
  %361 = vmatprep.subr.bf16.mxu0 0
  %362 = vmatpush2.bf16.msra.mxu0 0
  %363 = vmatprep.subr.bf16.mxu0 0
  %364 = vmatpush2.bf16.msra.mxu0 0
  %365 = vmatprep.subr.bf16.mxu0 0
  %366 = vmatpush2.bf16.msra.mxu0 0
  %367 = vmatprep.subr.bf16.mxu0 0
  %368 = vmatpush2.bf16.msra.mxu0 0
  %369 = vmatprep.subr.bf16.mxu0 0
  %370 = vmatpush2.bf16.msra.mxu0 0
  %371 = vmatprep.subr.bf16.mxu0 0
  %372 = vmatpush2.bf16.msra.mxu0 0
  %373 = vmatprep.subr.bf16.mxu0 0
  %374 = vmatpush2.bf16.msra.mxu0 0
  %375 = vmatprep.subr.bf16.mxu0 0
  %376 = vmatpush2.bf16.msra.mxu0 0
  %377 = vmatprep.mubr.bf16.mxu0 0
  %378 = vmatmul.mubr.bf16.gmra.mxu0 %v340
  %v379 = vpop.f32.mrf.mxu0
  %v380 = vadd.f32 0.0, %v379
  %v381 = vpop.f32.mrf.mxu0
  %v382 = vpop.f32.mrf.mxu0
  %v383 = vadd.f32 0.0, %v382
  %v384 = vpop.f32.mrf.mxu0
  %385 = vmatprep.mubr.bf16.mxu0 0
  %386 = vmatmul.mubr.bf16.gmra.mxu0 %v343
  %v387 = vpop.f32.mrf.mxu0
  %v388 = vadd.f32 0.0, %v387
  %v389 = vpop.f32.mrf.mxu0
  %v390 = vpop.f32.mrf.mxu0
  %v391 = vadd.f32 0.0, %v390
  %v392 = vpop.f32.mrf.mxu0
  %393 = vdwg.mxu0
  %v394 = vpack.c.bf16 %v383, %v380
  %v395 = vpack.c.bf16 %v391, %v388
  %397 = vset.pattern.permute.xlu0 3
  %398 = vperm.xlu0 %397, %v294
  %v399 = vpop.permute.xlu0 %398
  %402 = vset.pattern.permute.xlu0 3
  %403 = vperm.xlu0 %402, %v295
  %v404 = vpop.permute.xlu0 %403
  %v408 = vunpack.c.l.b16 %v292
  %v409 = vunpack.c.l.b16 %v293
  %v410 = vpack.c.b16 %v409, %v408
  %vm411 = vcmask 261120
  %v413 = vsel %vm411, %v410, 0
  %415 = vmatprep.subr.bf16.mxu0 0
  %416 = vmatpush1.bf16.msra.mxu0 0
  %417 = vmatprep.subr.bf16.mxu0 0
  %418 = vmatpush1.bf16.msra.mxu0 0
  %419 = vmatprep.subr.bf16.mxu0 0
  %420 = vmatpush1.bf16.msra.mxu0 0
  %421 = vmatprep.subr.bf16.mxu0 0
  %422 = vmatpush1.bf16.msra.mxu0 0
  %423 = vmatprep.subr.bf16.mxu0 0
  %424 = vmatpush1.bf16.msra.mxu0 0
  %425 = vmatprep.subr.bf16.mxu0 0
  %426 = vmatpush1.bf16.msra.mxu0 0
  %427 = vmatprep.subr.bf16.mxu0 0
  %428 = vmatpush1.bf16.msra.mxu0 %v395
  %429 = vmatprep.subr.bf16.mxu0 0
  %430 = vmatpush1.bf16.msra.mxu0 %v394
  %431 = vmatprep.subr.bf16.mxu0 0
  %432 = vmatpush2.bf16.msra.mxu0 0
  %433 = vmatprep.subr.bf16.mxu0 0
  %434 = vmatpush2.bf16.msra.mxu0 0
  %435 = vmatprep.subr.bf16.mxu0 0
  %436 = vmatpush2.bf16.msra.mxu0 0
  %437 = vmatprep.subr.bf16.mxu0 0
  %438 = vmatpush2.bf16.msra.mxu0 0
  %439 = vmatprep.subr.bf16.mxu0 0
  %440 = vmatpush2.bf16.msra.mxu0 0
  %441 = vmatprep.subr.bf16.mxu0 0
  %442 = vmatpush2.bf16.msra.mxu0 0
  %443 = vmatprep.subr.bf16.mxu0 0
  %444 = vmatpush2.bf16.msra.mxu0 0
  %445 = vmatprep.subr.bf16.mxu0 0
  %446 = vmatpush2.bf16.msra.mxu0 0
  %447 = vmatprep.mubr.bf16.mxu0 0
  %448 = vmatmul.mubr.bf16.gmra.mxu0 %v413
  %v449 = vpop.f32.mrf.mxu0
  %v450 = vadd.f32 %v399, %v449
  %v451 = vpop.f32.mrf.mxu0
  %v452 = vpop.f32.mrf.mxu0
  %v453 = vadd.f32 %v404, %v452
  %v454 = vpop.f32.mrf.mxu0
  %455 = vdwg.mxu0
  %vm456 = vcmp.gt.f32.partialorder %v450, 0.0
  %vm457 = vcmp.gt.f32.partialorder %v453, 0.0
  %v458 = vmin.f32 %v450, 0.0
  %v459 = vmin.f32 %v453, 0.0
  %v460 = vmul.f32 %v458, 1.442695
  %v461 = vpow.pop %v460
  %v462 = vmul.f32 %v459, 1.442695
  %v463 = vpow.pop %v462
  %v464 = vsub.f32 %v461, 1.0
  %v465 = vsub.f32 %v463, 1.0
  %v466 = vsel %vm456, %v450, %v464
  %v467 = vsel %vm457, %v453, %v465
  %s468 = scalar_lea.vmem %s1, 128
  %v469 = vld [vmem:[%s468] sm:$0xf]
  %472 = vrot.lane.b32.xlu0 %v466, 2
  %v473 = vpop.permute.xlu0 %472
  %474 = vrot.lane.b32.xlu0 %v467, 2
  %v475 = vpop.permute.xlu0 %474
  %v478 = vsel %vm159, 0.0, %v473
  %v479 = vsel %vm159, 0.0, %v475
  %vm480 = vcmask 277504
  %v481 = vsel %vm480, %v478, 0.0
  %v482 = vsel %vm480, %v479, 0.0
  %485 = vrot.lane.b32.xlu0 %v481, 126
  %v486 = vpop.permute.xlu0 %485
  %487 = vrot.lane.b32.xlu0 %v482, 126
  %v488 = vpop.permute.xlu0 %487
  %491 = vrot.lane.b32.xlu0 %v481, 124
  %v492 = vpop.permute.xlu0 %491
  %493 = vrot.lane.b32.xlu0 %v482, 124
  %v494 = vpop.permute.xlu0 %493
  %v497 = vpack.c.bf16 %v482, %v481
  %v498 = vpack.c.bf16 %v488, %v486
  %v499 = vpack.c.bf16 %v494, %v492
  %500 = vset.pattern.permute.xlu0 4
  %501 = vperm.xlu0 %500, %v41
  %v502 = vpop.permute.xlu0 %501
  %vm504 = vcmask 392192
  %v506 = vsel %vm504, %v469, 0
  %508 = vmatprep.subr.bf16.mxu0 0
  %509 = vmatpush1.bf16.msra.mxu0 0
  %510 = vmatprep.subr.bf16.mxu0 0
  %511 = vmatpush1.bf16.msra.mxu0 0
  %512 = vmatprep.subr.bf16.mxu0 0
  %513 = vmatpush1.bf16.msra.mxu0 0
  %514 = vmatprep.subr.bf16.mxu0 0
  %515 = vmatpush1.bf16.msra.mxu0 0
  %516 = vmatprep.subr.bf16.mxu0 0
  %517 = vmatpush1.bf16.msra.mxu0 0
  %518 = vmatprep.subr.bf16.mxu0 0
  %519 = vmatpush1.bf16.msra.mxu0 %v499
  %520 = vmatprep.subr.bf16.mxu0 0
  %521 = vmatpush1.bf16.msra.mxu0 %v498
  %522 = vmatprep.subr.bf16.mxu0 0
  %523 = vmatpush1.bf16.msra.mxu0 %v497
  %524 = vmatprep.subr.bf16.mxu0 0
  %525 = vmatpush2.bf16.msra.mxu0 0
  %526 = vmatprep.subr.bf16.mxu0 0
  %527 = vmatpush2.bf16.msra.mxu0 0
  %528 = vmatprep.subr.bf16.mxu0 0
  %529 = vmatpush2.bf16.msra.mxu0 0
  %530 = vmatprep.subr.bf16.mxu0 0
  %531 = vmatpush2.bf16.msra.mxu0 0
  %532 = vmatprep.subr.bf16.mxu0 0
  %533 = vmatpush2.bf16.msra.mxu0 0
  %534 = vmatprep.subr.bf16.mxu0 0
  %535 = vmatpush2.bf16.msra.mxu0 0
  %536 = vmatprep.subr.bf16.mxu0 0
  %537 = vmatpush2.bf16.msra.mxu0 0
  %538 = vmatprep.subr.bf16.mxu0 0
  %539 = vmatpush2.bf16.msra.mxu0 0
  %540 = vmatprep.mubr.bf16.mxu0 0
  %541 = vmatmul.mubr.bf16.gmra.mxu0 %v506
  %v542 = vpop.f32.mrf.mxu0
  %v543 = vadd.f32 %v502, %v542
  %v544 = vpop.f32.mrf.mxu0
  %v545 = vpop.f32.mrf.mxu0
  %v546 = vpop.f32.mrf.mxu0
  %547 = vdwg.mxu0
  %vm548 = vcmp.gt.f32.partialorder %v543, 0.0
  %v549 = vmin.f32 %v543, 0.0
  %v550 = vmul.f32 %v549, 1.442695
  %v551 = vpow.pop %v550
  %v552 = vsub.f32 %v551, 1.0
  %v553 = vsel %vm548, %v543, %v552
  %s554 = scalar_lea.vmem %s1, 160
  %v555 = vld [vmem:[%s554] sm:$0xf]
  %v556 = vld [vmem:[%s554 + $0x8] sm:$0xf]
  %v557 = vpack.c.bf16 %v553, %v553
  %558 = vset.pattern.permute.xlu0 5
  %559 = vperm.xlu0 %558, %v294
  %v560 = vpop.permute.xlu0 %559
  %562 = vset.pattern.permute.xlu0 5
  %563 = vperm.xlu0 %562, %v295
  %v564 = vpop.permute.xlu0 %563
  %v568 = vunpack.c.l.b16 %v555
  %v569 = vunpack.c.l.b16 %v556
  %v570 = vpack.c.b16 %v569, %v568
  %vm571 = vcmask 64512
  %v573 = vsel %vm571, %v570, 0
  %v576 = vsel %vm85, %v557, 0
  %578 = vmatprep.subr.bf16.mxu0 0
  %579 = vmatpush1.bf16.msra.mxu0 0
  %580 = vmatprep.subr.bf16.mxu0 0
  %581 = vmatpush1.bf16.msra.mxu0 0
  %582 = vmatprep.subr.bf16.mxu0 0
  %583 = vmatpush1.bf16.msra.mxu0 0
  %584 = vmatprep.subr.bf16.mxu0 0
  %585 = vmatpush1.bf16.msra.mxu0 0
  %586 = vmatprep.subr.bf16.mxu0 0
  %587 = vmatpush1.bf16.msra.mxu0 0
  %588 = vmatprep.subr.bf16.mxu0 0
  %589 = vmatpush1.bf16.msra.mxu0 0
  %590 = vmatprep.subr.bf16.mxu0 0
  %591 = vmatpush1.bf16.msra.mxu0 0
  %592 = vmatprep.subr.bf16.mxu0 0
  %593 = vmatpush1.bf16.msra.mxu0 %v576
  %594 = vmatprep.subr.bf16.mxu0 0
  %595 = vmatpush2.bf16.msra.mxu0 0
  %596 = vmatprep.subr.bf16.mxu0 0
  %597 = vmatpush2.bf16.msra.mxu0 0
  %598 = vmatprep.subr.bf16.mxu0 0
  %599 = vmatpush2.bf16.msra.mxu0 0
  %600 = vmatprep.subr.bf16.mxu0 0
  %601 = vmatpush2.bf16.msra.mxu0 0
  %602 = vmatprep.subr.bf16.mxu0 0
  %603 = vmatpush2.bf16.msra.mxu0 0
  %604 = vmatprep.subr.bf16.mxu0 0
  %605 = vmatpush2.bf16.msra.mxu0 0
  %606 = vmatprep.subr.bf16.mxu0 0
  %607 = vmatpush2.bf16.msra.mxu0 0
  %608 = vmatprep.subr.bf16.mxu0 0
  %609 = vmatpush2.bf16.msra.mxu0 0
  %610 = vmatprep.mubr.bf16.mxu0 0
  %611 = vmatmul.mubr.bf16.gmra.mxu0 %v573
  %v612 = vpop.f32.mrf.mxu0
  %v613 = vadd.f32 %v560, %v612
  %v614 = vpop.f32.mrf.mxu0
  %v615 = vpop.f32.mrf.mxu0
  %v616 = vadd.f32 %v564, %v615
  %v617 = vpop.f32.mrf.mxu0
  %618 = vdwg.mxu0
  %v619 = vadd.f32 %v450, %v613
  %v620 = vadd.f32 %v453, %v616
  %vm621 = vcmp.gt.f32.partialorder %v619, 0.0
  %vm622 = vcmp.gt.f32.partialorder %v620, 0.0
  %v623 = vmin.f32 %v619, 0.0
  %v624 = vmin.f32 %v620, 0.0
  %v625 = vmul.f32 %v623, 1.442695
  %v626 = vpow.pop %v625
  %v627 = vmul.f32 %v624, 1.442695
  %v628 = vpow.pop %v627
  %v629 = vsub.f32 %v626, 1.0
  %v630 = vsub.f32 %v628, 1.0
  %v631 = vsel %vm621, %v619, %v629
  %v632 = vsel %vm622, %v620, %v630
  %s633 = scalar_lea.vmem %s1, 192
  %v634 = vld [vmem:[%s633] sm:$0xf]
  %v635 = vld [vmem:[%s633 + $0x8] sm:$0xf]
  %v636 = vld [vmem:[%s633 + $0x10] sm:$0xf]
  %v637 = vld [vmem:[%s633 + $0x18] sm:$0xf]
  %v638 = vld [vmem:[%s2] sm:$0xff]
  %v639 = vld [vmem:[%s2 + $0x8] sm:$0xff]
  %v640 = vld [vmem:[%s2 + $0x10] sm:$0xff]
  %v641 = vld [vmem:[%s2 + $0x18] sm:$0xff]
  %644 = vrot.lane.b32.xlu0 %v631, 2
  %v645 = vpop.permute.xlu0 %644
  %646 = vrot.lane.b32.xlu0 %v632, 2
  %v647 = vpop.permute.xlu0 %646
  %v650 = vsel %vm159, 0.0, %v645
  %v651 = vsel %vm159, 0.0, %v647
  %v652 = vsel %vm480, %v650, 0.0
  %v653 = vsel %vm480, %v651, 0.0
  %656 = vrot.lane.b32.xlu0 %v652, 126
  %v657 = vpop.permute.xlu0 %656
  %658 = vrot.lane.b32.xlu0 %v653, 126
  %v659 = vpop.permute.xlu0 %658
  %662 = vrot.lane.b32.xlu0 %v652, 124
  %v663 = vpop.permute.xlu0 %662
  %664 = vrot.lane.b32.xlu0 %v653, 124
  %v665 = vpop.permute.xlu0 %664
  %668 = vrot.lane.b32.xlu0 %v652, 122
  %v669 = vpop.permute.xlu0 %668
  %670 = vrot.lane.b32.xlu0 %v653, 122
  %v671 = vpop.permute.xlu0 %670
  %v674 = vpack.c.bf16 %v653, %v652
  %v675 = vpack.c.bf16 %v659, %v657
  %v676 = vpack.c.bf16 %v665, %v663
  %v677 = vpack.c.bf16 %v671, %v669
  %v682 = vunpack.c.l.b16 %v35
  %v683 = vunpack.c.l.b16 %v36
  %v684 = vunpack.c.l.b16 %v37
  %v685 = vunpack.c.l.b16 %v38
  %v686 = vpack.c.b16 %v683, %v682
  %v687 = vpack.c.b16 %v685, %v684
  %v691 = vsel %vm411, %v674, 0
  %v694 = vsel %vm411, %v675, 0
  %v697 = vsel %vm411, %v676, 0
  %v700 = vsel %vm411, %v677, 0
  %702 = vmatprep.subr.bf16.mxu0 0
  %703 = vmatpush1.bf16.msra.mxu0 0
  %704 = vmatprep.subr.bf16.mxu0 0
  %705 = vmatpush1.bf16.msra.mxu0 0
  %706 = vmatprep.subr.bf16.mxu0 0
  %707 = vmatpush1.bf16.msra.mxu0 0
  %708 = vmatprep.subr.bf16.mxu0 0
  %709 = vmatpush1.bf16.msra.mxu0 0
  %710 = vmatprep.subr.bf16.mxu0 0
  %711 = vmatpush1.bf16.msra.mxu0 0
  %712 = vmatprep.subr.bf16.mxu0 0
  %713 = vmatpush1.bf16.msra.mxu0 0
  %714 = vmatprep.subr.bf16.mxu0 0
  %715 = vmatpush1.bf16.msra.mxu0 %v687
  %716 = vmatprep.subr.bf16.mxu0 0
  %717 = vmatpush1.bf16.msra.mxu0 %v686
  %718 = vmatprep.subr.bf16.mxu0 0
  %719 = vmatpush2.bf16.msra.mxu0 0
  %720 = vmatprep.subr.bf16.mxu0 0
  %721 = vmatpush2.bf16.msra.mxu0 0
  %722 = vmatprep.subr.bf16.mxu0 0
  %723 = vmatpush2.bf16.msra.mxu0 0
  %724 = vmatprep.subr.bf16.mxu0 0
  %725 = vmatpush2.bf16.msra.mxu0 0
  %726 = vmatprep.subr.bf16.mxu0 0
  %727 = vmatpush2.bf16.msra.mxu0 0
  %728 = vmatprep.subr.bf16.mxu0 0
  %729 = vmatpush2.bf16.msra.mxu0 0
  %730 = vmatprep.subr.bf16.mxu0 0
  %731 = vmatpush2.bf16.msra.mxu0 0
  %732 = vmatprep.subr.bf16.mxu0 0
  %733 = vmatpush2.bf16.msra.mxu0 0
  %734 = vmatprep.mubr.bf16.mxu0 0
  %735 = vmatmul.mubr.bf16.gmra.mxu0 %v691
  %v736 = vpop.f32.mrf.mxu0
  %v737 = vadd.f32 0.0, %v736
  %v738 = vpop.f32.mrf.mxu0
  %v739 = vpop.f32.mrf.mxu0
  %v740 = vadd.f32 0.0, %v739
  %v741 = vpop.f32.mrf.mxu0
  %742 = vmatprep.mubr.bf16.mxu0 0
  %743 = vmatmul.mubr.bf16.gmra.mxu0 %v694
  %v744 = vpop.f32.mrf.mxu0
  %v745 = vadd.f32 0.0, %v744
  %v746 = vpop.f32.mrf.mxu0
  %v747 = vpop.f32.mrf.mxu0
  %v748 = vadd.f32 0.0, %v747
  %v749 = vpop.f32.mrf.mxu0
  %750 = vmatprep.mubr.bf16.mxu0 0
  %751 = vmatmul.mubr.bf16.gmra.mxu0 %v697
  %v752 = vpop.f32.mrf.mxu0
  %v753 = vadd.f32 0.0, %v752
  %v754 = vpop.f32.mrf.mxu0
  %v755 = vpop.f32.mrf.mxu0
  %v756 = vadd.f32 0.0, %v755
  %v757 = vpop.f32.mrf.mxu0
  %758 = vmatprep.mubr.bf16.mxu0 0
  %759 = vmatmul.mubr.bf16.gmra.mxu0 %v700
  %v760 = vpop.f32.mrf.mxu0
  %v761 = vadd.f32 0.0, %v760
  %v762 = vpop.f32.mrf.mxu0
  %v763 = vpop.f32.mrf.mxu0
  %v764 = vadd.f32 0.0, %v763
  %v765 = vpop.f32.mrf.mxu0
  %766 = vdwg.mxu0
  %v767 = vpack.c.bf16 %v740, %v737
  %v768 = vpack.c.bf16 %v748, %v745
  %v769 = vpack.c.bf16 %v756, %v753
  %v770 = vpack.c.bf16 %v764, %v761
  %772 = vset.pattern.permute.xlu0 6
  %773 = vperm.xlu0 %772, %v638
  %v774 = vpop.permute.xlu0 %773
  %777 = vset.pattern.permute.xlu0 6
  %778 = vperm.xlu0 %777, %v639
  %v779 = vpop.permute.xlu0 %778
  %782 = vset.pattern.permute.xlu0 6
  %783 = vperm.xlu0 %782, %v640
  %v784 = vpop.permute.xlu0 %783
  %787 = vset.pattern.permute.xlu0 6
  %788 = vperm.xlu0 %787, %v641
  %v789 = vpop.permute.xlu0 %788
  %v795 = vunpack.c.l.b16 %v634
  %v796 = vunpack.c.l.b16 %v635
  %v797 = vunpack.c.l.b16 %v636
  %v798 = vunpack.c.l.b16 %v637
  %v799 = vpack.c.b16 %v796, %v795
  %v800 = vpack.c.b16 %v798, %v797
  %v802 = vsel %vm338, %v799, 0
  %v805 = vsel %vm338, %v800, 0
  %807 = vmatprep.subr.bf16.mxu0 0
  %808 = vmatpush1.bf16.msra.mxu0 0
  %809 = vmatprep.subr.bf16.mxu0 0
  %810 = vmatpush1.bf16.msra.mxu0 0
  %811 = vmatprep.subr.bf16.mxu0 0
  %812 = vmatpush1.bf16.msra.mxu0 0
  %813 = vmatprep.subr.bf16.mxu0 0
  %814 = vmatpush1.bf16.msra.mxu0 0
  %815 = vmatprep.subr.bf16.mxu0 0
  %816 = vmatpush1.bf16.msra.mxu0 %v770
  %817 = vmatprep.subr.bf16.mxu0 0
  %818 = vmatpush1.bf16.msra.mxu0 %v769
  %819 = vmatprep.subr.bf16.mxu0 0
  %820 = vmatpush1.bf16.msra.mxu0 %v768
  %821 = vmatprep.subr.bf16.mxu0 0
  %822 = vmatpush1.bf16.msra.mxu0 %v767
  %823 = vmatprep.subr.bf16.mxu0 0
  %824 = vmatpush2.bf16.msra.mxu0 0
  %825 = vmatprep.subr.bf16.mxu0 0
  %826 = vmatpush2.bf16.msra.mxu0 0
  %827 = vmatprep.subr.bf16.mxu0 0
  %828 = vmatpush2.bf16.msra.mxu0 0
  %829 = vmatprep.subr.bf16.mxu0 0
  %830 = vmatpush2.bf16.msra.mxu0 0
  %831 = vmatprep.subr.bf16.mxu0 0
  %832 = vmatpush2.bf16.msra.mxu0 0
  %833 = vmatprep.subr.bf16.mxu0 0
  %834 = vmatpush2.bf16.msra.mxu0 0
  %835 = vmatprep.subr.bf16.mxu0 0
  %836 = vmatpush2.bf16.msra.mxu0 0
  %837 = vmatprep.subr.bf16.mxu0 0
  %838 = vmatpush2.bf16.msra.mxu0 0
  %839 = vmatprep.mubr.bf16.mxu0 0
  %840 = vmatmul.mubr.bf16.gmra.mxu0 %v802
  %v841 = vpop.f32.mrf.mxu0
  %v842 = vadd.f32 %v774, %v841
  %v843 = vpop.f32.mrf.mxu0
  %v844 = vpop.f32.mrf.mxu0
  %v845 = vadd.f32 %v779, %v844
  %v846 = vpop.f32.mrf.mxu0
  %847 = vmatprep.mubr.bf16.mxu0 0
  %848 = vmatmul.mubr.bf16.gmra.mxu0 %v805
  %v849 = vpop.f32.mrf.mxu0
  %v850 = vadd.f32 %v784, %v849
  %v851 = vpop.f32.mrf.mxu0
  %v852 = vpop.f32.mrf.mxu0
  %v853 = vadd.f32 %v789, %v852
  %v854 = vpop.f32.mrf.mxu0
  %855 = vdwg.mxu0
  %v856 = vld [vmem:[%s3] sm:$0xf]
  %v857 = vld [vmem:[%s3 + $0x4] sm:$0xf]
  %v858 = vld [vmem:[%s3 + $0x8] sm:$0xf]
  %v859 = vld [vmem:[%s3 + $0xc] sm:$0xf]
  %v860 = vld [vmem:[%s3 + $0x10] sm:$0xf]
  %v861 = vld [vmem:[%s3 + $0x14] sm:$0xf]
  %v862 = vld [vmem:[%s3 + $0x18] sm:$0xf]
  %v863 = vld [vmem:[%s3 + $0x1c] sm:$0xf]
  %v864 = vld [vmem:[%s3 + $0x20] sm:$0xf]
  %v865 = vld [vmem:[%s3 + $0x24] sm:$0xf]
  %v866 = vld [vmem:[%s3 + $0x28] sm:$0xf]
  %v867 = vld [vmem:[%s3 + $0x2c] sm:$0xf]
  %v868 = vld [vmem:[%s3 + $0x30] sm:$0xf]
  %v869 = vld [vmem:[%s3 + $0x34] sm:$0xf]
  %v870 = vld [vmem:[%s3 + $0x38] sm:$0xf]
  %v871 = vld [vmem:[%s3 + $0x3c] sm:$0xf]
  %v872 = vld [vmem:[%s4] sm:$0xff]
  %v873 = vld [vmem:[%s4 + $0x8] sm:$0xff]
  %v874 = vld [vmem:[%s4 + $0x10] sm:$0xff]
  %v875 = vld [vmem:[%s4 + $0x18] sm:$0xff]
  %v876 = vld [vmem:[%s4 + $0x20] sm:$0xff]
  %v877 = vld [vmem:[%s4 + $0x28] sm:$0xff]
  %v878 = vld [vmem:[%s4 + $0x30] sm:$0xff]
  %v879 = vld [vmem:[%s4 + $0x38] sm:$0xff]
  %v880 = vld [vmem:[%s4 + $0x40] sm:$0xff]
  %v881 = vld [vmem:[%s4 + $0x48] sm:$0xff]
  %v882 = vld [vmem:[%s4 + $0x50] sm:$0xff]
  %v883 = vld [vmem:[%s4 + $0x58] sm:$0xff]
  %v884 = vld [vmem:[%s4 + $0x60] sm:$0xff]
  %v885 = vld [vmem:[%s4 + $0x68] sm:$0xff]
  %v886 = vld [vmem:[%s4 + $0x70] sm:$0xff]
  %v887 = vld [vmem:[%s4 + $0x78] sm:$0xff]
  %v888 = vpack.c.bf16 %v845, %v842
  %v889 = vpack.c.bf16 %v853, %v850
  %891 = vset.pattern.permute.xlu0 0
  %892 = vperm.xlu0 %891, %v872
  %v893 = vpop.permute.xlu0 %892
  %896 = vset.pattern.permute.xlu0 0
  %897 = vperm.xlu0 %896, %v873
  %v898 = vpop.permute.xlu0 %897
  %901 = vset.pattern.permute.xlu0 0
  %902 = vperm.xlu0 %901, %v874
  %v903 = vpop.permute.xlu0 %902
  %906 = vset.pattern.permute.xlu0 0
  %907 = vperm.xlu0 %906, %v875
  %v908 = vpop.permute.xlu0 %907
  %911 = vset.pattern.permute.xlu0 0
  %912 = vperm.xlu0 %911, %v876
  %v913 = vpop.permute.xlu0 %912
  %916 = vset.pattern.permute.xlu0 0
  %917 = vperm.xlu0 %916, %v877
  %v918 = vpop.permute.xlu0 %917
  %921 = vset.pattern.permute.xlu0 0
  %922 = vperm.xlu0 %921, %v878
  %v923 = vpop.permute.xlu0 %922
  %926 = vset.pattern.permute.xlu0 0
  %927 = vperm.xlu0 %926, %v879
  %v928 = vpop.permute.xlu0 %927
  %931 = vset.pattern.permute.xlu0 0
  %932 = vperm.xlu0 %931, %v880
  %v933 = vpop.permute.xlu0 %932
  %936 = vset.pattern.permute.xlu0 0
  %937 = vperm.xlu0 %936, %v881
  %v938 = vpop.permute.xlu0 %937
  %941 = vset.pattern.permute.xlu0 0
  %942 = vperm.xlu0 %941, %v882
  %v943 = vpop.permute.xlu0 %942
  %946 = vset.pattern.permute.xlu0 0
  %947 = vperm.xlu0 %946, %v883
  %v948 = vpop.permute.xlu0 %947
  %951 = vset.pattern.permute.xlu0 0
  %952 = vperm.xlu0 %951, %v884
  %v953 = vpop.permute.xlu0 %952
  %956 = vset.pattern.permute.xlu0 0
  %957 = vperm.xlu0 %956, %v885
  %v958 = vpop.permute.xlu0 %957
  %961 = vset.pattern.permute.xlu0 0
  %962 = vperm.xlu0 %961, %v886
  %v963 = vpop.permute.xlu0 %962
  %966 = vset.pattern.permute.xlu0 0
  %967 = vperm.xlu0 %966, %v887
  %v968 = vpop.permute.xlu0 %967
  %v986 = vunpack.c.l.b16 %v856
  %v987 = vunpack.c.l.b16 %v857
  %v988 = vunpack.c.l.b16 %v858
  %v989 = vunpack.c.l.b16 %v859
  %v990 = vunpack.c.l.b16 %v860
  %v991 = vunpack.c.l.b16 %v861
  %v992 = vunpack.c.l.b16 %v862
  %v993 = vunpack.c.l.b16 %v863
  %v994 = vunpack.c.l.b16 %v864
  %v995 = vunpack.c.l.b16 %v865
  %v996 = vunpack.c.l.b16 %v866
  %v997 = vunpack.c.l.b16 %v867
  %v998 = vunpack.c.l.b16 %v868
  %v999 = vunpack.c.l.b16 %v869
  %v1000 = vunpack.c.l.b16 %v870
  %v1001 = vunpack.c.l.b16 %v871
  %v1002 = vpack.c.b16 %v987, %v986
  %v1003 = vpack.c.b16 %v989, %v988
  %v1004 = vpack.c.b16 %v991, %v990
  %v1005 = vpack.c.b16 %v993, %v992
  %v1006 = vpack.c.b16 %v995, %v994
  %v1007 = vpack.c.b16 %v997, %v996
  %v1008 = vpack.c.b16 %v999, %v998
  %v1009 = vpack.c.b16 %v1001, %v1000
  %v1011 = vsel %vm411, %v1002, 0
  %v1014 = vsel %vm411, %v1003, 0
  %v1017 = vsel %vm411, %v1004, 0
  %v1020 = vsel %vm411, %v1005, 0
  %v1023 = vsel %vm411, %v1006, 0
  %v1026 = vsel %vm411, %v1007, 0
  %v1029 = vsel %vm411, %v1008, 0
  %v1032 = vsel %vm411, %v1009, 0
  %1034 = vmatprep.subr.bf16.mxu0 0
  %1035 = vmatpush1.bf16.msra.mxu0 0
  %1036 = vmatprep.subr.bf16.mxu0 0
  %1037 = vmatpush1.bf16.msra.mxu0 0
  %1038 = vmatprep.subr.bf16.mxu0 0
  %1039 = vmatpush1.bf16.msra.mxu0 0
  %1040 = vmatprep.subr.bf16.mxu0 0
  %1041 = vmatpush1.bf16.msra.mxu0 0
  %1042 = vmatprep.subr.bf16.mxu0 0
  %1043 = vmatpush1.bf16.msra.mxu0 0
  %1044 = vmatprep.subr.bf16.mxu0 0
  %1045 = vmatpush1.bf16.msra.mxu0 0
  %1046 = vmatprep.subr.bf16.mxu0 0
  %1047 = vmatpush1.bf16.msra.mxu0 %v889
  %1048 = vmatprep.subr.bf16.mxu0 0
  %1049 = vmatpush1.bf16.msra.mxu0 %v888
  %1050 = vmatprep.subr.bf16.mxu0 0
  %1051 = vmatpush2.bf16.msra.mxu0 0
  %1052 = vmatprep.subr.bf16.mxu0 0
  %1053 = vmatpush2.bf16.msra.mxu0 0
  %1054 = vmatprep.subr.bf16.mxu0 0
  %1055 = vmatpush2.bf16.msra.mxu0 0
  %1056 = vmatprep.subr.bf16.mxu0 0
  %1057 = vmatpush2.bf16.msra.mxu0 0
  %1058 = vmatprep.subr.bf16.mxu0 0
  %1059 = vmatpush2.bf16.msra.mxu0 0
  %1060 = vmatprep.subr.bf16.mxu0 0
  %1061 = vmatpush2.bf16.msra.mxu0 0
  %1062 = vmatprep.subr.bf16.mxu0 0
  %1063 = vmatpush2.bf16.msra.mxu0 0
  %1064 = vmatprep.subr.bf16.mxu0 0
  %1065 = vmatpush2.bf16.msra.mxu0 0
  %1066 = vmatprep.mubr.bf16.mxu0 0
  %1067 = vmatmul.mubr.bf16.gmra.mxu0 %v1011
  %v1068 = vpop.f32.mrf.mxu0
  %v1069 = vadd.f32 %v893, %v1068
  %v1070 = vpop.f32.mrf.mxu0
  %v1071 = vpop.f32.mrf.mxu0
  %v1072 = vadd.f32 %v898, %v1071
  %v1073 = vpop.f32.mrf.mxu0
  %1074 = vmatprep.mubr.bf16.mxu0 0
  %1075 = vmatmul.mubr.bf16.gmra.mxu0 %v1014
  %v1076 = vpop.f32.mrf.mxu0
  %v1077 = vadd.f32 %v903, %v1076
  %v1078 = vpop.f32.mrf.mxu0
  %v1079 = vpop.f32.mrf.mxu0
  %v1080 = vadd.f32 %v908, %v1079
  %v1081 = vpop.f32.mrf.mxu0
  %1082 = vmatprep.mubr.bf16.mxu0 0
  %1083 = vmatmul.mubr.bf16.gmra.mxu0 %v1017
  %v1084 = vpop.f32.mrf.mxu0
  %v1085 = vadd.f32 %v913, %v1084
  %v1086 = vpop.f32.mrf.mxu0
  %v1087 = vpop.f32.mrf.mxu0
  %v1088 = vadd.f32 %v918, %v1087
  %v1089 = vpop.f32.mrf.mxu0
  %1090 = vmatprep.mubr.bf16.mxu0 0
  %1091 = vmatmul.mubr.bf16.gmra.mxu0 %v1020
  %v1092 = vpop.f32.mrf.mxu0
  %v1093 = vadd.f32 %v923, %v1092
  %v1094 = vpop.f32.mrf.mxu0
  %v1095 = vpop.f32.mrf.mxu0
  %v1096 = vadd.f32 %v928, %v1095
  %v1097 = vpop.f32.mrf.mxu0
  %1098 = vmatprep.mubr.bf16.mxu0 0
  %1099 = vmatmul.mubr.bf16.gmra.mxu0 %v1023
  %v1100 = vpop.f32.mrf.mxu0
  %v1101 = vadd.f32 %v933, %v1100
  %v1102 = vpop.f32.mrf.mxu0
  %v1103 = vpop.f32.mrf.mxu0
  %v1104 = vadd.f32 %v938, %v1103
  %v1105 = vpop.f32.mrf.mxu0
  %1106 = vmatprep.mubr.bf16.mxu0 0
  %1107 = vmatmul.mubr.bf16.gmra.mxu0 %v1026
  %v1108 = vpop.f32.mrf.mxu0
  %v1109 = vadd.f32 %v943, %v1108
  %v1110 = vpop.f32.mrf.mxu0
  %v1111 = vpop.f32.mrf.mxu0
  %v1112 = vadd.f32 %v948, %v1111
  %v1113 = vpop.f32.mrf.mxu0
  %1114 = vmatprep.mubr.bf16.mxu0 0
  %1115 = vmatmul.mubr.bf16.gmra.mxu0 %v1029
  %v1116 = vpop.f32.mrf.mxu0
  %v1117 = vadd.f32 %v953, %v1116
  %v1118 = vpop.f32.mrf.mxu0
  %v1119 = vpop.f32.mrf.mxu0
  %v1120 = vadd.f32 %v958, %v1119
  %v1121 = vpop.f32.mrf.mxu0
  %1122 = vmatprep.mubr.bf16.mxu0 0
  %1123 = vmatmul.mubr.bf16.gmra.mxu0 %v1032
  %v1124 = vpop.f32.mrf.mxu0
  %v1125 = vadd.f32 %v963, %v1124
  %v1126 = vpop.f32.mrf.mxu0
  %v1127 = vpop.f32.mrf.mxu0
  %v1128 = vadd.f32 %v968, %v1127
  %v1129 = vpop.f32.mrf.mxu0
  %1130 = vdwg.mxu0
  %1131 = vrot.lane.b32.xlu0 %v1002, 96
  %v1132 = vpop.permute.xlu0 %1131
  %1133 = vrot.lane.b32.xlu0 %v1003, 96
  %v1134 = vpop.permute.xlu0 %1133
  %1135 = vrot.lane.b32.xlu0 %v1004, 96
  %v1136 = vpop.permute.xlu0 %1135
  %1137 = vrot.lane.b32.xlu0 %v1005, 96
  %v1138 = vpop.permute.xlu0 %1137
  %1139 = vrot.lane.b32.xlu0 %v1006, 96
  %v1140 = vpop.permute.xlu0 %1139
  %1141 = vrot.lane.b32.xlu0 %v1007, 96
  %v1142 = vpop.permute.xlu0 %1141
  %1143 = vrot.lane.b32.xlu0 %v1008, 96
  %v1144 = vpop.permute.xlu0 %1143
  %1145 = vrot.lane.b32.xlu0 %v1009, 96
  %v1146 = vpop.permute.xlu0 %1145
  %v1148 = vsel %vm411, %v1132, 0
  %v1151 = vsel %vm411, %v1134, 0
  %v1154 = vsel %vm411, %v1136, 0
  %v1157 = vsel %vm411, %v1138, 0
  %v1160 = vsel %vm411, %v1140, 0
  %v1163 = vsel %vm411, %v1142, 0
  %v1166 = vsel %vm411, %v1144, 0
  %v1169 = vsel %vm411, %v1146, 0
  %1171 = vmatprep.subr.bf16.mxu0 0
  %1172 = vmatpush1.bf16.msra.mxu0 0
  %1173 = vmatprep.subr.bf16.mxu0 0
  %1174 = vmatpush1.bf16.msra.mxu0 0
  %1175 = vmatprep.subr.bf16.mxu0 0
  %1176 = vmatpush1.bf16.msra.mxu0 0
  %1177 = vmatprep.subr.bf16.mxu0 0
  %1178 = vmatpush1.bf16.msra.mxu0 0
  %1179 = vmatprep.subr.bf16.mxu0 0
  %1180 = vmatpush1.bf16.msra.mxu0 0
  %1181 = vmatprep.subr.bf16.mxu0 0
  %1182 = vmatpush1.bf16.msra.mxu0 0
  %1183 = vmatprep.subr.bf16.mxu0 0
  %1184 = vmatpush1.bf16.msra.mxu0 0
  %1185 = vmatprep.subr.bf16.mxu0 0
  %1186 = vmatpush1.bf16.msra.mxu0 0
  %1187 = vmatprep.subr.bf16.mxu0 0
  %1188 = vmatpush2.bf16.msra.mxu0 0
  %1189 = vmatprep.subr.bf16.mxu0 0
  %1190 = vmatpush2.bf16.msra.mxu0 0
  %1191 = vmatprep.subr.bf16.mxu0 0
  %1192 = vmatpush2.bf16.msra.mxu0 0
  %1193 = vmatprep.subr.bf16.mxu0 0
  %1194 = vmatpush2.bf16.msra.mxu0 0
  %1195 = vmatprep.subr.bf16.mxu0 0
  %1196 = vmatpush2.bf16.msra.mxu0 0
  %1197 = vmatprep.subr.bf16.mxu0 0
  %1198 = vmatpush2.bf16.msra.mxu0 0
  %1199 = vmatprep.subr.bf16.mxu0 0
  %1200 = vmatpush2.bf16.msra.mxu0 0
  %1201 = vmatprep.subr.bf16.mxu0 0
  %1202 = vmatpush2.bf16.msra.mxu0 0
  %1203 = vmatprep.mubr.bf16.mxu0 0
  %1204 = vmatmul.mubr.bf16.gmra.mxu0 %v1148
  %v1205 = vpop.f32.mrf.mxu0
  %v1206 = vadd.f32 0.0, %v1205
  %v1207 = vpop.f32.mrf.mxu0
  %v1208 = vpop.f32.mrf.mxu0
  %v1209 = vadd.f32 0.0, %v1208
  %v1210 = vpop.f32.mrf.mxu0
  %1211 = vmatprep.mubr.bf16.mxu0 0
  %1212 = vmatmul.mubr.bf16.gmra.mxu0 %v1151
  %v1213 = vpop.f32.mrf.mxu0
  %v1214 = vadd.f32 0.0, %v1213
  %v1215 = vpop.f32.mrf.mxu0
  %v1216 = vpop.f32.mrf.mxu0
  %v1217 = vadd.f32 0.0, %v1216
  %v1218 = vpop.f32.mrf.mxu0
  %1219 = vmatprep.mubr.bf16.mxu0 0
  %1220 = vmatmul.mubr.bf16.gmra.mxu0 %v1154
  %v1221 = vpop.f32.mrf.mxu0
  %v1222 = vadd.f32 0.0, %v1221
  %v1223 = vpop.f32.mrf.mxu0
  %v1224 = vpop.f32.mrf.mxu0
  %v1225 = vadd.f32 0.0, %v1224
  %v1226 = vpop.f32.mrf.mxu0
  %1227 = vmatprep.mubr.bf16.mxu0 0
  %1228 = vmatmul.mubr.bf16.gmra.mxu0 %v1157
  %v1229 = vpop.f32.mrf.mxu0
  %v1230 = vadd.f32 0.0, %v1229
  %v1231 = vpop.f32.mrf.mxu0
  %v1232 = vpop.f32.mrf.mxu0
  %v1233 = vadd.f32 0.0, %v1232
  %v1234 = vpop.f32.mrf.mxu0
  %1235 = vmatprep.mubr.bf16.mxu0 0
  %1236 = vmatmul.mubr.bf16.gmra.mxu0 %v1160
  %v1237 = vpop.f32.mrf.mxu0
  %v1238 = vadd.f32 0.0, %v1237
  %v1239 = vpop.f32.mrf.mxu0
  %v1240 = vpop.f32.mrf.mxu0
  %v1241 = vadd.f32 0.0, %v1240
  %v1242 = vpop.f32.mrf.mxu0
  %1243 = vmatprep.mubr.bf16.mxu0 0
  %1244 = vmatmul.mubr.bf16.gmra.mxu0 %v1163
  %v1245 = vpop.f32.mrf.mxu0
  %v1246 = vadd.f32 0.0, %v1245
  %v1247 = vpop.f32.mrf.mxu0
  %v1248 = vpop.f32.mrf.mxu0
  %v1249 = vadd.f32 0.0, %v1248
  %v1250 = vpop.f32.mrf.mxu0
  %1251 = vmatprep.mubr.bf16.mxu0 0
  %1252 = vmatmul.mubr.bf16.gmra.mxu0 %v1166
  %v1253 = vpop.f32.mrf.mxu0
  %v1254 = vadd.f32 0.0, %v1253
  %v1255 = vpop.f32.mrf.mxu0
  %v1256 = vpop.f32.mrf.mxu0
  %v1257 = vadd.f32 0.0, %v1256
  %v1258 = vpop.f32.mrf.mxu0
  %1259 = vmatprep.mubr.bf16.mxu0 0
  %1260 = vmatmul.mubr.bf16.gmra.mxu0 %v1169
  %v1261 = vpop.f32.mrf.mxu0
  %v1262 = vadd.f32 0.0, %v1261
  %v1263 = vpop.f32.mrf.mxu0
  %v1264 = vpop.f32.mrf.mxu0
  %v1265 = vadd.f32 0.0, %v1264
  %v1266 = vpop.f32.mrf.mxu0
  %1267 = vdwg.mxu0
  %v1268 = vadd.f32 %v1069, %v1206
  %v1269 = vadd.f32 %v1072, %v1209
  %v1270 = vadd.f32 %v1077, %v1214
  %v1271 = vadd.f32 %v1080, %v1217
  %v1272 = vadd.f32 %v1085, %v1222
  %v1273 = vadd.f32 %v1088, %v1225
  %v1274 = vadd.f32 %v1093, %v1230
  %v1275 = vadd.f32 %v1096, %v1233
  %v1276 = vadd.f32 %v1101, %v1238
  %v1277 = vadd.f32 %v1104, %v1241
  %v1278 = vadd.f32 %v1109, %v1246
  %v1279 = vadd.f32 %v1112, %v1249
  %v1280 = vadd.f32 %v1117, %v1254
  %v1281 = vadd.f32 %v1120, %v1257
  %v1282 = vadd.f32 %v1125, %v1262
  %v1283 = vadd.f32 %v1128, %v1265
  %v1284 = vsub.f32 0.0, %v1268
  %v1285 = vsub.f32 0.0, %v1269
  %v1286 = vsub.f32 0.0, %v1270
  %v1287 = vsub.f32 0.0, %v1271
  %v1288 = vmul.f32 %v1284, 1.442695
  %v1289 = vpow.pop %v1288
  %v1290 = vmul.f32 %v1285, 1.442695
  %v1291 = vpow.pop %v1290
  %v1292 = vmul.f32 %v1286, 1.442695
  %v1293 = vpow.pop %v1292
  %v1294 = vmul.f32 %v1287, 1.442695
  %v1295 = vpow.pop %v1294
  %v1296 = vadd.f32 %v1289, 1.0
  %v1297 = vadd.f32 %v1291, 1.0
  %v1298 = vadd.f32 %v1293, 1.0
  %v1299 = vadd.f32 %v1295, 1.0
  %v1300 = vrcp.pop %v1296
  %v1301 = vrcp.pop %v1297
  %v1302 = vrcp.pop %v1298
  %v1303 = vrcp.pop %v1299
  %v1304 = vsub.f32 0.0, %v1272
  %v1305 = vsub.f32 0.0, %v1273
  %v1306 = vsub.f32 0.0, %v1274
  %v1307 = vsub.f32 0.0, %v1275
  %v1308 = vmul.f32 %v1304, 1.442695
  %v1309 = vpow.pop %v1308
  %v1310 = vmul.f32 %v1305, 1.442695
  %v1311 = vpow.pop %v1310
  %v1312 = vmul.f32 %v1306, 1.442695
  %v1313 = vpow.pop %v1312
  %v1314 = vmul.f32 %v1307, 1.442695
  %v1315 = vpow.pop %v1314
  %v1316 = vadd.f32 %v1309, 1.0
  %v1317 = vadd.f32 %v1311, 1.0
  %v1318 = vadd.f32 %v1313, 1.0
  %v1319 = vadd.f32 %v1315, 1.0
  %v1320 = vrcp.pop %v1316
  %v1321 = vrcp.pop %v1317
  %v1322 = vrcp.pop %v1318
  %v1323 = vrcp.pop %v1319
  %v1324 = vtanh.pop %v1276
  %v1325 = vtanh.pop %v1277
  %v1326 = vtanh.pop %v1278
  %v1327 = vtanh.pop %v1279
  %v1328 = vsub.f32 0.0, %v1280
  %v1329 = vsub.f32 0.0, %v1281
  %v1330 = vsub.f32 0.0, %v1282
  %v1331 = vsub.f32 0.0, %v1283
  %v1332 = vmul.f32 %v1328, 1.442695
  %v1333 = vpow.pop %v1332
  %v1334 = vmul.f32 %v1329, 1.442695
  %v1335 = vpow.pop %v1334
  %v1336 = vmul.f32 %v1330, 1.442695
  %v1337 = vpow.pop %v1336
  %v1338 = vmul.f32 %v1331, 1.442695
  %v1339 = vpow.pop %v1338
  %v1340 = vadd.f32 %v1333, 1.0
  %v1341 = vadd.f32 %v1335, 1.0
  %v1342 = vadd.f32 %v1337, 1.0
  %v1343 = vadd.f32 %v1339, 1.0
  %v1344 = vrcp.pop %v1340
  %v1345 = vrcp.pop %v1341
  %v1346 = vrcp.pop %v1342
  %v1347 = vrcp.pop %v1343
  %v1348 = vmul.f32 %v1320, 0.0
  %v1349 = vmul.f32 %v1321, 0.0
  %v1350 = vmul.f32 %v1322, 0.0
  %v1351 = vmul.f32 %v1323, 0.0
  %v1352 = vmul.f32 %v1300, %v1324
  %v1353 = vmul.f32 %v1301, %v1325
  %v1354 = vmul.f32 %v1302, %v1326
  %v1355 = vmul.f32 %v1303, %v1327
  %v1356 = vadd.f32 %v1348, %v1352
  %v1357 = vadd.f32 %v1349, %v1353
  %v1358 = vadd.f32 %v1350, %v1354
  %v1359 = vadd.f32 %v1351, %v1355
  %v1360 = vtanh.pop %v1356
  %v1361 = vtanh.pop %v1357
  %v1362 = vtanh.pop %v1358
  %v1363 = vtanh.pop %v1359
  %v1364 = vmul.f32 %v1344, %v1360
  %v1365 = vmul.f32 %v1345, %v1361
  %v1366 = vmul.f32 %v1346, %v1362
  %v1367 = vmul.f32 %v1347, %v1363
  %v1368 = vpack.c.bf16 %v1365, %v1364
  %v1369 = vpack.c.bf16 %v1367, %v1366
  %1370 = vmatprep.subr.bf16.mxu0 0
  %1371 = vmatpush1.bf16.msra.mxu0 0
  %1372 = vmatprep.subr.bf16.mxu0 0
  %1373 = vmatpush1.bf16.msra.mxu0 0
  %1374 = vmatprep.subr.bf16.mxu0 0
  %1375 = vmatpush1.bf16.msra.mxu0 0
  %1376 = vmatprep.subr.bf16.mxu0 0
  %1377 = vmatpush1.bf16.msra.mxu0 0
  %1378 = vmatprep.subr.bf16.mxu0 0
  %1379 = vmatpush1.bf16.msra.mxu0 0
  %1380 = vmatprep.subr.bf16.mxu0 0
  %1381 = vmatpush1.bf16.msra.mxu0 0
  %1382 = vmatprep.subr.bf16.mxu0 0
  %1383 = vmatpush1.bf16.msra.mxu0 %v1369
  %1384 = vmatprep.subr.bf16.mxu0 0
  %1385 = vmatpush1.bf16.msra.mxu0 %v1368
  %1386 = vmatprep.subr.bf16.mxu0 0
  %1387 = vmatpush2.bf16.msra.mxu0 0
  %1388 = vmatprep.subr.bf16.mxu0 0
  %1389 = vmatpush2.bf16.msra.mxu0 0
  %1390 = vmatprep.subr.bf16.mxu0 0
  %1391 = vmatpush2.bf16.msra.mxu0 0
  %1392 = vmatprep.subr.bf16.mxu0 0
  %1393 = vmatpush2.bf16.msra.mxu0 0
  %1394 = vmatprep.subr.bf16.mxu0 0
  %1395 = vmatpush2.bf16.msra.mxu0 0
  %1396 = vmatprep.subr.bf16.mxu0 0
  %1397 = vmatpush2.bf16.msra.mxu0 0
  %1398 = vmatprep.subr.bf16.mxu0 0
  %1399 = vmatpush2.bf16.msra.mxu0 0
  %1400 = vmatprep.subr.bf16.mxu0 0
  %1401 = vmatpush2.bf16.msra.mxu0 0
  %1402 = vmatprep.mubr.bf16.mxu0 0
  %1403 = vmatmul.mubr.bf16.gmra.mxu0 %v1148
  %v1404 = vpop.f32.mrf.mxu0
  %v1405 = vadd.f32 0.0, %v1404
  %v1406 = vpop.f32.mrf.mxu0
  %v1407 = vpop.f32.mrf.mxu0
  %v1408 = vadd.f32 0.0, %v1407
  %v1409 = vpop.f32.mrf.mxu0
  %1410 = vmatprep.mubr.bf16.mxu0 0
  %1411 = vmatmul.mubr.bf16.gmra.mxu0 %v1151
  %v1412 = vpop.f32.mrf.mxu0
  %v1413 = vadd.f32 0.0, %v1412
  %v1414 = vpop.f32.mrf.mxu0
  %v1415 = vpop.f32.mrf.mxu0
  %v1416 = vadd.f32 0.0, %v1415
  %v1417 = vpop.f32.mrf.mxu0
  %1418 = vmatprep.mubr.bf16.mxu0 0
  %1419 = vmatmul.mubr.bf16.gmra.mxu0 %v1154
  %v1420 = vpop.f32.mrf.mxu0
  %v1421 = vadd.f32 0.0, %v1420
  %v1422 = vpop.f32.mrf.mxu0
  %v1423 = vpop.f32.mrf.mxu0
  %v1424 = vadd.f32 0.0, %v1423
  %v1425 = vpop.f32.mrf.mxu0
  %1426 = vmatprep.mubr.bf16.mxu0 0
  %1427 = vmatmul.mubr.bf16.gmra.mxu0 %v1157
  %v1428 = vpop.f32.mrf.mxu0
  %v1429 = vadd.f32 0.0, %v1428
  %v1430 = vpop.f32.mrf.mxu0
  %v1431 = vpop.f32.mrf.mxu0
  %v1432 = vadd.f32 0.0, %v1431
  %v1433 = vpop.f32.mrf.mxu0
  %1434 = vmatprep.mubr.bf16.mxu0 0
  %1435 = vmatmul.mubr.bf16.gmra.mxu0 %v1160
  %v1436 = vpop.f32.mrf.mxu0
  %v1437 = vadd.f32 0.0, %v1436
  %v1438 = vpop.f32.mrf.mxu0
  %v1439 = vpop.f32.mrf.mxu0
  %v1440 = vadd.f32 0.0, %v1439
  %v1441 = vpop.f32.mrf.mxu0
  %1442 = vmatprep.mubr.bf16.mxu0 0
  %1443 = vmatmul.mubr.bf16.gmra.mxu0 %v1163
  %v1444 = vpop.f32.mrf.mxu0
  %v1445 = vadd.f32 0.0, %v1444
  %v1446 = vpop.f32.mrf.mxu0
  %v1447 = vpop.f32.mrf.mxu0
  %v1448 = vadd.f32 0.0, %v1447
  %v1449 = vpop.f32.mrf.mxu0
  %1450 = vmatprep.mubr.bf16.mxu0 0
  %1451 = vmatmul.mubr.bf16.gmra.mxu0 %v1166
  %v1452 = vpop.f32.mrf.mxu0
  %v1453 = vadd.f32 0.0, %v1452
  %v1454 = vpop.f32.mrf.mxu0
  %v1455 = vpop.f32.mrf.mxu0
  %v1456 = vadd.f32 0.0, %v1455
  %v1457 = vpop.f32.mrf.mxu0
  %1458 = vmatprep.mubr.bf16.mxu0 0
  %1459 = vmatmul.mubr.bf16.gmra.mxu0 %v1169
  %v1460 = vpop.f32.mrf.mxu0
  %v1461 = vadd.f32 0.0, %v1460
  %v1462 = vpop.f32.mrf.mxu0
  %v1463 = vpop.f32.mrf.mxu0
  %v1464 = vadd.f32 0.0, %v1463
  %v1465 = vpop.f32.mrf.mxu0
  %1466 = vdwg.mxu0
  %1483 = vrot.lane.b32.xlu0 %v1405, 2
  %v1484 = vpop.permute.xlu0 %1483
  %1485 = vrot.lane.b32.xlu0 %v1408, 2
  %v1486 = vpop.permute.xlu0 %1485
  %1487 = vrot.lane.b32.xlu0 %v1413, 2
  %v1488 = vpop.permute.xlu0 %1487
  %1489 = vrot.lane.b32.xlu0 %v1416, 2
  %v1490 = vpop.permute.xlu0 %1489
  %1491 = vrot.lane.b32.xlu0 %v1421, 2
  %v1492 = vpop.permute.xlu0 %1491
  %1493 = vrot.lane.b32.xlu0 %v1424, 2
  %v1494 = vpop.permute.xlu0 %1493
  %1495 = vrot.lane.b32.xlu0 %v1429, 2
  %v1496 = vpop.permute.xlu0 %1495
  %1497 = vrot.lane.b32.xlu0 %v1432, 2
  %v1498 = vpop.permute.xlu0 %1497
  %1499 = vrot.lane.b32.xlu0 %v1437, 2
  %v1500 = vpop.permute.xlu0 %1499
  %1501 = vrot.lane.b32.xlu0 %v1440, 2
  %v1502 = vpop.permute.xlu0 %1501
  %1503 = vrot.lane.b32.xlu0 %v1445, 2
  %v1504 = vpop.permute.xlu0 %1503
  %1505 = vrot.lane.b32.xlu0 %v1448, 2
  %v1506 = vpop.permute.xlu0 %1505
  %1507 = vrot.lane.b32.xlu0 %v1453, 2
  %v1508 = vpop.permute.xlu0 %1507
  %1509 = vrot.lane.b32.xlu0 %v1456, 2
  %v1510 = vpop.permute.xlu0 %1509
  %1511 = vrot.lane.b32.xlu0 %v1461, 2
  %v1512 = vpop.permute.xlu0 %1511
  %1513 = vrot.lane.b32.xlu0 %v1464, 2
  %v1514 = vpop.permute.xlu0 %1513
  %v1531 = vadd.f32 %v1069, %v1484
  %v1532 = vadd.f32 %v1072, %v1486
  %v1533 = vadd.f32 %v1077, %v1488
  %v1534 = vadd.f32 %v1080, %v1490
  %v1535 = vadd.f32 %v1085, %v1492
  %v1536 = vadd.f32 %v1088, %v1494
  %v1537 = vadd.f32 %v1093, %v1496
  %v1538 = vadd.f32 %v1096, %v1498
  %v1539 = vadd.f32 %v1101, %v1500
  %v1540 = vadd.f32 %v1104, %v1502
  %v1541 = vadd.f32 %v1109, %v1504
  %v1542 = vadd.f32 %v1112, %v1506
  %v1543 = vadd.f32 %v1117, %v1508
  %v1544 = vadd.f32 %v1120, %v1510
  %v1545 = vadd.f32 %v1125, %v1512
  %v1546 = vadd.f32 %v1128, %v1514
  %v1547 = vsub.f32 0.0, %v1531
  %v1548 = vsub.f32 0.0, %v1532
  %v1549 = vsub.f32 0.0, %v1533
  %v1550 = vsub.f32 0.0, %v1534
  %v1551 = vmul.f32 %v1547, 1.442695
  %v1552 = vpow.pop %v1551
  %v1553 = vmul.f32 %v1548, 1.442695
  %v1554 = vpow.pop %v1553
  %v1555 = vmul.f32 %v1549, 1.442695
  %v1556 = vpow.pop %v1555
  %v1557 = vmul.f32 %v1550, 1.442695
  %v1558 = vpow.pop %v1557
  %v1559 = vadd.f32 %v1552, 1.0
  %v1560 = vadd.f32 %v1554, 1.0
  %v1561 = vadd.f32 %v1556, 1.0
  %v1562 = vadd.f32 %v1558, 1.0
  %v1563 = vrcp.pop %v1559
  %v1564 = vrcp.pop %v1560
  %v1565 = vrcp.pop %v1561
  %v1566 = vrcp.pop %v1562
  %v1567 = vsub.f32 0.0, %v1535
  %v1568 = vsub.f32 0.0, %v1536
  %v1569 = vsub.f32 0.0, %v1537
  %v1570 = vsub.f32 0.0, %v1538
  %v1571 = vmul.f32 %v1567, 1.442695
  %v1572 = vpow.pop %v1571
  %v1573 = vmul.f32 %v1568, 1.442695
  %v1574 = vpow.pop %v1573
  %v1575 = vmul.f32 %v1569, 1.442695
  %v1576 = vpow.pop %v1575
  %v1577 = vmul.f32 %v1570, 1.442695
  %v1578 = vpow.pop %v1577
  %v1579 = vadd.f32 %v1572, 1.0
  %v1580 = vadd.f32 %v1574, 1.0
  %v1581 = vadd.f32 %v1576, 1.0
  %v1582 = vadd.f32 %v1578, 1.0
  %v1583 = vrcp.pop %v1579
  %v1584 = vrcp.pop %v1580
  %v1585 = vrcp.pop %v1581
  %v1586 = vrcp.pop %v1582
  %v1587 = vtanh.pop %v1539
  %v1588 = vtanh.pop %v1540
  %v1589 = vtanh.pop %v1541
  %v1590 = vtanh.pop %v1542
  %v1591 = vsub.f32 0.0, %v1543
  %v1592 = vsub.f32 0.0, %v1544
  %v1593 = vsub.f32 0.0, %v1545
  %v1594 = vsub.f32 0.0, %v1546
  %v1595 = vmul.f32 %v1591, 1.442695
  %v1596 = vpow.pop %v1595
  %v1597 = vmul.f32 %v1592, 1.442695
  %v1598 = vpow.pop %v1597
  %v1599 = vmul.f32 %v1593, 1.442695
  %v1600 = vpow.pop %v1599
  %v1601 = vmul.f32 %v1594, 1.442695
  %v1602 = vpow.pop %v1601
  %v1603 = vadd.f32 %v1596, 1.0
  %v1604 = vadd.f32 %v1598, 1.0
  %v1605 = vadd.f32 %v1600, 1.0
  %v1606 = vadd.f32 %v1602, 1.0
  %v1607 = vrcp.pop %v1603
  %v1608 = vrcp.pop %v1604
  %v1609 = vrcp.pop %v1605
  %v1610 = vrcp.pop %v1606
  %1615 = vrot.lane.b32.xlu0 %v1356, 2
  %v1616 = vpop.permute.xlu0 %1615
  %1617 = vrot.lane.b32.xlu0 %v1357, 2
  %v1618 = vpop.permute.xlu0 %1617
  %1619 = vrot.lane.b32.xlu0 %v1358, 2
  %v1620 = vpop.permute.xlu0 %1619
  %1621 = vrot.lane.b32.xlu0 %v1359, 2
  %v1622 = vpop.permute.xlu0 %1621
  %v1627 = vmul.f32 %v1583, %v1616
  %v1628 = vmul.f32 %v1584, %v1618
  %v1629 = vmul.f32 %v1585, %v1620
  %v1630 = vmul.f32 %v1586, %v1622
  %v1631 = vmul.f32 %v1563, %v1587
  %v1632 = vmul.f32 %v1564, %v1588
  %v1633 = vmul.f32 %v1565, %v1589
  %v1634 = vmul.f32 %v1566, %v1590
  %v1635 = vadd.f32 %v1627, %v1631
  %v1636 = vadd.f32 %v1628, %v1632
  %v1637 = vadd.f32 %v1629, %v1633
  %v1638 = vadd.f32 %v1630, %v1634
  %v1639 = vtanh.pop %v1635
  %v1640 = vtanh.pop %v1636
  %v1641 = vtanh.pop %v1637
  %v1642 = vtanh.pop %v1638
  %v1643 = vmul.f32 %v1607, %v1639
  %v1644 = vmul.f32 %v1608, %v1640
  %v1645 = vmul.f32 %v1609, %v1641
  %v1646 = vmul.f32 %v1610, %v1642
  %v1647 = vpack.c.bf16 %v1644, %v1643
  %v1648 = vpack.c.bf16 %v1646, %v1645
  %1651 = vrot.lane.b32.xlu0 %v1647, 126
  %v1652 = vpop.permute.xlu0 %1651
  %1653 = vrot.lane.b32.xlu0 %v1648, 126
  %v1654 = vpop.permute.xlu0 %1653
  %1657 = vmatprep.subr.bf16.mxu0 0
  %1658 = vmatpush1.bf16.msra.mxu0 0
  %1659 = vmatprep.subr.bf16.mxu0 0
  %1660 = vmatpush1.bf16.msra.mxu0 0
  %1661 = vmatprep.subr.bf16.mxu0 0
  %1662 = vmatpush1.bf16.msra.mxu0 0
  %1663 = vmatprep.subr.bf16.mxu0 0
  %1664 = vmatpush1.bf16.msra.mxu0 0
  %1665 = vmatprep.subr.bf16.mxu0 0
  %1666 = vmatpush1.bf16.msra.mxu0 0
  %1667 = vmatprep.subr.bf16.mxu0 0
  %1668 = vmatpush1.bf16.msra.mxu0 0
  %1669 = vmatprep.subr.bf16.mxu0 0
  %1670 = vmatpush1.bf16.msra.mxu0 %v1654
  %1671 = vmatprep.subr.bf16.mxu0 0
  %1672 = vmatpush1.bf16.msra.mxu0 %v1652
  %1673 = vmatprep.subr.bf16.mxu0 0
  %1674 = vmatpush2.bf16.msra.mxu0 0
  %1675 = vmatprep.subr.bf16.mxu0 0
  %1676 = vmatpush2.bf16.msra.mxu0 0
  %1677 = vmatprep.subr.bf16.mxu0 0
  %1678 = vmatpush2.bf16.msra.mxu0 0
  %1679 = vmatprep.subr.bf16.mxu0 0
  %1680 = vmatpush2.bf16.msra.mxu0 0
  %1681 = vmatprep.subr.bf16.mxu0 0
  %1682 = vmatpush2.bf16.msra.mxu0 0
  %1683 = vmatprep.subr.bf16.mxu0 0
  %1684 = vmatpush2.bf16.msra.mxu0 0
  %1685 = vmatprep.subr.bf16.mxu0 0
  %1686 = vmatpush2.bf16.msra.mxu0 0
  %1687 = vmatprep.subr.bf16.mxu0 0
  %1688 = vmatpush2.bf16.msra.mxu0 0
  %1689 = vmatprep.mubr.bf16.mxu0 0
  %1690 = vmatmul.mubr.bf16.gmra.mxu0 %v1148
  %v1691 = vpop.f32.mrf.mxu0
  %v1692 = vadd.f32 0.0, %v1691
  %v1693 = vpop.f32.mrf.mxu0
  %v1694 = vpop.f32.mrf.mxu0
  %v1695 = vadd.f32 0.0, %v1694
  %v1696 = vpop.f32.mrf.mxu0
  %1697 = vmatprep.mubr.bf16.mxu0 0
  %1698 = vmatmul.mubr.bf16.gmra.mxu0 %v1151
  %v1699 = vpop.f32.mrf.mxu0
  %v1700 = vadd.f32 0.0, %v1699
  %v1701 = vpop.f32.mrf.mxu0
  %v1702 = vpop.f32.mrf.mxu0
  %v1703 = vadd.f32 0.0, %v1702
  %v1704 = vpop.f32.mrf.mxu0
  %1705 = vmatprep.mubr.bf16.mxu0 0
  %1706 = vmatmul.mubr.bf16.gmra.mxu0 %v1154
  %v1707 = vpop.f32.mrf.mxu0
  %v1708 = vadd.f32 0.0, %v1707
  %v1709 = vpop.f32.mrf.mxu0
  %v1710 = vpop.f32.mrf.mxu0
  %v1711 = vadd.f32 0.0, %v1710
  %v1712 = vpop.f32.mrf.mxu0
  %1713 = vmatprep.mubr.bf16.mxu0 0
  %1714 = vmatmul.mubr.bf16.gmra.mxu0 %v1157
  %v1715 = vpop.f32.mrf.mxu0
  %v1716 = vadd.f32 0.0, %v1715
  %v1717 = vpop.f32.mrf.mxu0
  %v1718 = vpop.f32.mrf.mxu0
  %v1719 = vadd.f32 0.0, %v1718
  %v1720 = vpop.f32.mrf.mxu0
  %1721 = vmatprep.mubr.bf16.mxu0 0
  %1722 = vmatmul.mubr.bf16.gmra.mxu0 %v1160
  %v1723 = vpop.f32.mrf.mxu0
  %v1724 = vadd.f32 0.0, %v1723
  %v1725 = vpop.f32.mrf.mxu0
  %v1726 = vpop.f32.mrf.mxu0
  %v1727 = vadd.f32 0.0, %v1726
  %v1728 = vpop.f32.mrf.mxu0
  %1729 = vmatprep.mubr.bf16.mxu0 0
  %1730 = vmatmul.mubr.bf16.gmra.mxu0 %v1163
  %v1731 = vpop.f32.mrf.mxu0
  %v1732 = vadd.f32 0.0, %v1731
  %v1733 = vpop.f32.mrf.mxu0
  %v1734 = vpop.f32.mrf.mxu0
  %v1735 = vadd.f32 0.0, %v1734
  %v1736 = vpop.f32.mrf.mxu0
  %1737 = vmatprep.mubr.bf16.mxu0 0
  %1738 = vmatmul.mubr.bf16.gmra.mxu0 %v1166
  %v1739 = vpop.f32.mrf.mxu0
  %v1740 = vadd.f32 0.0, %v1739
  %v1741 = vpop.f32.mrf.mxu0
  %v1742 = vpop.f32.mrf.mxu0
  %v1743 = vadd.f32 0.0, %v1742
  %v1744 = vpop.f32.mrf.mxu0
  %1745 = vmatprep.mubr.bf16.mxu0 0
  %1746 = vmatmul.mubr.bf16.gmra.mxu0 %v1169
  %v1747 = vpop.f32.mrf.mxu0
  %v1748 = vadd.f32 0.0, %v1747
  %v1749 = vpop.f32.mrf.mxu0
  %v1750 = vpop.f32.mrf.mxu0
  %v1751 = vadd.f32 0.0, %v1750
  %v1752 = vpop.f32.mrf.mxu0
  %1753 = vdwg.mxu0
  %1770 = vrot.lane.b32.xlu0 %v1692, 4
  %v1771 = vpop.permute.xlu0 %1770
  %1772 = vrot.lane.b32.xlu0 %v1695, 4
  %v1773 = vpop.permute.xlu0 %1772
  %1774 = vrot.lane.b32.xlu0 %v1700, 4
  %v1775 = vpop.permute.xlu0 %1774
  %1776 = vrot.lane.b32.xlu0 %v1703, 4
  %v1777 = vpop.permute.xlu0 %1776
  %1778 = vrot.lane.b32.xlu0 %v1708, 4
  %v1779 = vpop.permute.xlu0 %1778
  %1780 = vrot.lane.b32.xlu0 %v1711, 4
  %v1781 = vpop.permute.xlu0 %1780
  %1782 = vrot.lane.b32.xlu0 %v1716, 4
  %v1783 = vpop.permute.xlu0 %1782
  %1784 = vrot.lane.b32.xlu0 %v1719, 4
  %v1785 = vpop.permute.xlu0 %1784
  %1786 = vrot.lane.b32.xlu0 %v1724, 4
  %v1787 = vpop.permute.xlu0 %1786
  %1788 = vrot.lane.b32.xlu0 %v1727, 4
  %v1789 = vpop.permute.xlu0 %1788
  %1790 = vrot.lane.b32.xlu0 %v1732, 4
  %v1791 = vpop.permute.xlu0 %1790
  %1792 = vrot.lane.b32.xlu0 %v1735, 4
  %v1793 = vpop.permute.xlu0 %1792
  %1794 = vrot.lane.b32.xlu0 %v1740, 4
  %v1795 = vpop.permute.xlu0 %1794
  %1796 = vrot.lane.b32.xlu0 %v1743, 4
  %v1797 = vpop.permute.xlu0 %1796
  %1798 = vrot.lane.b32.xlu0 %v1748, 4
  %v1799 = vpop.permute.xlu0 %1798
  %1800 = vrot.lane.b32.xlu0 %v1751, 4
  %v1801 = vpop.permute.xlu0 %1800
  %v1818 = vadd.f32 %v1069, %v1771
  %v1819 = vadd.f32 %v1072, %v1773
  %v1820 = vadd.f32 %v1077, %v1775
  %v1821 = vadd.f32 %v1080, %v1777
  %v1822 = vadd.f32 %v1085, %v1779
  %v1823 = vadd.f32 %v1088, %v1781
  %v1824 = vadd.f32 %v1093, %v1783
  %v1825 = vadd.f32 %v1096, %v1785
  %v1826 = vadd.f32 %v1101, %v1787
  %v1827 = vadd.f32 %v1104, %v1789
  %v1828 = vadd.f32 %v1109, %v1791
  %v1829 = vadd.f32 %v1112, %v1793
  %v1830 = vadd.f32 %v1117, %v1795
  %v1831 = vadd.f32 %v1120, %v1797
  %v1832 = vadd.f32 %v1125, %v1799
  %v1833 = vadd.f32 %v1128, %v1801
  %v1834 = vsub.f32 0.0, %v1818
  %v1835 = vsub.f32 0.0, %v1819
  %v1836 = vsub.f32 0.0, %v1820
  %v1837 = vsub.f32 0.0, %v1821
  %v1838 = vmul.f32 %v1834, 1.442695
  %v1839 = vpow.pop %v1838
  %v1840 = vmul.f32 %v1835, 1.442695
  %v1841 = vpow.pop %v1840
  %v1842 = vmul.f32 %v1836, 1.442695
  %v1843 = vpow.pop %v1842
  %v1844 = vmul.f32 %v1837, 1.442695
  %v1845 = vpow.pop %v1844
  %v1846 = vadd.f32 %v1839, 1.0
  %v1847 = vadd.f32 %v1841, 1.0
  %v1848 = vadd.f32 %v1843, 1.0
  %v1849 = vadd.f32 %v1845, 1.0
  %v1850 = vrcp.pop %v1846
  %v1851 = vrcp.pop %v1847
  %v1852 = vrcp.pop %v1848
  %v1853 = vrcp.pop %v1849
  %v1854 = vsub.f32 0.0, %v1822
  %v1855 = vsub.f32 0.0, %v1823
  %v1856 = vsub.f32 0.0, %v1824
  %v1857 = vsub.f32 0.0, %v1825
  %v1858 = vmul.f32 %v1854, 1.442695
  %v1859 = vpow.pop %v1858
  %v1860 = vmul.f32 %v1855, 1.442695
  %v1861 = vpow.pop %v1860
  %v1862 = vmul.f32 %v1856, 1.442695
  %v1863 = vpow.pop %v1862
  %v1864 = vmul.f32 %v1857, 1.442695
  %v1865 = vpow.pop %v1864
  %v1866 = vadd.f32 %v1859, 1.0
  %v1867 = vadd.f32 %v1861, 1.0
  %v1868 = vadd.f32 %v1863, 1.0
  %v1869 = vadd.f32 %v1865, 1.0
  %v1870 = vrcp.pop %v1866
  %v1871 = vrcp.pop %v1867
  %v1872 = vrcp.pop %v1868
  %v1873 = vrcp.pop %v1869
  %v1874 = vtanh.pop %v1826
  %v1875 = vtanh.pop %v1827
  %v1876 = vtanh.pop %v1828
  %v1877 = vtanh.pop %v1829
  %v1878 = vsub.f32 0.0, %v1830
  %v1879 = vsub.f32 0.0, %v1831
  %v1880 = vsub.f32 0.0, %v1832
  %v1881 = vsub.f32 0.0, %v1833
  %v1882 = vmul.f32 %v1878, 1.442695
  %v1883 = vpow.pop %v1882
  %v1884 = vmul.f32 %v1879, 1.442695
  %v1885 = vpow.pop %v1884
  %v1886 = vmul.f32 %v1880, 1.442695
  %v1887 = vpow.pop %v1886
  %v1888 = vmul.f32 %v1881, 1.442695
  %v1889 = vpow.pop %v1888
  %v1890 = vadd.f32 %v1883, 1.0
  %v1891 = vadd.f32 %v1885, 1.0
  %v1892 = vadd.f32 %v1887, 1.0
  %v1893 = vadd.f32 %v1889, 1.0
  %v1894 = vrcp.pop %v1890
  %v1895 = vrcp.pop %v1891
  %v1896 = vrcp.pop %v1892
  %v1897 = vrcp.pop %v1893
  %1902 = vrot.lane.b32.xlu0 %v1635, 2
  %v1903 = vpop.permute.xlu0 %1902
  %1904 = vrot.lane.b32.xlu0 %v1636, 2
  %v1905 = vpop.permute.xlu0 %1904
  %1906 = vrot.lane.b32.xlu0 %v1637, 2
  %v1907 = vpop.permute.xlu0 %1906
  %1908 = vrot.lane.b32.xlu0 %v1638, 2
  %v1909 = vpop.permute.xlu0 %1908
  %v1914 = vmul.f32 %v1870, %v1903
  %v1915 = vmul.f32 %v1871, %v1905
  %v1916 = vmul.f32 %v1872, %v1907
  %v1917 = vmul.f32 %v1873, %v1909
  %v1918 = vmul.f32 %v1850, %v1874
  %v1919 = vmul.f32 %v1851, %v1875
  %v1920 = vmul.f32 %v1852, %v1876
  %v1921 = vmul.f32 %v1853, %v1877
  %v1922 = vadd.f32 %v1914, %v1918
  %v1923 = vadd.f32 %v1915, %v1919
  %v1924 = vadd.f32 %v1916, %v1920
  %v1925 = vadd.f32 %v1917, %v1921
  %v1926 = vtanh.pop %v1922
  %v1927 = vtanh.pop %v1923
  %v1928 = vtanh.pop %v1924
  %v1929 = vtanh.pop %v1925
  %v1930 = vmul.f32 %v1894, %v1926
  %v1931 = vmul.f32 %v1895, %v1927
  %v1932 = vmul.f32 %v1896, %v1928
  %v1933 = vmul.f32 %v1897, %v1929
  %v1934 = vpack.c.bf16 %v1931, %v1930
  %v1935 = vpack.c.bf16 %v1933, %v1932
  %1938 = vrot.lane.b32.xlu0 %v1934, 124
  %v1939 = vpop.permute.xlu0 %1938
  %1940 = vrot.lane.b32.xlu0 %v1935, 124
  %v1941 = vpop.permute.xlu0 %1940
  %1944 = vmatprep.subr.bf16.mxu0 0
  %1945 = vmatpush1.bf16.msra.mxu0 0
  %1946 = vmatprep.subr.bf16.mxu0 0
  %1947 = vmatpush1.bf16.msra.mxu0 0
  %1948 = vmatprep.subr.bf16.mxu0 0
  %1949 = vmatpush1.bf16.msra.mxu0 0
  %1950 = vmatprep.subr.bf16.mxu0 0
  %1951 = vmatpush1.bf16.msra.mxu0 0
  %1952 = vmatprep.subr.bf16.mxu0 0
  %1953 = vmatpush1.bf16.msra.mxu0 0
  %1954 = vmatprep.subr.bf16.mxu0 0
  %1955 = vmatpush1.bf16.msra.mxu0 0
  %1956 = vmatprep.subr.bf16.mxu0 0
  %1957 = vmatpush1.bf16.msra.mxu0 %v1941
  %1958 = vmatprep.subr.bf16.mxu0 0
  %1959 = vmatpush1.bf16.msra.mxu0 %v1939
  %1960 = vmatprep.subr.bf16.mxu0 0
  %1961 = vmatpush2.bf16.msra.mxu0 0
  %1962 = vmatprep.subr.bf16.mxu0 0
  %1963 = vmatpush2.bf16.msra.mxu0 0
  %1964 = vmatprep.subr.bf16.mxu0 0
  %1965 = vmatpush2.bf16.msra.mxu0 0
  %1966 = vmatprep.subr.bf16.mxu0 0
  %1967 = vmatpush2.bf16.msra.mxu0 0
  %1968 = vmatprep.subr.bf16.mxu0 0
  %1969 = vmatpush2.bf16.msra.mxu0 0
  %1970 = vmatprep.subr.bf16.mxu0 0
  %1971 = vmatpush2.bf16.msra.mxu0 0
  %1972 = vmatprep.subr.bf16.mxu0 0
  %1973 = vmatpush2.bf16.msra.mxu0 0
  %1974 = vmatprep.subr.bf16.mxu0 0
  %1975 = vmatpush2.bf16.msra.mxu0 0
  %1976 = vmatprep.mubr.bf16.mxu0 0
  %1977 = vmatmul.mubr.bf16.gmra.mxu0 %v1148
  %v1978 = vpop.f32.mrf.mxu0
  %v1979 = vadd.f32 0.0, %v1978
  %v1980 = vpop.f32.mrf.mxu0
  %v1981 = vpop.f32.mrf.mxu0
  %v1982 = vadd.f32 0.0, %v1981
  %v1983 = vpop.f32.mrf.mxu0
  %1984 = vmatprep.mubr.bf16.mxu0 0
  %1985 = vmatmul.mubr.bf16.gmra.mxu0 %v1151
  %v1986 = vpop.f32.mrf.mxu0
  %v1987 = vadd.f32 0.0, %v1986
  %v1988 = vpop.f32.mrf.mxu0
  %v1989 = vpop.f32.mrf.mxu0
  %v1990 = vadd.f32 0.0, %v1989
  %v1991 = vpop.f32.mrf.mxu0
  %1992 = vmatprep.mubr.bf16.mxu0 0
  %1993 = vmatmul.mubr.bf16.gmra.mxu0 %v1154
  %v1994 = vpop.f32.mrf.mxu0
  %v1995 = vadd.f32 0.0, %v1994
  %v1996 = vpop.f32.mrf.mxu0
  %v1997 = vpop.f32.mrf.mxu0
  %v1998 = vadd.f32 0.0, %v1997
  %v1999 = vpop.f32.mrf.mxu0
  %2000 = vmatprep.mubr.bf16.mxu0 0
  %2001 = vmatmul.mubr.bf16.gmra.mxu0 %v1157
  %v2002 = vpop.f32.mrf.mxu0
  %v2003 = vadd.f32 0.0, %v2002
  %v2004 = vpop.f32.mrf.mxu0
  %v2005 = vpop.f32.mrf.mxu0
  %v2006 = vadd.f32 0.0, %v2005
  %v2007 = vpop.f32.mrf.mxu0
  %2008 = vmatprep.mubr.bf16.mxu0 0
  %2009 = vmatmul.mubr.bf16.gmra.mxu0 %v1160
  %v2010 = vpop.f32.mrf.mxu0
  %v2011 = vadd.f32 0.0, %v2010
  %v2012 = vpop.f32.mrf.mxu0
  %v2013 = vpop.f32.mrf.mxu0
  %v2014 = vadd.f32 0.0, %v2013
  %v2015 = vpop.f32.mrf.mxu0
  %2016 = vmatprep.mubr.bf16.mxu0 0
  %2017 = vmatmul.mubr.bf16.gmra.mxu0 %v1163
  %v2018 = vpop.f32.mrf.mxu0
  %v2019 = vadd.f32 0.0, %v2018
  %v2020 = vpop.f32.mrf.mxu0
  %v2021 = vpop.f32.mrf.mxu0
  %v2022 = vadd.f32 0.0, %v2021
  %v2023 = vpop.f32.mrf.mxu0
  %2024 = vmatprep.mubr.bf16.mxu0 0
  %2025 = vmatmul.mubr.bf16.gmra.mxu0 %v1166
  %v2026 = vpop.f32.mrf.mxu0
  %v2027 = vadd.f32 0.0, %v2026
  %v2028 = vpop.f32.mrf.mxu0
  %v2029 = vpop.f32.mrf.mxu0
  %v2030 = vadd.f32 0.0, %v2029
  %v2031 = vpop.f32.mrf.mxu0
  %2032 = vmatprep.mubr.bf16.mxu0 0
  %2033 = vmatmul.mubr.bf16.gmra.mxu0 %v1169
  %v2034 = vpop.f32.mrf.mxu0
  %v2035 = vadd.f32 0.0, %v2034
  %v2036 = vpop.f32.mrf.mxu0
  %v2037 = vpop.f32.mrf.mxu0
  %v2038 = vadd.f32 0.0, %v2037
  %v2039 = vpop.f32.mrf.mxu0
  %2040 = vdwg.mxu0
  %2057 = vrot.lane.b32.xlu0 %v1979, 6
  %v2058 = vpop.permute.xlu0 %2057
  %2059 = vrot.lane.b32.xlu0 %v1982, 6
  %v2060 = vpop.permute.xlu0 %2059
  %2061 = vrot.lane.b32.xlu0 %v1987, 6
  %v2062 = vpop.permute.xlu0 %2061
  %2063 = vrot.lane.b32.xlu0 %v1990, 6
  %v2064 = vpop.permute.xlu0 %2063
  %2065 = vrot.lane.b32.xlu0 %v1995, 6
  %v2066 = vpop.permute.xlu0 %2065
  %2067 = vrot.lane.b32.xlu0 %v1998, 6
  %v2068 = vpop.permute.xlu0 %2067
  %2069 = vrot.lane.b32.xlu0 %v2003, 6
  %v2070 = vpop.permute.xlu0 %2069
  %2071 = vrot.lane.b32.xlu0 %v2006, 6
  %v2072 = vpop.permute.xlu0 %2071
  %2073 = vrot.lane.b32.xlu0 %v2011, 6
  %v2074 = vpop.permute.xlu0 %2073
  %2075 = vrot.lane.b32.xlu0 %v2014, 6
  %v2076 = vpop.permute.xlu0 %2075
  %2077 = vrot.lane.b32.xlu0 %v2019, 6
  %v2078 = vpop.permute.xlu0 %2077
  %2079 = vrot.lane.b32.xlu0 %v2022, 6
  %v2080 = vpop.permute.xlu0 %2079
  %2081 = vrot.lane.b32.xlu0 %v2027, 6
  %v2082 = vpop.permute.xlu0 %2081
  %2083 = vrot.lane.b32.xlu0 %v2030, 6
  %v2084 = vpop.permute.xlu0 %2083
  %2085 = vrot.lane.b32.xlu0 %v2035, 6
  %v2086 = vpop.permute.xlu0 %2085
  %2087 = vrot.lane.b32.xlu0 %v2038, 6
  %v2088 = vpop.permute.xlu0 %2087
  %v2105 = vadd.f32 %v1069, %v2058
  %v2106 = vadd.f32 %v1072, %v2060
  %v2107 = vadd.f32 %v1077, %v2062
  %v2108 = vadd.f32 %v1080, %v2064
  %v2109 = vadd.f32 %v1085, %v2066
  %v2110 = vadd.f32 %v1088, %v2068
  %v2111 = vadd.f32 %v1093, %v2070
  %v2112 = vadd.f32 %v1096, %v2072
  %v2113 = vadd.f32 %v1101, %v2074
  %v2114 = vadd.f32 %v1104, %v2076
  %v2115 = vadd.f32 %v1109, %v2078
  %v2116 = vadd.f32 %v1112, %v2080
  %v2117 = vadd.f32 %v1117, %v2082
  %v2118 = vadd.f32 %v1120, %v2084
  %v2119 = vadd.f32 %v1125, %v2086
  %v2120 = vadd.f32 %v1128, %v2088
  %v2121 = vsub.f32 0.0, %v2105
  %v2122 = vsub.f32 0.0, %v2106
  %v2123 = vsub.f32 0.0, %v2107
  %v2124 = vsub.f32 0.0, %v2108
  %v2125 = vmul.f32 %v2121, 1.442695
  %v2126 = vpow.pop %v2125
  %v2127 = vmul.f32 %v2122, 1.442695
  %v2128 = vpow.pop %v2127
  %v2129 = vmul.f32 %v2123, 1.442695
  %v2130 = vpow.pop %v2129
  %v2131 = vmul.f32 %v2124, 1.442695
  %v2132 = vpow.pop %v2131
  %v2133 = vadd.f32 %v2126, 1.0
  %v2134 = vadd.f32 %v2128, 1.0
  %v2135 = vadd.f32 %v2130, 1.0
  %v2136 = vadd.f32 %v2132, 1.0
  %v2137 = vrcp.pop %v2133
  %v2138 = vrcp.pop %v2134
  %v2139 = vrcp.pop %v2135
  %v2140 = vrcp.pop %v2136
  %v2141 = vsub.f32 0.0, %v2109
  %v2142 = vsub.f32 0.0, %v2110
  %v2143 = vsub.f32 0.0, %v2111
  %v2144 = vsub.f32 0.0, %v2112
  %v2145 = vmul.f32 %v2141, 1.442695
  %v2146 = vpow.pop %v2145
  %v2147 = vmul.f32 %v2142, 1.442695
  %v2148 = vpow.pop %v2147
  %v2149 = vmul.f32 %v2143, 1.442695
  %v2150 = vpow.pop %v2149
  %v2151 = vmul.f32 %v2144, 1.442695
  %v2152 = vpow.pop %v2151
  %v2153 = vadd.f32 %v2146, 1.0
  %v2154 = vadd.f32 %v2148, 1.0
  %v2155 = vadd.f32 %v2150, 1.0
  %v2156 = vadd.f32 %v2152, 1.0
  %v2157 = vrcp.pop %v2153
  %v2158 = vrcp.pop %v2154
  %v2159 = vrcp.pop %v2155
  %v2160 = vrcp.pop %v2156
  %v2161 = vtanh.pop %v2113
  %v2162 = vtanh.pop %v2114
  %v2163 = vtanh.pop %v2115
  %v2164 = vtanh.pop %v2116
  %v2165 = vsub.f32 0.0, %v2117
  %v2166 = vsub.f32 0.0, %v2118
  %v2167 = vsub.f32 0.0, %v2119
  %v2168 = vsub.f32 0.0, %v2120
  %v2169 = vmul.f32 %v2165, 1.442695
  %v2170 = vpow.pop %v2169
  %v2171 = vmul.f32 %v2166, 1.442695
  %v2172 = vpow.pop %v2171
  %v2173 = vmul.f32 %v2167, 1.442695
  %v2174 = vpow.pop %v2173
  %v2175 = vmul.f32 %v2168, 1.442695
  %v2176 = vpow.pop %v2175
  %v2177 = vadd.f32 %v2170, 1.0
  %v2178 = vadd.f32 %v2172, 1.0
  %v2179 = vadd.f32 %v2174, 1.0
  %v2180 = vadd.f32 %v2176, 1.0
  %v2181 = vrcp.pop %v2177
  %v2182 = vrcp.pop %v2178
  %v2183 = vrcp.pop %v2179
  %v2184 = vrcp.pop %v2180
  %2189 = vrot.lane.b32.xlu0 %v1922, 2
  %v2190 = vpop.permute.xlu0 %2189
  %2191 = vrot.lane.b32.xlu0 %v1923, 2
  %v2192 = vpop.permute.xlu0 %2191
  %2193 = vrot.lane.b32.xlu0 %v1924, 2
  %v2194 = vpop.permute.xlu0 %2193
  %2195 = vrot.lane.b32.xlu0 %v1925, 2
  %v2196 = vpop.permute.xlu0 %2195
  %v2201 = vmul.f32 %v2157, %v2190
  %v2202 = vmul.f32 %v2158, %v2192
  %v2203 = vmul.f32 %v2159, %v2194
  %v2204 = vmul.f32 %v2160, %v2196
  %v2205 = vmul.f32 %v2137, %v2161
  %v2206 = vmul.f32 %v2138, %v2162
  %v2207 = vmul.f32 %v2139, %v2163
  %v2208 = vmul.f32 %v2140, %v2164
  %v2209 = vadd.f32 %v2201, %v2205
  %v2210 = vadd.f32 %v2202, %v2206
  %v2211 = vadd.f32 %v2203, %v2207
  %v2212 = vadd.f32 %v2204, %v2208
  %v2213 = vtanh.pop %v2209
  %v2214 = vtanh.pop %v2210
  %v2215 = vtanh.pop %v2211
  %v2216 = vtanh.pop %v2212
  %v2217 = vmul.f32 %v2181, %v2213
  %v2218 = vmul.f32 %v2182, %v2214
  %v2219 = vmul.f32 %v2183, %v2215
  %v2220 = vmul.f32 %v2184, %v2216
  %v2221 = vpack.c.bf16 %v2218, %v2217
  %v2222 = vpack.c.bf16 %v2220, %v2219
  %2225 = vrot.lane.b32.xlu0 %v2221, 122
  %v2226 = vpop.permute.xlu0 %2225
  %2227 = vrot.lane.b32.xlu0 %v2222, 122
  %v2228 = vpop.permute.xlu0 %2227
  %2231 = vmatprep.subr.bf16.mxu0 0
  %2232 = vmatpush1.bf16.msra.mxu0 0
  %2233 = vmatprep.subr.bf16.mxu0 0
  %2234 = vmatpush1.bf16.msra.mxu0 0
  %2235 = vmatprep.subr.bf16.mxu0 0
  %2236 = vmatpush1.bf16.msra.mxu0 0
  %2237 = vmatprep.subr.bf16.mxu0 0
  %2238 = vmatpush1.bf16.msra.mxu0 0
  %2239 = vmatprep.subr.bf16.mxu0 0
  %2240 = vmatpush1.bf16.msra.mxu0 0
  %2241 = vmatprep.subr.bf16.mxu0 0
  %2242 = vmatpush1.bf16.msra.mxu0 0
  %2243 = vmatprep.subr.bf16.mxu0 0
  %2244 = vmatpush1.bf16.msra.mxu0 %v2228
  %2245 = vmatprep.subr.bf16.mxu0 0
  %2246 = vmatpush1.bf16.msra.mxu0 %v2226
  %2247 = vmatprep.subr.bf16.mxu0 0
  %2248 = vmatpush2.bf16.msra.mxu0 0
  %2249 = vmatprep.subr.bf16.mxu0 0
  %2250 = vmatpush2.bf16.msra.mxu0 0
  %2251 = vmatprep.subr.bf16.mxu0 0
  %2252 = vmatpush2.bf16.msra.mxu0 0
  %2253 = vmatprep.subr.bf16.mxu0 0
  %2254 = vmatpush2.bf16.msra.mxu0 0
  %2255 = vmatprep.subr.bf16.mxu0 0
  %2256 = vmatpush2.bf16.msra.mxu0 0
  %2257 = vmatprep.subr.bf16.mxu0 0
  %2258 = vmatpush2.bf16.msra.mxu0 0
  %2259 = vmatprep.subr.bf16.mxu0 0
  %2260 = vmatpush2.bf16.msra.mxu0 0
  %2261 = vmatprep.subr.bf16.mxu0 0
  %2262 = vmatpush2.bf16.msra.mxu0 0
  %2263 = vmatprep.mubr.bf16.mxu0 0
  %2264 = vmatmul.mubr.bf16.gmra.mxu0 %v1148
  %v2265 = vpop.f32.mrf.mxu0
  %v2266 = vadd.f32 0.0, %v2265
  %v2267 = vpop.f32.mrf.mxu0
  %v2268 = vpop.f32.mrf.mxu0
  %v2269 = vadd.f32 0.0, %v2268
  %v2270 = vpop.f32.mrf.mxu0
  %2271 = vmatprep.mubr.bf16.mxu0 0
  %2272 = vmatmul.mubr.bf16.gmra.mxu0 %v1151
  %v2273 = vpop.f32.mrf.mxu0
  %v2274 = vadd.f32 0.0, %v2273
  %v2275 = vpop.f32.mrf.mxu0
  %v2276 = vpop.f32.mrf.mxu0
  %v2277 = vadd.f32 0.0, %v2276
  %v2278 = vpop.f32.mrf.mxu0
  %2279 = vmatprep.mubr.bf16.mxu0 0
  %2280 = vmatmul.mubr.bf16.gmra.mxu0 %v1154
  %v2281 = vpop.f32.mrf.mxu0
  %v2282 = vadd.f32 0.0, %v2281
  %v2283 = vpop.f32.mrf.mxu0
  %v2284 = vpop.f32.mrf.mxu0
  %v2285 = vadd.f32 0.0, %v2284
  %v2286 = vpop.f32.mrf.mxu0
  %2287 = vmatprep.mubr.bf16.mxu0 0
  %2288 = vmatmul.mubr.bf16.gmra.mxu0 %v1157
  %v2289 = vpop.f32.mrf.mxu0
  %v2290 = vadd.f32 0.0, %v2289
  %v2291 = vpop.f32.mrf.mxu0
  %v2292 = vpop.f32.mrf.mxu0
  %v2293 = vadd.f32 0.0, %v2292
  %v2294 = vpop.f32.mrf.mxu0
  %2295 = vmatprep.mubr.bf16.mxu0 0
  %2296 = vmatmul.mubr.bf16.gmra.mxu0 %v1160
  %v2297 = vpop.f32.mrf.mxu0
  %v2298 = vadd.f32 0.0, %v2297
  %v2299 = vpop.f32.mrf.mxu0
  %v2300 = vpop.f32.mrf.mxu0
  %v2301 = vadd.f32 0.0, %v2300
  %v2302 = vpop.f32.mrf.mxu0
  %2303 = vmatprep.mubr.bf16.mxu0 0
  %2304 = vmatmul.mubr.bf16.gmra.mxu0 %v1163
  %v2305 = vpop.f32.mrf.mxu0
  %v2306 = vadd.f32 0.0, %v2305
  %v2307 = vpop.f32.mrf.mxu0
  %v2308 = vpop.f32.mrf.mxu0
  %v2309 = vadd.f32 0.0, %v2308
  %v2310 = vpop.f32.mrf.mxu0
  %2311 = vmatprep.mubr.bf16.mxu0 0
  %2312 = vmatmul.mubr.bf16.gmra.mxu0 %v1166
  %v2313 = vpop.f32.mrf.mxu0
  %v2314 = vadd.f32 0.0, %v2313
  %v2315 = vpop.f32.mrf.mxu0
  %v2316 = vpop.f32.mrf.mxu0
  %v2317 = vadd.f32 0.0, %v2316
  %v2318 = vpop.f32.mrf.mxu0
  %2319 = vmatprep.mubr.bf16.mxu0 0
  %2320 = vmatmul.mubr.bf16.gmra.mxu0 %v1169
  %v2321 = vpop.f32.mrf.mxu0
  %v2322 = vadd.f32 0.0, %v2321
  %v2323 = vpop.f32.mrf.mxu0
  %v2324 = vpop.f32.mrf.mxu0
  %v2325 = vadd.f32 0.0, %v2324
  %v2326 = vpop.f32.mrf.mxu0
  %2327 = vdwg.mxu0
  %2344 = vrot.lane.b32.xlu0 %v2266, 8
  %v2345 = vpop.permute.xlu0 %2344
  %2346 = vrot.lane.b32.xlu0 %v2269, 8
  %v2347 = vpop.permute.xlu0 %2346
  %2348 = vrot.lane.b32.xlu0 %v2274, 8
  %v2349 = vpop.permute.xlu0 %2348
  %2350 = vrot.lane.b32.xlu0 %v2277, 8
  %v2351 = vpop.permute.xlu0 %2350
  %2352 = vrot.lane.b32.xlu0 %v2282, 8
  %v2353 = vpop.permute.xlu0 %2352
  %2354 = vrot.lane.b32.xlu0 %v2285, 8
  %v2355 = vpop.permute.xlu0 %2354
  %2356 = vrot.lane.b32.xlu0 %v2290, 8
  %v2357 = vpop.permute.xlu0 %2356
  %2358 = vrot.lane.b32.xlu0 %v2293, 8
  %v2359 = vpop.permute.xlu0 %2358
  %2360 = vrot.lane.b32.xlu0 %v2298, 8
  %v2361 = vpop.permute.xlu0 %2360
  %2362 = vrot.lane.b32.xlu0 %v2301, 8
  %v2363 = vpop.permute.xlu0 %2362
  %2364 = vrot.lane.b32.xlu0 %v2306, 8
  %v2365 = vpop.permute.xlu0 %2364
  %2366 = vrot.lane.b32.xlu0 %v2309, 8
  %v2367 = vpop.permute.xlu0 %2366
  %2368 = vrot.lane.b32.xlu0 %v2314, 8
  %v2369 = vpop.permute.xlu0 %2368
  %2370 = vrot.lane.b32.xlu0 %v2317, 8
  %v2371 = vpop.permute.xlu0 %2370
  %2372 = vrot.lane.b32.xlu0 %v2322, 8
  %v2373 = vpop.permute.xlu0 %2372
  %2374 = vrot.lane.b32.xlu0 %v2325, 8
  %v2375 = vpop.permute.xlu0 %2374
  %v2392 = vadd.f32 %v1069, %v2345
  %v2393 = vadd.f32 %v1072, %v2347
  %v2394 = vadd.f32 %v1077, %v2349
  %v2395 = vadd.f32 %v1080, %v2351
  %v2396 = vadd.f32 %v1085, %v2353
  %v2397 = vadd.f32 %v1088, %v2355
  %v2398 = vadd.f32 %v1093, %v2357
  %v2399 = vadd.f32 %v1096, %v2359
  %v2400 = vadd.f32 %v1101, %v2361
  %v2401 = vadd.f32 %v1104, %v2363
  %v2402 = vadd.f32 %v1109, %v2365
  %v2403 = vadd.f32 %v1112, %v2367
  %v2404 = vadd.f32 %v1117, %v2369
  %v2405 = vadd.f32 %v1120, %v2371
  %v2406 = vadd.f32 %v1125, %v2373
  %v2407 = vadd.f32 %v1128, %v2375
  %v2408 = vsub.f32 0.0, %v2392
  %v2409 = vsub.f32 0.0, %v2393
  %v2410 = vsub.f32 0.0, %v2394
  %v2411 = vsub.f32 0.0, %v2395
  %v2412 = vmul.f32 %v2408, 1.442695
  %v2413 = vpow.pop %v2412
  %v2414 = vmul.f32 %v2409, 1.442695
  %v2415 = vpow.pop %v2414
  %v2416 = vmul.f32 %v2410, 1.442695
  %v2417 = vpow.pop %v2416
  %v2418 = vmul.f32 %v2411, 1.442695
  %v2419 = vpow.pop %v2418
  %v2420 = vadd.f32 %v2413, 1.0
  %v2421 = vadd.f32 %v2415, 1.0
  %v2422 = vadd.f32 %v2417, 1.0
  %v2423 = vadd.f32 %v2419, 1.0
  %v2424 = vrcp.pop %v2420
  %v2425 = vrcp.pop %v2421
  %v2426 = vrcp.pop %v2422
  %v2427 = vrcp.pop %v2423
  %v2428 = vsub.f32 0.0, %v2396
  %v2429 = vsub.f32 0.0, %v2397
  %v2430 = vsub.f32 0.0, %v2398
  %v2431 = vsub.f32 0.0, %v2399
  %v2432 = vmul.f32 %v2428, 1.442695
  %v2433 = vpow.pop %v2432
  %v2434 = vmul.f32 %v2429, 1.442695
  %v2435 = vpow.pop %v2434
  %v2436 = vmul.f32 %v2430, 1.442695
  %v2437 = vpow.pop %v2436
  %v2438 = vmul.f32 %v2431, 1.442695
  %v2439 = vpow.pop %v2438
  %v2440 = vadd.f32 %v2433, 1.0
  %v2441 = vadd.f32 %v2435, 1.0
  %v2442 = vadd.f32 %v2437, 1.0
  %v2443 = vadd.f32 %v2439, 1.0
  %v2444 = vrcp.pop %v2440
  %v2445 = vrcp.pop %v2441
  %v2446 = vrcp.pop %v2442
  %v2447 = vrcp.pop %v2443
  %v2448 = vtanh.pop %v2400
  %v2449 = vtanh.pop %v2401
  %v2450 = vtanh.pop %v2402
  %v2451 = vtanh.pop %v2403
  %v2452 = vsub.f32 0.0, %v2404
  %v2453 = vsub.f32 0.0, %v2405
  %v2454 = vsub.f32 0.0, %v2406
  %v2455 = vsub.f32 0.0, %v2407
  %v2456 = vmul.f32 %v2452, 1.442695
  %v2457 = vpow.pop %v2456
  %v2458 = vmul.f32 %v2453, 1.442695
  %v2459 = vpow.pop %v2458
  %v2460 = vmul.f32 %v2454, 1.442695
  %v2461 = vpow.pop %v2460
  %v2462 = vmul.f32 %v2455, 1.442695
  %v2463 = vpow.pop %v2462
  %v2464 = vadd.f32 %v2457, 1.0
  %v2465 = vadd.f32 %v2459, 1.0
  %v2466 = vadd.f32 %v2461, 1.0
  %v2467 = vadd.f32 %v2463, 1.0
  %v2468 = vrcp.pop %v2464
  %v2469 = vrcp.pop %v2465
  %v2470 = vrcp.pop %v2466
  %v2471 = vrcp.pop %v2467
  %2476 = vrot.lane.b32.xlu0 %v2209, 2
  %v2477 = vpop.permute.xlu0 %2476
  %2478 = vrot.lane.b32.xlu0 %v2210, 2
  %v2479 = vpop.permute.xlu0 %2478
  %2480 = vrot.lane.b32.xlu0 %v2211, 2
  %v2481 = vpop.permute.xlu0 %2480
  %2482 = vrot.lane.b32.xlu0 %v2212, 2
  %v2483 = vpop.permute.xlu0 %2482
  %v2488 = vmul.f32 %v2444, %v2477
  %v2489 = vmul.f32 %v2445, %v2479
  %v2490 = vmul.f32 %v2446, %v2481
  %v2491 = vmul.f32 %v2447, %v2483
  %v2492 = vmul.f32 %v2424, %v2448
  %v2493 = vmul.f32 %v2425, %v2449
  %v2494 = vmul.f32 %v2426, %v2450
  %v2495 = vmul.f32 %v2427, %v2451
  %v2496 = vadd.f32 %v2488, %v2492
  %v2497 = vadd.f32 %v2489, %v2493
  %v2498 = vadd.f32 %v2490, %v2494
  %v2499 = vadd.f32 %v2491, %v2495
  %v2500 = vtanh.pop %v2496
  %v2501 = vtanh.pop %v2497
  %v2502 = vtanh.pop %v2498
  %v2503 = vtanh.pop %v2499
  %v2504 = vmul.f32 %v2468, %v2500
  %v2505 = vmul.f32 %v2469, %v2501
  %v2506 = vmul.f32 %v2470, %v2502
  %v2507 = vmul.f32 %v2471, %v2503
  %v2508 = vpack.c.bf16 %v2505, %v2504
  %v2509 = vpack.c.bf16 %v2507, %v2506
  %2512 = vrot.lane.b32.xlu0 %v2508, 120
  %v2513 = vpop.permute.xlu0 %2512
  %2514 = vrot.lane.b32.xlu0 %v2509, 120
  %v2515 = vpop.permute.xlu0 %2514
  %2518 = vmatprep.subr.bf16.mxu0 0
  %2519 = vmatpush1.bf16.msra.mxu0 0
  %2520 = vmatprep.subr.bf16.mxu0 0
  %2521 = vmatpush1.bf16.msra.mxu0 0
  %2522 = vmatprep.subr.bf16.mxu0 0
  %2523 = vmatpush1.bf16.msra.mxu0 0
  %2524 = vmatprep.subr.bf16.mxu0 0
  %2525 = vmatpush1.bf16.msra.mxu0 0
  %2526 = vmatprep.subr.bf16.mxu0 0
  %2527 = vmatpush1.bf16.msra.mxu0 0
  %2528 = vmatprep.subr.bf16.mxu0 0
  %2529 = vmatpush1.bf16.msra.mxu0 0
  %2530 = vmatprep.subr.bf16.mxu0 0
  %2531 = vmatpush1.bf16.msra.mxu0 %v2515
  %2532 = vmatprep.subr.bf16.mxu0 0
  %2533 = vmatpush1.bf16.msra.mxu0 %v2513
  %2534 = vmatprep.subr.bf16.mxu0 0
  %2535 = vmatpush2.bf16.msra.mxu0 0
  %2536 = vmatprep.subr.bf16.mxu0 0
  %2537 = vmatpush2.bf16.msra.mxu0 0
  %2538 = vmatprep.subr.bf16.mxu0 0
  %2539 = vmatpush2.bf16.msra.mxu0 0
  %2540 = vmatprep.subr.bf16.mxu0 0
  %2541 = vmatpush2.bf16.msra.mxu0 0
  %2542 = vmatprep.subr.bf16.mxu0 0
  %2543 = vmatpush2.bf16.msra.mxu0 0
  %2544 = vmatprep.subr.bf16.mxu0 0
  %2545 = vmatpush2.bf16.msra.mxu0 0
  %2546 = vmatprep.subr.bf16.mxu0 0
  %2547 = vmatpush2.bf16.msra.mxu0 0
  %2548 = vmatprep.subr.bf16.mxu0 0
  %2549 = vmatpush2.bf16.msra.mxu0 0
  %2550 = vmatprep.mubr.bf16.mxu0 0
  %2551 = vmatmul.mubr.bf16.gmra.mxu0 %v1148
  %v2552 = vpop.f32.mrf.mxu0
  %v2553 = vadd.f32 0.0, %v2552
  %v2554 = vpop.f32.mrf.mxu0
  %v2555 = vpop.f32.mrf.mxu0
  %v2556 = vadd.f32 0.0, %v2555
  %v2557 = vpop.f32.mrf.mxu0
  %2558 = vmatprep.mubr.bf16.mxu0 0
  %2559 = vmatmul.mubr.bf16.gmra.mxu0 %v1151
  %v2560 = vpop.f32.mrf.mxu0
  %v2561 = vadd.f32 0.0, %v2560
  %v2562 = vpop.f32.mrf.mxu0
  %v2563 = vpop.f32.mrf.mxu0
  %v2564 = vadd.f32 0.0, %v2563
  %v2565 = vpop.f32.mrf.mxu0
  %2566 = vmatprep.mubr.bf16.mxu0 0
  %2567 = vmatmul.mubr.bf16.gmra.mxu0 %v1154
  %v2568 = vpop.f32.mrf.mxu0
  %v2569 = vadd.f32 0.0, %v2568
  %v2570 = vpop.f32.mrf.mxu0
  %v2571 = vpop.f32.mrf.mxu0
  %v2572 = vadd.f32 0.0, %v2571
  %v2573 = vpop.f32.mrf.mxu0
  %2574 = vmatprep.mubr.bf16.mxu0 0
  %2575 = vmatmul.mubr.bf16.gmra.mxu0 %v1157
  %v2576 = vpop.f32.mrf.mxu0
  %v2577 = vadd.f32 0.0, %v2576
  %v2578 = vpop.f32.mrf.mxu0
  %v2579 = vpop.f32.mrf.mxu0
  %v2580 = vadd.f32 0.0, %v2579
  %v2581 = vpop.f32.mrf.mxu0
  %2582 = vmatprep.mubr.bf16.mxu0 0
  %2583 = vmatmul.mubr.bf16.gmra.mxu0 %v1160
  %v2584 = vpop.f32.mrf.mxu0
  %v2585 = vadd.f32 0.0, %v2584
  %v2586 = vpop.f32.mrf.mxu0
  %v2587 = vpop.f32.mrf.mxu0
  %v2588 = vadd.f32 0.0, %v2587
  %v2589 = vpop.f32.mrf.mxu0
  %2590 = vmatprep.mubr.bf16.mxu0 0
  %2591 = vmatmul.mubr.bf16.gmra.mxu0 %v1163
  %v2592 = vpop.f32.mrf.mxu0
  %v2593 = vadd.f32 0.0, %v2592
  %v2594 = vpop.f32.mrf.mxu0
  %v2595 = vpop.f32.mrf.mxu0
  %v2596 = vadd.f32 0.0, %v2595
  %v2597 = vpop.f32.mrf.mxu0
  %2598 = vmatprep.mubr.bf16.mxu0 0
  %2599 = vmatmul.mubr.bf16.gmra.mxu0 %v1166
  %v2600 = vpop.f32.mrf.mxu0
  %v2601 = vadd.f32 0.0, %v2600
  %v2602 = vpop.f32.mrf.mxu0
  %v2603 = vpop.f32.mrf.mxu0
  %v2604 = vadd.f32 0.0, %v2603
  %v2605 = vpop.f32.mrf.mxu0
  %2606 = vmatprep.mubr.bf16.mxu0 0
  %2607 = vmatmul.mubr.bf16.gmra.mxu0 %v1169
  %v2608 = vpop.f32.mrf.mxu0
  %v2609 = vadd.f32 0.0, %v2608
  %v2610 = vpop.f32.mrf.mxu0
  %v2611 = vpop.f32.mrf.mxu0
  %v2612 = vadd.f32 0.0, %v2611
  %v2613 = vpop.f32.mrf.mxu0
  %2614 = vdwg.mxu0
  %2631 = vrot.lane.b32.xlu0 %v2553, 10
  %v2632 = vpop.permute.xlu0 %2631
  %2633 = vrot.lane.b32.xlu0 %v2556, 10
  %v2634 = vpop.permute.xlu0 %2633
  %2635 = vrot.lane.b32.xlu0 %v2561, 10
  %v2636 = vpop.permute.xlu0 %2635
  %2637 = vrot.lane.b32.xlu0 %v2564, 10
  %v2638 = vpop.permute.xlu0 %2637
  %2639 = vrot.lane.b32.xlu0 %v2569, 10
  %v2640 = vpop.permute.xlu0 %2639
  %2641 = vrot.lane.b32.xlu0 %v2572, 10
  %v2642 = vpop.permute.xlu0 %2641
  %2643 = vrot.lane.b32.xlu0 %v2577, 10
  %v2644 = vpop.permute.xlu0 %2643
  %2645 = vrot.lane.b32.xlu0 %v2580, 10
  %v2646 = vpop.permute.xlu0 %2645
  %2647 = vrot.lane.b32.xlu0 %v2585, 10
  %v2648 = vpop.permute.xlu0 %2647
  %2649 = vrot.lane.b32.xlu0 %v2588, 10
  %v2650 = vpop.permute.xlu0 %2649
  %2651 = vrot.lane.b32.xlu0 %v2593, 10
  %v2652 = vpop.permute.xlu0 %2651
  %2653 = vrot.lane.b32.xlu0 %v2596, 10
  %v2654 = vpop.permute.xlu0 %2653
  %2655 = vrot.lane.b32.xlu0 %v2601, 10
  %v2656 = vpop.permute.xlu0 %2655
  %2657 = vrot.lane.b32.xlu0 %v2604, 10
  %v2658 = vpop.permute.xlu0 %2657
  %2659 = vrot.lane.b32.xlu0 %v2609, 10
  %v2660 = vpop.permute.xlu0 %2659
  %2661 = vrot.lane.b32.xlu0 %v2612, 10
  %v2662 = vpop.permute.xlu0 %2661
  %v2679 = vadd.f32 %v1069, %v2632
  %v2680 = vadd.f32 %v1072, %v2634
  %v2681 = vadd.f32 %v1077, %v2636
  %v2682 = vadd.f32 %v1080, %v2638
  %v2683 = vadd.f32 %v1085, %v2640
  %v2684 = vadd.f32 %v1088, %v2642
  %v2685 = vadd.f32 %v1093, %v2644
  %v2686 = vadd.f32 %v1096, %v2646
  %v2687 = vadd.f32 %v1101, %v2648
  %v2688 = vadd.f32 %v1104, %v2650
  %v2689 = vadd.f32 %v1109, %v2652
  %v2690 = vadd.f32 %v1112, %v2654
  %v2691 = vadd.f32 %v1117, %v2656
  %v2692 = vadd.f32 %v1120, %v2658
  %v2693 = vadd.f32 %v1125, %v2660
  %v2694 = vadd.f32 %v1128, %v2662
  %v2695 = vsub.f32 0.0, %v2679
  %v2696 = vsub.f32 0.0, %v2680
  %v2697 = vsub.f32 0.0, %v2681
  %v2698 = vsub.f32 0.0, %v2682
  %v2699 = vmul.f32 %v2695, 1.442695
  %v2700 = vpow.pop %v2699
  %v2701 = vmul.f32 %v2696, 1.442695
  %v2702 = vpow.pop %v2701
  %v2703 = vmul.f32 %v2697, 1.442695
  %v2704 = vpow.pop %v2703
  %v2705 = vmul.f32 %v2698, 1.442695
  %v2706 = vpow.pop %v2705
  %v2707 = vadd.f32 %v2700, 1.0
  %v2708 = vadd.f32 %v2702, 1.0
  %v2709 = vadd.f32 %v2704, 1.0
  %v2710 = vadd.f32 %v2706, 1.0
  %v2711 = vrcp.pop %v2707
  %v2712 = vrcp.pop %v2708
  %v2713 = vrcp.pop %v2709
  %v2714 = vrcp.pop %v2710
  %v2715 = vsub.f32 0.0, %v2683
  %v2716 = vsub.f32 0.0, %v2684
  %v2717 = vsub.f32 0.0, %v2685
  %v2718 = vsub.f32 0.0, %v2686
  %v2719 = vmul.f32 %v2715, 1.442695
  %v2720 = vpow.pop %v2719
  %v2721 = vmul.f32 %v2716, 1.442695
  %v2722 = vpow.pop %v2721
  %v2723 = vmul.f32 %v2717, 1.442695
  %v2724 = vpow.pop %v2723
  %v2725 = vmul.f32 %v2718, 1.442695
  %v2726 = vpow.pop %v2725
  %v2727 = vadd.f32 %v2720, 1.0
  %v2728 = vadd.f32 %v2722, 1.0
  %v2729 = vadd.f32 %v2724, 1.0
  %v2730 = vadd.f32 %v2726, 1.0
  %v2731 = vrcp.pop %v2727
  %v2732 = vrcp.pop %v2728
  %v2733 = vrcp.pop %v2729
  %v2734 = vrcp.pop %v2730
  %v2735 = vtanh.pop %v2687
  %v2736 = vtanh.pop %v2688
  %v2737 = vtanh.pop %v2689
  %v2738 = vtanh.pop %v2690
  %v2739 = vsub.f32 0.0, %v2691
  %v2740 = vsub.f32 0.0, %v2692
  %v2741 = vsub.f32 0.0, %v2693
  %v2742 = vsub.f32 0.0, %v2694
  %v2743 = vmul.f32 %v2739, 1.442695
  %v2744 = vpow.pop %v2743
  %v2745 = vmul.f32 %v2740, 1.442695
  %v2746 = vpow.pop %v2745
  %v2747 = vmul.f32 %v2741, 1.442695
  %v2748 = vpow.pop %v2747
  %v2749 = vmul.f32 %v2742, 1.442695
  %v2750 = vpow.pop %v2749
  %v2751 = vadd.f32 %v2744, 1.0
  %v2752 = vadd.f32 %v2746, 1.0
  %v2753 = vadd.f32 %v2748, 1.0
  %v2754 = vadd.f32 %v2750, 1.0
  %v2755 = vrcp.pop %v2751
  %v2756 = vrcp.pop %v2752
  %v2757 = vrcp.pop %v2753
  %v2758 = vrcp.pop %v2754
  %2763 = vrot.lane.b32.xlu0 %v2496, 2
  %v2764 = vpop.permute.xlu0 %2763
  %2765 = vrot.lane.b32.xlu0 %v2497, 2
  %v2766 = vpop.permute.xlu0 %2765
  %2767 = vrot.lane.b32.xlu0 %v2498, 2
  %v2768 = vpop.permute.xlu0 %2767
  %2769 = vrot.lane.b32.xlu0 %v2499, 2
  %v2770 = vpop.permute.xlu0 %2769
  %v2775 = vmul.f32 %v2731, %v2764
  %v2776 = vmul.f32 %v2732, %v2766
  %v2777 = vmul.f32 %v2733, %v2768
  %v2778 = vmul.f32 %v2734, %v2770
  %v2779 = vmul.f32 %v2711, %v2735
  %v2780 = vmul.f32 %v2712, %v2736
  %v2781 = vmul.f32 %v2713, %v2737
  %v2782 = vmul.f32 %v2714, %v2738
  %v2783 = vadd.f32 %v2775, %v2779
  %v2784 = vadd.f32 %v2776, %v2780
  %v2785 = vadd.f32 %v2777, %v2781
  %v2786 = vadd.f32 %v2778, %v2782
  %v2787 = vtanh.pop %v2783
  %v2788 = vtanh.pop %v2784
  %v2789 = vtanh.pop %v2785
  %v2790 = vtanh.pop %v2786
  %v2791 = vmul.f32 %v2755, %v2787
  %v2792 = vmul.f32 %v2756, %v2788
  %v2793 = vmul.f32 %v2757, %v2789
  %v2794 = vmul.f32 %v2758, %v2790
  %v2795 = vpack.c.bf16 %v2792, %v2791
  %v2796 = vpack.c.bf16 %v2794, %v2793
  %2799 = vrot.lane.b32.xlu0 %v2795, 118
  %v2800 = vpop.permute.xlu0 %2799
  %2801 = vrot.lane.b32.xlu0 %v2796, 118
  %v2802 = vpop.permute.xlu0 %2801
  %2805 = vmatprep.subr.bf16.mxu0 0
  %2806 = vmatpush1.bf16.msra.mxu0 0
  %2807 = vmatprep.subr.bf16.mxu0 0
  %2808 = vmatpush1.bf16.msra.mxu0 0
  %2809 = vmatprep.subr.bf16.mxu0 0
  %2810 = vmatpush1.bf16.msra.mxu0 0
  %2811 = vmatprep.subr.bf16.mxu0 0
  %2812 = vmatpush1.bf16.msra.mxu0 0
  %2813 = vmatprep.subr.bf16.mxu0 0
  %2814 = vmatpush1.bf16.msra.mxu0 0
  %2815 = vmatprep.subr.bf16.mxu0 0
  %2816 = vmatpush1.bf16.msra.mxu0 0
  %2817 = vmatprep.subr.bf16.mxu0 0
  %2818 = vmatpush1.bf16.msra.mxu0 %v2802
  %2819 = vmatprep.subr.bf16.mxu0 0
  %2820 = vmatpush1.bf16.msra.mxu0 %v2800
  %2821 = vmatprep.subr.bf16.mxu0 0
  %2822 = vmatpush2.bf16.msra.mxu0 0
  %2823 = vmatprep.subr.bf16.mxu0 0
  %2824 = vmatpush2.bf16.msra.mxu0 0
  %2825 = vmatprep.subr.bf16.mxu0 0
  %2826 = vmatpush2.bf16.msra.mxu0 0
  %2827 = vmatprep.subr.bf16.mxu0 0
  %2828 = vmatpush2.bf16.msra.mxu0 0
  %2829 = vmatprep.subr.bf16.mxu0 0
  %2830 = vmatpush2.bf16.msra.mxu0 0
  %2831 = vmatprep.subr.bf16.mxu0 0
  %2832 = vmatpush2.bf16.msra.mxu0 0
  %2833 = vmatprep.subr.bf16.mxu0 0
  %2834 = vmatpush2.bf16.msra.mxu0 0
  %2835 = vmatprep.subr.bf16.mxu0 0
  %2836 = vmatpush2.bf16.msra.mxu0 0
  %2837 = vmatprep.mubr.bf16.mxu0 0
  %2838 = vmatmul.mubr.bf16.gmra.mxu0 %v1148
  %v2839 = vpop.f32.mrf.mxu0
  %v2840 = vadd.f32 0.0, %v2839
  %v2841 = vpop.f32.mrf.mxu0
  %v2842 = vpop.f32.mrf.mxu0
  %v2843 = vadd.f32 0.0, %v2842
  %v2844 = vpop.f32.mrf.mxu0
  %2845 = vmatprep.mubr.bf16.mxu0 0
  %2846 = vmatmul.mubr.bf16.gmra.mxu0 %v1151
  %v2847 = vpop.f32.mrf.mxu0
  %v2848 = vadd.f32 0.0, %v2847
  %v2849 = vpop.f32.mrf.mxu0
  %v2850 = vpop.f32.mrf.mxu0
  %v2851 = vadd.f32 0.0, %v2850
  %v2852 = vpop.f32.mrf.mxu0
  %2853 = vmatprep.mubr.bf16.mxu0 0
  %2854 = vmatmul.mubr.bf16.gmra.mxu0 %v1154
  %v2855 = vpop.f32.mrf.mxu0
  %v2856 = vadd.f32 0.0, %v2855
  %v2857 = vpop.f32.mrf.mxu0
  %v2858 = vpop.f32.mrf.mxu0
  %v2859 = vadd.f32 0.0, %v2858
  %v2860 = vpop.f32.mrf.mxu0
  %2861 = vmatprep.mubr.bf16.mxu0 0
  %2862 = vmatmul.mubr.bf16.gmra.mxu0 %v1157
  %v2863 = vpop.f32.mrf.mxu0
  %v2864 = vadd.f32 0.0, %v2863
  %v2865 = vpop.f32.mrf.mxu0
  %v2866 = vpop.f32.mrf.mxu0
  %v2867 = vadd.f32 0.0, %v2866
  %v2868 = vpop.f32.mrf.mxu0
  %2869 = vmatprep.mubr.bf16.mxu0 0
  %2870 = vmatmul.mubr.bf16.gmra.mxu0 %v1160
  %v2871 = vpop.f32.mrf.mxu0
  %v2872 = vadd.f32 0.0, %v2871
  %v2873 = vpop.f32.mrf.mxu0
  %v2874 = vpop.f32.mrf.mxu0
  %v2875 = vadd.f32 0.0, %v2874
  %v2876 = vpop.f32.mrf.mxu0
  %2877 = vmatprep.mubr.bf16.mxu0 0
  %2878 = vmatmul.mubr.bf16.gmra.mxu0 %v1163
  %v2879 = vpop.f32.mrf.mxu0
  %v2880 = vadd.f32 0.0, %v2879
  %v2881 = vpop.f32.mrf.mxu0
  %v2882 = vpop.f32.mrf.mxu0
  %v2883 = vadd.f32 0.0, %v2882
  %v2884 = vpop.f32.mrf.mxu0
  %2885 = vmatprep.mubr.bf16.mxu0 0
  %2886 = vmatmul.mubr.bf16.gmra.mxu0 %v1166
  %v2887 = vpop.f32.mrf.mxu0
  %v2888 = vadd.f32 0.0, %v2887
  %v2889 = vpop.f32.mrf.mxu0
  %v2890 = vpop.f32.mrf.mxu0
  %v2891 = vadd.f32 0.0, %v2890
  %v2892 = vpop.f32.mrf.mxu0
  %2893 = vmatprep.mubr.bf16.mxu0 0
  %2894 = vmatmul.mubr.bf16.gmra.mxu0 %v1169
  %v2895 = vpop.f32.mrf.mxu0
  %v2896 = vadd.f32 0.0, %v2895
  %v2897 = vpop.f32.mrf.mxu0
  %v2898 = vpop.f32.mrf.mxu0
  %v2899 = vadd.f32 0.0, %v2898
  %v2900 = vpop.f32.mrf.mxu0
  %2901 = vdwg.mxu0
  %2918 = vrot.lane.b32.xlu0 %v2840, 12
  %v2919 = vpop.permute.xlu0 %2918
  %2920 = vrot.lane.b32.xlu0 %v2843, 12
  %v2921 = vpop.permute.xlu0 %2920
  %2922 = vrot.lane.b32.xlu0 %v2848, 12
  %v2923 = vpop.permute.xlu0 %2922
  %2924 = vrot.lane.b32.xlu0 %v2851, 12
  %v2925 = vpop.permute.xlu0 %2924
  %2926 = vrot.lane.b32.xlu0 %v2856, 12
  %v2927 = vpop.permute.xlu0 %2926
  %2928 = vrot.lane.b32.xlu0 %v2859, 12
  %v2929 = vpop.permute.xlu0 %2928
  %2930 = vrot.lane.b32.xlu0 %v2864, 12
  %v2931 = vpop.permute.xlu0 %2930
  %2932 = vrot.lane.b32.xlu0 %v2867, 12
  %v2933 = vpop.permute.xlu0 %2932
  %2934 = vrot.lane.b32.xlu0 %v2872, 12
  %v2935 = vpop.permute.xlu0 %2934
  %2936 = vrot.lane.b32.xlu0 %v2875, 12
  %v2937 = vpop.permute.xlu0 %2936
  %2938 = vrot.lane.b32.xlu0 %v2880, 12
  %v2939 = vpop.permute.xlu0 %2938
  %2940 = vrot.lane.b32.xlu0 %v2883, 12
  %v2941 = vpop.permute.xlu0 %2940
  %2942 = vrot.lane.b32.xlu0 %v2888, 12
  %v2943 = vpop.permute.xlu0 %2942
  %2944 = vrot.lane.b32.xlu0 %v2891, 12
  %v2945 = vpop.permute.xlu0 %2944
  %2946 = vrot.lane.b32.xlu0 %v2896, 12
  %v2947 = vpop.permute.xlu0 %2946
  %2948 = vrot.lane.b32.xlu0 %v2899, 12
  %v2949 = vpop.permute.xlu0 %2948
  %v2966 = vadd.f32 %v1069, %v2919
  %v2967 = vadd.f32 %v1072, %v2921
  %v2968 = vadd.f32 %v1077, %v2923
  %v2969 = vadd.f32 %v1080, %v2925
  %v2970 = vadd.f32 %v1085, %v2927
  %v2971 = vadd.f32 %v1088, %v2929
  %v2972 = vadd.f32 %v1093, %v2931
  %v2973 = vadd.f32 %v1096, %v2933
  %v2974 = vadd.f32 %v1101, %v2935
  %v2975 = vadd.f32 %v1104, %v2937
  %v2976 = vadd.f32 %v1109, %v2939
  %v2977 = vadd.f32 %v1112, %v2941
  %v2978 = vadd.f32 %v1117, %v2943
  %v2979 = vadd.f32 %v1120, %v2945
  %v2980 = vadd.f32 %v1125, %v2947
  %v2981 = vadd.f32 %v1128, %v2949
  %v2982 = vsub.f32 0.0, %v2966
  %v2983 = vsub.f32 0.0, %v2967
  %v2984 = vsub.f32 0.0, %v2968
  %v2985 = vsub.f32 0.0, %v2969
  %v2986 = vmul.f32 %v2982, 1.442695
  %v2987 = vpow.pop %v2986
  %v2988 = vmul.f32 %v2983, 1.442695
  %v2989 = vpow.pop %v2988
  %v2990 = vmul.f32 %v2984, 1.442695
  %v2991 = vpow.pop %v2990
  %v2992 = vmul.f32 %v2985, 1.442695
  %v2993 = vpow.pop %v2992
  %v2994 = vadd.f32 %v2987, 1.0
  %v2995 = vadd.f32 %v2989, 1.0
  %v2996 = vadd.f32 %v2991, 1.0
  %v2997 = vadd.f32 %v2993, 1.0
  %v2998 = vrcp.pop %v2994
  %v2999 = vrcp.pop %v2995
  %v3000 = vrcp.pop %v2996
  %v3001 = vrcp.pop %v2997
  %v3002 = vsub.f32 0.0, %v2970
  %v3003 = vsub.f32 0.0, %v2971
  %v3004 = vsub.f32 0.0, %v2972
  %v3005 = vsub.f32 0.0, %v2973
  %v3006 = vmul.f32 %v3002, 1.442695
  %v3007 = vpow.pop %v3006
  %v3008 = vmul.f32 %v3003, 1.442695
  %v3009 = vpow.pop %v3008
  %v3010 = vmul.f32 %v3004, 1.442695
  %v3011 = vpow.pop %v3010
  %v3012 = vmul.f32 %v3005, 1.442695
  %v3013 = vpow.pop %v3012
  %v3014 = vadd.f32 %v3007, 1.0
  %v3015 = vadd.f32 %v3009, 1.0
  %v3016 = vadd.f32 %v3011, 1.0
  %v3017 = vadd.f32 %v3013, 1.0
  %v3018 = vrcp.pop %v3014
  %v3019 = vrcp.pop %v3015
  %v3020 = vrcp.pop %v3016
  %v3021 = vrcp.pop %v3017
  %v3022 = vtanh.pop %v2974
  %v3023 = vtanh.pop %v2975
  %v3024 = vtanh.pop %v2976
  %v3025 = vtanh.pop %v2977
  %v3026 = vsub.f32 0.0, %v2978
  %v3027 = vsub.f32 0.0, %v2979
  %v3028 = vsub.f32 0.0, %v2980
  %v3029 = vsub.f32 0.0, %v2981
  %v3030 = vmul.f32 %v3026, 1.442695
  %v3031 = vpow.pop %v3030
  %v3032 = vmul.f32 %v3027, 1.442695
  %v3033 = vpow.pop %v3032
  %v3034 = vmul.f32 %v3028, 1.442695
  %v3035 = vpow.pop %v3034
  %v3036 = vmul.f32 %v3029, 1.442695
  %v3037 = vpow.pop %v3036
  %v3038 = vadd.f32 %v3031, 1.0
  %v3039 = vadd.f32 %v3033, 1.0
  %v3040 = vadd.f32 %v3035, 1.0
  %v3041 = vadd.f32 %v3037, 1.0
  %v3042 = vrcp.pop %v3038
  %v3043 = vrcp.pop %v3039
  %v3044 = vrcp.pop %v3040
  %v3045 = vrcp.pop %v3041
  %3050 = vrot.lane.b32.xlu0 %v2783, 2
  %v3051 = vpop.permute.xlu0 %3050
  %3052 = vrot.lane.b32.xlu0 %v2784, 2
  %v3053 = vpop.permute.xlu0 %3052
  %3054 = vrot.lane.b32.xlu0 %v2785, 2
  %v3055 = vpop.permute.xlu0 %3054
  %3056 = vrot.lane.b32.xlu0 %v2786, 2
  %v3057 = vpop.permute.xlu0 %3056
  %v3062 = vmul.f32 %v3018, %v3051
  %v3063 = vmul.f32 %v3019, %v3053
  %v3064 = vmul.f32 %v3020, %v3055
  %v3065 = vmul.f32 %v3021, %v3057
  %v3066 = vmul.f32 %v2998, %v3022
  %v3067 = vmul.f32 %v2999, %v3023
  %v3068 = vmul.f32 %v3000, %v3024
  %v3069 = vmul.f32 %v3001, %v3025
  %v3070 = vadd.f32 %v3062, %v3066
  %v3071 = vadd.f32 %v3063, %v3067
  %v3072 = vadd.f32 %v3064, %v3068
  %v3073 = vadd.f32 %v3065, %v3069
  %v3074 = vtanh.pop %v3070
  %v3075 = vtanh.pop %v3071
  %v3076 = vtanh.pop %v3072
  %v3077 = vtanh.pop %v3073
  %v3078 = vmul.f32 %v3042, %v3074
  %v3079 = vmul.f32 %v3043, %v3075
  %v3080 = vmul.f32 %v3044, %v3076
  %v3081 = vmul.f32 %v3045, %v3077
  %v3082 = vpack.c.bf16 %v3079, %v3078
  %v3083 = vpack.c.bf16 %v3081, %v3080
  %3086 = vrot.lane.b32.xlu0 %v3082, 116
  %v3087 = vpop.permute.xlu0 %3086
  %3088 = vrot.lane.b32.xlu0 %v3083, 116
  %v3089 = vpop.permute.xlu0 %3088
  %3092 = vmatprep.subr.bf16.mxu0 0
  %3093 = vmatpush1.bf16.msra.mxu0 0
  %3094 = vmatprep.subr.bf16.mxu0 0
  %3095 = vmatpush1.bf16.msra.mxu0 0
  %3096 = vmatprep.subr.bf16.mxu0 0
  %3097 = vmatpush1.bf16.msra.mxu0 0
  %3098 = vmatprep.subr.bf16.mxu0 0
  %3099 = vmatpush1.bf16.msra.mxu0 0
  %3100 = vmatprep.subr.bf16.mxu0 0
  %3101 = vmatpush1.bf16.msra.mxu0 0
  %3102 = vmatprep.subr.bf16.mxu0 0
  %3103 = vmatpush1.bf16.msra.mxu0 0
  %3104 = vmatprep.subr.bf16.mxu0 0
  %3105 = vmatpush1.bf16.msra.mxu0 %v3089
  %3106 = vmatprep.subr.bf16.mxu0 0
  %3107 = vmatpush1.bf16.msra.mxu0 %v3087
  %3108 = vmatprep.subr.bf16.mxu0 0
  %3109 = vmatpush2.bf16.msra.mxu0 0
  %3110 = vmatprep.subr.bf16.mxu0 0
  %3111 = vmatpush2.bf16.msra.mxu0 0
  %3112 = vmatprep.subr.bf16.mxu0 0
  %3113 = vmatpush2.bf16.msra.mxu0 0
  %3114 = vmatprep.subr.bf16.mxu0 0
  %3115 = vmatpush2.bf16.msra.mxu0 0
  %3116 = vmatprep.subr.bf16.mxu0 0
  %3117 = vmatpush2.bf16.msra.mxu0 0
  %3118 = vmatprep.subr.bf16.mxu0 0
  %3119 = vmatpush2.bf16.msra.mxu0 0
  %3120 = vmatprep.subr.bf16.mxu0 0
  %3121 = vmatpush2.bf16.msra.mxu0 0
  %3122 = vmatprep.subr.bf16.mxu0 0
  %3123 = vmatpush2.bf16.msra.mxu0 0
  %3124 = vmatprep.mubr.bf16.mxu0 0
  %3125 = vmatmul.mubr.bf16.gmra.mxu0 %v1148
  %v3126 = vpop.f32.mrf.mxu0
  %v3127 = vadd.f32 0.0, %v3126
  %v3128 = vpop.f32.mrf.mxu0
  %v3129 = vpop.f32.mrf.mxu0
  %v3130 = vadd.f32 0.0, %v3129
  %v3131 = vpop.f32.mrf.mxu0
  %3132 = vmatprep.mubr.bf16.mxu0 0
  %3133 = vmatmul.mubr.bf16.gmra.mxu0 %v1151
  %v3134 = vpop.f32.mrf.mxu0
  %v3135 = vadd.f32 0.0, %v3134
  %v3136 = vpop.f32.mrf.mxu0
  %v3137 = vpop.f32.mrf.mxu0
  %v3138 = vadd.f32 0.0, %v3137
  %v3139 = vpop.f32.mrf.mxu0
  %3140 = vmatprep.mubr.bf16.mxu0 0
  %3141 = vmatmul.mubr.bf16.gmra.mxu0 %v1154
  %v3142 = vpop.f32.mrf.mxu0
  %v3143 = vadd.f32 0.0, %v3142
  %v3144 = vpop.f32.mrf.mxu0
  %v3145 = vpop.f32.mrf.mxu0
  %v3146 = vadd.f32 0.0, %v3145
  %v3147 = vpop.f32.mrf.mxu0
  %3148 = vmatprep.mubr.bf16.mxu0 0
  %3149 = vmatmul.mubr.bf16.gmra.mxu0 %v1157
  %v3150 = vpop.f32.mrf.mxu0
  %v3151 = vadd.f32 0.0, %v3150
  %v3152 = vpop.f32.mrf.mxu0
  %v3153 = vpop.f32.mrf.mxu0
  %v3154 = vadd.f32 0.0, %v3153
  %v3155 = vpop.f32.mrf.mxu0
  %3156 = vmatprep.mubr.bf16.mxu0 0
  %3157 = vmatmul.mubr.bf16.gmra.mxu0 %v1160
  %v3158 = vpop.f32.mrf.mxu0
  %v3159 = vadd.f32 0.0, %v3158
  %v3160 = vpop.f32.mrf.mxu0
  %v3161 = vpop.f32.mrf.mxu0
  %v3162 = vadd.f32 0.0, %v3161
  %v3163 = vpop.f32.mrf.mxu0
  %3164 = vmatprep.mubr.bf16.mxu0 0
  %3165 = vmatmul.mubr.bf16.gmra.mxu0 %v1163
  %v3166 = vpop.f32.mrf.mxu0
  %v3167 = vadd.f32 0.0, %v3166
  %v3168 = vpop.f32.mrf.mxu0
  %v3169 = vpop.f32.mrf.mxu0
  %v3170 = vadd.f32 0.0, %v3169
  %v3171 = vpop.f32.mrf.mxu0
  %3172 = vmatprep.mubr.bf16.mxu0 0
  %3173 = vmatmul.mubr.bf16.gmra.mxu0 %v1166
  %v3174 = vpop.f32.mrf.mxu0
  %v3175 = vadd.f32 0.0, %v3174
  %v3176 = vpop.f32.mrf.mxu0
  %v3177 = vpop.f32.mrf.mxu0
  %v3178 = vadd.f32 0.0, %v3177
  %v3179 = vpop.f32.mrf.mxu0
  %3180 = vmatprep.mubr.bf16.mxu0 0
  %3181 = vmatmul.mubr.bf16.gmra.mxu0 %v1169
  %v3182 = vpop.f32.mrf.mxu0
  %v3183 = vadd.f32 0.0, %v3182
  %v3184 = vpop.f32.mrf.mxu0
  %v3185 = vpop.f32.mrf.mxu0
  %v3186 = vadd.f32 0.0, %v3185
  %v3187 = vpop.f32.mrf.mxu0
  %3188 = vdwg.mxu0
  %3205 = vrot.lane.b32.xlu0 %v3127, 14
  %v3206 = vpop.permute.xlu0 %3205
  %3207 = vrot.lane.b32.xlu0 %v3130, 14
  %v3208 = vpop.permute.xlu0 %3207
  %3209 = vrot.lane.b32.xlu0 %v3135, 14
  %v3210 = vpop.permute.xlu0 %3209
  %3211 = vrot.lane.b32.xlu0 %v3138, 14
  %v3212 = vpop.permute.xlu0 %3211
  %3213 = vrot.lane.b32.xlu0 %v3143, 14
  %v3214 = vpop.permute.xlu0 %3213
  %3215 = vrot.lane.b32.xlu0 %v3146, 14
  %v3216 = vpop.permute.xlu0 %3215
  %3217 = vrot.lane.b32.xlu0 %v3151, 14
  %v3218 = vpop.permute.xlu0 %3217
  %3219 = vrot.lane.b32.xlu0 %v3154, 14
  %v3220 = vpop.permute.xlu0 %3219
  %3221 = vrot.lane.b32.xlu0 %v3159, 14
  %v3222 = vpop.permute.xlu0 %3221
  %3223 = vrot.lane.b32.xlu0 %v3162, 14
  %v3224 = vpop.permute.xlu0 %3223
  %3225 = vrot.lane.b32.xlu0 %v3167, 14
  %v3226 = vpop.permute.xlu0 %3225
  %3227 = vrot.lane.b32.xlu0 %v3170, 14
  %v3228 = vpop.permute.xlu0 %3227
  %3229 = vrot.lane.b32.xlu0 %v3175, 14
  %v3230 = vpop.permute.xlu0 %3229
  %3231 = vrot.lane.b32.xlu0 %v3178, 14
  %v3232 = vpop.permute.xlu0 %3231
  %3233 = vrot.lane.b32.xlu0 %v3183, 14
  %v3234 = vpop.permute.xlu0 %3233
  %3235 = vrot.lane.b32.xlu0 %v3186, 14
  %v3236 = vpop.permute.xlu0 %3235
  %v3253 = vadd.f32 %v1069, %v3206
  %v3254 = vadd.f32 %v1072, %v3208
  %v3255 = vadd.f32 %v1077, %v3210
  %v3256 = vadd.f32 %v1080, %v3212
  %v3257 = vadd.f32 %v1085, %v3214
  %v3258 = vadd.f32 %v1088, %v3216
  %v3259 = vadd.f32 %v1093, %v3218
  %v3260 = vadd.f32 %v1096, %v3220
  %v3261 = vadd.f32 %v1101, %v3222
  %v3262 = vadd.f32 %v1104, %v3224
  %v3263 = vadd.f32 %v1109, %v3226
  %v3264 = vadd.f32 %v1112, %v3228
  %v3265 = vadd.f32 %v1117, %v3230
  %v3266 = vadd.f32 %v1120, %v3232
  %v3267 = vadd.f32 %v1125, %v3234
  %v3268 = vadd.f32 %v1128, %v3236
  %v3269 = vsub.f32 0.0, %v3253
  %v3270 = vsub.f32 0.0, %v3254
  %v3271 = vsub.f32 0.0, %v3255
  %v3272 = vsub.f32 0.0, %v3256
  %v3273 = vmul.f32 %v3269, 1.442695
  %v3274 = vpow.pop %v3273
  %v3275 = vmul.f32 %v3270, 1.442695
  %v3276 = vpow.pop %v3275
  %v3277 = vmul.f32 %v3271, 1.442695
  %v3278 = vpow.pop %v3277
  %v3279 = vmul.f32 %v3272, 1.442695
  %v3280 = vpow.pop %v3279
  %v3281 = vadd.f32 %v3274, 1.0
  %v3282 = vadd.f32 %v3276, 1.0
  %v3283 = vadd.f32 %v3278, 1.0
  %v3284 = vadd.f32 %v3280, 1.0
  %v3285 = vrcp.pop %v3281
  %v3286 = vrcp.pop %v3282
  %v3287 = vrcp.pop %v3283
  %v3288 = vrcp.pop %v3284
  %v3289 = vsub.f32 0.0, %v3257
  %v3290 = vsub.f32 0.0, %v3258
  %v3291 = vsub.f32 0.0, %v3259
  %v3292 = vsub.f32 0.0, %v3260
  %v3293 = vmul.f32 %v3289, 1.442695
  %v3294 = vpow.pop %v3293
  %v3295 = vmul.f32 %v3290, 1.442695
  %v3296 = vpow.pop %v3295
  %v3297 = vmul.f32 %v3291, 1.442695
  %v3298 = vpow.pop %v3297
  %v3299 = vmul.f32 %v3292, 1.442695
  %v3300 = vpow.pop %v3299
  %v3301 = vadd.f32 %v3294, 1.0
  %v3302 = vadd.f32 %v3296, 1.0
  %v3303 = vadd.f32 %v3298, 1.0
  %v3304 = vadd.f32 %v3300, 1.0
  %v3305 = vrcp.pop %v3301
  %v3306 = vrcp.pop %v3302
  %v3307 = vrcp.pop %v3303
  %v3308 = vrcp.pop %v3304
  %v3309 = vtanh.pop %v3261
  %v3310 = vtanh.pop %v3262
  %v3311 = vtanh.pop %v3263
  %v3312 = vtanh.pop %v3264
  %v3313 = vsub.f32 0.0, %v3265
  %v3314 = vsub.f32 0.0, %v3266
  %v3315 = vsub.f32 0.0, %v3267
  %v3316 = vsub.f32 0.0, %v3268
  %v3317 = vmul.f32 %v3313, 1.442695
  %v3318 = vpow.pop %v3317
  %v3319 = vmul.f32 %v3314, 1.442695
  %v3320 = vpow.pop %v3319
  %v3321 = vmul.f32 %v3315, 1.442695
  %v3322 = vpow.pop %v3321
  %v3323 = vmul.f32 %v3316, 1.442695
  %v3324 = vpow.pop %v3323
  %v3325 = vadd.f32 %v3318, 1.0
  %v3326 = vadd.f32 %v3320, 1.0
  %v3327 = vadd.f32 %v3322, 1.0
  %v3328 = vadd.f32 %v3324, 1.0
  %v3329 = vrcp.pop %v3325
  %v3330 = vrcp.pop %v3326
  %v3331 = vrcp.pop %v3327
  %v3332 = vrcp.pop %v3328
  %3337 = vrot.lane.b32.xlu0 %v3070, 2
  %v3338 = vpop.permute.xlu0 %3337
  %3339 = vrot.lane.b32.xlu0 %v3071, 2
  %v3340 = vpop.permute.xlu0 %3339
  %3341 = vrot.lane.b32.xlu0 %v3072, 2
  %v3342 = vpop.permute.xlu0 %3341
  %3343 = vrot.lane.b32.xlu0 %v3073, 2
  %v3344 = vpop.permute.xlu0 %3343
  %v3349 = vmul.f32 %v3305, %v3338
  %v3350 = vmul.f32 %v3306, %v3340
  %v3351 = vmul.f32 %v3307, %v3342
  %v3352 = vmul.f32 %v3308, %v3344
  %v3353 = vmul.f32 %v3285, %v3309
  %v3354 = vmul.f32 %v3286, %v3310
  %v3355 = vmul.f32 %v3287, %v3311
  %v3356 = vmul.f32 %v3288, %v3312
  %v3357 = vadd.f32 %v3349, %v3353
  %v3358 = vadd.f32 %v3350, %v3354
  %v3359 = vadd.f32 %v3351, %v3355
  %v3360 = vadd.f32 %v3352, %v3356
  %v3361 = vtanh.pop %v3357
  %v3362 = vtanh.pop %v3358
  %v3363 = vtanh.pop %v3359
  %v3364 = vtanh.pop %v3360
  %v3365 = vmul.f32 %v3329, %v3361
  %v3366 = vmul.f32 %v3330, %v3362
  %v3367 = vmul.f32 %v3331, %v3363
  %v3368 = vmul.f32 %v3332, %v3364
  %v3369 = vsel %vm159, %v1364, %v1643
  %v3370 = vsel %vm159, %v1365, %v1644
  %v3371 = vsel %vm159, %v1366, %v1645
  %v3372 = vsel %vm159, %v1367, %v1646
  %v3373 = vsel %vm237, %v3369, %v1930
  %v3374 = vsel %vm237, %v3370, %v1931
  %v3375 = vsel %vm237, %v3371, %v1932
  %v3376 = vsel %vm237, %v3372, %v1933
  %v3377 = vsel %vm50, %v3373, %v2217
  %v3378 = vsel %vm50, %v3374, %v2218
  %v3379 = vsel %vm50, %v3375, %v2219
  %v3380 = vsel %vm50, %v3376, %v2220
  %v3381 = vsel %vm571, %v3377, %v2504
  %v3382 = vsel %vm571, %v3378, %v2505
  %v3383 = vsel %vm571, %v3379, %v2506
  %v3384 = vsel %vm571, %v3380, %v2507
  %vm3385 = vcmask 80896
  %v3386 = vsel %vm3385, %v3381, %v2791
  %v3387 = vsel %vm3385, %v3382, %v2792
  %v3388 = vsel %vm3385, %v3383, %v2793
  %v3389 = vsel %vm3385, %v3384, %v2794
  %vm3390 = vcmask 97280
  %v3391 = vsel %vm3390, %v3386, %v3078
  %v3392 = vsel %vm3390, %v3387, %v3079
  %v3393 = vsel %vm3390, %v3388, %v3080
  %v3394 = vsel %vm3390, %v3389, %v3081
  %vm3395 = vcmask 113664
  %v3396 = vsel %vm3395, %v3391, %v3365
  %v3397 = vsel %vm3395, %v3392, %v3366
  %v3398 = vsel %vm3395, %v3393, %v3367
  %v3399 = vsel %vm3395, %v3394, %v3368
  %v3400 = vadd.f32 %v3396, %v842
  %v3401 = vadd.f32 %v3397, %v845
  %v3402 = vadd.f32 %v3398, %v850
  %v3403 = vadd.f32 %v3399, %v853
  %vm3404 = vcmp.gt.f32.partialorder %v3400, 0.0
  %vm3405 = vcmp.gt.f32.partialorder %v3401, 0.0
  %vm3406 = vcmp.gt.f32.partialorder %v3402, 0.0
  %vm3407 = vcmp.gt.f32.partialorder %v3403, 0.0
  %v3408 = vmin.f32 %v3400, 0.0
  %v3409 = vmin.f32 %v3401, 0.0
  %v3410 = vmin.f32 %v3402, 0.0
  %v3411 = vmin.f32 %v3403, 0.0
  %v3412 = vmul.f32 %v3408, 1.442695
  %v3413 = vpow.pop %v3412
  %v3414 = vmul.f32 %v3409, 1.442695
  %v3415 = vpow.pop %v3414
  %v3416 = vmul.f32 %v3410, 1.442695
  %v3417 = vpow.pop %v3416
  %v3418 = vmul.f32 %v3411, 1.442695
  %v3419 = vpow.pop %v3418
  %v3420 = vsub.f32 %v3413, 1.0
  %v3421 = vsub.f32 %v3415, 1.0
  %v3422 = vsub.f32 %v3417, 1.0
  %v3423 = vsub.f32 %v3419, 1.0
  %v3424 = vsel %vm3404, %v3400, %v3420
  %v3425 = vsel %vm3405, %v3401, %v3421
  %v3426 = vsel %vm3406, %v3402, %v3422
  %v3427 = vsel %vm3407, %v3403, %v3423
  %s3428 = scalar_lea.vmem %s1, 224
  %v3429 = vld [vmem:[%s3428] sm:$0xff]
  %v3430 = vld [vmem:[%s3428 + $0x8] sm:$0xff]
  %v3431 = vld [vmem:[%s3428 + $0x10] sm:$0xff]
  %v3432 = vld [vmem:[%s3428 + $0x18] sm:$0xff]
  %3437 = vrot.lane.b32.xlu0 %v3424, 6
  %v3438 = vpop.permute.xlu0 %3437
  %3439 = vrot.lane.b32.xlu0 %v3425, 6
  %v3440 = vpop.permute.xlu0 %3439
  %3441 = vrot.lane.b32.xlu0 %v3426, 6
  %v3442 = vpop.permute.xlu0 %3441
  %3443 = vrot.lane.b32.xlu0 %v3427, 6
  %v3444 = vpop.permute.xlu0 %3443
  %v3449 = vsel %vm50, 0.0, %v3438
  %v3450 = vsel %vm50, 0.0, %v3440
  %v3451 = vsel %vm50, 0.0, %v3442
  %v3452 = vsel %vm50, 0.0, %v3444
  %vm3453 = vcmask 179200
  %v3454 = vsel %vm3453, %v3449, 0.0
  %v3455 = vsel %vm3453, %v3450, 0.0
  %v3456 = vsel %vm3453, %v3451, 0.0
  %v3457 = vsel %vm3453, %v3452, 0.0
  %3462 = vrot.lane.b32.xlu0 %v3454, 126
  %v3463 = vpop.permute.xlu0 %3462
  %3464 = vrot.lane.b32.xlu0 %v3455, 126
  %v3465 = vpop.permute.xlu0 %3464
  %3466 = vrot.lane.b32.xlu0 %v3456, 126
  %v3467 = vpop.permute.xlu0 %3466
  %3468 = vrot.lane.b32.xlu0 %v3457, 126
  %v3469 = vpop.permute.xlu0 %3468
  %3474 = vrot.lane.b32.xlu0 %v3454, 124
  %v3475 = vpop.permute.xlu0 %3474
  %3476 = vrot.lane.b32.xlu0 %v3455, 124
  %v3477 = vpop.permute.xlu0 %3476
  %3478 = vrot.lane.b32.xlu0 %v3456, 124
  %v3479 = vpop.permute.xlu0 %3478
  %3480 = vrot.lane.b32.xlu0 %v3457, 124
  %v3481 = vpop.permute.xlu0 %3480
  %3486 = vrot.lane.b32.xlu0 %v3454, 122
  %v3487 = vpop.permute.xlu0 %3486
  %3488 = vrot.lane.b32.xlu0 %v3455, 122
  %v3489 = vpop.permute.xlu0 %3488
  %3490 = vrot.lane.b32.xlu0 %v3456, 122
  %v3491 = vpop.permute.xlu0 %3490
  %3492 = vrot.lane.b32.xlu0 %v3457, 122
  %v3493 = vpop.permute.xlu0 %3492
  %3498 = vrot.lane.b32.xlu0 %v3454, 120
  %v3499 = vpop.permute.xlu0 %3498
  %3500 = vrot.lane.b32.xlu0 %v3455, 120
  %v3501 = vpop.permute.xlu0 %3500
  %3502 = vrot.lane.b32.xlu0 %v3456, 120
  %v3503 = vpop.permute.xlu0 %3502
  %3504 = vrot.lane.b32.xlu0 %v3457, 120
  %v3505 = vpop.permute.xlu0 %3504
  %3510 = vrot.lane.b32.xlu0 %v3454, 118
  %v3511 = vpop.permute.xlu0 %3510
  %3512 = vrot.lane.b32.xlu0 %v3455, 118
  %v3513 = vpop.permute.xlu0 %3512
  %3514 = vrot.lane.b32.xlu0 %v3456, 118
  %v3515 = vpop.permute.xlu0 %3514
  %3516 = vrot.lane.b32.xlu0 %v3457, 118
  %v3517 = vpop.permute.xlu0 %3516
  %3522 = vrot.lane.b32.xlu0 %v3454, 116
  %v3523 = vpop.permute.xlu0 %3522
  %3524 = vrot.lane.b32.xlu0 %v3455, 116
  %v3525 = vpop.permute.xlu0 %3524
  %3526 = vrot.lane.b32.xlu0 %v3456, 116
  %v3527 = vpop.permute.xlu0 %3526
  %3528 = vrot.lane.b32.xlu0 %v3457, 116
  %v3529 = vpop.permute.xlu0 %3528
  %v3534 = vpack.c.bf16 %v3455, %v3454
  %v3535 = vpack.c.bf16 %v3457, %v3456
  %v3536 = vpack.c.bf16 %v3465, %v3463
  %v3537 = vpack.c.bf16 %v3469, %v3467
  %v3538 = vpack.c.bf16 %v3477, %v3475
  %v3539 = vpack.c.bf16 %v3481, %v3479
  %v3540 = vpack.c.bf16 %v3489, %v3487
  %v3541 = vpack.c.bf16 %v3493, %v3491
  %v3542 = vpack.c.bf16 %v3501, %v3499
  %v3543 = vpack.c.bf16 %v3505, %v3503
  %v3544 = vpack.c.bf16 %v3513, %v3511
  %v3545 = vpack.c.bf16 %v3517, %v3515
  %v3546 = vpack.c.bf16 %v3525, %v3523
  %v3547 = vpack.c.bf16 %v3529, %v3527
  %3548 = vset.pattern.permute.xlu0 7
  %3549 = vperm.xlu0 %3548, %v638
  %v3550 = vpop.permute.xlu0 %3549
  %3552 = vset.pattern.permute.xlu0 7
  %3553 = vperm.xlu0 %3552, %v639
  %v3554 = vpop.permute.xlu0 %3553
  %3556 = vset.pattern.permute.xlu0 7
  %3557 = vperm.xlu0 %3556, %v640
  %v3558 = vpop.permute.xlu0 %3557
  %3560 = vset.pattern.permute.xlu0 7
  %3561 = vperm.xlu0 %3560, %v641
  %v3562 = vpop.permute.xlu0 %3561
  %v3568 = vunpack.c.l.b16 %v3429
  %v3569 = vunpack.c.h.b16 %v3429
  %v3570 = vunpack.c.l.b16 %v3430
  %v3571 = vunpack.c.h.b16 %v3430
  %v3572 = vunpack.c.l.b16 %v3431
  %v3573 = vunpack.c.h.b16 %v3431
  %v3574 = vunpack.c.l.b16 %v3432
  %v3575 = vunpack.c.h.b16 %v3432
  %v3576 = vpack.c.b16 %v3570, %v3568
  %v3577 = vpack.c.b16 %v3571, %v3569
  %v3578 = vpack.c.b16 %v3574, %v3572
  %v3579 = vpack.c.b16 %v3575, %v3573
  %vm3582 = vcmask 785408
  %v3584 = vsel %vm3582, %v3577, 0
  %v3587 = vsel %vm3582, %v3579, 0
  %3589 = vmatprep.subr.bf16.mxu0 0
  %3590 = vmatpush1.bf16.msra.mxu0 %v3541
  %3591 = vmatprep.subr.bf16.mxu0 0
  %3592 = vmatpush1.bf16.msra.mxu0 %v3540
  %3593 = vmatprep.subr.bf16.mxu0 0
  %3594 = vmatpush1.bf16.msra.mxu0 %v3539
  %3595 = vmatprep.subr.bf16.mxu0 0
  %3596 = vmatpush1.bf16.msra.mxu0 %v3538
  %3597 = vmatprep.subr.bf16.mxu0 0
  %3598 = vmatpush1.bf16.msra.mxu0 %v3537
  %3599 = vmatprep.subr.bf16.mxu0 0
  %3600 = vmatpush1.bf16.msra.mxu0 %v3536
  %3601 = vmatprep.subr.bf16.mxu0 0
  %3602 = vmatpush1.bf16.msra.mxu0 %v3535
  %3603 = vmatprep.subr.bf16.mxu0 0
  %3604 = vmatpush1.bf16.msra.mxu0 %v3534
  %3605 = vmatprep.subr.bf16.mxu0 0
  %3606 = vmatpush2.bf16.msra.mxu0 0
  %3607 = vmatprep.subr.bf16.mxu0 0
  %3608 = vmatpush2.bf16.msra.mxu0 0
  %3609 = vmatprep.subr.bf16.mxu0 0
  %3610 = vmatpush2.bf16.msra.mxu0 %v3547
  %3611 = vmatprep.subr.bf16.mxu0 0
  %3612 = vmatpush2.bf16.msra.mxu0 %v3546
  %3613 = vmatprep.subr.bf16.mxu0 0
  %3614 = vmatpush2.bf16.msra.mxu0 %v3545
  %3615 = vmatprep.subr.bf16.mxu0 0
  %3616 = vmatpush2.bf16.msra.mxu0 %v3544
  %3617 = vmatprep.subr.bf16.mxu0 0
  %3618 = vmatpush2.bf16.msra.mxu0 %v3543
  %3619 = vmatprep.subr.bf16.mxu0 0
  %3620 = vmatpush2.bf16.msra.mxu0 %v3542
  %3621 = vmatprep.mubr.bf16.mxu0 %v3584
  %3622 = vmatmul.mubr.bf16.gmra.mxu0 %v3576
  %v3623 = vpop.f32.mrf.mxu0
  %v3624 = vadd.f32 %v3550, %v3623
  %v3625 = vpop.f32.mrf.mxu0
  %v3626 = vpop.f32.mrf.mxu0
  %v3627 = vadd.f32 %v3554, %v3626
  %v3628 = vpop.f32.mrf.mxu0
  %3629 = vmatprep.mubr.bf16.mxu0 %v3587
  %3630 = vmatmul.mubr.bf16.gmra.mxu0 %v3578
  %v3631 = vpop.f32.mrf.mxu0
  %v3632 = vadd.f32 %v3558, %v3631
  %v3633 = vpop.f32.mrf.mxu0
  %v3634 = vpop.f32.mrf.mxu0
  %v3635 = vadd.f32 %v3562, %v3634
  %v3636 = vpop.f32.mrf.mxu0
  %3637 = vdwg.mxu0
  %vm3638 = vcmask 130048
  %3639 = vst.msk [vmem:[%s7] sm:$0xff] %vm3638, %v3624
  %3640 = vst.msk [vmem:[%s7 + $0x8] sm:$0xff] %vm3638, %v3627
  %3641 = vst.msk [vmem:[%s7 + $0x10] sm:$0xff] %vm3638, %v3632
  %3642 = vst.msk [vmem:[%s7 + $0x18] sm:$0xff] %vm3638, %v3635
  // Predicated region
  $region30: #{vae2_forward.2} parent=0 // pred_check
    _
  $region31: #{vae2_forward.2} parent=0 // pred_check_branch
    %3644 = sbr.rel (0) target = $region33
  $region32: #{vae2_forward.2} parent=0 // pred_region
    _
  $region33: #{vae2_forward.2} parent=0 // pred_fallthru
    _
  // Predicated region
  $region34: #{vae2_forward.2} parent=0 // pred_check
    _
  $region35: #{vae2_forward.2} parent=0 // pred_check_branch
    %3646 = sbr.rel (0) target = $region37
  $region36: #{vae2_forward.2} parent=0 // pred_region
    _
  $region37: #{vae2_forward.2} parent=0 // pred_fallthru
    _

</llo_original>
